<compile_context>
chip_gen: v7x
topology: tpu7x:2x2x1
jax: 0.10.0
libtpu: 0.0.40
codegen_flags: <defaults>
</compile_context>

<pallas_src>
import functools

import jax
import jax.numpy as jnp
from jax.experimental import pallas as pl
from jax.experimental.pallas import tpu as pltpu


# ----------------------------- Pallas kernel --------------------------------
def _gemm_lrelu_kernel(x_ref, w_ref, o_ref, *, alpha):
    """One M-tile of out = leaky_relu(x @ w, alpha); alpha == 1.0 skips the select."""
    y = jnp.dot(x_ref[...], w_ref[...], preferred_element_type=jnp.float32)
    if alpha != 1.0:  # trace-time constant: final layer emits no compare/select
        y = jnp.where(y >= 0.0, y, alpha * y)
    o_ref[...] = y.astype(o_ref.dtype)


def _round_up(v, m):
    return ((v + m - 1) // m) * m


def _pick_tm(m, kp, cp):
    """Largest M tile that divides M, keeps >= 2 grid steps (v7x dual TensorCore)
    and fits a conservative double-buffered VMEM budget (sized against v7x)."""
    budget = 24 * 1024 * 1024  # bytes, well under 32 MiB scoped VMEM on v7x

    def fits(t):
        # double-buffered: bf16 input block + bf16 weight block + (<=f32) output block
        per_step = 2 * (t * kp * 2 + kp * cp * 2 + t * cp * 4)
        return per_step <= budget

    for t in (4096, 2048, 1024, 512, 256, 128, 64, 32, 16, 8):
        if m % t == 0 and m // t >= 2 and fits(t):
            return t
    return m  # tiny / odd M: single full-extent block


def gemm_leaky_relu(patches, w_mat, alpha, out_dtype):
    """patches [M, K] @ w_mat [K, Cout] with fused LeakyReLU, via Pallas.

    K and Cout are zero-padded to multiples of 128 (lane-dense, unmasked loads and
    stores, non-ragged MXU contraction), operands cast to bf16, f32 accumulation.
    Returns [M, Cout] in out_dtype.
    """
    m, k = patches.shape
    k2, cout = w_mat.shape
    assert k == k2
    kp = _round_up(k, 128)
    cp = _round_up(cout, 128)

    x = jnp.pad(patches, ((0, 0), (0, kp - k))).astype(jnp.bfloat16)
    w = jnp.pad(w_mat, ((0, kp - k), (0, cp - cout))).astype(jnp.bfloat16)

    tm = _pick_tm(m, kp, cp)
    kernel = functools.partial(_gemm_lrelu_kernel, alpha=alpha)
    out = pl.pallas_call(
        kernel,
        out_shape=jax.ShapeDtypeStruct((m, cp), out_dtype),
        grid_spec=pltpu.PrefetchScalarGridSpec(
            num_scalar_prefetch=0,
            grid=(m // tm,),
            in_specs=[
                pl.BlockSpec((tm, kp), lambda i: (i, 0)),
                pl.BlockSpec((kp, cp), lambda i: (0, 0)),
            ],
            out_specs=pl.BlockSpec((tm, cp), lambda i: (i, 0)),
        ),
        compiler_params=pltpu.CompilerParams(
            dimension_semantics=("parallel",),
            vmem_limit_bytes=32 * 1024 * 1024,
        ),
    )(x, w)
    return out[:, :cout]


# ------------------------------ JAX glue -------------------------------------
def im2col_nhwc(x, k, stride, pad):
    """x: [N, H, W, C] -> patches [N*Ho*Wo, k*k*C] (order kh, kw, Cin)."""
    if pad > 0:
        x = jnp.pad(x, ((0, 0), (pad, pad), (pad, pad), (0, 0)))
    n, h, w, c = x.shape
    ho = (h - k) // stride + 1
    wo = (w - k) // stride + 1
    slabs = []
    for i in range(k):
        for j in range(k):
            slabs.append(x[:, i:i + stride * ho:stride,
                           j:j + stride * wo:stride, :])
    p = jnp.stack(slabs, axis=3)                  # [N, Ho, Wo, k*k, C]
    return p.reshape(n * ho * wo, k * k * c), (n, ho, wo)


def spectral_norm_weight(w, u, n_power_iterations=1, eps=1e-12):
    """PyTorch-style spectral norm on conv weight w [Cout, Cin, kh, kw]."""
    cout = w.shape[0]
    w_mat = w.reshape(cout, -1)                   # (out, in*kh*kw)

    def _normalize(v):
        return v / (jnp.linalg.norm(v) + eps)

    v = None
    for _ in range(n_power_iterations):
        v = _normalize(w_mat.T @ u)
        u = _normalize(w_mat @ v)
    sigma = u @ (w_mat @ v)
    return w / sigma


def xavier_normal(key, cout, cin, k):
    fan_in = cin * k * k
    fan_out = cout * k * k
    std = jnp.sqrt(2.0 / (fan_in + fan_out))
    return jax.random.normal(key, (cout, cin, k, k), jnp.float32) * std


def init_discriminator_params(key, nc, ndf):
    """Returns list of (weight [Cout,Cin,4,4], u [Cout], stride, pad, alpha)."""
    layer_defs = [
        (nc,        ndf,       2, 1, 0.2),
        (ndf,       ndf * 2,   2, 1, 0.2),
        (ndf * 2,   ndf * 4,   2, 1, 0.2),
        (ndf * 4,   ndf * 8,   2, 1, 0.2),
        (ndf * 8,   ndf * 16,  2, 1, 0.2),
        (ndf * 16,  1,         1, 0, 1.0),  # final conv, no activation
    ]
    params = []
    for idx, (cin, cout, stride, pad, alpha) in enumerate(layer_defs):
        kw, ku = jax.random.split(jax.random.fold_in(key, idx))
        w = xavier_normal(kw, cout, cin, 4)
        u = jax.random.normal(ku, (cout,), jnp.float32)
        u = u / (jnp.linalg.norm(u) + 1e-12)
        params.append((w, u, stride, pad, alpha))
    return params


def discriminator_forward(x_nchw, params):
    """x_nchw: [N, nc, H, W] f32 -> [N, 1, 1, 1] f32 (same as PyTorch)."""
    x = jnp.transpose(x_nchw, (0, 2, 3, 1))       # NCHW -> NHWC
    n_layers = len(params)
    for li, (w, u, stride, pad, alpha) in enumerate(params):
        w_sn = spectral_norm_weight(w, u)         # [Cout, Cin, 4, 4]
        cout = w_sn.shape[0]
        # weight matrix ordered (kh, kw, Cin) to match im2col patch layout
        w_mat = jnp.transpose(w_sn, (2, 3, 1, 0)).reshape(-1, cout)
        patches, (n, ho, wo) = im2col_nhwc(x, 4, stride, pad)
        # Intermediate activations stay bf16 (next GEMM consumes bf16 operands
        # anyway, so no extra precision loss); final layer result is f32.
        out_dtype = jnp.float32 if li == n_layers - 1 else jnp.bfloat16
        y = gemm_leaky_relu(patches, w_mat, alpha, out_dtype)   # Pallas hot path
        x = y.reshape(n, ho, wo, cout)
    return jnp.transpose(x, (0, 3, 1, 2))         # NHWC -> NCHW


# --------------------------------- main ---------------------------------------
if __name__ == "__main__":
    key = jax.random.PRNGKey(0)
    k_in, k_par = jax.random.split(key)

    # Small channel counts; spatial size 128 is what the 6-conv stack implies
    # (five stride-2 convs + final 4x4 valid conv -> 1x1 output).
    batch, nc, ndf, img = 2, 3, 4, 128
    x = jax.random.normal(k_in, (batch, nc, img, img), jnp.float32)

    params = init_discriminator_params(k_par, nc, ndf)

    fwd = jax.jit(lambda inp: discriminator_forward(inp, params))
    out = fwd(x)
    jax.block_until_ready(out)

    assert out.shape == (batch, 1, 1, 1), out.shape
    assert out.dtype == jnp.float32
    print("KERNEL_OK")
</pallas_src>

<mosaic_0001>
module attributes {stable_mosaic.version = 11 : i64} {
  func.func @_gemm_lrelu_kernel(%arg0: i32, %arg1: memref<4096x128xbf16, #tpu.memory_space<vmem>>, %arg2: memref<128x128xbf16, #tpu.memory_space<vmem>>, %arg3: memref<4096x128xbf16, #tpu.memory_space<vmem>>) attributes {dimension_semantics = [#tpu.dimension_semantics<parallel>], iteration_bounds = array<i64: 2>, scalar_prefetch = 0 : i64, scratch_operands = 0 : i64, tpu.core_type = #tpu.core_type<tc>, window_params = [{transform_indices = @transform_0, window_bounds = array<i64: 4096, 128>}, {pipeline_mode = #tpu.pipeline_mode<synchronous>, transform_indices = @transform_1, window_bounds = array<i64: 128, 128>}, {transform_indices = @transform_2, window_bounds = array<i64: 4096, 128>}]} {
    %c0 = arith.constant 0 : index
    %c0_0 = arith.constant 0 : index
    %0 = vector.load %arg1[%c0, %c0_0] : memref<4096x128xbf16, #tpu.memory_space<vmem>>, vector<4096x128xbf16>
    %c0_1 = arith.constant 0 : index
    %c0_2 = arith.constant 0 : index
    %1 = vector.load %arg2[%c0_1, %c0_2] : memref<128x128xbf16, #tpu.memory_space<vmem>>, vector<128x128xbf16>
    %cst = arith.constant dense<0.000000e+00> : vector<4096x128xf32>
    %2 = tpu.matmul %0, %1, %cst {dimension_numbers = #tpu.dot_dimension_numbers<[1], [0], [0], [1], [0, 0, 1, 1], [], []>} : vector<4096x128xbf16>, vector<128x128xbf16>, vector<4096x128xf32> -> vector<4096x128xf32>
    %cst_3 = arith.constant 0.000000e+00 : f32
    %3 = vector.broadcast %cst_3 : f32 to vector<4096x128xf32>
    %4 = arith.cmpf oge, %2, %3 : vector<4096x128xf32>
    %cst_4 = arith.constant 2.000000e-01 : f32
    %5 = vector.broadcast %cst_4 : f32 to vector<4096x128xf32>
    %6 = arith.mulf %5, %2 : vector<4096x128xf32>
    %7 = arith.select %4, %2, %6 : vector<4096x128xi1>, vector<4096x128xf32>
    %8 = arith.truncf %7 : vector<4096x128xf32> to vector<4096x128xbf16>
    %c0_5 = arith.constant 0 : index
    %c0_6 = arith.constant 0 : index
    %9 = vector.load %arg3[%c0_5, %c0_6] : memref<4096x128xbf16, #tpu.memory_space<vmem>>, vector<4096x128xbf16>
    tpu.vector_store %arg3[%c0_5, %c0_6], %8 {strides = array<i32>} : memref<4096x128xbf16, #tpu.memory_space<vmem>>, vector<4096x128xbf16>,
    return
  }
  func.func @transform_0(%arg0: i32) -> (i32, i32) {
    %c0_i32 = arith.constant 0 : i32
    %c0_i32_0 = arith.constant 0 : i32
    return %arg0, %c0_i32 : i32, i32
  }
  func.func @transform_1(%arg0: i32) -> (i32, i32) {
    %c0_i32 = arith.constant 0 : i32
    %c0_i32_0 = arith.constant 0 : i32
    %c0_i32_1 = arith.constant 0 : i32
    return %c0_i32, %c0_i32_0 : i32, i32
  }
  func.func @transform_2(%arg0: i32) -> (i32, i32) {
    %c0_i32 = arith.constant 0 : i32
    %c0_i32_0 = arith.constant 0 : i32
    return %arg0, %c0_i32 : i32, i32
  }
}

module attributes {stable_mosaic.version = 11 : i64} {
  func.func @_gemm_lrelu_kernel(%arg0: i32, %arg1: memref<1024x128xbf16, #tpu.memory_space<vmem>>, %arg2: memref<128x128xbf16, #tpu.memory_space<vmem>>, %arg3: memref<1024x128xbf16, #tpu.memory_space<vmem>>) attributes {dimension_semantics = [#tpu.dimension_semantics<parallel>], iteration_bounds = array<i64: 2>, scalar_prefetch = 0 : i64, scratch_operands = 0 : i64, tpu.core_type = #tpu.core_type<tc>, window_params = [{transform_indices = @transform_0, window_bounds = array<i64: 1024, 128>}, {pipeline_mode = #tpu.pipeline_mode<synchronous>, transform_indices = @transform_1, window_bounds = array<i64: 128, 128>}, {transform_indices = @transform_2, window_bounds = array<i64: 1024, 128>}]} {
    %c0 = arith.constant 0 : index
    %c0_0 = arith.constant 0 : index
    %0 = vector.load %arg1[%c0, %c0_0] : memref<1024x128xbf16, #tpu.memory_space<vmem>>, vector<1024x128xbf16>
    %c0_1 = arith.constant 0 : index
    %c0_2 = arith.constant 0 : index
    %1 = vector.load %arg2[%c0_1, %c0_2] : memref<128x128xbf16, #tpu.memory_space<vmem>>, vector<128x128xbf16>
    %cst = arith.constant dense<0.000000e+00> : vector<1024x128xf32>
    %2 = tpu.matmul %0, %1, %cst {dimension_numbers = #tpu.dot_dimension_numbers<[1], [0], [0], [1], [0, 0, 1, 1], [], []>} : vector<1024x128xbf16>, vector<128x128xbf16>, vector<1024x128xf32> -> vector<1024x128xf32>
    %cst_3 = arith.constant 0.000000e+00 : f32
    %3 = vector.broadcast %cst_3 : f32 to vector<1024x128xf32>
    %4 = arith.cmpf oge, %2, %3 : vector<1024x128xf32>
    %cst_4 = arith.constant 2.000000e-01 : f32
    %5 = vector.broadcast %cst_4 : f32 to vector<1024x128xf32>
    %6 = arith.mulf %5, %2 : vector<1024x128xf32>
    %7 = arith.select %4, %2, %6 : vector<1024x128xi1>, vector<1024x128xf32>
    %8 = arith.truncf %7 : vector<1024x128xf32> to vector<1024x128xbf16>
    %c0_5 = arith.constant 0 : index
    %c0_6 = arith.constant 0 : index
    %9 = vector.load %arg3[%c0_5, %c0_6] : memref<1024x128xbf16, #tpu.memory_space<vmem>>, vector<1024x128xbf16>
    tpu.vector_store %arg3[%c0_5, %c0_6], %8 {strides = array<i32>} : memref<1024x128xbf16, #tpu.memory_space<vmem>>, vector<1024x128xbf16>,
    return
  }
  func.func @transform_0(%arg0: i32) -> (i32, i32) {
    %c0_i32 = arith.constant 0 : i32
    %c0_i32_0 = arith.constant 0 : i32
    return %arg0, %c0_i32 : i32, i32
  }
  func.func @transform_1(%arg0: i32) -> (i32, i32) {
    %c0_i32 = arith.constant 0 : i32
    %c0_i32_0 = arith.constant 0 : i32
    %c0_i32_1 = arith.constant 0 : i32
    return %c0_i32, %c0_i32_0 : i32, i32
  }
  func.func @transform_2(%arg0: i32) -> (i32, i32) {
    %c0_i32 = arith.constant 0 : i32
    %c0_i32_0 = arith.constant 0 : i32
    return %arg0, %c0_i32 : i32, i32
  }
}

module attributes {stable_mosaic.version = 11 : i64} {
  func.func @_gemm_lrelu_kernel(%arg0: i32, %arg1: memref<256x128xbf16, #tpu.memory_space<vmem>>, %arg2: memref<128x128xbf16, #tpu.memory_space<vmem>>, %arg3: memref<256x128xbf16, #tpu.memory_space<vmem>>) attributes {dimension_semantics = [#tpu.dimension_semantics<parallel>], iteration_bounds = array<i64: 2>, scalar_prefetch = 0 : i64, scratch_operands = 0 : i64, tpu.core_type = #tpu.core_type<tc>, window_params = [{transform_indices = @transform_0, window_bounds = array<i64: 256, 128>}, {pipeline_mode = #tpu.pipeline_mode<synchronous>, transform_indices = @transform_1, window_bounds = array<i64: 128, 128>}, {transform_indices = @transform_2, window_bounds = array<i64: 256, 128>}]} {
    %c0 = arith.constant 0 : index
    %c0_0 = arith.constant 0 : index
    %0 = vector.load %arg1[%c0, %c0_0] : memref<256x128xbf16, #tpu.memory_space<vmem>>, vector<256x128xbf16>
    %c0_1 = arith.constant 0 : index
    %c0_2 = arith.constant 0 : index
    %1 = vector.load %arg2[%c0_1, %c0_2] : memref<128x128xbf16, #tpu.memory_space<vmem>>, vector<128x128xbf16>
    %cst = arith.constant dense<0.000000e+00> : vector<256x128xf32>
    %2 = tpu.matmul %0, %1, %cst {dimension_numbers = #tpu.dot_dimension_numbers<[1], [0], [0], [1], [0, 0, 1, 1], [], []>} : vector<256x128xbf16>, vector<128x128xbf16>, vector<256x128xf32> -> vector<256x128xf32>
    %cst_3 = arith.constant 0.000000e+00 : f32
    %3 = vector.broadcast %cst_3 : f32 to vector<256x128xf32>
    %4 = arith.cmpf oge, %2, %3 : vector<256x128xf32>
    %cst_4 = arith.constant 2.000000e-01 : f32
    %5 = vector.broadcast %cst_4 : f32 to vector<256x128xf32>
    %6 = arith.mulf %5, %2 : vector<256x128xf32>
    %7 = arith.select %4, %2, %6 : vector<256x128xi1>, vector<256x128xf32>
    %8 = arith.truncf %7 : vector<256x128xf32> to vector<256x128xbf16>
    %c0_5 = arith.constant 0 : index
    %c0_6 = arith.constant 0 : index
    %9 = vector.load %arg3[%c0_5, %c0_6] : memref<256x128xbf16, #tpu.memory_space<vmem>>, vector<256x128xbf16>
    tpu.vector_store %arg3[%c0_5, %c0_6], %8 {strides = array<i32>} : memref<256x128xbf16, #tpu.memory_space<vmem>>, vector<256x128xbf16>,
    return
  }
  func.func @transform_0(%arg0: i32) -> (i32, i32) {
    %c0_i32 = arith.constant 0 : i32
    %c0_i32_0 = arith.constant 0 : i32
    return %arg0, %c0_i32 : i32, i32
  }
  func.func @transform_1(%arg0: i32) -> (i32, i32) {
    %c0_i32 = arith.constant 0 : i32
    %c0_i32_0 = arith.constant 0 : i32
    %c0_i32_1 = arith.constant 0 : i32
    return %c0_i32, %c0_i32_0 : i32, i32
  }
  func.func @transform_2(%arg0: i32) -> (i32, i32) {
    %c0_i32 = arith.constant 0 : i32
    %c0_i32_0 = arith.constant 0 : i32
    return %arg0, %c0_i32 : i32, i32
  }
}

module attributes {stable_mosaic.version = 11 : i64} {
  func.func @_gemm_lrelu_kernel(%arg0: i32, %arg1: memref<64x256xbf16, #tpu.memory_space<vmem>>, %arg2: memref<256x128xbf16, #tpu.memory_space<vmem>>, %arg3: memref<64x128xbf16, #tpu.memory_space<vmem>>) attributes {dimension_semantics = [#tpu.dimension_semantics<parallel>], iteration_bounds = array<i64: 2>, scalar_prefetch = 0 : i64, scratch_operands = 0 : i64, tpu.core_type = #tpu.core_type<tc>, window_params = [{transform_indices = @transform_0, window_bounds = array<i64: 64, 256>}, {pipeline_mode = #tpu.pipeline_mode<synchronous>, transform_indices = @transform_1, window_bounds = array<i64: 256, 128>}, {transform_indices = @transform_2, window_bounds = array<i64: 64, 128>}]} {
    %c0 = arith.constant 0 : index
    %c0_0 = arith.constant 0 : index
    %0 = vector.load %arg1[%c0, %c0_0] : memref<64x256xbf16, #tpu.memory_space<vmem>>, vector<64x256xbf16>
    %c0_1 = arith.constant 0 : index
    %c0_2 = arith.constant 0 : index
    %1 = vector.load %arg2[%c0_1, %c0_2] : memref<256x128xbf16, #tpu.memory_space<vmem>>, vector<256x128xbf16>
    %cst = arith.constant dense<0.000000e+00> : vector<64x128xf32>
    %2 = tpu.matmul %0, %1, %cst {dimension_numbers = #tpu.dot_dimension_numbers<[1], [0], [0], [1], [0, 0, 1, 1], [], []>} : vector<64x256xbf16>, vector<256x128xbf16>, vector<64x128xf32> -> vector<64x128xf32>
    %cst_3 = arith.constant 0.000000e+00 : f32
    %3 = vector.broadcast %cst_3 : f32 to vector<64x128xf32>
    %4 = arith.cmpf oge, %2, %3 : vector<64x128xf32>
    %cst_4 = arith.constant 2.000000e-01 : f32
    %5 = vector.broadcast %cst_4 : f32 to vector<64x128xf32>
    %6 = arith.mulf %5, %2 : vector<64x128xf32>
    %7 = arith.select %4, %2, %6 : vector<64x128xi1>, vector<64x128xf32>
    %8 = arith.truncf %7 : vector<64x128xf32> to vector<64x128xbf16>
    %c0_5 = arith.constant 0 : index
    %c0_6 = arith.constant 0 : index
    %9 = vector.load %arg3[%c0_5, %c0_6] : memref<64x128xbf16, #tpu.memory_space<vmem>>, vector<64x128xbf16>
    tpu.vector_store %arg3[%c0_5, %c0_6], %8 {strides = array<i32>} : memref<64x128xbf16, #tpu.memory_space<vmem>>, vector<64x128xbf16>,
    return
  }
  func.func @transform_0(%arg0: i32) -> (i32, i32) {
    %c0_i32 = arith.constant 0 : i32
    %c0_i32_0 = arith.constant 0 : i32
    return %arg0, %c0_i32 : i32, i32
  }
  func.func @transform_1(%arg0: i32) -> (i32, i32) {
    %c0_i32 = arith.constant 0 : i32
    %c0_i32_0 = arith.constant 0 : i32
    %c0_i32_1 = arith.constant 0 : i32
    return %c0_i32, %c0_i32_0 : i32, i32
  }
  func.func @transform_2(%arg0: i32) -> (i32, i32) {
    %c0_i32 = arith.constant 0 : i32
    %c0_i32_0 = arith.constant 0 : i32
    return %arg0, %c0_i32 : i32, i32
  }
}

module attributes {stable_mosaic.version = 11 : i64} {
  func.func @_gemm_lrelu_kernel(%arg0: i32, %arg1: memref<16x512xbf16, #tpu.memory_space<vmem>>, %arg2: memref<512x128xbf16, #tpu.memory_space<vmem>>, %arg3: memref<16x128xbf16, #tpu.memory_space<vmem>>) attributes {dimension_semantics = [#tpu.dimension_semantics<parallel>], iteration_bounds = array<i64: 2>, scalar_prefetch = 0 : i64, scratch_operands = 0 : i64, tpu.core_type = #tpu.core_type<tc>, window_params = [{transform_indices = @transform_0, window_bounds = array<i64: 16, 512>}, {pipeline_mode = #tpu.pipeline_mode<synchronous>, transform_indices = @transform_1, window_bounds = array<i64: 512, 128>}, {transform_indices = @transform_2, window_bounds = array<i64: 16, 128>}]} {
    %c0 = arith.constant 0 : index
    %c0_0 = arith.constant 0 : index
    %0 = vector.load %arg1[%c0, %c0_0] : memref<16x512xbf16, #tpu.memory_space<vmem>>, vector<16x512xbf16>
    %c0_1 = arith.constant 0 : index
    %c0_2 = arith.constant 0 : index
    %1 = vector.load %arg2[%c0_1, %c0_2] : memref<512x128xbf16, #tpu.memory_space<vmem>>, vector<512x128xbf16>
    %cst = arith.constant dense<0.000000e+00> : vector<16x128xf32>
    %2 = tpu.matmul %0, %1, %cst {dimension_numbers = #tpu.dot_dimension_numbers<[1], [0], [0], [1], [0, 0, 1, 1], [], []>} : vector<16x512xbf16>, vector<512x128xbf16>, vector<16x128xf32> -> vector<16x128xf32>
    %cst_3 = arith.constant 0.000000e+00 : f32
    %3 = vector.broadcast %cst_3 : f32 to vector<16x128xf32>
    %4 = arith.cmpf oge, %2, %3 : vector<16x128xf32>
    %cst_4 = arith.constant 2.000000e-01 : f32
    %5 = vector.broadcast %cst_4 : f32 to vector<16x128xf32>
    %6 = arith.mulf %5, %2 : vector<16x128xf32>
    %7 = arith.select %4, %2, %6 : vector<16x128xi1>, vector<16x128xf32>
    %8 = arith.truncf %7 : vector<16x128xf32> to vector<16x128xbf16>
    %c0_5 = arith.constant 0 : index
    %c0_6 = arith.constant 0 : index
    %9 = vector.load %arg3[%c0_5, %c0_6] : memref<16x128xbf16, #tpu.memory_space<vmem>>, vector<16x128xbf16>
    tpu.vector_store %arg3[%c0_5, %c0_6], %8 {strides = array<i32>} : memref<16x128xbf16, #tpu.memory_space<vmem>>, vector<16x128xbf16>,
    return
  }
  func.func @transform_0(%arg0: i32) -> (i32, i32) {
    %c0_i32 = arith.constant 0 : i32
    %c0_i32_0 = arith.constant 0 : i32
    return %arg0, %c0_i32 : i32, i32
  }
  func.func @transform_1(%arg0: i32) -> (i32, i32) {
    %c0_i32 = arith.constant 0 : i32
    %c0_i32_0 = arith.constant 0 : i32
    %c0_i32_1 = arith.constant 0 : i32
    return %c0_i32, %c0_i32_0 : i32, i32
  }
  func.func @transform_2(%arg0: i32) -> (i32, i32) {
    %c0_i32 = arith.constant 0 : i32
    %c0_i32_0 = arith.constant 0 : i32
    return %arg0, %c0_i32 : i32, i32
  }
}

module attributes {stable_mosaic.version = 11 : i64} {
  func.func @_gemm_lrelu_kernel(%arg0: i32, %arg1: memref<2x1024xbf16, #tpu.memory_space<vmem>>, %arg2: memref<1024x128xbf16, #tpu.memory_space<vmem>>, %arg3: memref<2x128xf32, #tpu.memory_space<vmem>>) attributes {dimension_semantics = [#tpu.dimension_semantics<parallel>], iteration_bounds = array<i64: 1>, scalar_prefetch = 0 : i64, scratch_operands = 0 : i64, tpu.core_type = #tpu.core_type<tc>, window_params = [{transform_indices = @transform_0, window_bounds = array<i64: 2, 1024>}, {pipeline_mode = #tpu.pipeline_mode<synchronous>, transform_indices = @transform_1, window_bounds = array<i64: 1024, 128>}, {transform_indices = @transform_2, window_bounds = array<i64: 2, 128>}]} {
    %c0 = arith.constant 0 : index
    %c0_0 = arith.constant 0 : index
    %0 = vector.load %arg1[%c0, %c0_0] : memref<2x1024xbf16, #tpu.memory_space<vmem>>, vector<2x1024xbf16>
    %c0_1 = arith.constant 0 : index
    %c0_2 = arith.constant 0 : index
    %1 = vector.load %arg2[%c0_1, %c0_2] : memref<1024x128xbf16, #tpu.memory_space<vmem>>, vector<1024x128xbf16>
    %cst = arith.constant dense<0.000000e+00> : vector<2x128xf32>
    %2 = tpu.matmul %0, %1, %cst {dimension_numbers = #tpu.dot_dimension_numbers<[1], [0], [0], [1], [0, 0, 1, 1], [], []>} : vector<2x1024xbf16>, vector<1024x128xbf16>, vector<2x128xf32> -> vector<2x128xf32>
    %c0_3 = arith.constant 0 : index
    %c0_4 = arith.constant 0 : index
    %3 = vector.load %arg3[%c0_3, %c0_4] : memref<2x128xf32, #tpu.memory_space<vmem>>, vector<2x128xf32>
    tpu.vector_store %arg3[%c0_3, %c0_4], %2 {strides = array<i32>} : memref<2x128xf32, #tpu.memory_space<vmem>>, vector<2x128xf32>,
    return
  }
  func.func @transform_0(%arg0: i32) -> (i32, i32) {
    %c0_i32 = arith.constant 0 : i32
    %c0_i32_0 = arith.constant 0 : i32
    return %arg0, %c0_i32 : i32, i32
  }
  func.func @transform_1(%arg0: i32) -> (i32, i32) {
    %c0_i32 = arith.constant 0 : i32
    %c0_i32_0 = arith.constant 0 : i32
    %c0_i32_1 = arith.constant 0 : i32
    return %c0_i32, %c0_i32_0 : i32, i32
  }
  func.func @transform_2(%arg0: i32) -> (i32, i32) {
    %c0_i32 = arith.constant 0 : i32
    %c0_i32_0 = arith.constant 0 : i32
    return %arg0, %c0_i32 : i32, i32
  }
}

</mosaic_0001>

<llo_original>
// kernel: _lambda_.6
$region0: #{_lambda_.6}
  #allocation0 [shape = 'u32[]', space=smem, size = 0x4, offset = 0x4, fixed_abs, tag = 'smem constant byte address 0x4 - core index']
  #allocation1 [shape = 'u32[144,128]{1,0:T(1,128)}', space=vmem, size = 0x12000, scoped, tag = 'internal scratch']
  %s0 = inlined_call_operand.vmem [shape: bf16[8192,128], index: 0, kind: input, shape index: {}]
  %s1 = inlined_call_operand.vmem [shape: bf16[128,128], index: 1, kind: input, shape index: {}]
  %s2 = inlined_call_operand.vmem [shape: bf16[8192,128], index: 2, kind: output, shape index: {}]
  %s3 = sld [smem:[#allocation0]]
  $region41: #{_lambda_.6} parent=0
    _
  %s5 = ssub.s32 1, %s3
  %s6 = scalar_select 0, %s5, %s3
  loop: start=0, step=1, limit=4
  $region2: #{_lambda_.6} parent=0 // loop_pre_header
    _
  $region3: #{_lambda_.6} parent=0 // loop_header
    %s8 = sphi 0, %s12
    %p9 = scmp.ge.s32.totalorder %s8, 4
    %s18 = sphi 0, %s20
    %s21 = sphi 0, %s18
    %s22 = sphi 0, %s21
    %s38 = sphi 0, %s22
    %s42 = sphi 0, %s42
    %s44 = sphi 0, %s42
    %s45 = sphi 0, %s44
    %s59 = sphi 0, %s45
    %s65 = sphi 0, %s67
    %s68 = sphi 0, %s65
    %s69 = sphi 0, %s68
    %s85 = sphi 0, %s69
  $region4: #{_lambda_.6} parent=0 // loop_header_branch
    %11 = sbr.rel (%p9) target = $region8
  $region5: #{_lambda_.6} parent=0 // loop_body
    %s13 = ssub.s32 %s8, 1
    %s14 = ssub.s32 %s8, 2
    %s15 = sadd.s32 %s8, 1
    %s16 = ssub.s32 %s8, %s15
    %p17 = scmp.eq.s32.totalorder %s16, 0
    %s19 = sadd.s32 %s18, 1
    %s20 = scalar_select %p17, %s18, %s19
    %p23 = pneg %p17
    %p24 = scmp.eq.s32.totalorder %s8, 1
    %p25 = por %p23, %p24
    %p26 = scmp.ne.s32.totalorder %s18, %s21
    %p27 = scmp.eq.s32.totalorder %s8, 0
    %p28 = por %p26, %p27
    %p29 = scmp.ne.s32.totalorder %s18, %s21
    %p30 = scmp.eq.s32.totalorder %s13, 1
    %p31 = por %p29, %p30
    %p32 = scmp.ne.s32.totalorder %s21, %s22
    %p33 = scmp.eq.s32.totalorder %s13, 0
    %p34 = por %p32, %p33
    %p35 = scmp.ne.s32.totalorder %s21, %s22
    %p36 = scmp.eq.s32.totalorder %s14, 1
    %p37 = por %p35, %p36
    %p39 = scmp.ne.s32.totalorder %s22, %s38
    %p40 = scmp.eq.s32.totalorder %s14, 0
    %p41 = por %p39, %p40
    %s43 = sadd.s32 %s42, 1
    %p46 = scmp.eq.s32.totalorder %s8, 1
    %p47 = scmp.ne.s32.totalorder %s42, %s44
    %p48 = scmp.eq.s32.totalorder %s8, 0
    %p49 = por %p47, %p48
    %p50 = scmp.ne.s32.totalorder %s42, %s44
    %p51 = scmp.eq.s32.totalorder %s13, 1
    %p52 = por %p50, %p51
    %p53 = scmp.ne.s32.totalorder %s44, %s45
    %p54 = scmp.eq.s32.totalorder %s13, 0
    %p55 = por %p53, %p54
    %p56 = scmp.ne.s32.totalorder %s44, %s45
    %p57 = scmp.eq.s32.totalorder %s14, 1
    %p58 = por %p56, %p57
    %p60 = scmp.ne.s32.totalorder %s45, %s59
    %p61 = scmp.eq.s32.totalorder %s14, 0
    %p62 = por %p60, %p61
    %s63 = ssub.s32 %s8, %s15
    %p64 = scmp.eq.s32.totalorder %s63, 0
    %s66 = sadd.s32 %s65, 1
    %s67 = scalar_select %p64, %s65, %s66
    %p70 = pneg %p64
    %p71 = scmp.eq.s32.totalorder %s8, 1
    %p72 = por %p70, %p71
    %p73 = scmp.ne.s32.totalorder %s65, %s68
    %p74 = scmp.eq.s32.totalorder %s8, 0
    %p75 = por %p73, %p74
    %p76 = scmp.ne.s32.totalorder %s65, %s68
    %p77 = scmp.eq.s32.totalorder %s13, 1
    %p78 = por %p76, %p77
    %p79 = scmp.ne.s32.totalorder %s68, %s69
    %p80 = scmp.eq.s32.totalorder %s13, 0
    %p81 = por %p79, %p80
    %p82 = scmp.ne.s32.totalorder %s68, %s69
    %p83 = scmp.eq.s32.totalorder %s14, 1
    %p84 = por %p82, %p83
    %p86 = scmp.ne.s32.totalorder %s69, %s85
    %p87 = scmp.eq.s32.totalorder %s14, 0
    %p88 = por %p86, %p87
    %p89 = scmp.le.s32.totalorder 1, %s8
    %p90 = scmp.lt.s32.totalorder %s8, 3
    %p91 = pnand %p89, %p90
    %p92 = pneg %p91
    // Predicated region
    $region9: #{_lambda_.6} parent=5 // pred_check
      _
    $region10: #{_lambda_.6} parent=5 // pred_check_branch
      %94 = sbr.rel (%p91) target = $region12
    $region11: #{_lambda_.6} parent=5 // pred_region
      %s95 = ssub.s32 %s8, 1
      // Predicated region
      $region13: #{_lambda_.6} parent=11 // pred_check
        %p96 = pneg %p55
      $region14: #{_lambda_.6} parent=11 // pred_check_branch
        %98 = sbr.rel (%p96) target = $region16
      $region15: #{_lambda_.6} parent=11 // pred_region
        _
      $region16: #{_lambda_.6} parent=11 // pred_fallthru
        _
    $region12: #{_lambda_.6} parent=5 // pred_fallthru
      _
    %p99 = scmp.lt.s32.totalorder %s8, 2
    // Predicated region
    $region17: #{_lambda_.6} parent=5 // pred_check
      %p100 = pneg %p99
    $region18: #{_lambda_.6} parent=5 // pred_check_branch
      %102 = sbr.rel (%p100) target = $region20
    $region19: #{_lambda_.6} parent=5 // pred_region
      // Predicated region
      $region21: #{_lambda_.6} parent=19 // pred_check
        %p103 = pneg %p28
      $region22: #{_lambda_.6} parent=19 // pred_check_branch
        %105 = sbr.rel (%p103) target = $region24
      $region23: #{_lambda_.6} parent=19 // pred_region
        %s106 = smul.u32 512, %s8
        %p107 = scmp.lt.s32.totalorder %s106, 1023
        %s108 = scalar_select %p107, %s106, 1023
        %s109 = smul.addr %s108, 4
        %s110 = scalar_lea.vmem %s0, %s109
        %s111 = smul.u32 512, %s8
      $region24: #{_lambda_.6} parent=19 // pred_fallthru
        _
    $region20: #{_lambda_.6} parent=5 // pred_fallthru
      _
    %p112 = scmp.le.s32.totalorder 1, %s8
    %p113 = scmp.lt.s32.totalorder %s8, 3
    %p114 = pnand %p112, %p113
    %p115 = pneg %p114
    // Predicated region
    $region25: #{_lambda_.6} parent=5 // pred_check
      _
    $region26: #{_lambda_.6} parent=5 // pred_check_branch
      %117 = sbr.rel (%p114) target = $region28
    $region27: #{_lambda_.6} parent=5 // pred_region
      %s118 = ssub.s32 %s8, 1
      %s119 = smul.u32 512, %s13
      %p120 = scmp.lt.s32.totalorder %s119, 1023
      %s121 = scalar_select %p120, %s119, 1023
      %s122 = smul.addr %s121, 4
      %s123 = scalar_lea.vmem %s0, %s122
      %p124 = pneg %p34
      %p125 = pneg %p31
      %p126 = pneg %p55
      %p127 = pneg %p52
      %p128 = pneg %p81
      %p129 = pneg %p78
      %s130 = smul.u32 512, %s13
      %p131 = scmp.lt.s32.totalorder %s130, 1023
      %s132 = scalar_select %p131, %s130, 1023
      %s133 = smul.addr %s132, 4
      %s134 = scalar_lea.vmem %s2, %s133
      %s135 = smul.u32 512, %s13
      %p136 = scmp.lt.s32.totalorder %s135, 1023
      %s137 = scalar_select %p136, %s135, 1023
      %s138 = smul.addr %s137, 4
      %s139 = scalar_lea.vmem %s0, %s138
      %s140 = smul.u32 512, %s13
      %s141 = smul.u32 512, %s13
      %p142 = scmp.lt.s32.totalorder %s141, 1023
      %s143 = scalar_select %p142, %s141, 1023
      %s144 = smul.addr %s143, 4
      %s145 = scalar_lea.vmem %s2, %s144
      %s146 = smul.u32 512, %s13
      %v148 = vld [vmem:[%s139] sm:$0xf]
      %v149 = vld [vmem:[%s139 + $0x4] sm:$0xf]
      %v150 = vld [vmem:[%s139 + $0x8] sm:$0xf]
      %v151 = vld [vmem:[%s139 + $0xc] sm:$0xf]
      %v152 = vld [vmem:[%s139 + $0x10] sm:$0xf]
      %v153 = vld [vmem:[%s139 + $0x14] sm:$0xf]
      %v154 = vld [vmem:[%s139 + $0x18] sm:$0xf]
      %v155 = vld [vmem:[%s139 + $0x1c] sm:$0xf]
      %v156 = vld [vmem:[%s139 + $0x20] sm:$0xf]
      %v157 = vld [vmem:[%s139 + $0x24] sm:$0xf]
      %v158 = vld [vmem:[%s139 + $0x28] sm:$0xf]
      %v159 = vld [vmem:[%s139 + $0x2c] sm:$0xf]
      %v160 = vld [vmem:[%s139 + $0x30] sm:$0xf]
      %v161 = vld [vmem:[%s139 + $0x34] sm:$0xf]
      %v162 = vld [vmem:[%s139 + $0x38] sm:$0xf]
      %v163 = vld [vmem:[%s139 + $0x3c] sm:$0xf]
      %v164 = vld [vmem:[%s139 + $0x40] sm:$0xf]
      %v165 = vld [vmem:[%s139 + $0x44] sm:$0xf]
      %v166 = vld [vmem:[%s139 + $0x48] sm:$0xf]
      %v167 = vld [vmem:[%s139 + $0x4c] sm:$0xf]
      %v168 = vld [vmem:[%s139 + $0x50] sm:$0xf]
      %v169 = vld [vmem:[%s139 + $0x54] sm:$0xf]
      %v170 = vld [vmem:[%s139 + $0x58] sm:$0xf]
      %v171 = vld [vmem:[%s139 + $0x5c] sm:$0xf]
      %v172 = vld [vmem:[%s139 + $0x60] sm:$0xf]
      %v173 = vld [vmem:[%s139 + $0x64] sm:$0xf]
      %v174 = vld [vmem:[%s139 + $0x68] sm:$0xf]
      %v175 = vld [vmem:[%s139 + $0x6c] sm:$0xf]
      %v176 = vld [vmem:[%s139 + $0x70] sm:$0xf]
      %v177 = vld [vmem:[%s139 + $0x74] sm:$0xf]
      %v178 = vld [vmem:[%s139 + $0x78] sm:$0xf]
      %v179 = vld [vmem:[%s139 + $0x7c] sm:$0xf]
      %v180 = vld [vmem:[%s139 + $0x80] sm:$0xf]
      %v181 = vld [vmem:[%s139 + $0x84] sm:$0xf]
      %v182 = vld [vmem:[%s139 + $0x88] sm:$0xf]
      %v183 = vld [vmem:[%s139 + $0x8c] sm:$0xf]
      %v184 = vld [vmem:[%s139 + $0x90] sm:$0xf]
      %v185 = vld [vmem:[%s139 + $0x94] sm:$0xf]
      %v186 = vld [vmem:[%s139 + $0x98] sm:$0xf]
      %v187 = vld [vmem:[%s139 + $0x9c] sm:$0xf]
      %v188 = vld [vmem:[%s139 + $0xa0] sm:$0xf]
      %v189 = vld [vmem:[%s139 + $0xa4] sm:$0xf]
      %v190 = vld [vmem:[%s139 + $0xa8] sm:$0xf]
      %v191 = vld [vmem:[%s139 + $0xac] sm:$0xf]
      %v192 = vld [vmem:[%s139 + $0xb0] sm:$0xf]
      %v193 = vld [vmem:[%s139 + $0xb4] sm:$0xf]
      %v194 = vld [vmem:[%s139 + $0xb8] sm:$0xf]
      %v195 = vld [vmem:[%s139 + $0xbc] sm:$0xf]
      %v196 = vld [vmem:[%s139 + $0xc0] sm:$0xf]
      %v197 = vld [vmem:[%s139 + $0xc4] sm:$0xf]
      %v198 = vld [vmem:[%s139 + $0xc8] sm:$0xf]
      %v199 = vld [vmem:[%s139 + $0xcc] sm:$0xf]
      %v200 = vld [vmem:[%s139 + $0xd0] sm:$0xf]
      %v201 = vld [vmem:[%s139 + $0xd4] sm:$0xf]
      %v202 = vld [vmem:[%s139 + $0xd8] sm:$0xf]
      %v203 = vld [vmem:[%s139 + $0xdc] sm:$0xf]
      %v204 = vld [vmem:[%s139 + $0xe0] sm:$0xf]
      %v205 = vld [vmem:[%s139 + $0xe4] sm:$0xf]
      %v206 = vld [vmem:[%s139 + $0xe8] sm:$0xf]
      %v207 = vld [vmem:[%s139 + $0xec] sm:$0xf]
      %v208 = vld [vmem:[%s139 + $0xf0] sm:$0xf]
      %v209 = vld [vmem:[%s139 + $0xf4] sm:$0xf]
      %v210 = vld [vmem:[%s139 + $0xf8] sm:$0xf]
      %v211 = vld [vmem:[%s139 + $0xfc] sm:$0xf]
      %v212 = vld [vmem:[%s139 + $0x100] sm:$0xf]
      %v213 = vld [vmem:[%s139 + $0x104] sm:$0xf]
      %v214 = vld [vmem:[%s139 + $0x108] sm:$0xf]
      %v215 = vld [vmem:[%s139 + $0x10c] sm:$0xf]
      %v216 = vld [vmem:[%s139 + $0x110] sm:$0xf]
      %v217 = vld [vmem:[%s139 + $0x114] sm:$0xf]
      %v218 = vld [vmem:[%s139 + $0x118] sm:$0xf]
      %v219 = vld [vmem:[%s139 + $0x11c] sm:$0xf]
      %v220 = vld [vmem:[%s139 + $0x120] sm:$0xf]
      %v221 = vld [vmem:[%s139 + $0x124] sm:$0xf]
      %v222 = vld [vmem:[%s139 + $0x128] sm:$0xf]
      %v223 = vld [vmem:[%s139 + $0x12c] sm:$0xf]
      %v224 = vld [vmem:[%s139 + $0x130] sm:$0xf]
      %v225 = vld [vmem:[%s139 + $0x134] sm:$0xf]
      %v226 = vld [vmem:[%s139 + $0x138] sm:$0xf]
      %v227 = vld [vmem:[%s139 + $0x13c] sm:$0xf]
      %v228 = vld [vmem:[%s139 + $0x140] sm:$0xf]
      %v229 = vld [vmem:[%s139 + $0x144] sm:$0xf]
      %v230 = vld [vmem:[%s139 + $0x148] sm:$0xf]
      %v231 = vld [vmem:[%s139 + $0x14c] sm:$0xf]
      %v232 = vld [vmem:[%s139 + $0x150] sm:$0xf]
      %v233 = vld [vmem:[%s139 + $0x154] sm:$0xf]
      %v234 = vld [vmem:[%s139 + $0x158] sm:$0xf]
      %v235 = vld [vmem:[%s139 + $0x15c] sm:$0xf]
      %v236 = vld [vmem:[%s139 + $0x160] sm:$0xf]
      %v237 = vld [vmem:[%s139 + $0x164] sm:$0xf]
      %v238 = vld [vmem:[%s139 + $0x168] sm:$0xf]
      %v239 = vld [vmem:[%s139 + $0x16c] sm:$0xf]
      %v240 = vld [vmem:[%s139 + $0x170] sm:$0xf]
      %v241 = vld [vmem:[%s139 + $0x174] sm:$0xf]
      %v242 = vld [vmem:[%s139 + $0x178] sm:$0xf]
      %v243 = vld [vmem:[%s139 + $0x17c] sm:$0xf]
      %v244 = vld [vmem:[%s139 + $0x180] sm:$0xf]
      %v245 = vld [vmem:[%s139 + $0x184] sm:$0xf]
      %v246 = vld [vmem:[%s139 + $0x188] sm:$0xf]
      %v247 = vld [vmem:[%s139 + $0x18c] sm:$0xf]
      %v248 = vld [vmem:[%s139 + $0x190] sm:$0xf]
      %v249 = vld [vmem:[%s139 + $0x194] sm:$0xf]
      %v250 = vld [vmem:[%s139 + $0x198] sm:$0xf]
      %v251 = vld [vmem:[%s139 + $0x19c] sm:$0xf]
      %v252 = vld [vmem:[%s139 + $0x1a0] sm:$0xf]
      %v253 = vld [vmem:[%s139 + $0x1a4] sm:$0xf]
      %v254 = vld [vmem:[%s139 + $0x1a8] sm:$0xf]
      %v255 = vld [vmem:[%s139 + $0x1ac] sm:$0xf]
      %v256 = vld [vmem:[%s139 + $0x1b0] sm:$0xf]
      %v257 = vld [vmem:[%s139 + $0x1b4] sm:$0xf]
      %v258 = vld [vmem:[%s139 + $0x1b8] sm:$0xf]
      %v259 = vld [vmem:[%s139 + $0x1bc] sm:$0xf]
      %v260 = vld [vmem:[%s139 + $0x1c0] sm:$0xf]
      %v261 = vld [vmem:[%s139 + $0x1c4] sm:$0xf]
      %v262 = vld [vmem:[%s139 + $0x1c8] sm:$0xf]
      %v263 = vld [vmem:[%s139 + $0x1cc] sm:$0xf]
      %v264 = vld [vmem:[%s139 + $0x1d0] sm:$0xf]
      %v265 = vld [vmem:[%s139 + $0x1d4] sm:$0xf]
      %v266 = vld [vmem:[%s139 + $0x1d8] sm:$0xf]
      %v267 = vld [vmem:[%s139 + $0x1dc] sm:$0xf]
      %v268 = vld [vmem:[%s139 + $0x1e0] sm:$0xf]
      %v269 = vld [vmem:[%s139 + $0x1e4] sm:$0xf]
      %v270 = vld [vmem:[%s139 + $0x1e8] sm:$0xf]
      %v271 = vld [vmem:[%s139 + $0x1ec] sm:$0xf]
      %v272 = vld [vmem:[%s139 + $0x1f0] sm:$0xf]
      %v273 = vld [vmem:[%s139 + $0x1f4] sm:$0xf]
      %v274 = vld [vmem:[%s139 + $0x1f8] sm:$0xf]
      %v275 = vld [vmem:[%s139 + $0x1fc] sm:$0xf]
      %v276 = vld [vmem:[%s139 + $0x200] sm:$0xf]
      %v277 = vld [vmem:[%s139 + $0x204] sm:$0xf]
      %v278 = vld [vmem:[%s139 + $0x208] sm:$0xf]
      %v279 = vld [vmem:[%s139 + $0x20c] sm:$0xf]
      %v280 = vld [vmem:[%s139 + $0x210] sm:$0xf]
      %v281 = vld [vmem:[%s139 + $0x214] sm:$0xf]
      %v282 = vld [vmem:[%s139 + $0x218] sm:$0xf]
      %v283 = vld [vmem:[%s139 + $0x21c] sm:$0xf]
      %v284 = vld [vmem:[%s139 + $0x220] sm:$0xf]
      %v285 = vld [vmem:[%s139 + $0x224] sm:$0xf]
      %v286 = vld [vmem:[%s139 + $0x228] sm:$0xf]
      %v287 = vld [vmem:[%s139 + $0x22c] sm:$0xf]
      %v288 = vld [vmem:[%s139 + $0x230] sm:$0xf]
      %v289 = vld [vmem:[%s139 + $0x234] sm:$0xf]
      %v290 = vld [vmem:[%s139 + $0x238] sm:$0xf]
      %v291 = vld [vmem:[%s139 + $0x23c] sm:$0xf]
      %v292 = vld [vmem:[%s139 + $0x240] sm:$0xf]
      %v293 = vld [vmem:[%s139 + $0x244] sm:$0xf]
      %v294 = vld [vmem:[%s139 + $0x248] sm:$0xf]
      %v295 = vld [vmem:[%s139 + $0x24c] sm:$0xf]
      %v296 = vld [vmem:[%s139 + $0x250] sm:$0xf]
      %v297 = vld [vmem:[%s139 + $0x254] sm:$0xf]
      %v298 = vld [vmem:[%s139 + $0x258] sm:$0xf]
      %v299 = vld [vmem:[%s139 + $0x25c] sm:$0xf]
      %v300 = vld [vmem:[%s139 + $0x260] sm:$0xf]
      %v301 = vld [vmem:[%s139 + $0x264] sm:$0xf]
      %v302 = vld [vmem:[%s139 + $0x268] sm:$0xf]
      %v303 = vld [vmem:[%s139 + $0x26c] sm:$0xf]
      %v304 = vld [vmem:[%s139 + $0x270] sm:$0xf]
      %v305 = vld [vmem:[%s139 + $0x274] sm:$0xf]
      %v306 = vld [vmem:[%s139 + $0x278] sm:$0xf]
      %v307 = vld [vmem:[%s139 + $0x27c] sm:$0xf]
      %v308 = vld [vmem:[%s139 + $0x280] sm:$0xf]
      %v309 = vld [vmem:[%s139 + $0x284] sm:$0xf]
      %v310 = vld [vmem:[%s139 + $0x288] sm:$0xf]
      %v311 = vld [vmem:[%s139 + $0x28c] sm:$0xf]
      %v312 = vld [vmem:[%s139 + $0x290] sm:$0xf]
      %v313 = vld [vmem:[%s139 + $0x294] sm:$0xf]
      %v314 = vld [vmem:[%s139 + $0x298] sm:$0xf]
      %v315 = vld [vmem:[%s139 + $0x29c] sm:$0xf]
      %v316 = vld [vmem:[%s139 + $0x2a0] sm:$0xf]
      %v317 = vld [vmem:[%s139 + $0x2a4] sm:$0xf]
      %v318 = vld [vmem:[%s139 + $0x2a8] sm:$0xf]
      %v319 = vld [vmem:[%s139 + $0x2ac] sm:$0xf]
      %v320 = vld [vmem:[%s139 + $0x2b0] sm:$0xf]
      %v321 = vld [vmem:[%s139 + $0x2b4] sm:$0xf]
      %v322 = vld [vmem:[%s139 + $0x2b8] sm:$0xf]
      %v323 = vld [vmem:[%s139 + $0x2bc] sm:$0xf]
      %v324 = vld [vmem:[%s139 + $0x2c0] sm:$0xf]
      %v325 = vld [vmem:[%s139 + $0x2c4] sm:$0xf]
      %v326 = vld [vmem:[%s139 + $0x2c8] sm:$0xf]
      %v327 = vld [vmem:[%s139 + $0x2cc] sm:$0xf]
      %v328 = vld [vmem:[%s139 + $0x2d0] sm:$0xf]
      %v329 = vld [vmem:[%s139 + $0x2d4] sm:$0xf]
      %v330 = vld [vmem:[%s139 + $0x2d8] sm:$0xf]
      %v331 = vld [vmem:[%s139 + $0x2dc] sm:$0xf]
      %v332 = vld [vmem:[%s139 + $0x2e0] sm:$0xf]
      %v333 = vld [vmem:[%s139 + $0x2e4] sm:$0xf]
      %v334 = vld [vmem:[%s139 + $0x2e8] sm:$0xf]
      %v335 = vld [vmem:[%s139 + $0x2ec] sm:$0xf]
      %v336 = vld [vmem:[%s139 + $0x2f0] sm:$0xf]
      %v337 = vld [vmem:[%s139 + $0x2f4] sm:$0xf]
      %v338 = vld [vmem:[%s139 + $0x2f8] sm:$0xf]
      %v339 = vld [vmem:[%s139 + $0x2fc] sm:$0xf]
      %v340 = vld [vmem:[%s139 + $0x300] sm:$0xf]
      %v341 = vld [vmem:[%s139 + $0x304] sm:$0xf]
      %v342 = vld [vmem:[%s139 + $0x308] sm:$0xf]
      %v343 = vld [vmem:[%s139 + $0x30c] sm:$0xf]
      %v344 = vld [vmem:[%s139 + $0x310] sm:$0xf]
      %v345 = vld [vmem:[%s139 + $0x314] sm:$0xf]
      %v346 = vld [vmem:[%s139 + $0x318] sm:$0xf]
      %v347 = vld [vmem:[%s139 + $0x31c] sm:$0xf]
      %v348 = vld [vmem:[%s139 + $0x320] sm:$0xf]
      %v349 = vld [vmem:[%s139 + $0x324] sm:$0xf]
      %v350 = vld [vmem:[%s139 + $0x328] sm:$0xf]
      %v351 = vld [vmem:[%s139 + $0x32c] sm:$0xf]
      %v352 = vld [vmem:[%s139 + $0x330] sm:$0xf]
      %v353 = vld [vmem:[%s139 + $0x334] sm:$0xf]
      %v354 = vld [vmem:[%s139 + $0x338] sm:$0xf]
      %v355 = vld [vmem:[%s139 + $0x33c] sm:$0xf]
      %v356 = vld [vmem:[%s139 + $0x340] sm:$0xf]
      %v357 = vld [vmem:[%s139 + $0x344] sm:$0xf]
      %v358 = vld [vmem:[%s139 + $0x348] sm:$0xf]
      %v359 = vld [vmem:[%s139 + $0x34c] sm:$0xf]
      %v360 = vld [vmem:[%s139 + $0x350] sm:$0xf]
      %v361 = vld [vmem:[%s139 + $0x354] sm:$0xf]
      %v362 = vld [vmem:[%s139 + $0x358] sm:$0xf]
      %v363 = vld [vmem:[%s139 + $0x35c] sm:$0xf]
      %v364 = vld [vmem:[%s139 + $0x360] sm:$0xf]
      %v365 = vld [vmem:[%s139 + $0x364] sm:$0xf]
      %v366 = vld [vmem:[%s139 + $0x368] sm:$0xf]
      %v367 = vld [vmem:[%s139 + $0x36c] sm:$0xf]
      %v368 = vld [vmem:[%s139 + $0x370] sm:$0xf]
      %v369 = vld [vmem:[%s139 + $0x374] sm:$0xf]
      %v370 = vld [vmem:[%s139 + $0x378] sm:$0xf]
      %v371 = vld [vmem:[%s139 + $0x37c] sm:$0xf]
      %v372 = vld [vmem:[%s139 + $0x380] sm:$0xf]
      %v373 = vld [vmem:[%s139 + $0x384] sm:$0xf]
      %v374 = vld [vmem:[%s139 + $0x388] sm:$0xf]
      %v375 = vld [vmem:[%s139 + $0x38c] sm:$0xf]
      %v376 = vld [vmem:[%s139 + $0x390] sm:$0xf]
      %v377 = vld [vmem:[%s139 + $0x394] sm:$0xf]
      %v378 = vld [vmem:[%s139 + $0x398] sm:$0xf]
      %v379 = vld [vmem:[%s139 + $0x39c] sm:$0xf]
      %v380 = vld [vmem:[%s139 + $0x3a0] sm:$0xf]
      %v381 = vld [vmem:[%s139 + $0x3a4] sm:$0xf]
      %v382 = vld [vmem:[%s139 + $0x3a8] sm:$0xf]
      %v383 = vld [vmem:[%s139 + $0x3ac] sm:$0xf]
      %v384 = vld [vmem:[%s139 + $0x3b0] sm:$0xf]
      %v385 = vld [vmem:[%s139 + $0x3b4] sm:$0xf]
      %v386 = vld [vmem:[%s139 + $0x3b8] sm:$0xf]
      %v387 = vld [vmem:[%s139 + $0x3bc] sm:$0xf]
      %v388 = vld [vmem:[%s139 + $0x3c0] sm:$0xf]
      %v389 = vld [vmem:[%s139 + $0x3c4] sm:$0xf]
      %v390 = vld [vmem:[%s139 + $0x3c8] sm:$0xf]
      %v391 = vld [vmem:[%s139 + $0x3cc] sm:$0xf]
      %v392 = vld [vmem:[%s139 + $0x3d0] sm:$0xf]
      %v393 = vld [vmem:[%s139 + $0x3d4] sm:$0xf]
      %v394 = vld [vmem:[%s139 + $0x3d8] sm:$0xf]
      %v395 = vld [vmem:[%s139 + $0x3dc] sm:$0xf]
      %v396 = vld [vmem:[%s139 + $0x3e0] sm:$0xf]
      %v397 = vld [vmem:[%s139 + $0x3e4] sm:$0xf]
      %v398 = vld [vmem:[%s139 + $0x3e8] sm:$0xf]
      %v399 = vld [vmem:[%s139 + $0x3ec] sm:$0xf]
      %v400 = vld [vmem:[%s139 + $0x3f0] sm:$0xf]
      %v401 = vld [vmem:[%s139 + $0x3f4] sm:$0xf]
      %v402 = vld [vmem:[%s139 + $0x3f8] sm:$0xf]
      %v403 = vld [vmem:[%s139 + $0x3fc] sm:$0xf]
      %v404 = vld [vmem:[%s139 + $0x400] sm:$0xf]
      %v405 = vld [vmem:[%s139 + $0x404] sm:$0xf]
      %v406 = vld [vmem:[%s139 + $0x408] sm:$0xf]
      %v407 = vld [vmem:[%s139 + $0x40c] sm:$0xf]
      %v408 = vld [vmem:[%s139 + $0x410] sm:$0xf]
      %v409 = vld [vmem:[%s139 + $0x414] sm:$0xf]
      %v410 = vld [vmem:[%s139 + $0x418] sm:$0xf]
      %v411 = vld [vmem:[%s139 + $0x41c] sm:$0xf]
      %v412 = vld [vmem:[%s139 + $0x420] sm:$0xf]
      %v413 = vld [vmem:[%s139 + $0x424] sm:$0xf]
      %v414 = vld [vmem:[%s139 + $0x428] sm:$0xf]
      %v415 = vld [vmem:[%s139 + $0x42c] sm:$0xf]
      %v416 = vld [vmem:[%s139 + $0x430] sm:$0xf]
      %v417 = vld [vmem:[%s139 + $0x434] sm:$0xf]
      %v418 = vld [vmem:[%s139 + $0x438] sm:$0xf]
      %v419 = vld [vmem:[%s139 + $0x43c] sm:$0xf]
      %v420 = vld [vmem:[%s139 + $0x440] sm:$0xf]
      %v421 = vld [vmem:[%s139 + $0x444] sm:$0xf]
      %v422 = vld [vmem:[%s139 + $0x448] sm:$0xf]
      %v423 = vld [vmem:[%s139 + $0x44c] sm:$0xf]
      %v424 = vld [vmem:[%s139 + $0x450] sm:$0xf]
      %v425 = vld [vmem:[%s139 + $0x454] sm:$0xf]
      %v426 = vld [vmem:[%s139 + $0x458] sm:$0xf]
      %v427 = vld [vmem:[%s139 + $0x45c] sm:$0xf]
      %v428 = vld [vmem:[%s139 + $0x460] sm:$0xf]
      %v429 = vld [vmem:[%s139 + $0x464] sm:$0xf]
      %v430 = vld [vmem:[%s139 + $0x468] sm:$0xf]
      %v431 = vld [vmem:[%s139 + $0x46c] sm:$0xf]
      %v432 = vld [vmem:[%s139 + $0x470] sm:$0xf]
      %v433 = vld [vmem:[%s139 + $0x474] sm:$0xf]
      %v434 = vld [vmem:[%s139 + $0x478] sm:$0xf]
      %v435 = vld [vmem:[%s139 + $0x47c] sm:$0xf]
      %v436 = vld [vmem:[%s139 + $0x480] sm:$0xf]
      %v437 = vld [vmem:[%s139 + $0x484] sm:$0xf]
      %v438 = vld [vmem:[%s139 + $0x488] sm:$0xf]
      %v439 = vld [vmem:[%s139 + $0x48c] sm:$0xf]
      %v440 = vld [vmem:[%s139 + $0x490] sm:$0xf]
      %v441 = vld [vmem:[%s139 + $0x494] sm:$0xf]
      %v442 = vld [vmem:[%s139 + $0x498] sm:$0xf]
      %v443 = vld [vmem:[%s139 + $0x49c] sm:$0xf]
      %v444 = vld [vmem:[%s139 + $0x4a0] sm:$0xf]
      %v445 = vld [vmem:[%s139 + $0x4a4] sm:$0xf]
      %v446 = vld [vmem:[%s139 + $0x4a8] sm:$0xf]
      %v447 = vld [vmem:[%s139 + $0x4ac] sm:$0xf]
      %v448 = vld [vmem:[%s139 + $0x4b0] sm:$0xf]
      %v449 = vld [vmem:[%s139 + $0x4b4] sm:$0xf]
      %v450 = vld [vmem:[%s139 + $0x4b8] sm:$0xf]
      %v451 = vld [vmem:[%s139 + $0x4bc] sm:$0xf]
      %v452 = vld [vmem:[%s139 + $0x4c0] sm:$0xf]
      %v453 = vld [vmem:[%s139 + $0x4c4] sm:$0xf]
      %v454 = vld [vmem:[%s139 + $0x4c8] sm:$0xf]
      %v455 = vld [vmem:[%s139 + $0x4cc] sm:$0xf]
      %v456 = vld [vmem:[%s139 + $0x4d0] sm:$0xf]
      %v457 = vld [vmem:[%s139 + $0x4d4] sm:$0xf]
      %v458 = vld [vmem:[%s139 + $0x4d8] sm:$0xf]
      %v459 = vld [vmem:[%s139 + $0x4dc] sm:$0xf]
      %v460 = vld [vmem:[%s139 + $0x4e0] sm:$0xf]
      %v461 = vld [vmem:[%s139 + $0x4e4] sm:$0xf]
      %v462 = vld [vmem:[%s139 + $0x4e8] sm:$0xf]
      %v463 = vld [vmem:[%s139 + $0x4ec] sm:$0xf]
      %v464 = vld [vmem:[%s139 + $0x4f0] sm:$0xf]
      %v465 = vld [vmem:[%s139 + $0x4f4] sm:$0xf]
      %v466 = vld [vmem:[%s139 + $0x4f8] sm:$0xf]
      %v467 = vld [vmem:[%s139 + $0x4fc] sm:$0xf]
      %v468 = vld [vmem:[%s139 + $0x500] sm:$0xf]
      %v469 = vld [vmem:[%s139 + $0x504] sm:$0xf]
      %v470 = vld [vmem:[%s139 + $0x508] sm:$0xf]
      %v471 = vld [vmem:[%s139 + $0x50c] sm:$0xf]
      %v472 = vld [vmem:[%s139 + $0x510] sm:$0xf]
      %v473 = vld [vmem:[%s139 + $0x514] sm:$0xf]
      %v474 = vld [vmem:[%s139 + $0x518] sm:$0xf]
      %v475 = vld [vmem:[%s139 + $0x51c] sm:$0xf]
      %v476 = vld [vmem:[%s139 + $0x520] sm:$0xf]
      %v477 = vld [vmem:[%s139 + $0x524] sm:$0xf]
      %v478 = vld [vmem:[%s139 + $0x528] sm:$0xf]
      %v479 = vld [vmem:[%s139 + $0x52c] sm:$0xf]
      %v480 = vld [vmem:[%s139 + $0x530] sm:$0xf]
      %v481 = vld [vmem:[%s139 + $0x534] sm:$0xf]
      %v482 = vld [vmem:[%s139 + $0x538] sm:$0xf]
      %v483 = vld [vmem:[%s139 + $0x53c] sm:$0xf]
      %v484 = vld [vmem:[%s139 + $0x540] sm:$0xf]
      %v485 = vld [vmem:[%s139 + $0x544] sm:$0xf]
      %v486 = vld [vmem:[%s139 + $0x548] sm:$0xf]
      %v487 = vld [vmem:[%s139 + $0x54c] sm:$0xf]
      %v488 = vld [vmem:[%s139 + $0x550] sm:$0xf]
      %v489 = vld [vmem:[%s139 + $0x554] sm:$0xf]
      %v490 = vld [vmem:[%s139 + $0x558] sm:$0xf]
      %v491 = vld [vmem:[%s139 + $0x55c] sm:$0xf]
      %v492 = vld [vmem:[%s139 + $0x560] sm:$0xf]
      %v493 = vld [vmem:[%s139 + $0x564] sm:$0xf]
      %v494 = vld [vmem:[%s139 + $0x568] sm:$0xf]
      %v495 = vld [vmem:[%s139 + $0x56c] sm:$0xf]
      %v496 = vld [vmem:[%s139 + $0x570] sm:$0xf]
      %v497 = vld [vmem:[%s139 + $0x574] sm:$0xf]
      %v498 = vld [vmem:[%s139 + $0x578] sm:$0xf]
      %v499 = vld [vmem:[%s139 + $0x57c] sm:$0xf]
      %v500 = vld [vmem:[%s139 + $0x580] sm:$0xf]
      %v501 = vld [vmem:[%s139 + $0x584] sm:$0xf]
      %v502 = vld [vmem:[%s139 + $0x588] sm:$0xf]
      %v503 = vld [vmem:[%s139 + $0x58c] sm:$0xf]
      %v504 = vld [vmem:[%s139 + $0x590] sm:$0xf]
      %v505 = vld [vmem:[%s139 + $0x594] sm:$0xf]
      %v506 = vld [vmem:[%s139 + $0x598] sm:$0xf]
      %v507 = vld [vmem:[%s139 + $0x59c] sm:$0xf]
      %v508 = vld [vmem:[%s139 + $0x5a0] sm:$0xf]
      %v509 = vld [vmem:[%s139 + $0x5a4] sm:$0xf]
      %v510 = vld [vmem:[%s139 + $0x5a8] sm:$0xf]
      %v511 = vld [vmem:[%s139 + $0x5ac] sm:$0xf]
      %v512 = vld [vmem:[%s139 + $0x5b0] sm:$0xf]
      %v513 = vld [vmem:[%s139 + $0x5b4] sm:$0xf]
      %v514 = vld [vmem:[%s139 + $0x5b8] sm:$0xf]
      %v515 = vld [vmem:[%s139 + $0x5bc] sm:$0xf]
      %v516 = vld [vmem:[%s139 + $0x5c0] sm:$0xf]
      %v517 = vld [vmem:[%s139 + $0x5c4] sm:$0xf]
      %v518 = vld [vmem:[%s139 + $0x5c8] sm:$0xf]
      %v519 = vld [vmem:[%s139 + $0x5cc] sm:$0xf]
      %v520 = vld [vmem:[%s139 + $0x5d0] sm:$0xf]
      %v521 = vld [vmem:[%s139 + $0x5d4] sm:$0xf]
      %v522 = vld [vmem:[%s139 + $0x5d8] sm:$0xf]
      %v523 = vld [vmem:[%s139 + $0x5dc] sm:$0xf]
      %v524 = vld [vmem:[%s139 + $0x5e0] sm:$0xf]
      %v525 = vld [vmem:[%s139 + $0x5e4] sm:$0xf]
      %v526 = vld [vmem:[%s139 + $0x5e8] sm:$0xf]
      %v527 = vld [vmem:[%s139 + $0x5ec] sm:$0xf]
      %v528 = vld [vmem:[%s139 + $0x5f0] sm:$0xf]
      %v529 = vld [vmem:[%s139 + $0x5f4] sm:$0xf]
      %v530 = vld [vmem:[%s139 + $0x5f8] sm:$0xf]
      %v531 = vld [vmem:[%s139 + $0x5fc] sm:$0xf]
      %v532 = vld [vmem:[%s139 + $0x600] sm:$0xf]
      %v533 = vld [vmem:[%s139 + $0x604] sm:$0xf]
      %v534 = vld [vmem:[%s139 + $0x608] sm:$0xf]
      %v535 = vld [vmem:[%s139 + $0x60c] sm:$0xf]
      %v536 = vld [vmem:[%s139 + $0x610] sm:$0xf]
      %v537 = vld [vmem:[%s139 + $0x614] sm:$0xf]
      %v538 = vld [vmem:[%s139 + $0x618] sm:$0xf]
      %v539 = vld [vmem:[%s139 + $0x61c] sm:$0xf]
      %v540 = vld [vmem:[%s139 + $0x620] sm:$0xf]
      %v541 = vld [vmem:[%s139 + $0x624] sm:$0xf]
      %v542 = vld [vmem:[%s139 + $0x628] sm:$0xf]
      %v543 = vld [vmem:[%s139 + $0x62c] sm:$0xf]
      %v544 = vld [vmem:[%s139 + $0x630] sm:$0xf]
      %v545 = vld [vmem:[%s139 + $0x634] sm:$0xf]
      %v546 = vld [vmem:[%s139 + $0x638] sm:$0xf]
      %v547 = vld [vmem:[%s139 + $0x63c] sm:$0xf]
      %v548 = vld [vmem:[%s139 + $0x640] sm:$0xf]
      %v549 = vld [vmem:[%s139 + $0x644] sm:$0xf]
      %v550 = vld [vmem:[%s139 + $0x648] sm:$0xf]
      %v551 = vld [vmem:[%s139 + $0x64c] sm:$0xf]
      %v552 = vld [vmem:[%s139 + $0x650] sm:$0xf]
      %v553 = vld [vmem:[%s139 + $0x654] sm:$0xf]
      %v554 = vld [vmem:[%s139 + $0x658] sm:$0xf]
      %v555 = vld [vmem:[%s139 + $0x65c] sm:$0xf]
      %v556 = vld [vmem:[%s139 + $0x660] sm:$0xf]
      %v557 = vld [vmem:[%s139 + $0x664] sm:$0xf]
      %v558 = vld [vmem:[%s139 + $0x668] sm:$0xf]
      %v559 = vld [vmem:[%s139 + $0x66c] sm:$0xf]
      %v560 = vld [vmem:[%s139 + $0x670] sm:$0xf]
      %v561 = vld [vmem:[%s139 + $0x674] sm:$0xf]
      %v562 = vld [vmem:[%s139 + $0x678] sm:$0xf]
      %v563 = vld [vmem:[%s139 + $0x67c] sm:$0xf]
      %v564 = vld [vmem:[%s139 + $0x680] sm:$0xf]
      %v565 = vld [vmem:[%s139 + $0x684] sm:$0xf]
      %v566 = vld [vmem:[%s139 + $0x688] sm:$0xf]
      %v567 = vld [vmem:[%s139 + $0x68c] sm:$0xf]
      %v568 = vld [vmem:[%s139 + $0x690] sm:$0xf]
      %v569 = vld [vmem:[%s139 + $0x694] sm:$0xf]
      %v570 = vld [vmem:[%s139 + $0x698] sm:$0xf]
      %v571 = vld [vmem:[%s139 + $0x69c] sm:$0xf]
      %v572 = vld [vmem:[%s139 + $0x6a0] sm:$0xf]
      %v573 = vld [vmem:[%s139 + $0x6a4] sm:$0xf]
      %v574 = vld [vmem:[%s139 + $0x6a8] sm:$0xf]
      %v575 = vld [vmem:[%s139 + $0x6ac] sm:$0xf]
      %v576 = vld [vmem:[%s139 + $0x6b0] sm:$0xf]
      %v577 = vld [vmem:[%s139 + $0x6b4] sm:$0xf]
      %v578 = vld [vmem:[%s139 + $0x6b8] sm:$0xf]
      %v579 = vld [vmem:[%s139 + $0x6bc] sm:$0xf]
      %v580 = vld [vmem:[%s139 + $0x6c0] sm:$0xf]
      %v581 = vld [vmem:[%s139 + $0x6c4] sm:$0xf]
      %v582 = vld [vmem:[%s139 + $0x6c8] sm:$0xf]
      %v583 = vld [vmem:[%s139 + $0x6cc] sm:$0xf]
      %v584 = vld [vmem:[%s139 + $0x6d0] sm:$0xf]
      %v585 = vld [vmem:[%s139 + $0x6d4] sm:$0xf]
      %v586 = vld [vmem:[%s139 + $0x6d8] sm:$0xf]
      %v587 = vld [vmem:[%s139 + $0x6dc] sm:$0xf]
      %v588 = vld [vmem:[%s139 + $0x6e0] sm:$0xf]
      %v589 = vld [vmem:[%s139 + $0x6e4] sm:$0xf]
      %v590 = vld [vmem:[%s139 + $0x6e8] sm:$0xf]
      %v591 = vld [vmem:[%s139 + $0x6ec] sm:$0xf]
      %v592 = vld [vmem:[%s139 + $0x6f0] sm:$0xf]
      %v593 = vld [vmem:[%s139 + $0x6f4] sm:$0xf]
      %v594 = vld [vmem:[%s139 + $0x6f8] sm:$0xf]
      %v595 = vld [vmem:[%s139 + $0x6fc] sm:$0xf]
      %v596 = vld [vmem:[%s139 + $0x700] sm:$0xf]
      %v597 = vld [vmem:[%s139 + $0x704] sm:$0xf]
      %v598 = vld [vmem:[%s139 + $0x708] sm:$0xf]
      %v599 = vld [vmem:[%s139 + $0x70c] sm:$0xf]
      %v600 = vld [vmem:[%s139 + $0x710] sm:$0xf]
      %v601 = vld [vmem:[%s139 + $0x714] sm:$0xf]
      %v602 = vld [vmem:[%s139 + $0x718] sm:$0xf]
      %v603 = vld [vmem:[%s139 + $0x71c] sm:$0xf]
      %v604 = vld [vmem:[%s139 + $0x720] sm:$0xf]
      %v605 = vld [vmem:[%s139 + $0x724] sm:$0xf]
      %v606 = vld [vmem:[%s139 + $0x728] sm:$0xf]
      %v607 = vld [vmem:[%s139 + $0x72c] sm:$0xf]
      %v608 = vld [vmem:[%s139 + $0x730] sm:$0xf]
      %v609 = vld [vmem:[%s139 + $0x734] sm:$0xf]
      %v610 = vld [vmem:[%s139 + $0x738] sm:$0xf]
      %v611 = vld [vmem:[%s139 + $0x73c] sm:$0xf]
      %v612 = vld [vmem:[%s139 + $0x740] sm:$0xf]
      %v613 = vld [vmem:[%s139 + $0x744] sm:$0xf]
      %v614 = vld [vmem:[%s139 + $0x748] sm:$0xf]
      %v615 = vld [vmem:[%s139 + $0x74c] sm:$0xf]
      %v616 = vld [vmem:[%s139 + $0x750] sm:$0xf]
      %v617 = vld [vmem:[%s139 + $0x754] sm:$0xf]
      %v618 = vld [vmem:[%s139 + $0x758] sm:$0xf]
      %v619 = vld [vmem:[%s139 + $0x75c] sm:$0xf]
      %v620 = vld [vmem:[%s139 + $0x760] sm:$0xf]
      %v621 = vld [vmem:[%s139 + $0x764] sm:$0xf]
      %v622 = vld [vmem:[%s139 + $0x768] sm:$0xf]
      %v623 = vld [vmem:[%s139 + $0x76c] sm:$0xf]
      %v624 = vld [vmem:[%s139 + $0x770] sm:$0xf]
      %v625 = vld [vmem:[%s139 + $0x774] sm:$0xf]
      %v626 = vld [vmem:[%s139 + $0x778] sm:$0xf]
      %v627 = vld [vmem:[%s139 + $0x77c] sm:$0xf]
      %v628 = vld [vmem:[%s139 + $0x780] sm:$0xf]
      %v629 = vld [vmem:[%s139 + $0x784] sm:$0xf]
      %v630 = vld [vmem:[%s139 + $0x788] sm:$0xf]
      %v631 = vld [vmem:[%s139 + $0x78c] sm:$0xf]
      %v632 = vld [vmem:[%s139 + $0x790] sm:$0xf]
      %v633 = vld [vmem:[%s139 + $0x794] sm:$0xf]
      %v634 = vld [vmem:[%s139 + $0x798] sm:$0xf]
      %v635 = vld [vmem:[%s139 + $0x79c] sm:$0xf]
      %v636 = vld [vmem:[%s139 + $0x7a0] sm:$0xf]
      %v637 = vld [vmem:[%s139 + $0x7a4] sm:$0xf]
      %v638 = vld [vmem:[%s139 + $0x7a8] sm:$0xf]
      %v639 = vld [vmem:[%s139 + $0x7ac] sm:$0xf]
      %v640 = vld [vmem:[%s139 + $0x7b0] sm:$0xf]
      %v641 = vld [vmem:[%s139 + $0x7b4] sm:$0xf]
      %v642 = vld [vmem:[%s139 + $0x7b8] sm:$0xf]
      %v643 = vld [vmem:[%s139 + $0x7bc] sm:$0xf]
      %v644 = vld [vmem:[%s139 + $0x7c0] sm:$0xf]
      %v645 = vld [vmem:[%s139 + $0x7c4] sm:$0xf]
      %v646 = vld [vmem:[%s139 + $0x7c8] sm:$0xf]
      %v647 = vld [vmem:[%s139 + $0x7cc] sm:$0xf]
      %v648 = vld [vmem:[%s139 + $0x7d0] sm:$0xf]
      %v649 = vld [vmem:[%s139 + $0x7d4] sm:$0xf]
      %v650 = vld [vmem:[%s139 + $0x7d8] sm:$0xf]
      %v651 = vld [vmem:[%s139 + $0x7dc] sm:$0xf]
      %v652 = vld [vmem:[%s139 + $0x7e0] sm:$0xf]
      %v653 = vld [vmem:[%s139 + $0x7e4] sm:$0xf]
      %v654 = vld [vmem:[%s139 + $0x7e8] sm:$0xf]
      %v655 = vld [vmem:[%s139 + $0x7ec] sm:$0xf]
      %v656 = vld [vmem:[%s139 + $0x7f0] sm:$0xf]
      %v657 = vld [vmem:[%s139 + $0x7f4] sm:$0xf]
      %v658 = vld [vmem:[%s139 + $0x7f8] sm:$0xf]
      %v659 = vld [vmem:[%s139 + $0x7fc] sm:$0xf]
      %v660 = vld [vmem:[%s1] sm:$0xf]
      %v661 = vld [vmem:[%s1 + $0x4] sm:$0xf]
      %v662 = vld [vmem:[%s1 + $0x8] sm:$0xf]
      %v663 = vld [vmem:[%s1 + $0xc] sm:$0xf]
      %v664 = vld [vmem:[%s1 + $0x10] sm:$0xf]
      %v665 = vld [vmem:[%s1 + $0x14] sm:$0xf]
      %v666 = vld [vmem:[%s1 + $0x18] sm:$0xf]
      %v667 = vld [vmem:[%s1 + $0x1c] sm:$0xf]
      %v668 = vld [vmem:[%s1 + $0x20] sm:$0xf]
      %v669 = vld [vmem:[%s1 + $0x24] sm:$0xf]
      %v670 = vld [vmem:[%s1 + $0x28] sm:$0xf]
      %v671 = vld [vmem:[%s1 + $0x2c] sm:$0xf]
      %v672 = vld [vmem:[%s1 + $0x30] sm:$0xf]
      %v673 = vld [vmem:[%s1 + $0x34] sm:$0xf]
      %v674 = vld [vmem:[%s1 + $0x38] sm:$0xf]
      %v675 = vld [vmem:[%s1 + $0x3c] sm:$0xf]
      %v1188 = vunpack.c.l.b16 %v148
      %v1189 = vunpack.c.l.b16 %v149
      %v1190 = vunpack.c.l.b16 %v150
      %v1191 = vunpack.c.l.b16 %v151
      %v1192 = vunpack.c.l.b16 %v152
      %v1193 = vunpack.c.l.b16 %v153
      %v1194 = vunpack.c.l.b16 %v154
      %v1195 = vunpack.c.l.b16 %v155
      %v1196 = vunpack.c.l.b16 %v156
      %v1197 = vunpack.c.l.b16 %v157
      %v1198 = vunpack.c.l.b16 %v158
      %v1199 = vunpack.c.l.b16 %v159
      %v1200 = vunpack.c.l.b16 %v160
      %v1201 = vunpack.c.l.b16 %v161
      %v1202 = vunpack.c.l.b16 %v162
      %v1203 = vunpack.c.l.b16 %v163
      %v1204 = vunpack.c.l.b16 %v164
      %v1205 = vunpack.c.l.b16 %v165
      %v1206 = vunpack.c.l.b16 %v166
      %v1207 = vunpack.c.l.b16 %v167
      %v1208 = vunpack.c.l.b16 %v168
      %v1209 = vunpack.c.l.b16 %v169
      %v1210 = vunpack.c.l.b16 %v170
      %v1211 = vunpack.c.l.b16 %v171
      %v1212 = vunpack.c.l.b16 %v172
      %v1213 = vunpack.c.l.b16 %v173
      %v1214 = vunpack.c.l.b16 %v174
      %v1215 = vunpack.c.l.b16 %v175
      %v1216 = vunpack.c.l.b16 %v176
      %v1217 = vunpack.c.l.b16 %v177
      %v1218 = vunpack.c.l.b16 %v178
      %v1219 = vunpack.c.l.b16 %v179
      %v1220 = vunpack.c.l.b16 %v180
      %v1221 = vunpack.c.l.b16 %v181
      %v1222 = vunpack.c.l.b16 %v182
      %v1223 = vunpack.c.l.b16 %v183
      %v1224 = vunpack.c.l.b16 %v184
      %v1225 = vunpack.c.l.b16 %v185
      %v1226 = vunpack.c.l.b16 %v186
      %v1227 = vunpack.c.l.b16 %v187
      %v1228 = vunpack.c.l.b16 %v188
      %v1229 = vunpack.c.l.b16 %v189
      %v1230 = vunpack.c.l.b16 %v190
      %v1231 = vunpack.c.l.b16 %v191
      %v1232 = vunpack.c.l.b16 %v192
      %v1233 = vunpack.c.l.b16 %v193
      %v1234 = vunpack.c.l.b16 %v194
      %v1235 = vunpack.c.l.b16 %v195
      %v1236 = vunpack.c.l.b16 %v196
      %v1237 = vunpack.c.l.b16 %v197
      %v1238 = vunpack.c.l.b16 %v198
      %v1239 = vunpack.c.l.b16 %v199
      %v1240 = vunpack.c.l.b16 %v200
      %v1241 = vunpack.c.l.b16 %v201
      %v1242 = vunpack.c.l.b16 %v202
      %v1243 = vunpack.c.l.b16 %v203
      %v1244 = vunpack.c.l.b16 %v204
      %v1245 = vunpack.c.l.b16 %v205
      %v1246 = vunpack.c.l.b16 %v206
      %v1247 = vunpack.c.l.b16 %v207
      %v1248 = vunpack.c.l.b16 %v208
      %v1249 = vunpack.c.l.b16 %v209
      %v1250 = vunpack.c.l.b16 %v210
      %v1251 = vunpack.c.l.b16 %v211
      %v1252 = vunpack.c.l.b16 %v212
      %v1253 = vunpack.c.l.b16 %v213
      %v1254 = vunpack.c.l.b16 %v214
      %v1255 = vunpack.c.l.b16 %v215
      %v1256 = vunpack.c.l.b16 %v216
      %v1257 = vunpack.c.l.b16 %v217
      %v1258 = vunpack.c.l.b16 %v218
      %v1259 = vunpack.c.l.b16 %v219
      %v1260 = vunpack.c.l.b16 %v220
      %v1261 = vunpack.c.l.b16 %v221
      %v1262 = vunpack.c.l.b16 %v222
      %v1263 = vunpack.c.l.b16 %v223
      %v1264 = vunpack.c.l.b16 %v224
      %v1265 = vunpack.c.l.b16 %v225
      %v1266 = vunpack.c.l.b16 %v226
      %v1267 = vunpack.c.l.b16 %v227
      %v1268 = vunpack.c.l.b16 %v228
      %v1269 = vunpack.c.l.b16 %v229
      %v1270 = vunpack.c.l.b16 %v230
      %v1271 = vunpack.c.l.b16 %v231
      %v1272 = vunpack.c.l.b16 %v232
      %v1273 = vunpack.c.l.b16 %v233
      %v1274 = vunpack.c.l.b16 %v234
      %v1275 = vunpack.c.l.b16 %v235
      %v1276 = vunpack.c.l.b16 %v236
      %v1277 = vunpack.c.l.b16 %v237
      %v1278 = vunpack.c.l.b16 %v238
      %v1279 = vunpack.c.l.b16 %v239
      %v1280 = vunpack.c.l.b16 %v240
      %v1281 = vunpack.c.l.b16 %v241
      %v1282 = vunpack.c.l.b16 %v242
      %v1283 = vunpack.c.l.b16 %v243
      %v1284 = vunpack.c.l.b16 %v244
      %v1285 = vunpack.c.l.b16 %v245
      %v1286 = vunpack.c.l.b16 %v246
      %v1287 = vunpack.c.l.b16 %v247
      %v1288 = vunpack.c.l.b16 %v248
      %v1289 = vunpack.c.l.b16 %v249
      %v1290 = vunpack.c.l.b16 %v250
      %v1291 = vunpack.c.l.b16 %v251
      %v1292 = vunpack.c.l.b16 %v252
      %v1293 = vunpack.c.l.b16 %v253
      %v1294 = vunpack.c.l.b16 %v254
      %v1295 = vunpack.c.l.b16 %v255
      %v1296 = vunpack.c.l.b16 %v256
      %v1297 = vunpack.c.l.b16 %v257
      %v1298 = vunpack.c.l.b16 %v258
      %v1299 = vunpack.c.l.b16 %v259
      %v1300 = vunpack.c.l.b16 %v260
      %v1301 = vunpack.c.l.b16 %v261
      %v1302 = vunpack.c.l.b16 %v262
      %v1303 = vunpack.c.l.b16 %v263
      %v1304 = vunpack.c.l.b16 %v264
      %v1305 = vunpack.c.l.b16 %v265
      %v1306 = vunpack.c.l.b16 %v266
      %v1307 = vunpack.c.l.b16 %v267
      %v1308 = vunpack.c.l.b16 %v268
      %v1309 = vunpack.c.l.b16 %v269
      %v1310 = vunpack.c.l.b16 %v270
      %v1311 = vunpack.c.l.b16 %v271
      %v1312 = vunpack.c.l.b16 %v272
      %v1313 = vunpack.c.l.b16 %v273
      %v1314 = vunpack.c.l.b16 %v274
      %v1315 = vunpack.c.l.b16 %v275
      %v1316 = vunpack.c.l.b16 %v276
      %v1317 = vunpack.c.l.b16 %v277
      %v1318 = vunpack.c.l.b16 %v278
      %v1319 = vunpack.c.l.b16 %v279
      %v1320 = vunpack.c.l.b16 %v280
      %v1321 = vunpack.c.l.b16 %v281
      %v1322 = vunpack.c.l.b16 %v282
      %v1323 = vunpack.c.l.b16 %v283
      %v1324 = vunpack.c.l.b16 %v284
      %v1325 = vunpack.c.l.b16 %v285
      %v1326 = vunpack.c.l.b16 %v286
      %v1327 = vunpack.c.l.b16 %v287
      %v1328 = vunpack.c.l.b16 %v288
      %v1329 = vunpack.c.l.b16 %v289
      %v1330 = vunpack.c.l.b16 %v290
      %v1331 = vunpack.c.l.b16 %v291
      %v1332 = vunpack.c.l.b16 %v292
      %v1333 = vunpack.c.l.b16 %v293
      %v1334 = vunpack.c.l.b16 %v294
      %v1335 = vunpack.c.l.b16 %v295
      %v1336 = vunpack.c.l.b16 %v296
      %v1337 = vunpack.c.l.b16 %v297
      %v1338 = vunpack.c.l.b16 %v298
      %v1339 = vunpack.c.l.b16 %v299
      %v1340 = vunpack.c.l.b16 %v300
      %v1341 = vunpack.c.l.b16 %v301
      %v1342 = vunpack.c.l.b16 %v302
      %v1343 = vunpack.c.l.b16 %v303
      %v1344 = vunpack.c.l.b16 %v304
      %v1345 = vunpack.c.l.b16 %v305
      %v1346 = vunpack.c.l.b16 %v306
      %v1347 = vunpack.c.l.b16 %v307
      %v1348 = vunpack.c.l.b16 %v308
      %v1349 = vunpack.c.l.b16 %v309
      %v1350 = vunpack.c.l.b16 %v310
      %v1351 = vunpack.c.l.b16 %v311
      %v1352 = vunpack.c.l.b16 %v312
      %v1353 = vunpack.c.l.b16 %v313
      %v1354 = vunpack.c.l.b16 %v314
      %v1355 = vunpack.c.l.b16 %v315
      %v1356 = vunpack.c.l.b16 %v316
      %v1357 = vunpack.c.l.b16 %v317
      %v1358 = vunpack.c.l.b16 %v318
      %v1359 = vunpack.c.l.b16 %v319
      %v1360 = vunpack.c.l.b16 %v320
      %v1361 = vunpack.c.l.b16 %v321
      %v1362 = vunpack.c.l.b16 %v322
      %v1363 = vunpack.c.l.b16 %v323
      %v1364 = vunpack.c.l.b16 %v324
      %v1365 = vunpack.c.l.b16 %v325
      %v1366 = vunpack.c.l.b16 %v326
      %v1367 = vunpack.c.l.b16 %v327
      %v1368 = vunpack.c.l.b16 %v328
      %v1369 = vunpack.c.l.b16 %v329
      %v1370 = vunpack.c.l.b16 %v330
      %v1371 = vunpack.c.l.b16 %v331
      %v1372 = vunpack.c.l.b16 %v332
      %v1373 = vunpack.c.l.b16 %v333
      %v1374 = vunpack.c.l.b16 %v334
      %v1375 = vunpack.c.l.b16 %v335
      %v1376 = vunpack.c.l.b16 %v336
      %v1377 = vunpack.c.l.b16 %v337
      %v1378 = vunpack.c.l.b16 %v338
      %v1379 = vunpack.c.l.b16 %v339
      %v1380 = vunpack.c.l.b16 %v340
      %v1381 = vunpack.c.l.b16 %v341
      %v1382 = vunpack.c.l.b16 %v342
      %v1383 = vunpack.c.l.b16 %v343
      %v1384 = vunpack.c.l.b16 %v344
      %v1385 = vunpack.c.l.b16 %v345
      %v1386 = vunpack.c.l.b16 %v346
      %v1387 = vunpack.c.l.b16 %v347
      %v1388 = vunpack.c.l.b16 %v348
      %v1389 = vunpack.c.l.b16 %v349
      %v1390 = vunpack.c.l.b16 %v350
      %v1391 = vunpack.c.l.b16 %v351
      %v1392 = vunpack.c.l.b16 %v352
      %v1393 = vunpack.c.l.b16 %v353
      %v1394 = vunpack.c.l.b16 %v354
      %v1395 = vunpack.c.l.b16 %v355
      %v1396 = vunpack.c.l.b16 %v356
      %v1397 = vunpack.c.l.b16 %v357
      %v1398 = vunpack.c.l.b16 %v358
      %v1399 = vunpack.c.l.b16 %v359
      %v1400 = vunpack.c.l.b16 %v360
      %v1401 = vunpack.c.l.b16 %v361
      %v1402 = vunpack.c.l.b16 %v362
      %v1403 = vunpack.c.l.b16 %v363
      %v1404 = vunpack.c.l.b16 %v364
      %v1405 = vunpack.c.l.b16 %v365
      %v1406 = vunpack.c.l.b16 %v366
      %v1407 = vunpack.c.l.b16 %v367
      %v1408 = vunpack.c.l.b16 %v368
      %v1409 = vunpack.c.l.b16 %v369
      %v1410 = vunpack.c.l.b16 %v370
      %v1411 = vunpack.c.l.b16 %v371
      %v1412 = vunpack.c.l.b16 %v372
      %v1413 = vunpack.c.l.b16 %v373
      %v1414 = vunpack.c.l.b16 %v374
      %v1415 = vunpack.c.l.b16 %v375
      %v1416 = vunpack.c.l.b16 %v376
      %v1417 = vunpack.c.l.b16 %v377
      %v1418 = vunpack.c.l.b16 %v378
      %v1419 = vunpack.c.l.b16 %v379
      %v1420 = vunpack.c.l.b16 %v380
      %v1421 = vunpack.c.l.b16 %v381
      %v1422 = vunpack.c.l.b16 %v382
      %v1423 = vunpack.c.l.b16 %v383
      %v1424 = vunpack.c.l.b16 %v384
      %v1425 = vunpack.c.l.b16 %v385
      %v1426 = vunpack.c.l.b16 %v386
      %v1427 = vunpack.c.l.b16 %v387
      %v1428 = vunpack.c.l.b16 %v388
      %v1429 = vunpack.c.l.b16 %v389
      %v1430 = vunpack.c.l.b16 %v390
      %v1431 = vunpack.c.l.b16 %v391
      %v1432 = vunpack.c.l.b16 %v392
      %v1433 = vunpack.c.l.b16 %v393
      %v1434 = vunpack.c.l.b16 %v394
      %v1435 = vunpack.c.l.b16 %v395
      %v1436 = vunpack.c.l.b16 %v396
      %v1437 = vunpack.c.l.b16 %v397
      %v1438 = vunpack.c.l.b16 %v398
      %v1439 = vunpack.c.l.b16 %v399
      %v1440 = vunpack.c.l.b16 %v400
      %v1441 = vunpack.c.l.b16 %v401
      %v1442 = vunpack.c.l.b16 %v402
      %v1443 = vunpack.c.l.b16 %v403
      %v1444 = vunpack.c.l.b16 %v404
      %v1445 = vunpack.c.l.b16 %v405
      %v1446 = vunpack.c.l.b16 %v406
      %v1447 = vunpack.c.l.b16 %v407
      %v1448 = vunpack.c.l.b16 %v408
      %v1449 = vunpack.c.l.b16 %v409
      %v1450 = vunpack.c.l.b16 %v410
      %v1451 = vunpack.c.l.b16 %v411
      %v1452 = vunpack.c.l.b16 %v412
      %v1453 = vunpack.c.l.b16 %v413
      %v1454 = vunpack.c.l.b16 %v414
      %v1455 = vunpack.c.l.b16 %v415
      %v1456 = vunpack.c.l.b16 %v416
      %v1457 = vunpack.c.l.b16 %v417
      %v1458 = vunpack.c.l.b16 %v418
      %v1459 = vunpack.c.l.b16 %v419
      %v1460 = vunpack.c.l.b16 %v420
      %v1461 = vunpack.c.l.b16 %v421
      %v1462 = vunpack.c.l.b16 %v422
      %v1463 = vunpack.c.l.b16 %v423
      %v1464 = vunpack.c.l.b16 %v424
      %v1465 = vunpack.c.l.b16 %v425
      %v1466 = vunpack.c.l.b16 %v426
      %v1467 = vunpack.c.l.b16 %v427
      %v1468 = vunpack.c.l.b16 %v428
      %v1469 = vunpack.c.l.b16 %v429
      %v1470 = vunpack.c.l.b16 %v430
      %v1471 = vunpack.c.l.b16 %v431
      %v1472 = vunpack.c.l.b16 %v432
      %v1473 = vunpack.c.l.b16 %v433
      %v1474 = vunpack.c.l.b16 %v434
      %v1475 = vunpack.c.l.b16 %v435
      %v1476 = vunpack.c.l.b16 %v436
      %v1477 = vunpack.c.l.b16 %v437
      %v1478 = vunpack.c.l.b16 %v438
      %v1479 = vunpack.c.l.b16 %v439
      %v1480 = vunpack.c.l.b16 %v440
      %v1481 = vunpack.c.l.b16 %v441
      %v1482 = vunpack.c.l.b16 %v442
      %v1483 = vunpack.c.l.b16 %v443
      %v1484 = vunpack.c.l.b16 %v444
      %v1485 = vunpack.c.l.b16 %v445
      %v1486 = vunpack.c.l.b16 %v446
      %v1487 = vunpack.c.l.b16 %v447
      %v1488 = vunpack.c.l.b16 %v448
      %v1489 = vunpack.c.l.b16 %v449
      %v1490 = vunpack.c.l.b16 %v450
      %v1491 = vunpack.c.l.b16 %v451
      %v1492 = vunpack.c.l.b16 %v452
      %v1493 = vunpack.c.l.b16 %v453
      %v1494 = vunpack.c.l.b16 %v454
      %v1495 = vunpack.c.l.b16 %v455
      %v1496 = vunpack.c.l.b16 %v456
      %v1497 = vunpack.c.l.b16 %v457
      %v1498 = vunpack.c.l.b16 %v458
      %v1499 = vunpack.c.l.b16 %v459
      %v1500 = vunpack.c.l.b16 %v460
      %v1501 = vunpack.c.l.b16 %v461
      %v1502 = vunpack.c.l.b16 %v462
      %v1503 = vunpack.c.l.b16 %v463
      %v1504 = vunpack.c.l.b16 %v464
      %v1505 = vunpack.c.l.b16 %v465
      %v1506 = vunpack.c.l.b16 %v466
      %v1507 = vunpack.c.l.b16 %v467
      %v1508 = vunpack.c.l.b16 %v468
      %v1509 = vunpack.c.l.b16 %v469
      %v1510 = vunpack.c.l.b16 %v470
      %v1511 = vunpack.c.l.b16 %v471
      %v1512 = vunpack.c.l.b16 %v472
      %v1513 = vunpack.c.l.b16 %v473
      %v1514 = vunpack.c.l.b16 %v474
      %v1515 = vunpack.c.l.b16 %v475
      %v1516 = vunpack.c.l.b16 %v476
      %v1517 = vunpack.c.l.b16 %v477
      %v1518 = vunpack.c.l.b16 %v478
      %v1519 = vunpack.c.l.b16 %v479
      %v1520 = vunpack.c.l.b16 %v480
      %v1521 = vunpack.c.l.b16 %v481
      %v1522 = vunpack.c.l.b16 %v482
      %v1523 = vunpack.c.l.b16 %v483
      %v1524 = vunpack.c.l.b16 %v484
      %v1525 = vunpack.c.l.b16 %v485
      %v1526 = vunpack.c.l.b16 %v486
      %v1527 = vunpack.c.l.b16 %v487
      %v1528 = vunpack.c.l.b16 %v488
      %v1529 = vunpack.c.l.b16 %v489
      %v1530 = vunpack.c.l.b16 %v490
      %v1531 = vunpack.c.l.b16 %v491
      %v1532 = vunpack.c.l.b16 %v492
      %v1533 = vunpack.c.l.b16 %v493
      %v1534 = vunpack.c.l.b16 %v494
      %v1535 = vunpack.c.l.b16 %v495
      %v1536 = vunpack.c.l.b16 %v496
      %v1537 = vunpack.c.l.b16 %v497
      %v1538 = vunpack.c.l.b16 %v498
      %v1539 = vunpack.c.l.b16 %v499
      %v1540 = vunpack.c.l.b16 %v500
      %v1541 = vunpack.c.l.b16 %v501
      %v1542 = vunpack.c.l.b16 %v502
      %v1543 = vunpack.c.l.b16 %v503
      %v1544 = vunpack.c.l.b16 %v504
      %v1545 = vunpack.c.l.b16 %v505
      %v1546 = vunpack.c.l.b16 %v506
      %v1547 = vunpack.c.l.b16 %v507
      %v1548 = vunpack.c.l.b16 %v508
      %v1549 = vunpack.c.l.b16 %v509
      %v1550 = vunpack.c.l.b16 %v510
      %v1551 = vunpack.c.l.b16 %v511
      %v1552 = vunpack.c.l.b16 %v512
      %v1553 = vunpack.c.l.b16 %v513
      %v1554 = vunpack.c.l.b16 %v514
      %v1555 = vunpack.c.l.b16 %v515
      %v1556 = vunpack.c.l.b16 %v516
      %v1557 = vunpack.c.l.b16 %v517
      %v1558 = vunpack.c.l.b16 %v518
      %v1559 = vunpack.c.l.b16 %v519
      %v1560 = vunpack.c.l.b16 %v520
      %v1561 = vunpack.c.l.b16 %v521
      %v1562 = vunpack.c.l.b16 %v522
      %v1563 = vunpack.c.l.b16 %v523
      %v1564 = vunpack.c.l.b16 %v524
      %v1565 = vunpack.c.l.b16 %v525
      %v1566 = vunpack.c.l.b16 %v526
      %v1567 = vunpack.c.l.b16 %v527
      %v1568 = vunpack.c.l.b16 %v528
      %v1569 = vunpack.c.l.b16 %v529
      %v1570 = vunpack.c.l.b16 %v530
      %v1571 = vunpack.c.l.b16 %v531
      %v1572 = vunpack.c.l.b16 %v532
      %v1573 = vunpack.c.l.b16 %v533
      %v1574 = vunpack.c.l.b16 %v534
      %v1575 = vunpack.c.l.b16 %v535
      %v1576 = vunpack.c.l.b16 %v536
      %v1577 = vunpack.c.l.b16 %v537
      %v1578 = vunpack.c.l.b16 %v538
      %v1579 = vunpack.c.l.b16 %v539
      %v1580 = vunpack.c.l.b16 %v540
      %v1581 = vunpack.c.l.b16 %v541
      %v1582 = vunpack.c.l.b16 %v542
      %v1583 = vunpack.c.l.b16 %v543
      %v1584 = vunpack.c.l.b16 %v544
      %v1585 = vunpack.c.l.b16 %v545
      %v1586 = vunpack.c.l.b16 %v546
      %v1587 = vunpack.c.l.b16 %v547
      %v1588 = vunpack.c.l.b16 %v548
      %v1589 = vunpack.c.l.b16 %v549
      %v1590 = vunpack.c.l.b16 %v550
      %v1591 = vunpack.c.l.b16 %v551
      %v1592 = vunpack.c.l.b16 %v552
      %v1593 = vunpack.c.l.b16 %v553
      %v1594 = vunpack.c.l.b16 %v554
      %v1595 = vunpack.c.l.b16 %v555
      %v1596 = vunpack.c.l.b16 %v556
      %v1597 = vunpack.c.l.b16 %v557
      %v1598 = vunpack.c.l.b16 %v558
      %v1599 = vunpack.c.l.b16 %v559
      %v1600 = vunpack.c.l.b16 %v560
      %v1601 = vunpack.c.l.b16 %v561
      %v1602 = vunpack.c.l.b16 %v562
      %v1603 = vunpack.c.l.b16 %v563
      %v1604 = vunpack.c.l.b16 %v564
      %v1605 = vunpack.c.l.b16 %v565
      %v1606 = vunpack.c.l.b16 %v566
      %v1607 = vunpack.c.l.b16 %v567
      %v1608 = vunpack.c.l.b16 %v568
      %v1609 = vunpack.c.l.b16 %v569
      %v1610 = vunpack.c.l.b16 %v570
      %v1611 = vunpack.c.l.b16 %v571
      %v1612 = vunpack.c.l.b16 %v572
      %v1613 = vunpack.c.l.b16 %v573
      %v1614 = vunpack.c.l.b16 %v574
      %v1615 = vunpack.c.l.b16 %v575
      %v1616 = vunpack.c.l.b16 %v576
      %v1617 = vunpack.c.l.b16 %v577
      %v1618 = vunpack.c.l.b16 %v578
      %v1619 = vunpack.c.l.b16 %v579
      %v1620 = vunpack.c.l.b16 %v580
      %v1621 = vunpack.c.l.b16 %v581
      %v1622 = vunpack.c.l.b16 %v582
      %v1623 = vunpack.c.l.b16 %v583
      %v1624 = vunpack.c.l.b16 %v584
      %v1625 = vunpack.c.l.b16 %v585
      %v1626 = vunpack.c.l.b16 %v586
      %v1627 = vunpack.c.l.b16 %v587
      %v1628 = vunpack.c.l.b16 %v588
      %v1629 = vunpack.c.l.b16 %v589
      %v1630 = vunpack.c.l.b16 %v590
      %v1631 = vunpack.c.l.b16 %v591
      %v1632 = vunpack.c.l.b16 %v592
      %v1633 = vunpack.c.l.b16 %v593
      %v1634 = vunpack.c.l.b16 %v594
      %v1635 = vunpack.c.l.b16 %v595
      %v1636 = vunpack.c.l.b16 %v596
      %v1637 = vunpack.c.l.b16 %v597
      %v1638 = vunpack.c.l.b16 %v598
      %v1639 = vunpack.c.l.b16 %v599
      %v1640 = vunpack.c.l.b16 %v600
      %v1641 = vunpack.c.l.b16 %v601
      %v1642 = vunpack.c.l.b16 %v602
      %v1643 = vunpack.c.l.b16 %v603
      %v1644 = vunpack.c.l.b16 %v604
      %v1645 = vunpack.c.l.b16 %v605
      %v1646 = vunpack.c.l.b16 %v606
      %v1647 = vunpack.c.l.b16 %v607
      %v1648 = vunpack.c.l.b16 %v608
      %v1649 = vunpack.c.l.b16 %v609
      %v1650 = vunpack.c.l.b16 %v610
      %v1651 = vunpack.c.l.b16 %v611
      %v1652 = vunpack.c.l.b16 %v612
      %v1653 = vunpack.c.l.b16 %v613
      %v1654 = vunpack.c.l.b16 %v614
      %v1655 = vunpack.c.l.b16 %v615
      %v1656 = vunpack.c.l.b16 %v616
      %v1657 = vunpack.c.l.b16 %v617
      %v1658 = vunpack.c.l.b16 %v618
      %v1659 = vunpack.c.l.b16 %v619
      %v1660 = vunpack.c.l.b16 %v620
      %v1661 = vunpack.c.l.b16 %v621
      %v1662 = vunpack.c.l.b16 %v622
      %v1663 = vunpack.c.l.b16 %v623
      %v1664 = vunpack.c.l.b16 %v624
      %v1665 = vunpack.c.l.b16 %v625
      %v1666 = vunpack.c.l.b16 %v626
      %v1667 = vunpack.c.l.b16 %v627
      %v1668 = vunpack.c.l.b16 %v628
      %v1669 = vunpack.c.l.b16 %v629
      %v1670 = vunpack.c.l.b16 %v630
      %v1671 = vunpack.c.l.b16 %v631
      %v1672 = vunpack.c.l.b16 %v632
      %v1673 = vunpack.c.l.b16 %v633
      %v1674 = vunpack.c.l.b16 %v634
      %v1675 = vunpack.c.l.b16 %v635
      %v1676 = vunpack.c.l.b16 %v636
      %v1677 = vunpack.c.l.b16 %v637
      %v1678 = vunpack.c.l.b16 %v638
      %v1679 = vunpack.c.l.b16 %v639
      %v1680 = vunpack.c.l.b16 %v640
      %v1681 = vunpack.c.l.b16 %v641
      %v1682 = vunpack.c.l.b16 %v642
      %v1683 = vunpack.c.l.b16 %v643
      %v1684 = vunpack.c.l.b16 %v644
      %v1685 = vunpack.c.l.b16 %v645
      %v1686 = vunpack.c.l.b16 %v646
      %v1687 = vunpack.c.l.b16 %v647
      %v1688 = vunpack.c.l.b16 %v648
      %v1689 = vunpack.c.l.b16 %v649
      %v1690 = vunpack.c.l.b16 %v650
      %v1691 = vunpack.c.l.b16 %v651
      %v1692 = vunpack.c.l.b16 %v652
      %v1693 = vunpack.c.l.b16 %v653
      %v1694 = vunpack.c.l.b16 %v654
      %v1695 = vunpack.c.l.b16 %v655
      %v1696 = vunpack.c.l.b16 %v656
      %v1697 = vunpack.c.l.b16 %v657
      %v1698 = vunpack.c.l.b16 %v658
      %v1699 = vunpack.c.l.b16 %v659
      %v1700 = vpack.c.b16 %v1189, %v1188
      %v1701 = vpack.c.b16 %v1191, %v1190
      %v1702 = vpack.c.b16 %v1193, %v1192
      %v1703 = vpack.c.b16 %v1195, %v1194
      %v1704 = vpack.c.b16 %v1197, %v1196
      %v1705 = vpack.c.b16 %v1199, %v1198
      %v1706 = vpack.c.b16 %v1201, %v1200
      %v1707 = vpack.c.b16 %v1203, %v1202
      %v1708 = vpack.c.b16 %v1205, %v1204
      %v1709 = vpack.c.b16 %v1207, %v1206
      %v1710 = vpack.c.b16 %v1209, %v1208
      %v1711 = vpack.c.b16 %v1211, %v1210
      %v1712 = vpack.c.b16 %v1213, %v1212
      %v1713 = vpack.c.b16 %v1215, %v1214
      %v1714 = vpack.c.b16 %v1217, %v1216
      %v1715 = vpack.c.b16 %v1219, %v1218
      %v1716 = vpack.c.b16 %v1221, %v1220
      %v1717 = vpack.c.b16 %v1223, %v1222
      %v1718 = vpack.c.b16 %v1225, %v1224
      %v1719 = vpack.c.b16 %v1227, %v1226
      %v1720 = vpack.c.b16 %v1229, %v1228
      %v1721 = vpack.c.b16 %v1231, %v1230
      %v1722 = vpack.c.b16 %v1233, %v1232
      %v1723 = vpack.c.b16 %v1235, %v1234
      %v1724 = vpack.c.b16 %v1237, %v1236
      %v1725 = vpack.c.b16 %v1239, %v1238
      %v1726 = vpack.c.b16 %v1241, %v1240
      %v1727 = vpack.c.b16 %v1243, %v1242
      %v1728 = vpack.c.b16 %v1245, %v1244
      %v1729 = vpack.c.b16 %v1247, %v1246
      %v1730 = vpack.c.b16 %v1249, %v1248
      %v1731 = vpack.c.b16 %v1251, %v1250
      %v1732 = vpack.c.b16 %v1253, %v1252
      %v1733 = vpack.c.b16 %v1255, %v1254
      %v1734 = vpack.c.b16 %v1257, %v1256
      %v1735 = vpack.c.b16 %v1259, %v1258
      %v1736 = vpack.c.b16 %v1261, %v1260
      %v1737 = vpack.c.b16 %v1263, %v1262
      %v1738 = vpack.c.b16 %v1265, %v1264
      %v1739 = vpack.c.b16 %v1267, %v1266
      %v1740 = vpack.c.b16 %v1269, %v1268
      %v1741 = vpack.c.b16 %v1271, %v1270
      %v1742 = vpack.c.b16 %v1273, %v1272
      %v1743 = vpack.c.b16 %v1275, %v1274
      %v1744 = vpack.c.b16 %v1277, %v1276
      %v1745 = vpack.c.b16 %v1279, %v1278
      %v1746 = vpack.c.b16 %v1281, %v1280
      %v1747 = vpack.c.b16 %v1283, %v1282
      %v1748 = vpack.c.b16 %v1285, %v1284
      %v1749 = vpack.c.b16 %v1287, %v1286
      %v1750 = vpack.c.b16 %v1289, %v1288
      %v1751 = vpack.c.b16 %v1291, %v1290
      %v1752 = vpack.c.b16 %v1293, %v1292
      %v1753 = vpack.c.b16 %v1295, %v1294
      %v1754 = vpack.c.b16 %v1297, %v1296
      %v1755 = vpack.c.b16 %v1299, %v1298
      %v1756 = vpack.c.b16 %v1301, %v1300
      %v1757 = vpack.c.b16 %v1303, %v1302
      %v1758 = vpack.c.b16 %v1305, %v1304
      %v1759 = vpack.c.b16 %v1307, %v1306
      %v1760 = vpack.c.b16 %v1309, %v1308
      %v1761 = vpack.c.b16 %v1311, %v1310
      %v1762 = vpack.c.b16 %v1313, %v1312
      %v1763 = vpack.c.b16 %v1315, %v1314
      %v1764 = vpack.c.b16 %v1317, %v1316
      %v1765 = vpack.c.b16 %v1319, %v1318
      %v1766 = vpack.c.b16 %v1321, %v1320
      %v1767 = vpack.c.b16 %v1323, %v1322
      %v1768 = vpack.c.b16 %v1325, %v1324
      %v1769 = vpack.c.b16 %v1327, %v1326
      %v1770 = vpack.c.b16 %v1329, %v1328
      %v1771 = vpack.c.b16 %v1331, %v1330
      %v1772 = vpack.c.b16 %v1333, %v1332
      %v1773 = vpack.c.b16 %v1335, %v1334
      %v1774 = vpack.c.b16 %v1337, %v1336
      %v1775 = vpack.c.b16 %v1339, %v1338
      %v1776 = vpack.c.b16 %v1341, %v1340
      %v1777 = vpack.c.b16 %v1343, %v1342
      %v1778 = vpack.c.b16 %v1345, %v1344
      %v1779 = vpack.c.b16 %v1347, %v1346
      %v1780 = vpack.c.b16 %v1349, %v1348
      %v1781 = vpack.c.b16 %v1351, %v1350
      %v1782 = vpack.c.b16 %v1353, %v1352
      %v1783 = vpack.c.b16 %v1355, %v1354
      %v1784 = vpack.c.b16 %v1357, %v1356
      %v1785 = vpack.c.b16 %v1359, %v1358
      %v1786 = vpack.c.b16 %v1361, %v1360
      %v1787 = vpack.c.b16 %v1363, %v1362
      %v1788 = vpack.c.b16 %v1365, %v1364
      %v1789 = vpack.c.b16 %v1367, %v1366
      %v1790 = vpack.c.b16 %v1369, %v1368
      %v1791 = vpack.c.b16 %v1371, %v1370
      %v1792 = vpack.c.b16 %v1373, %v1372
      %v1793 = vpack.c.b16 %v1375, %v1374
      %v1794 = vpack.c.b16 %v1377, %v1376
      %v1795 = vpack.c.b16 %v1379, %v1378
      %v1796 = vpack.c.b16 %v1381, %v1380
      %v1797 = vpack.c.b16 %v1383, %v1382
      %v1798 = vpack.c.b16 %v1385, %v1384
      %v1799 = vpack.c.b16 %v1387, %v1386
      %v1800 = vpack.c.b16 %v1389, %v1388
      %v1801 = vpack.c.b16 %v1391, %v1390
      %v1802 = vpack.c.b16 %v1393, %v1392
      %v1803 = vpack.c.b16 %v1395, %v1394
      %v1804 = vpack.c.b16 %v1397, %v1396
      %v1805 = vpack.c.b16 %v1399, %v1398
      %v1806 = vpack.c.b16 %v1401, %v1400
      %v1807 = vpack.c.b16 %v1403, %v1402
      %v1808 = vpack.c.b16 %v1405, %v1404
      %v1809 = vpack.c.b16 %v1407, %v1406
      %v1810 = vpack.c.b16 %v1409, %v1408
      %v1811 = vpack.c.b16 %v1411, %v1410
      %v1812 = vpack.c.b16 %v1413, %v1412
      %v1813 = vpack.c.b16 %v1415, %v1414
      %v1814 = vpack.c.b16 %v1417, %v1416
      %v1815 = vpack.c.b16 %v1419, %v1418
      %v1816 = vpack.c.b16 %v1421, %v1420
      %v1817 = vpack.c.b16 %v1423, %v1422
      %v1818 = vpack.c.b16 %v1425, %v1424
      %v1819 = vpack.c.b16 %v1427, %v1426
      %v1820 = vpack.c.b16 %v1429, %v1428
      %v1821 = vpack.c.b16 %v1431, %v1430
      %v1822 = vpack.c.b16 %v1433, %v1432
      %v1823 = vpack.c.b16 %v1435, %v1434
      %v1824 = vpack.c.b16 %v1437, %v1436
      %v1825 = vpack.c.b16 %v1439, %v1438
      %v1826 = vpack.c.b16 %v1441, %v1440
      %v1827 = vpack.c.b16 %v1443, %v1442
      %v1828 = vpack.c.b16 %v1445, %v1444
      %v1829 = vpack.c.b16 %v1447, %v1446
      %v1830 = vpack.c.b16 %v1449, %v1448
      %v1831 = vpack.c.b16 %v1451, %v1450
      %v1832 = vpack.c.b16 %v1453, %v1452
      %v1833 = vpack.c.b16 %v1455, %v1454
      %v1834 = vpack.c.b16 %v1457, %v1456
      %v1835 = vpack.c.b16 %v1459, %v1458
      %v1836 = vpack.c.b16 %v1461, %v1460
      %v1837 = vpack.c.b16 %v1463, %v1462
      %v1838 = vpack.c.b16 %v1465, %v1464
      %v1839 = vpack.c.b16 %v1467, %v1466
      %v1840 = vpack.c.b16 %v1469, %v1468
      %v1841 = vpack.c.b16 %v1471, %v1470
      %v1842 = vpack.c.b16 %v1473, %v1472
      %v1843 = vpack.c.b16 %v1475, %v1474
      %v1844 = vpack.c.b16 %v1477, %v1476
      %v1845 = vpack.c.b16 %v1479, %v1478
      %v1846 = vpack.c.b16 %v1481, %v1480
      %v1847 = vpack.c.b16 %v1483, %v1482
      %v1848 = vpack.c.b16 %v1485, %v1484
      %v1849 = vpack.c.b16 %v1487, %v1486
      %v1850 = vpack.c.b16 %v1489, %v1488
      %v1851 = vpack.c.b16 %v1491, %v1490
      %v1852 = vpack.c.b16 %v1493, %v1492
      %v1853 = vpack.c.b16 %v1495, %v1494
      %v1854 = vpack.c.b16 %v1497, %v1496
      %v1855 = vpack.c.b16 %v1499, %v1498
      %v1856 = vpack.c.b16 %v1501, %v1500
      %v1857 = vpack.c.b16 %v1503, %v1502
      %v1858 = vpack.c.b16 %v1505, %v1504
      %v1859 = vpack.c.b16 %v1507, %v1506
      %v1860 = vpack.c.b16 %v1509, %v1508
      %v1861 = vpack.c.b16 %v1511, %v1510
      %v1862 = vpack.c.b16 %v1513, %v1512
      %v1863 = vpack.c.b16 %v1515, %v1514
      %v1864 = vpack.c.b16 %v1517, %v1516
      %v1865 = vpack.c.b16 %v1519, %v1518
      %v1866 = vpack.c.b16 %v1521, %v1520
      %v1867 = vpack.c.b16 %v1523, %v1522
      %v1868 = vpack.c.b16 %v1525, %v1524
      %v1869 = vpack.c.b16 %v1527, %v1526
      %v1870 = vpack.c.b16 %v1529, %v1528
      %v1871 = vpack.c.b16 %v1531, %v1530
      %v1872 = vpack.c.b16 %v1533, %v1532
      %v1873 = vpack.c.b16 %v1535, %v1534
      %v1874 = vpack.c.b16 %v1537, %v1536
      %v1875 = vpack.c.b16 %v1539, %v1538
      %v1876 = vpack.c.b16 %v1541, %v1540
      %v1877 = vpack.c.b16 %v1543, %v1542
      %v1878 = vpack.c.b16 %v1545, %v1544
      %v1879 = vpack.c.b16 %v1547, %v1546
      %v1880 = vpack.c.b16 %v1549, %v1548
      %v1881 = vpack.c.b16 %v1551, %v1550
      %v1882 = vpack.c.b16 %v1553, %v1552
      %v1883 = vpack.c.b16 %v1555, %v1554
      %v1884 = vpack.c.b16 %v1557, %v1556
      %v1885 = vpack.c.b16 %v1559, %v1558
      %v1886 = vpack.c.b16 %v1561, %v1560
      %v1887 = vpack.c.b16 %v1563, %v1562
      %v1888 = vpack.c.b16 %v1565, %v1564
      %v1889 = vpack.c.b16 %v1567, %v1566
      %v1890 = vpack.c.b16 %v1569, %v1568
      %v1891 = vpack.c.b16 %v1571, %v1570
      %v1892 = vpack.c.b16 %v1573, %v1572
      %v1893 = vpack.c.b16 %v1575, %v1574
      %v1894 = vpack.c.b16 %v1577, %v1576
      %v1895 = vpack.c.b16 %v1579, %v1578
      %v1896 = vpack.c.b16 %v1581, %v1580
      %v1897 = vpack.c.b16 %v1583, %v1582
      %v1898 = vpack.c.b16 %v1585, %v1584
      %v1899 = vpack.c.b16 %v1587, %v1586
      %v1900 = vpack.c.b16 %v1589, %v1588
      %v1901 = vpack.c.b16 %v1591, %v1590
      %v1902 = vpack.c.b16 %v1593, %v1592
      %v1903 = vpack.c.b16 %v1595, %v1594
      %v1904 = vpack.c.b16 %v1597, %v1596
      %v1905 = vpack.c.b16 %v1599, %v1598
      %v1906 = vpack.c.b16 %v1601, %v1600
      %v1907 = vpack.c.b16 %v1603, %v1602
      %v1908 = vpack.c.b16 %v1605, %v1604
      %v1909 = vpack.c.b16 %v1607, %v1606
      %v1910 = vpack.c.b16 %v1609, %v1608
      %v1911 = vpack.c.b16 %v1611, %v1610
      %v1912 = vpack.c.b16 %v1613, %v1612
      %v1913 = vpack.c.b16 %v1615, %v1614
      %v1914 = vpack.c.b16 %v1617, %v1616
      %v1915 = vpack.c.b16 %v1619, %v1618
      %v1916 = vpack.c.b16 %v1621, %v1620
      %v1917 = vpack.c.b16 %v1623, %v1622
      %v1918 = vpack.c.b16 %v1625, %v1624
      %v1919 = vpack.c.b16 %v1627, %v1626
      %v1920 = vpack.c.b16 %v1629, %v1628
      %v1921 = vpack.c.b16 %v1631, %v1630
      %v1922 = vpack.c.b16 %v1633, %v1632
      %v1923 = vpack.c.b16 %v1635, %v1634
      %v1924 = vpack.c.b16 %v1637, %v1636
      %v1925 = vpack.c.b16 %v1639, %v1638
      %v1926 = vpack.c.b16 %v1641, %v1640
      %v1927 = vpack.c.b16 %v1643, %v1642
      %v1928 = vpack.c.b16 %v1645, %v1644
      %v1929 = vpack.c.b16 %v1647, %v1646
      %v1930 = vpack.c.b16 %v1649, %v1648
      %v1931 = vpack.c.b16 %v1651, %v1650
      %v1932 = vpack.c.b16 %v1653, %v1652
      %v1933 = vpack.c.b16 %v1655, %v1654
      %v1934 = vpack.c.b16 %v1657, %v1656
      %v1935 = vpack.c.b16 %v1659, %v1658
      %v1936 = vpack.c.b16 %v1661, %v1660
      %v1937 = vpack.c.b16 %v1663, %v1662
      %v1938 = vpack.c.b16 %v1665, %v1664
      %v1939 = vpack.c.b16 %v1667, %v1666
      %v1940 = vpack.c.b16 %v1669, %v1668
      %v1941 = vpack.c.b16 %v1671, %v1670
      %v1942 = vpack.c.b16 %v1673, %v1672
      %v1943 = vpack.c.b16 %v1675, %v1674
      %v1944 = vpack.c.b16 %v1677, %v1676
      %v1945 = vpack.c.b16 %v1679, %v1678
      %v1946 = vpack.c.b16 %v1681, %v1680
      %v1947 = vpack.c.b16 %v1683, %v1682
      %v1948 = vpack.c.b16 %v1685, %v1684
      %v1949 = vpack.c.b16 %v1687, %v1686
      %v1950 = vpack.c.b16 %v1689, %v1688
      %v1951 = vpack.c.b16 %v1691, %v1690
      %v1952 = vpack.c.b16 %v1693, %v1692
      %v1953 = vpack.c.b16 %v1695, %v1694
      %v1954 = vpack.c.b16 %v1697, %v1696
      %v1955 = vpack.c.b16 %v1699, %v1698
      %v2228 = vunpack.c.l.b16 %v660
      %v2229 = vunpack.c.l.b16 %v661
      %v2230 = vunpack.c.l.b16 %v662
      %v2231 = vunpack.c.l.b16 %v663
      %v2232 = vunpack.c.l.b16 %v664
      %v2233 = vunpack.c.l.b16 %v665
      %v2234 = vunpack.c.l.b16 %v666
      %v2235 = vunpack.c.l.b16 %v667
      %v2236 = vunpack.c.l.b16 %v668
      %v2237 = vunpack.c.l.b16 %v669
      %v2238 = vunpack.c.l.b16 %v670
      %v2239 = vunpack.c.l.b16 %v671
      %v2240 = vunpack.c.l.b16 %v672
      %v2241 = vunpack.c.l.b16 %v673
      %v2242 = vunpack.c.l.b16 %v674
      %v2243 = vunpack.c.l.b16 %v675
      %v2244 = vpack.c.b16 %v2229, %v2228
      %v2245 = vpack.c.b16 %v2231, %v2230
      %v2246 = vpack.c.b16 %v2233, %v2232
      %v2247 = vpack.c.b16 %v2235, %v2234
      %v2248 = vpack.c.b16 %v2237, %v2236
      %v2249 = vpack.c.b16 %v2239, %v2238
      %v2250 = vpack.c.b16 %v2241, %v2240
      %v2251 = vpack.c.b16 %v2243, %v2242
      %2260 = vmatprep.subr.bf16.mxu0 0
      %2261 = vmatpush1.bf16.msra.mxu0 %v2244
      %2262 = vmatprep.subr.bf16.mxu0 0
      %2263 = vmatpush1.bf16.msra.mxu0 %v2245
      %2264 = vmatprep.subr.bf16.mxu0 0
      %2265 = vmatpush1.bf16.msra.mxu0 %v2246
      %2266 = vmatprep.subr.bf16.mxu0 0
      %2267 = vmatpush1.bf16.msra.mxu0 %v2247
      %2268 = vmatprep.subr.bf16.mxu0 0
      %2269 = vmatpush1.bf16.msra.mxu0 %v2248
      %2270 = vmatprep.subr.bf16.mxu0 0
      %2271 = vmatpush1.bf16.msra.mxu0 %v2249
      %2272 = vmatprep.subr.bf16.mxu0 0
      %2273 = vmatpush1.bf16.msra.mxu0 %v2250
      %2274 = vmatprep.subr.bf16.mxu0 0
      %2275 = vmatpush1.bf16.msra.mxu0 %v2251
      %2276 = vmatprep.subr.bf16.mxu0 0
      %2277 = vmatpush1.bf16.msra.mxu0 0
      %2278 = vmatprep.subr.bf16.mxu0 0
      %2279 = vmatpush1.bf16.msra.mxu0 0
      %2280 = vmatprep.subr.bf16.mxu0 0
      %2281 = vmatpush1.bf16.msra.mxu0 0
      %2282 = vmatprep.subr.bf16.mxu0 0
      %2283 = vmatpush1.bf16.msra.mxu0 0
      %2284 = vmatprep.subr.bf16.mxu0 0
      %2285 = vmatpush1.bf16.msra.mxu0 0
      %2286 = vmatprep.subr.bf16.mxu0 0
      %2287 = vmatpush1.bf16.msra.mxu0 0
      %2288 = vmatprep.subr.bf16.mxu0 0
      %2289 = vmatpush1.bf16.msra.mxu0 0
      %2290 = vmatprep.subr.bf16.mxu0 0
      %2291 = vmatpush1.bf16.msra.mxu0 0
      %2292 = vmatprep.mubr.bf16.mxu0 0
      %2293 = vmatmul.mubr.bf16.gmra.mrb[0].mxu0 %v1700
      %v2294 = vpop.f32.mrb[0].mxu0
      %v2295 = vadd.f32 0.0, %v2294
      %v2296 = vpop.f32.mrb[0].mxu0
      %v2297 = vpop.f32.mrb[0].mxu0
      %v2298 = vadd.f32 0.0, %v2297
      %v2299 = vpop.f32.mrb[0].mxu0
      %2300 = vmatprep.mubr.bf16.mxu0 0
      %2301 = vmatmul.mubr.bf16.gmra.mrb[0].mxu0 %v1701
      %v2302 = vpop.f32.mrb[0].mxu0
      %v2303 = vadd.f32 0.0, %v2302
      %v2304 = vpop.f32.mrb[0].mxu0
      %v2305 = vpop.f32.mrb[0].mxu0
      %v2306 = vadd.f32 0.0, %v2305
      %v2307 = vpop.f32.mrb[0].mxu0
      %2308 = vmatprep.mubr.bf16.mxu0 0
      %2309 = vmatmul.mubr.bf16.gmra.mrb[0].mxu0 %v1702
      %v2310 = vpop.f32.mrb[0].mxu0
      %v2311 = vadd.f32 0.0, %v2310
      %v2312 = vpop.f32.mrb[0].mxu0
      %v2313 = vpop.f32.mrb[0].mxu0
      %v2314 = vadd.f32 0.0, %v2313
      %v2315 = vpop.f32.mrb[0].mxu0
      %2316 = vmatprep.mubr.bf16.mxu0 0
      %2317 = vmatmul.mubr.bf16.gmra.mrb[0].mxu0 %v1703
      %v2318 = vpop.f32.mrb[0].mxu0
      %v2319 = vadd.f32 0.0, %v2318
      %v2320 = vpop.f32.mrb[0].mxu0
      %v2321 = vpop.f32.mrb[0].mxu0
      %v2322 = vadd.f32 0.0, %v2321
      %v2323 = vpop.f32.mrb[0].mxu0
      %2324 = vmatprep.mubr.bf16.mxu0 0
      %2325 = vmatmul.mubr.bf16.gmra.mrb[0].mxu0 %v1704
      %v2326 = vpop.f32.mrb[0].mxu0
      %v2327 = vadd.f32 0.0, %v2326
      %v2328 = vpop.f32.mrb[0].mxu0
      %v2329 = vpop.f32.mrb[0].mxu0
      %v2330 = vadd.f32 0.0, %v2329
      %v2331 = vpop.f32.mrb[0].mxu0
      %2332 = vmatprep.mubr.bf16.mxu0 0
      %2333 = vmatmul.mubr.bf16.gmra.mrb[0].mxu0 %v1705
      %v2334 = vpop.f32.mrb[0].mxu0
      %v2335 = vadd.f32 0.0, %v2334
      %v2336 = vpop.f32.mrb[0].mxu0
      %v2337 = vpop.f32.mrb[0].mxu0
      %v2338 = vadd.f32 0.0, %v2337
      %v2339 = vpop.f32.mrb[0].mxu0
      %2340 = vmatprep.mubr.bf16.mxu0 0
      %2341 = vmatmul.mubr.bf16.gmra.mrb[0].mxu0 %v1706
      %v2342 = vpop.f32.mrb[0].mxu0
      %v2343 = vadd.f32 0.0, %v2342
      %v2344 = vpop.f32.mrb[0].mxu0
      %v2345 = vpop.f32.mrb[0].mxu0
      %v2346 = vadd.f32 0.0, %v2345
      %v2347 = vpop.f32.mrb[0].mxu0
      %2348 = vmatprep.mubr.bf16.mxu0 0
      %2349 = vmatmul.mubr.bf16.gmra.mrb[0].mxu0 %v1707
      %v2350 = vpop.f32.mrb[0].mxu0
      %v2351 = vadd.f32 0.0, %v2350
      %v2352 = vpop.f32.mrb[0].mxu0
      %v2353 = vpop.f32.mrb[0].mxu0
      %v2354 = vadd.f32 0.0, %v2353
      %v2355 = vpop.f32.mrb[0].mxu0
      %2356 = vmatprep.mubr.bf16.mxu0 0
      %2357 = vmatmul.mubr.bf16.gmra.mrb[0].mxu0 %v1708
      %v2358 = vpop.f32.mrb[0].mxu0
      %v2359 = vadd.f32 0.0, %v2358
      %v2360 = vpop.f32.mrb[0].mxu0
      %v2361 = vpop.f32.mrb[0].mxu0
      %v2362 = vadd.f32 0.0, %v2361
      %v2363 = vpop.f32.mrb[0].mxu0
      %2364 = vmatprep.mubr.bf16.mxu0 0
      %2365 = vmatmul.mubr.bf16.gmra.mrb[0].mxu0 %v1709
      %v2366 = vpop.f32.mrb[0].mxu0
      %v2367 = vadd.f32 0.0, %v2366
      %v2368 = vpop.f32.mrb[0].mxu0
      %v2369 = vpop.f32.mrb[0].mxu0
      %v2370 = vadd.f32 0.0, %v2369
      %v2371 = vpop.f32.mrb[0].mxu0
      %2372 = vmatprep.mubr.bf16.mxu0 0
      %2373 = vmatmul.mubr.bf16.gmra.mrb[0].mxu0 %v1710
      %v2374 = vpop.f32.mrb[0].mxu0
      %v2375 = vadd.f32 0.0, %v2374
      %v2376 = vpop.f32.mrb[0].mxu0
      %v2377 = vpop.f32.mrb[0].mxu0
      %v2378 = vadd.f32 0.0, %v2377
      %v2379 = vpop.f32.mrb[0].mxu0
      %2380 = vmatprep.mubr.bf16.mxu0 0
      %2381 = vmatmul.mubr.bf16.gmra.mrb[0].mxu0 %v1711
      %v2382 = vpop.f32.mrb[0].mxu0
      %v2383 = vadd.f32 0.0, %v2382
      %v2384 = vpop.f32.mrb[0].mxu0
      %v2385 = vpop.f32.mrb[0].mxu0
      %v2386 = vadd.f32 0.0, %v2385
      %v2387 = vpop.f32.mrb[0].mxu0
      %2388 = vmatprep.mubr.bf16.mxu0 0
      %2389 = vmatmul.mubr.bf16.gmra.mrb[0].mxu0 %v1712
      %v2390 = vpop.f32.mrb[0].mxu0
      %v2391 = vadd.f32 0.0, %v2390
      %v2392 = vpop.f32.mrb[0].mxu0
      %v2393 = vpop.f32.mrb[0].mxu0
      %v2394 = vadd.f32 0.0, %v2393
      %v2395 = vpop.f32.mrb[0].mxu0
      %2396 = vmatprep.mubr.bf16.mxu0 0
      %2397 = vmatmul.mubr.bf16.gmra.mrb[0].mxu0 %v1713
      %v2398 = vpop.f32.mrb[0].mxu0
      %v2399 = vadd.f32 0.0, %v2398
      %v2400 = vpop.f32.mrb[0].mxu0
      %v2401 = vpop.f32.mrb[0].mxu0
      %v2402 = vadd.f32 0.0, %v2401
      %v2403 = vpop.f32.mrb[0].mxu0
      %2404 = vmatprep.mubr.bf16.mxu0 0
      %2405 = vmatmul.mubr.bf16.gmra.mrb[0].mxu0 %v1714
      %v2406 = vpop.f32.mrb[0].mxu0
      %v2407 = vadd.f32 0.0, %v2406
      %v2408 = vpop.f32.mrb[0].mxu0
      %v2409 = vpop.f32.mrb[0].mxu0
      %v2410 = vadd.f32 0.0, %v2409
      %v2411 = vpop.f32.mrb[0].mxu0
      %2412 = vmatprep.mubr.bf16.mxu0 0
      %2413 = vmatmul.mubr.bf16.gmra.mrb[0].mxu0 %v1715
      %v2414 = vpop.f32.mrb[0].mxu0
      %v2415 = vadd.f32 0.0, %v2414
      %v2416 = vpop.f32.mrb[0].mxu0
      %v2417 = vpop.f32.mrb[0].mxu0
      %v2418 = vadd.f32 0.0, %v2417
      %v2419 = vpop.f32.mrb[0].mxu0
      %2420 = vmatprep.mubr.bf16.mxu0 0
      %2421 = vmatmul.mubr.bf16.gmra.mrb[0].mxu0 %v1716
      %v2422 = vpop.f32.mrb[0].mxu0
      %v2423 = vadd.f32 0.0, %v2422
      %v2424 = vpop.f32.mrb[0].mxu0
      %v2425 = vpop.f32.mrb[0].mxu0
      %v2426 = vadd.f32 0.0, %v2425
      %v2427 = vpop.f32.mrb[0].mxu0
      %2428 = vmatprep.mubr.bf16.mxu0 0
      %2429 = vmatmul.mubr.bf16.gmra.mrb[0].mxu0 %v1717
      %v2430 = vpop.f32.mrb[0].mxu0
      %v2431 = vadd.f32 0.0, %v2430
      %v2432 = vpop.f32.mrb[0].mxu0
      %v2433 = vpop.f32.mrb[0].mxu0
      %v2434 = vadd.f32 0.0, %v2433
      %v2435 = vpop.f32.mrb[0].mxu0
      %2436 = vmatprep.mubr.bf16.mxu0 0
      %2437 = vmatmul.mubr.bf16.gmra.mrb[0].mxu0 %v1718
      %v2438 = vpop.f32.mrb[0].mxu0
      %v2439 = vadd.f32 0.0, %v2438
      %v2440 = vpop.f32.mrb[0].mxu0
      %v2441 = vpop.f32.mrb[0].mxu0
      %v2442 = vadd.f32 0.0, %v2441
      %v2443 = vpop.f32.mrb[0].mxu0
      %2444 = vmatprep.mubr.bf16.mxu0 0
      %2445 = vmatmul.mubr.bf16.gmra.mrb[0].mxu0 %v1719
      %v2446 = vpop.f32.mrb[0].mxu0
      %v2447 = vadd.f32 0.0, %v2446
      %v2448 = vpop.f32.mrb[0].mxu0
      %v2449 = vpop.f32.mrb[0].mxu0
      %v2450 = vadd.f32 0.0, %v2449
      %v2451 = vpop.f32.mrb[0].mxu0
      %2452 = vmatprep.mubr.bf16.mxu0 0
      %2453 = vmatmul.mubr.bf16.gmra.mrb[0].mxu0 %v1720
      %v2454 = vpop.f32.mrb[0].mxu0
      %v2455 = vadd.f32 0.0, %v2454
      %v2456 = vpop.f32.mrb[0].mxu0
      %v2457 = vpop.f32.mrb[0].mxu0
      %v2458 = vadd.f32 0.0, %v2457
      %v2459 = vpop.f32.mrb[0].mxu0
      %2460 = vmatprep.mubr.bf16.mxu0 0
      %2461 = vmatmul.mubr.bf16.gmra.mrb[0].mxu0 %v1721
      %v2462 = vpop.f32.mrb[0].mxu0
      %v2463 = vadd.f32 0.0, %v2462
      %v2464 = vpop.f32.mrb[0].mxu0
      %v2465 = vpop.f32.mrb[0].mxu0
      %v2466 = vadd.f32 0.0, %v2465
      %v2467 = vpop.f32.mrb[0].mxu0
      %2468 = vmatprep.mubr.bf16.mxu0 0
      %2469 = vmatmul.mubr.bf16.gmra.mrb[0].mxu0 %v1722
      %v2470 = vpop.f32.mrb[0].mxu0
      %v2471 = vadd.f32 0.0, %v2470
      %v2472 = vpop.f32.mrb[0].mxu0
      %v2473 = vpop.f32.mrb[0].mxu0
      %v2474 = vadd.f32 0.0, %v2473
      %v2475 = vpop.f32.mrb[0].mxu0
      %2476 = vmatprep.mubr.bf16.mxu0 0
      %2477 = vmatmul.mubr.bf16.gmra.mrb[0].mxu0 %v1723
      %v2478 = vpop.f32.mrb[0].mxu0
      %v2479 = vadd.f32 0.0, %v2478
      %v2480 = vpop.f32.mrb[0].mxu0
      %v2481 = vpop.f32.mrb[0].mxu0
      %v2482 = vadd.f32 0.0, %v2481
      %v2483 = vpop.f32.mrb[0].mxu0
      %2484 = vmatprep.mubr.bf16.mxu0 0
      %2485 = vmatmul.mubr.bf16.gmra.mrb[0].mxu0 %v1724
      %v2486 = vpop.f32.mrb[0].mxu0
      %v2487 = vadd.f32 0.0, %v2486
      %v2488 = vpop.f32.mrb[0].mxu0
      %v2489 = vpop.f32.mrb[0].mxu0
      %v2490 = vadd.f32 0.0, %v2489
      %v2491 = vpop.f32.mrb[0].mxu0
      %2492 = vmatprep.mubr.bf16.mxu0 0
      %2493 = vmatmul.mubr.bf16.gmra.mrb[0].mxu0 %v1725
      %v2494 = vpop.f32.mrb[0].mxu0
      %v2495 = vadd.f32 0.0, %v2494
      %v2496 = vpop.f32.mrb[0].mxu0
      %v2497 = vpop.f32.mrb[0].mxu0
      %v2498 = vadd.f32 0.0, %v2497
      %v2499 = vpop.f32.mrb[0].mxu0
      %2500 = vmatprep.mubr.bf16.mxu0 0
      %2501 = vmatmul.mubr.bf16.gmra.mrb[0].mxu0 %v1726
      %v2502 = vpop.f32.mrb[0].mxu0
      %v2503 = vadd.f32 0.0, %v2502
      %v2504 = vpop.f32.mrb[0].mxu0
      %v2505 = vpop.f32.mrb[0].mxu0
      %v2506 = vadd.f32 0.0, %v2505
      %v2507 = vpop.f32.mrb[0].mxu0
      %2508 = vmatprep.mubr.bf16.mxu0 0
      %2509 = vmatmul.mubr.bf16.gmra.mrb[0].mxu0 %v1727
      %v2510 = vpop.f32.mrb[0].mxu0
      %v2511 = vadd.f32 0.0, %v2510
      %v2512 = vpop.f32.mrb[0].mxu0
      %v2513 = vpop.f32.mrb[0].mxu0
      %v2514 = vadd.f32 0.0, %v2513
      %v2515 = vpop.f32.mrb[0].mxu0
      %2516 = vmatprep.mubr.bf16.mxu0 0
      %2517 = vmatmul.mubr.bf16.gmra.mrb[0].mxu0 %v1728
      %v2518 = vpop.f32.mrb[0].mxu0
      %v2519 = vadd.f32 0.0, %v2518
      %v2520 = vpop.f32.mrb[0].mxu0
      %v2521 = vpop.f32.mrb[0].mxu0
      %v2522 = vadd.f32 0.0, %v2521
      %v2523 = vpop.f32.mrb[0].mxu0
      %2524 = vmatprep.mubr.bf16.mxu0 0
      %2525 = vmatmul.mubr.bf16.gmra.mrb[0].mxu0 %v1729
      %v2526 = vpop.f32.mrb[0].mxu0
      %v2527 = vadd.f32 0.0, %v2526
      %v2528 = vpop.f32.mrb[0].mxu0
      %v2529 = vpop.f32.mrb[0].mxu0
      %v2530 = vadd.f32 0.0, %v2529
      %v2531 = vpop.f32.mrb[0].mxu0
      %2532 = vmatprep.mubr.bf16.mxu0 0
      %2533 = vmatmul.mubr.bf16.gmra.mrb[0].mxu0 %v1730
      %v2534 = vpop.f32.mrb[0].mxu0
      %v2535 = vadd.f32 0.0, %v2534
      %v2536 = vpop.f32.mrb[0].mxu0
      %v2537 = vpop.f32.mrb[0].mxu0
      %v2538 = vadd.f32 0.0, %v2537
      %v2539 = vpop.f32.mrb[0].mxu0
      %2540 = vmatprep.mubr.bf16.mxu0 0
      %2541 = vmatmul.mubr.bf16.gmra.mrb[0].mxu0 %v1731
      %v2542 = vpop.f32.mrb[0].mxu0
      %v2543 = vadd.f32 0.0, %v2542
      %v2544 = vpop.f32.mrb[0].mxu0
      %v2545 = vpop.f32.mrb[0].mxu0
      %v2546 = vadd.f32 0.0, %v2545
      %v2547 = vpop.f32.mrb[0].mxu0
      %2548 = vmatprep.mubr.bf16.mxu0 0
      %2549 = vmatmul.mubr.bf16.gmra.mrb[0].mxu0 %v1732
      %v2550 = vpop.f32.mrb[0].mxu0
      %v2551 = vadd.f32 0.0, %v2550
      %v2552 = vpop.f32.mrb[0].mxu0
      %v2553 = vpop.f32.mrb[0].mxu0
      %v2554 = vadd.f32 0.0, %v2553
      %v2555 = vpop.f32.mrb[0].mxu0
      %2556 = vmatprep.mubr.bf16.mxu0 0
      %2557 = vmatmul.mubr.bf16.gmra.mrb[0].mxu0 %v1733
      %v2558 = vpop.f32.mrb[0].mxu0
      %v2559 = vadd.f32 0.0, %v2558
      %v2560 = vpop.f32.mrb[0].mxu0
      %v2561 = vpop.f32.mrb[0].mxu0
      %v2562 = vadd.f32 0.0, %v2561
      %v2563 = vpop.f32.mrb[0].mxu0
      %2564 = vmatprep.mubr.bf16.mxu0 0
      %2565 = vmatmul.mubr.bf16.gmra.mrb[0].mxu0 %v1734
      %v2566 = vpop.f32.mrb[0].mxu0
      %v2567 = vadd.f32 0.0, %v2566
      %v2568 = vpop.f32.mrb[0].mxu0
      %v2569 = vpop.f32.mrb[0].mxu0
      %v2570 = vadd.f32 0.0, %v2569
      %v2571 = vpop.f32.mrb[0].mxu0
      %2572 = vmatprep.mubr.bf16.mxu0 0
      %2573 = vmatmul.mubr.bf16.gmra.mrb[0].mxu0 %v1735
      %v2574 = vpop.f32.mrb[0].mxu0
      %v2575 = vadd.f32 0.0, %v2574
      %v2576 = vpop.f32.mrb[0].mxu0
      %v2577 = vpop.f32.mrb[0].mxu0
      %v2578 = vadd.f32 0.0, %v2577
      %v2579 = vpop.f32.mrb[0].mxu0
      %2580 = vmatprep.mubr.bf16.mxu0 0
      %2581 = vmatmul.mubr.bf16.gmra.mrb[0].mxu0 %v1736
      %v2582 = vpop.f32.mrb[0].mxu0
      %v2583 = vadd.f32 0.0, %v2582
      %v2584 = vpop.f32.mrb[0].mxu0
      %v2585 = vpop.f32.mrb[0].mxu0
      %v2586 = vadd.f32 0.0, %v2585
      %v2587 = vpop.f32.mrb[0].mxu0
      %2588 = vmatprep.mubr.bf16.mxu0 0
      %2589 = vmatmul.mubr.bf16.gmra.mrb[0].mxu0 %v1737
      %v2590 = vpop.f32.mrb[0].mxu0
      %v2591 = vadd.f32 0.0, %v2590
      %v2592 = vpop.f32.mrb[0].mxu0
      %v2593 = vpop.f32.mrb[0].mxu0
      %v2594 = vadd.f32 0.0, %v2593
      %v2595 = vpop.f32.mrb[0].mxu0
      %2596 = vmatprep.mubr.bf16.mxu0 0
      %2597 = vmatmul.mubr.bf16.gmra.mrb[0].mxu0 %v1738
      %v2598 = vpop.f32.mrb[0].mxu0
      %v2599 = vadd.f32 0.0, %v2598
      %v2600 = vpop.f32.mrb[0].mxu0
      %v2601 = vpop.f32.mrb[0].mxu0
      %v2602 = vadd.f32 0.0, %v2601
      %v2603 = vpop.f32.mrb[0].mxu0
      %2604 = vmatprep.mubr.bf16.mxu0 0
      %2605 = vmatmul.mubr.bf16.gmra.mrb[0].mxu0 %v1739
      %v2606 = vpop.f32.mrb[0].mxu0
      %v2607 = vadd.f32 0.0, %v2606
      %v2608 = vpop.f32.mrb[0].mxu0
      %v2609 = vpop.f32.mrb[0].mxu0
      %v2610 = vadd.f32 0.0, %v2609
      %v2611 = vpop.f32.mrb[0].mxu0
      %2612 = vmatprep.mubr.bf16.mxu0 0
      %2613 = vmatmul.mubr.bf16.gmra.mrb[0].mxu0 %v1740
      %v2614 = vpop.f32.mrb[0].mxu0
      %v2615 = vadd.f32 0.0, %v2614
      %v2616 = vpop.f32.mrb[0].mxu0
      %v2617 = vpop.f32.mrb[0].mxu0
      %v2618 = vadd.f32 0.0, %v2617
      %v2619 = vpop.f32.mrb[0].mxu0
      %2620 = vmatprep.mubr.bf16.mxu0 0
      %2621 = vmatmul.mubr.bf16.gmra.mrb[0].mxu0 %v1741
      %v2622 = vpop.f32.mrb[0].mxu0
      %v2623 = vadd.f32 0.0, %v2622
      %v2624 = vpop.f32.mrb[0].mxu0
      %v2625 = vpop.f32.mrb[0].mxu0
      %v2626 = vadd.f32 0.0, %v2625
      %v2627 = vpop.f32.mrb[0].mxu0
      %2628 = vmatprep.mubr.bf16.mxu0 0
      %2629 = vmatmul.mubr.bf16.gmra.mrb[0].mxu0 %v1742
      %v2630 = vpop.f32.mrb[0].mxu0
      %v2631 = vadd.f32 0.0, %v2630
      %v2632 = vpop.f32.mrb[0].mxu0
      %v2633 = vpop.f32.mrb[0].mxu0
      %v2634 = vadd.f32 0.0, %v2633
      %v2635 = vpop.f32.mrb[0].mxu0
      %2636 = vmatprep.mubr.bf16.mxu0 0
      %2637 = vmatmul.mubr.bf16.gmra.mrb[0].mxu0 %v1743
      %v2638 = vpop.f32.mrb[0].mxu0
      %v2639 = vadd.f32 0.0, %v2638
      %v2640 = vpop.f32.mrb[0].mxu0
      %v2641 = vpop.f32.mrb[0].mxu0
      %v2642 = vadd.f32 0.0, %v2641
      %v2643 = vpop.f32.mrb[0].mxu0
      %2644 = vmatprep.mubr.bf16.mxu0 0
      %2645 = vmatmul.mubr.bf16.gmra.mrb[0].mxu0 %v1744
      %v2646 = vpop.f32.mrb[0].mxu0
      %v2647 = vadd.f32 0.0, %v2646
      %v2648 = vpop.f32.mrb[0].mxu0
      %v2649 = vpop.f32.mrb[0].mxu0
      %v2650 = vadd.f32 0.0, %v2649
      %v2651 = vpop.f32.mrb[0].mxu0
      %2652 = vmatprep.mubr.bf16.mxu0 0
      %2653 = vmatmul.mubr.bf16.gmra.mrb[0].mxu0 %v1745
      %v2654 = vpop.f32.mrb[0].mxu0
      %v2655 = vadd.f32 0.0, %v2654
      %v2656 = vpop.f32.mrb[0].mxu0
      %v2657 = vpop.f32.mrb[0].mxu0
      %v2658 = vadd.f32 0.0, %v2657
      %v2659 = vpop.f32.mrb[0].mxu0
      %2660 = vmatprep.mubr.bf16.mxu0 0
      %2661 = vmatmul.mubr.bf16.gmra.mrb[0].mxu0 %v1746
      %v2662 = vpop.f32.mrb[0].mxu0
      %v2663 = vadd.f32 0.0, %v2662
      %v2664 = vpop.f32.mrb[0].mxu0
      %v2665 = vpop.f32.mrb[0].mxu0
      %v2666 = vadd.f32 0.0, %v2665
      %v2667 = vpop.f32.mrb[0].mxu0
      %2668 = vmatprep.mubr.bf16.mxu0 0
      %2669 = vmatmul.mubr.bf16.gmra.mrb[0].mxu0 %v1747
      %v2670 = vpop.f32.mrb[0].mxu0
      %v2671 = vadd.f32 0.0, %v2670
      %v2672 = vpop.f32.mrb[0].mxu0
      %v2673 = vpop.f32.mrb[0].mxu0
      %v2674 = vadd.f32 0.0, %v2673
      %v2675 = vpop.f32.mrb[0].mxu0
      %2676 = vmatprep.mubr.bf16.mxu0 0
      %2677 = vmatmul.mubr.bf16.gmra.mrb[0].mxu0 %v1748
      %v2678 = vpop.f32.mrb[0].mxu0
      %v2679 = vadd.f32 0.0, %v2678
      %v2680 = vpop.f32.mrb[0].mxu0
      %v2681 = vpop.f32.mrb[0].mxu0
      %v2682 = vadd.f32 0.0, %v2681
      %v2683 = vpop.f32.mrb[0].mxu0
      %2684 = vmatprep.mubr.bf16.mxu0 0
      %2685 = vmatmul.mubr.bf16.gmra.mrb[0].mxu0 %v1749
      %v2686 = vpop.f32.mrb[0].mxu0
      %v2687 = vadd.f32 0.0, %v2686
      %v2688 = vpop.f32.mrb[0].mxu0
      %v2689 = vpop.f32.mrb[0].mxu0
      %v2690 = vadd.f32 0.0, %v2689
      %v2691 = vpop.f32.mrb[0].mxu0
      %2692 = vmatprep.mubr.bf16.mxu0 0
      %2693 = vmatmul.mubr.bf16.gmra.mrb[0].mxu0 %v1750
      %v2694 = vpop.f32.mrb[0].mxu0
      %v2695 = vadd.f32 0.0, %v2694
      %v2696 = vpop.f32.mrb[0].mxu0
      %v2697 = vpop.f32.mrb[0].mxu0
      %v2698 = vadd.f32 0.0, %v2697
      %v2699 = vpop.f32.mrb[0].mxu0
      %2700 = vmatprep.mubr.bf16.mxu0 0
      %2701 = vmatmul.mubr.bf16.gmra.mrb[0].mxu0 %v1751
      %v2702 = vpop.f32.mrb[0].mxu0
      %v2703 = vadd.f32 0.0, %v2702
      %v2704 = vpop.f32.mrb[0].mxu0
      %v2705 = vpop.f32.mrb[0].mxu0
      %v2706 = vadd.f32 0.0, %v2705
      %v2707 = vpop.f32.mrb[0].mxu0
      %2708 = vmatprep.mubr.bf16.mxu0 0
      %2709 = vmatmul.mubr.bf16.gmra.mrb[0].mxu0 %v1752
      %v2710 = vpop.f32.mrb[0].mxu0
      %v2711 = vadd.f32 0.0, %v2710
      %v2712 = vpop.f32.mrb[0].mxu0
      %v2713 = vpop.f32.mrb[0].mxu0
      %v2714 = vadd.f32 0.0, %v2713
      %v2715 = vpop.f32.mrb[0].mxu0
      %2716 = vmatprep.mubr.bf16.mxu0 0
      %2717 = vmatmul.mubr.bf16.gmra.mrb[0].mxu0 %v1753
      %v2718 = vpop.f32.mrb[0].mxu0
      %v2719 = vadd.f32 0.0, %v2718
      %v2720 = vpop.f32.mrb[0].mxu0
      %v2721 = vpop.f32.mrb[0].mxu0
      %v2722 = vadd.f32 0.0, %v2721
      %v2723 = vpop.f32.mrb[0].mxu0
      %2724 = vmatprep.mubr.bf16.mxu0 0
      %2725 = vmatmul.mubr.bf16.gmra.mrb[0].mxu0 %v1754
      %v2726 = vpop.f32.mrb[0].mxu0
      %v2727 = vadd.f32 0.0, %v2726
      %v2728 = vpop.f32.mrb[0].mxu0
      %v2729 = vpop.f32.mrb[0].mxu0
      %v2730 = vadd.f32 0.0, %v2729
      %v2731 = vpop.f32.mrb[0].mxu0
      %2732 = vmatprep.mubr.bf16.mxu0 0
      %2733 = vmatmul.mubr.bf16.gmra.mrb[0].mxu0 %v1755
      %v2734 = vpop.f32.mrb[0].mxu0
      %v2735 = vadd.f32 0.0, %v2734
      %v2736 = vpop.f32.mrb[0].mxu0
      %v2737 = vpop.f32.mrb[0].mxu0
      %v2738 = vadd.f32 0.0, %v2737
      %v2739 = vpop.f32.mrb[0].mxu0
      %2740 = vmatprep.mubr.bf16.mxu0 0
      %2741 = vmatmul.mubr.bf16.gmra.mrb[0].mxu0 %v1756
      %v2742 = vpop.f32.mrb[0].mxu0
      %v2743 = vadd.f32 0.0, %v2742
      %v2744 = vpop.f32.mrb[0].mxu0
      %v2745 = vpop.f32.mrb[0].mxu0
      %v2746 = vadd.f32 0.0, %v2745
      %v2747 = vpop.f32.mrb[0].mxu0
      %2748 = vmatprep.mubr.bf16.mxu0 0
      %2749 = vmatmul.mubr.bf16.gmra.mrb[0].mxu0 %v1757
      %v2750 = vpop.f32.mrb[0].mxu0
      %v2751 = vadd.f32 0.0, %v2750
      %v2752 = vpop.f32.mrb[0].mxu0
      %v2753 = vpop.f32.mrb[0].mxu0
      %v2754 = vadd.f32 0.0, %v2753
      %v2755 = vpop.f32.mrb[0].mxu0
      %2756 = vmatprep.mubr.bf16.mxu0 0
      %2757 = vmatmul.mubr.bf16.gmra.mrb[0].mxu0 %v1758
      %v2758 = vpop.f32.mrb[0].mxu0
      %v2759 = vadd.f32 0.0, %v2758
      %v2760 = vpop.f32.mrb[0].mxu0
      %v2761 = vpop.f32.mrb[0].mxu0
      %v2762 = vadd.f32 0.0, %v2761
      %v2763 = vpop.f32.mrb[0].mxu0
      %2764 = vmatprep.mubr.bf16.mxu0 0
      %2765 = vmatmul.mubr.bf16.gmra.mrb[0].mxu0 %v1759
      %v2766 = vpop.f32.mrb[0].mxu0
      %v2767 = vadd.f32 0.0, %v2766
      %v2768 = vpop.f32.mrb[0].mxu0
      %v2769 = vpop.f32.mrb[0].mxu0
      %v2770 = vadd.f32 0.0, %v2769
      %v2771 = vpop.f32.mrb[0].mxu0
      %2772 = vmatprep.mubr.bf16.mxu0 0
      %2773 = vmatmul.mubr.bf16.gmra.mrb[0].mxu0 %v1760
      %v2774 = vpop.f32.mrb[0].mxu0
      %v2775 = vadd.f32 0.0, %v2774
      %v2776 = vpop.f32.mrb[0].mxu0
      %v2777 = vpop.f32.mrb[0].mxu0
      %v2778 = vadd.f32 0.0, %v2777
      %v2779 = vpop.f32.mrb[0].mxu0
      %2780 = vmatprep.mubr.bf16.mxu0 0
      %2781 = vmatmul.mubr.bf16.gmra.mrb[0].mxu0 %v1761
      %v2782 = vpop.f32.mrb[0].mxu0
      %v2783 = vadd.f32 0.0, %v2782
      %v2784 = vpop.f32.mrb[0].mxu0
      %v2785 = vpop.f32.mrb[0].mxu0
      %v2786 = vadd.f32 0.0, %v2785
      %v2787 = vpop.f32.mrb[0].mxu0
      %2788 = vmatprep.mubr.bf16.mxu0 0
      %2789 = vmatmul.mubr.bf16.gmra.mrb[0].mxu0 %v1762
      %v2790 = vpop.f32.mrb[0].mxu0
      %v2791 = vadd.f32 0.0, %v2790
      %v2792 = vpop.f32.mrb[0].mxu0
      %v2793 = vpop.f32.mrb[0].mxu0
      %v2794 = vadd.f32 0.0, %v2793
      %v2795 = vpop.f32.mrb[0].mxu0
      %2796 = vmatprep.mubr.bf16.mxu0 0
      %2797 = vmatmul.mubr.bf16.gmra.mrb[0].mxu0 %v1763
      %v2798 = vpop.f32.mrb[0].mxu0
      %v2799 = vadd.f32 0.0, %v2798
      %v2800 = vpop.f32.mrb[0].mxu0
      %v2801 = vpop.f32.mrb[0].mxu0
      %v2802 = vadd.f32 0.0, %v2801
      %v2803 = vpop.f32.mrb[0].mxu0
      %2804 = vmatprep.mubr.bf16.mxu0 0
      %2805 = vmatmul.mubr.bf16.gmra.mrb[0].mxu0 %v1764
      %v2806 = vpop.f32.mrb[0].mxu0
      %v2807 = vadd.f32 0.0, %v2806
      %v2808 = vpop.f32.mrb[0].mxu0
      %v2809 = vpop.f32.mrb[0].mxu0
      %v2810 = vadd.f32 0.0, %v2809
      %v2811 = vpop.f32.mrb[0].mxu0
      %2812 = vmatprep.mubr.bf16.mxu0 0
      %2813 = vmatmul.mubr.bf16.gmra.mrb[0].mxu0 %v1765
      %v2814 = vpop.f32.mrb[0].mxu0
      %v2815 = vadd.f32 0.0, %v2814
      %v2816 = vpop.f32.mrb[0].mxu0
      %v2817 = vpop.f32.mrb[0].mxu0
      %v2818 = vadd.f32 0.0, %v2817
      %v2819 = vpop.f32.mrb[0].mxu0
      %2820 = vmatprep.mubr.bf16.mxu0 0
      %2821 = vmatmul.mubr.bf16.gmra.mrb[0].mxu0 %v1766
      %v2822 = vpop.f32.mrb[0].mxu0
      %v2823 = vadd.f32 0.0, %v2822
      %v2824 = vpop.f32.mrb[0].mxu0
      %v2825 = vpop.f32.mrb[0].mxu0
      %v2826 = vadd.f32 0.0, %v2825
      %v2827 = vpop.f32.mrb[0].mxu0
      %2828 = vmatprep.mubr.bf16.mxu0 0
      %2829 = vmatmul.mubr.bf16.gmra.mrb[0].mxu0 %v1767
      %v2830 = vpop.f32.mrb[0].mxu0
      %v2831 = vadd.f32 0.0, %v2830
      %v2832 = vpop.f32.mrb[0].mxu0
      %v2833 = vpop.f32.mrb[0].mxu0
      %v2834 = vadd.f32 0.0, %v2833
      %v2835 = vpop.f32.mrb[0].mxu0
      %2836 = vmatprep.mubr.bf16.mxu0 0
      %2837 = vmatmul.mubr.bf16.gmra.mrb[0].mxu0 %v1768
      %v2838 = vpop.f32.mrb[0].mxu0
      %v2839 = vadd.f32 0.0, %v2838
      %v2840 = vpop.f32.mrb[0].mxu0
      %v2841 = vpop.f32.mrb[0].mxu0
      %v2842 = vadd.f32 0.0, %v2841
      %v2843 = vpop.f32.mrb[0].mxu0
      %2844 = vmatprep.mubr.bf16.mxu0 0
      %2845 = vmatmul.mubr.bf16.gmra.mrb[0].mxu0 %v1769
      %v2846 = vpop.f32.mrb[0].mxu0
      %v2847 = vadd.f32 0.0, %v2846
      %v2848 = vpop.f32.mrb[0].mxu0
      %v2849 = vpop.f32.mrb[0].mxu0
      %v2850 = vadd.f32 0.0, %v2849
      %v2851 = vpop.f32.mrb[0].mxu0
      %2852 = vmatprep.mubr.bf16.mxu0 0
      %2853 = vmatmul.mubr.bf16.gmra.mrb[0].mxu0 %v1770
      %v2854 = vpop.f32.mrb[0].mxu0
      %v2855 = vadd.f32 0.0, %v2854
      %v2856 = vpop.f32.mrb[0].mxu0
      %v2857 = vpop.f32.mrb[0].mxu0
      %v2858 = vadd.f32 0.0, %v2857
      %v2859 = vpop.f32.mrb[0].mxu0
      %2860 = vmatprep.mubr.bf16.mxu0 0
      %2861 = vmatmul.mubr.bf16.gmra.mrb[0].mxu0 %v1771
      %v2862 = vpop.f32.mrb[0].mxu0
      %v2863 = vadd.f32 0.0, %v2862
      %v2864 = vpop.f32.mrb[0].mxu0
      %v2865 = vpop.f32.mrb[0].mxu0
      %v2866 = vadd.f32 0.0, %v2865
      %v2867 = vpop.f32.mrb[0].mxu0
      %2868 = vmatprep.mubr.bf16.mxu0 0
      %2869 = vmatmul.mubr.bf16.gmra.mrb[0].mxu0 %v1772
      %v2870 = vpop.f32.mrb[0].mxu0
      %v2871 = vadd.f32 0.0, %v2870
      %v2872 = vpop.f32.mrb[0].mxu0
      %v2873 = vpop.f32.mrb[0].mxu0
      %v2874 = vadd.f32 0.0, %v2873
      %v2875 = vpop.f32.mrb[0].mxu0
      %2876 = vmatprep.mubr.bf16.mxu0 0
      %2877 = vmatmul.mubr.bf16.gmra.mrb[0].mxu0 %v1773
      %v2878 = vpop.f32.mrb[0].mxu0
      %v2879 = vadd.f32 0.0, %v2878
      %v2880 = vpop.f32.mrb[0].mxu0
      %v2881 = vpop.f32.mrb[0].mxu0
      %v2882 = vadd.f32 0.0, %v2881
      %v2883 = vpop.f32.mrb[0].mxu0
      %2884 = vmatprep.mubr.bf16.mxu0 0
      %2885 = vmatmul.mubr.bf16.gmra.mrb[0].mxu0 %v1774
      %v2886 = vpop.f32.mrb[0].mxu0
      %v2887 = vadd.f32 0.0, %v2886
      %v2888 = vpop.f32.mrb[0].mxu0
      %v2889 = vpop.f32.mrb[0].mxu0
      %v2890 = vadd.f32 0.0, %v2889
      %v2891 = vpop.f32.mrb[0].mxu0
      %2892 = vmatprep.mubr.bf16.mxu0 0
      %2893 = vmatmul.mubr.bf16.gmra.mrb[0].mxu0 %v1775
      %v2894 = vpop.f32.mrb[0].mxu0
      %v2895 = vadd.f32 0.0, %v2894
      %v2896 = vpop.f32.mrb[0].mxu0
      %v2897 = vpop.f32.mrb[0].mxu0
      %v2898 = vadd.f32 0.0, %v2897
      %v2899 = vpop.f32.mrb[0].mxu0
      %2900 = vmatprep.mubr.bf16.mxu0 0
      %2901 = vmatmul.mubr.bf16.gmra.mrb[0].mxu0 %v1776
      %v2902 = vpop.f32.mrb[0].mxu0
      %v2903 = vadd.f32 0.0, %v2902
      %v2904 = vpop.f32.mrb[0].mxu0
      %v2905 = vpop.f32.mrb[0].mxu0
      %v2906 = vadd.f32 0.0, %v2905
      %v2907 = vpop.f32.mrb[0].mxu0
      %2908 = vmatprep.mubr.bf16.mxu0 0
      %2909 = vmatmul.mubr.bf16.gmra.mrb[0].mxu0 %v1777
      %v2910 = vpop.f32.mrb[0].mxu0
      %v2911 = vadd.f32 0.0, %v2910
      %v2912 = vpop.f32.mrb[0].mxu0
      %v2913 = vpop.f32.mrb[0].mxu0
      %v2914 = vadd.f32 0.0, %v2913
      %v2915 = vpop.f32.mrb[0].mxu0
      %2916 = vmatprep.mubr.bf16.mxu0 0
      %2917 = vmatmul.mubr.bf16.gmra.mrb[0].mxu0 %v1778
      %v2918 = vpop.f32.mrb[0].mxu0
      %v2919 = vadd.f32 0.0, %v2918
      %v2920 = vpop.f32.mrb[0].mxu0
      %v2921 = vpop.f32.mrb[0].mxu0
      %v2922 = vadd.f32 0.0, %v2921
      %v2923 = vpop.f32.mrb[0].mxu0
      %2924 = vmatprep.mubr.bf16.mxu0 0
      %2925 = vmatmul.mubr.bf16.gmra.mrb[0].mxu0 %v1779
      %v2926 = vpop.f32.mrb[0].mxu0
      %v2927 = vadd.f32 0.0, %v2926
      %v2928 = vpop.f32.mrb[0].mxu0
      %v2929 = vpop.f32.mrb[0].mxu0
      %v2930 = vadd.f32 0.0, %v2929
      %v2931 = vpop.f32.mrb[0].mxu0
      %2932 = vmatprep.mubr.bf16.mxu0 0
      %2933 = vmatmul.mubr.bf16.gmra.mrb[0].mxu0 %v1780
      %v2934 = vpop.f32.mrb[0].mxu0
      %v2935 = vadd.f32 0.0, %v2934
      %v2936 = vpop.f32.mrb[0].mxu0
      %v2937 = vpop.f32.mrb[0].mxu0
      %v2938 = vadd.f32 0.0, %v2937
      %v2939 = vpop.f32.mrb[0].mxu0
      %2940 = vmatprep.mubr.bf16.mxu0 0
      %2941 = vmatmul.mubr.bf16.gmra.mrb[0].mxu0 %v1781
      %v2942 = vpop.f32.mrb[0].mxu0
      %v2943 = vadd.f32 0.0, %v2942
      %v2944 = vpop.f32.mrb[0].mxu0
      %v2945 = vpop.f32.mrb[0].mxu0
      %v2946 = vadd.f32 0.0, %v2945
      %v2947 = vpop.f32.mrb[0].mxu0
      %2948 = vmatprep.mubr.bf16.mxu0 0
      %2949 = vmatmul.mubr.bf16.gmra.mrb[0].mxu0 %v1782
      %v2950 = vpop.f32.mrb[0].mxu0
      %v2951 = vadd.f32 0.0, %v2950
      %v2952 = vpop.f32.mrb[0].mxu0
      %v2953 = vpop.f32.mrb[0].mxu0
      %v2954 = vadd.f32 0.0, %v2953
      %v2955 = vpop.f32.mrb[0].mxu0
      %2956 = vmatprep.mubr.bf16.mxu0 0
      %2957 = vmatmul.mubr.bf16.gmra.mrb[0].mxu0 %v1783
      %v2958 = vpop.f32.mrb[0].mxu0
      %v2959 = vadd.f32 0.0, %v2958
      %v2960 = vpop.f32.mrb[0].mxu0
      %v2961 = vpop.f32.mrb[0].mxu0
      %v2962 = vadd.f32 0.0, %v2961
      %v2963 = vpop.f32.mrb[0].mxu0
      %2964 = vmatprep.mubr.bf16.mxu0 0
      %2965 = vmatmul.mubr.bf16.gmra.mrb[0].mxu0 %v1784
      %v2966 = vpop.f32.mrb[0].mxu0
      %v2967 = vadd.f32 0.0, %v2966
      %v2968 = vpop.f32.mrb[0].mxu0
      %v2969 = vpop.f32.mrb[0].mxu0
      %v2970 = vadd.f32 0.0, %v2969
      %v2971 = vpop.f32.mrb[0].mxu0
      %2972 = vmatprep.mubr.bf16.mxu0 0
      %2973 = vmatmul.mubr.bf16.gmra.mrb[0].mxu0 %v1785
      %v2974 = vpop.f32.mrb[0].mxu0
      %v2975 = vadd.f32 0.0, %v2974
      %v2976 = vpop.f32.mrb[0].mxu0
      %v2977 = vpop.f32.mrb[0].mxu0
      %v2978 = vadd.f32 0.0, %v2977
      %v2979 = vpop.f32.mrb[0].mxu0
      %2980 = vmatprep.mubr.bf16.mxu0 0
      %2981 = vmatmul.mubr.bf16.gmra.mrb[0].mxu0 %v1786
      %v2982 = vpop.f32.mrb[0].mxu0
      %v2983 = vadd.f32 0.0, %v2982
      %v2984 = vpop.f32.mrb[0].mxu0
      %v2985 = vpop.f32.mrb[0].mxu0
      %v2986 = vadd.f32 0.0, %v2985
      %v2987 = vpop.f32.mrb[0].mxu0
      %2988 = vmatprep.mubr.bf16.mxu0 0
      %2989 = vmatmul.mubr.bf16.gmra.mrb[0].mxu0 %v1787
      %v2990 = vpop.f32.mrb[0].mxu0
      %v2991 = vadd.f32 0.0, %v2990
      %v2992 = vpop.f32.mrb[0].mxu0
      %v2993 = vpop.f32.mrb[0].mxu0
      %v2994 = vadd.f32 0.0, %v2993
      %v2995 = vpop.f32.mrb[0].mxu0
      %2996 = vmatprep.mubr.bf16.mxu0 0
      %2997 = vmatmul.mubr.bf16.gmra.mrb[0].mxu0 %v1788
      %v2998 = vpop.f32.mrb[0].mxu0
      %v2999 = vadd.f32 0.0, %v2998
      %v3000 = vpop.f32.mrb[0].mxu0
      %v3001 = vpop.f32.mrb[0].mxu0
      %v3002 = vadd.f32 0.0, %v3001
      %v3003 = vpop.f32.mrb[0].mxu0
      %3004 = vmatprep.mubr.bf16.mxu0 0
      %3005 = vmatmul.mubr.bf16.gmra.mrb[0].mxu0 %v1789
      %v3006 = vpop.f32.mrb[0].mxu0
      %v3007 = vadd.f32 0.0, %v3006
      %v3008 = vpop.f32.mrb[0].mxu0
      %v3009 = vpop.f32.mrb[0].mxu0
      %v3010 = vadd.f32 0.0, %v3009
      %v3011 = vpop.f32.mrb[0].mxu0
      %3012 = vmatprep.mubr.bf16.mxu0 0
      %3013 = vmatmul.mubr.bf16.gmra.mrb[0].mxu0 %v1790
      %v3014 = vpop.f32.mrb[0].mxu0
      %v3015 = vadd.f32 0.0, %v3014
      %v3016 = vpop.f32.mrb[0].mxu0
      %v3017 = vpop.f32.mrb[0].mxu0
      %v3018 = vadd.f32 0.0, %v3017
      %v3019 = vpop.f32.mrb[0].mxu0
      %3020 = vmatprep.mubr.bf16.mxu0 0
      %3021 = vmatmul.mubr.bf16.gmra.mrb[0].mxu0 %v1791
      %v3022 = vpop.f32.mrb[0].mxu0
      %v3023 = vadd.f32 0.0, %v3022
      %v3024 = vpop.f32.mrb[0].mxu0
      %v3025 = vpop.f32.mrb[0].mxu0
      %v3026 = vadd.f32 0.0, %v3025
      %v3027 = vpop.f32.mrb[0].mxu0
      %3028 = vmatprep.mubr.bf16.mxu0 0
      %3029 = vmatmul.mubr.bf16.gmra.mrb[0].mxu0 %v1792
      %v3030 = vpop.f32.mrb[0].mxu0
      %v3031 = vadd.f32 0.0, %v3030
      %v3032 = vpop.f32.mrb[0].mxu0
      %v3033 = vpop.f32.mrb[0].mxu0
      %v3034 = vadd.f32 0.0, %v3033
      %v3035 = vpop.f32.mrb[0].mxu0
      %3036 = vmatprep.mubr.bf16.mxu0 0
      %3037 = vmatmul.mubr.bf16.gmra.mrb[0].mxu0 %v1793
      %v3038 = vpop.f32.mrb[0].mxu0
      %v3039 = vadd.f32 0.0, %v3038
      %v3040 = vpop.f32.mrb[0].mxu0
      %v3041 = vpop.f32.mrb[0].mxu0
      %v3042 = vadd.f32 0.0, %v3041
      %v3043 = vpop.f32.mrb[0].mxu0
      %3044 = vmatprep.mubr.bf16.mxu0 0
      %3045 = vmatmul.mubr.bf16.gmra.mrb[0].mxu0 %v1794
      %v3046 = vpop.f32.mrb[0].mxu0
      %v3047 = vadd.f32 0.0, %v3046
      %v3048 = vpop.f32.mrb[0].mxu0
      %v3049 = vpop.f32.mrb[0].mxu0
      %v3050 = vadd.f32 0.0, %v3049
      %v3051 = vpop.f32.mrb[0].mxu0
      %3052 = vmatprep.mubr.bf16.mxu0 0
      %3053 = vmatmul.mubr.bf16.gmra.mrb[0].mxu0 %v1795
      %v3054 = vpop.f32.mrb[0].mxu0
      %v3055 = vadd.f32 0.0, %v3054
      %v3056 = vpop.f32.mrb[0].mxu0
      %v3057 = vpop.f32.mrb[0].mxu0
      %v3058 = vadd.f32 0.0, %v3057
      %v3059 = vpop.f32.mrb[0].mxu0
      %3060 = vmatprep.mubr.bf16.mxu0 0
      %3061 = vmatmul.mubr.bf16.gmra.mrb[0].mxu0 %v1796
      %v3062 = vpop.f32.mrb[0].mxu0
      %v3063 = vadd.f32 0.0, %v3062
      %v3064 = vpop.f32.mrb[0].mxu0
      %v3065 = vpop.f32.mrb[0].mxu0
      %v3066 = vadd.f32 0.0, %v3065
      %v3067 = vpop.f32.mrb[0].mxu0
      %3068 = vmatprep.mubr.bf16.mxu0 0
      %3069 = vmatmul.mubr.bf16.gmra.mrb[0].mxu0 %v1797
      %v3070 = vpop.f32.mrb[0].mxu0
      %v3071 = vadd.f32 0.0, %v3070
      %v3072 = vpop.f32.mrb[0].mxu0
      %v3073 = vpop.f32.mrb[0].mxu0
      %v3074 = vadd.f32 0.0, %v3073
      %v3075 = vpop.f32.mrb[0].mxu0
      %3076 = vmatprep.mubr.bf16.mxu0 0
      %3077 = vmatmul.mubr.bf16.gmra.mrb[0].mxu0 %v1798
      %v3078 = vpop.f32.mrb[0].mxu0
      %v3079 = vadd.f32 0.0, %v3078
      %v3080 = vpop.f32.mrb[0].mxu0
      %v3081 = vpop.f32.mrb[0].mxu0
      %v3082 = vadd.f32 0.0, %v3081
      %v3083 = vpop.f32.mrb[0].mxu0
      %3084 = vmatprep.mubr.bf16.mxu0 0
      %3085 = vmatmul.mubr.bf16.gmra.mrb[0].mxu0 %v1799
      %v3086 = vpop.f32.mrb[0].mxu0
      %v3087 = vadd.f32 0.0, %v3086
      %v3088 = vpop.f32.mrb[0].mxu0
      %v3089 = vpop.f32.mrb[0].mxu0
      %v3090 = vadd.f32 0.0, %v3089
      %v3091 = vpop.f32.mrb[0].mxu0
      %3092 = vmatprep.mubr.bf16.mxu0 0
      %3093 = vmatmul.mubr.bf16.gmra.mrb[0].mxu0 %v1800
      %v3094 = vpop.f32.mrb[0].mxu0
      %v3095 = vadd.f32 0.0, %v3094
      %v3096 = vpop.f32.mrb[0].mxu0
      %v3097 = vpop.f32.mrb[0].mxu0
      %v3098 = vadd.f32 0.0, %v3097
      %v3099 = vpop.f32.mrb[0].mxu0
      %3100 = vmatprep.mubr.bf16.mxu0 0
      %3101 = vmatmul.mubr.bf16.gmra.mrb[0].mxu0 %v1801
      %v3102 = vpop.f32.mrb[0].mxu0
      %v3103 = vadd.f32 0.0, %v3102
      %v3104 = vpop.f32.mrb[0].mxu0
      %v3105 = vpop.f32.mrb[0].mxu0
      %v3106 = vadd.f32 0.0, %v3105
      %v3107 = vpop.f32.mrb[0].mxu0
      %3108 = vmatprep.mubr.bf16.mxu0 0
      %3109 = vmatmul.mubr.bf16.gmra.mrb[0].mxu0 %v1802
      %v3110 = vpop.f32.mrb[0].mxu0
      %v3111 = vadd.f32 0.0, %v3110
      %v3112 = vpop.f32.mrb[0].mxu0
      %v3113 = vpop.f32.mrb[0].mxu0
      %v3114 = vadd.f32 0.0, %v3113
      %v3115 = vpop.f32.mrb[0].mxu0
      %3116 = vmatprep.mubr.bf16.mxu0 0
      %3117 = vmatmul.mubr.bf16.gmra.mrb[0].mxu0 %v1803
      %v3118 = vpop.f32.mrb[0].mxu0
      %v3119 = vadd.f32 0.0, %v3118
      %v3120 = vpop.f32.mrb[0].mxu0
      %v3121 = vpop.f32.mrb[0].mxu0
      %v3122 = vadd.f32 0.0, %v3121
      %v3123 = vpop.f32.mrb[0].mxu0
      %3124 = vmatprep.mubr.bf16.mxu0 0
      %3125 = vmatmul.mubr.bf16.gmra.mrb[0].mxu0 %v1804
      %v3126 = vpop.f32.mrb[0].mxu0
      %v3127 = vadd.f32 0.0, %v3126
      %v3128 = vpop.f32.mrb[0].mxu0
      %v3129 = vpop.f32.mrb[0].mxu0
      %v3130 = vadd.f32 0.0, %v3129
      %v3131 = vpop.f32.mrb[0].mxu0
      %3132 = vmatprep.mubr.bf16.mxu0 0
      %3133 = vmatmul.mubr.bf16.gmra.mrb[0].mxu0 %v1805
      %v3134 = vpop.f32.mrb[0].mxu0
      %v3135 = vadd.f32 0.0, %v3134
      %v3136 = vpop.f32.mrb[0].mxu0
      %v3137 = vpop.f32.mrb[0].mxu0
      %v3138 = vadd.f32 0.0, %v3137
      %v3139 = vpop.f32.mrb[0].mxu0
      %3140 = vmatprep.mubr.bf16.mxu0 0
      %3141 = vmatmul.mubr.bf16.gmra.mrb[0].mxu0 %v1806
      %v3142 = vpop.f32.mrb[0].mxu0
      %v3143 = vadd.f32 0.0, %v3142
      %v3144 = vpop.f32.mrb[0].mxu0
      %v3145 = vpop.f32.mrb[0].mxu0
      %v3146 = vadd.f32 0.0, %v3145
      %v3147 = vpop.f32.mrb[0].mxu0
      %3148 = vmatprep.mubr.bf16.mxu0 0
      %3149 = vmatmul.mubr.bf16.gmra.mrb[0].mxu0 %v1807
      %v3150 = vpop.f32.mrb[0].mxu0
      %v3151 = vadd.f32 0.0, %v3150
      %v3152 = vpop.f32.mrb[0].mxu0
      %v3153 = vpop.f32.mrb[0].mxu0
      %v3154 = vadd.f32 0.0, %v3153
      %v3155 = vpop.f32.mrb[0].mxu0
      %3156 = vmatprep.mubr.bf16.mxu0 0
      %3157 = vmatmul.mubr.bf16.gmra.mrb[0].mxu0 %v1808
      %v3158 = vpop.f32.mrb[0].mxu0
      %v3159 = vadd.f32 0.0, %v3158
      %v3160 = vpop.f32.mrb[0].mxu0
      %v3161 = vpop.f32.mrb[0].mxu0
      %v3162 = vadd.f32 0.0, %v3161
      %v3163 = vpop.f32.mrb[0].mxu0
      %3164 = vmatprep.mubr.bf16.mxu0 0
      %3165 = vmatmul.mubr.bf16.gmra.mrb[0].mxu0 %v1809
      %v3166 = vpop.f32.mrb[0].mxu0
      %v3167 = vadd.f32 0.0, %v3166
      %v3168 = vpop.f32.mrb[0].mxu0
      %v3169 = vpop.f32.mrb[0].mxu0
      %v3170 = vadd.f32 0.0, %v3169
      %v3171 = vpop.f32.mrb[0].mxu0
      %3172 = vmatprep.mubr.bf16.mxu0 0
      %3173 = vmatmul.mubr.bf16.gmra.mrb[0].mxu0 %v1810
      %v3174 = vpop.f32.mrb[0].mxu0
      %v3175 = vadd.f32 0.0, %v3174
      %v3176 = vpop.f32.mrb[0].mxu0
      %v3177 = vpop.f32.mrb[0].mxu0
      %v3178 = vadd.f32 0.0, %v3177
      %v3179 = vpop.f32.mrb[0].mxu0
      %3180 = vmatprep.mubr.bf16.mxu0 0
      %3181 = vmatmul.mubr.bf16.gmra.mrb[0].mxu0 %v1811
      %v3182 = vpop.f32.mrb[0].mxu0
      %v3183 = vadd.f32 0.0, %v3182
      %v3184 = vpop.f32.mrb[0].mxu0
      %v3185 = vpop.f32.mrb[0].mxu0
      %v3186 = vadd.f32 0.0, %v3185
      %v3187 = vpop.f32.mrb[0].mxu0
      %3188 = vmatprep.mubr.bf16.mxu0 0
      %3189 = vmatmul.mubr.bf16.gmra.mrb[0].mxu0 %v1812
      %v3190 = vpop.f32.mrb[0].mxu0
      %v3191 = vadd.f32 0.0, %v3190
      %v3192 = vpop.f32.mrb[0].mxu0
      %v3193 = vpop.f32.mrb[0].mxu0
      %v3194 = vadd.f32 0.0, %v3193
      %v3195 = vpop.f32.mrb[0].mxu0
      %3196 = vmatprep.mubr.bf16.mxu0 0
      %3197 = vmatmul.mubr.bf16.gmra.mrb[0].mxu0 %v1813
      %v3198 = vpop.f32.mrb[0].mxu0
      %v3199 = vadd.f32 0.0, %v3198
      %v3200 = vpop.f32.mrb[0].mxu0
      %v3201 = vpop.f32.mrb[0].mxu0
      %v3202 = vadd.f32 0.0, %v3201
      %v3203 = vpop.f32.mrb[0].mxu0
      %3204 = vmatprep.mubr.bf16.mxu0 0
      %3205 = vmatmul.mubr.bf16.gmra.mrb[0].mxu0 %v1814
      %v3206 = vpop.f32.mrb[0].mxu0
      %v3207 = vadd.f32 0.0, %v3206
      %v3208 = vpop.f32.mrb[0].mxu0
      %v3209 = vpop.f32.mrb[0].mxu0
      %v3210 = vadd.f32 0.0, %v3209
      %v3211 = vpop.f32.mrb[0].mxu0
      %3212 = vmatprep.mubr.bf16.mxu0 0
      %3213 = vmatmul.mubr.bf16.gmra.mrb[0].mxu0 %v1815
      %v3214 = vpop.f32.mrb[0].mxu0
      %v3215 = vadd.f32 0.0, %v3214
      %v3216 = vpop.f32.mrb[0].mxu0
      %v3217 = vpop.f32.mrb[0].mxu0
      %v3218 = vadd.f32 0.0, %v3217
      %v3219 = vpop.f32.mrb[0].mxu0
      %3220 = vmatprep.mubr.bf16.mxu0 0
      %3221 = vmatmul.mubr.bf16.gmra.mrb[0].mxu0 %v1816
      %v3222 = vpop.f32.mrb[0].mxu0
      %v3223 = vadd.f32 0.0, %v3222
      %v3224 = vpop.f32.mrb[0].mxu0
      %v3225 = vpop.f32.mrb[0].mxu0
      %v3226 = vadd.f32 0.0, %v3225
      %v3227 = vpop.f32.mrb[0].mxu0
      %3228 = vmatprep.mubr.bf16.mxu0 0
      %3229 = vmatmul.mubr.bf16.gmra.mrb[0].mxu0 %v1817
      %v3230 = vpop.f32.mrb[0].mxu0
      %v3231 = vadd.f32 0.0, %v3230
      %v3232 = vpop.f32.mrb[0].mxu0
      %v3233 = vpop.f32.mrb[0].mxu0
      %v3234 = vadd.f32 0.0, %v3233
      %v3235 = vpop.f32.mrb[0].mxu0
      %3236 = vmatprep.mubr.bf16.mxu0 0
      %3237 = vmatmul.mubr.bf16.gmra.mrb[0].mxu0 %v1818
      %v3238 = vpop.f32.mrb[0].mxu0
      %v3239 = vadd.f32 0.0, %v3238
      %v3240 = vpop.f32.mrb[0].mxu0
      %v3241 = vpop.f32.mrb[0].mxu0
      %v3242 = vadd.f32 0.0, %v3241
      %v3243 = vpop.f32.mrb[0].mxu0
      %3244 = vmatprep.mubr.bf16.mxu0 0
      %3245 = vmatmul.mubr.bf16.gmra.mrb[0].mxu0 %v1819
      %v3246 = vpop.f32.mrb[0].mxu0
      %v3247 = vadd.f32 0.0, %v3246
      %v3248 = vpop.f32.mrb[0].mxu0
      %v3249 = vpop.f32.mrb[0].mxu0
      %v3250 = vadd.f32 0.0, %v3249
      %v3251 = vpop.f32.mrb[0].mxu0
      %3252 = vmatprep.mubr.bf16.mxu0 0
      %3253 = vmatmul.mubr.bf16.gmra.mrb[0].mxu0 %v1820
      %v3254 = vpop.f32.mrb[0].mxu0
      %v3255 = vadd.f32 0.0, %v3254
      %v3256 = vpop.f32.mrb[0].mxu0
      %v3257 = vpop.f32.mrb[0].mxu0
      %v3258 = vadd.f32 0.0, %v3257
      %v3259 = vpop.f32.mrb[0].mxu0
      %3260 = vmatprep.mubr.bf16.mxu0 0
      %3261 = vmatmul.mubr.bf16.gmra.mrb[0].mxu0 %v1821
      %v3262 = vpop.f32.mrb[0].mxu0
      %v3263 = vadd.f32 0.0, %v3262
      %v3264 = vpop.f32.mrb[0].mxu0
      %v3265 = vpop.f32.mrb[0].mxu0
      %v3266 = vadd.f32 0.0, %v3265
      %v3267 = vpop.f32.mrb[0].mxu0
      %3268 = vmatprep.mubr.bf16.mxu0 0
      %3269 = vmatmul.mubr.bf16.gmra.mrb[0].mxu0 %v1822
      %v3270 = vpop.f32.mrb[0].mxu0
      %v3271 = vadd.f32 0.0, %v3270
      %v3272 = vpop.f32.mrb[0].mxu0
      %v3273 = vpop.f32.mrb[0].mxu0
      %v3274 = vadd.f32 0.0, %v3273
      %v3275 = vpop.f32.mrb[0].mxu0
      %3276 = vmatprep.mubr.bf16.mxu0 0
      %3277 = vmatmul.mubr.bf16.gmra.mrb[0].mxu0 %v1823
      %v3278 = vpop.f32.mrb[0].mxu0
      %v3279 = vadd.f32 0.0, %v3278
      %v3280 = vpop.f32.mrb[0].mxu0
      %v3281 = vpop.f32.mrb[0].mxu0
      %v3282 = vadd.f32 0.0, %v3281
      %v3283 = vpop.f32.mrb[0].mxu0
      %3284 = vmatprep.mubr.bf16.mxu0 0
      %3285 = vmatmul.mubr.bf16.gmra.mrb[0].mxu0 %v1824
      %v3286 = vpop.f32.mrb[0].mxu0
      %v3287 = vadd.f32 0.0, %v3286
      %v3288 = vpop.f32.mrb[0].mxu0
      %v3289 = vpop.f32.mrb[0].mxu0
      %v3290 = vadd.f32 0.0, %v3289
      %v3291 = vpop.f32.mrb[0].mxu0
      %3292 = vmatprep.mubr.bf16.mxu0 0
      %3293 = vmatmul.mubr.bf16.gmra.mrb[0].mxu0 %v1825
      %v3294 = vpop.f32.mrb[0].mxu0
      %v3295 = vadd.f32 0.0, %v3294
      %v3296 = vpop.f32.mrb[0].mxu0
      %v3297 = vpop.f32.mrb[0].mxu0
      %v3298 = vadd.f32 0.0, %v3297
      %v3299 = vpop.f32.mrb[0].mxu0
      %3300 = vmatprep.mubr.bf16.mxu0 0
      %3301 = vmatmul.mubr.bf16.gmra.mrb[0].mxu0 %v1826
      %v3302 = vpop.f32.mrb[0].mxu0
      %v3303 = vadd.f32 0.0, %v3302
      %v3304 = vpop.f32.mrb[0].mxu0
      %v3305 = vpop.f32.mrb[0].mxu0
      %v3306 = vadd.f32 0.0, %v3305
      %v3307 = vpop.f32.mrb[0].mxu0
      %3308 = vmatprep.mubr.bf16.mxu0 0
      %3309 = vmatmul.mubr.bf16.gmra.mrb[0].mxu0 %v1827
      %v3310 = vpop.f32.mrb[0].mxu0
      %v3311 = vadd.f32 0.0, %v3310
      %v3312 = vpop.f32.mrb[0].mxu0
      %v3313 = vpop.f32.mrb[0].mxu0
      %v3314 = vadd.f32 0.0, %v3313
      %v3315 = vpop.f32.mrb[0].mxu0
      %3316 = vmatprep.mubr.bf16.mxu0 0
      %3317 = vmatmul.mubr.bf16.gmra.mrb[0].mxu0 %v1828
      %v3318 = vpop.f32.mrb[0].mxu0
      %v3319 = vadd.f32 0.0, %v3318
      %v3320 = vpop.f32.mrb[0].mxu0
      %v3321 = vpop.f32.mrb[0].mxu0
      %v3322 = vadd.f32 0.0, %v3321
      %v3323 = vpop.f32.mrb[0].mxu0
      %3324 = vmatprep.mubr.bf16.mxu0 0
      %3325 = vmatmul.mubr.bf16.gmra.mrb[0].mxu0 %v1829
      %v3326 = vpop.f32.mrb[0].mxu0
      %v3327 = vadd.f32 0.0, %v3326
      %v3328 = vpop.f32.mrb[0].mxu0
      %v3329 = vpop.f32.mrb[0].mxu0
      %v3330 = vadd.f32 0.0, %v3329
      %v3331 = vpop.f32.mrb[0].mxu0
      %3332 = vmatprep.mubr.bf16.mxu0 0
      %3333 = vmatmul.mubr.bf16.gmra.mrb[0].mxu0 %v1830
      %v3334 = vpop.f32.mrb[0].mxu0
      %v3335 = vadd.f32 0.0, %v3334
      %v3336 = vpop.f32.mrb[0].mxu0
      %v3337 = vpop.f32.mrb[0].mxu0
      %v3338 = vadd.f32 0.0, %v3337
      %v3339 = vpop.f32.mrb[0].mxu0
      %3340 = vmatprep.mubr.bf16.mxu0 0
      %3341 = vmatmul.mubr.bf16.gmra.mrb[0].mxu0 %v1831
      %v3342 = vpop.f32.mrb[0].mxu0
      %v3343 = vadd.f32 0.0, %v3342
      %v3344 = vpop.f32.mrb[0].mxu0
      %v3345 = vpop.f32.mrb[0].mxu0
      %v3346 = vadd.f32 0.0, %v3345
      %v3347 = vpop.f32.mrb[0].mxu0
      %3348 = vmatprep.mubr.bf16.mxu0 0
      %3349 = vmatmul.mubr.bf16.gmra.mrb[0].mxu0 %v1832
      %v3350 = vpop.f32.mrb[0].mxu0
      %v3351 = vadd.f32 0.0, %v3350
      %v3352 = vpop.f32.mrb[0].mxu0
      %v3353 = vpop.f32.mrb[0].mxu0
      %v3354 = vadd.f32 0.0, %v3353
      %v3355 = vpop.f32.mrb[0].mxu0
      %3356 = vmatprep.mubr.bf16.mxu0 0
      %3357 = vmatmul.mubr.bf16.gmra.mrb[0].mxu0 %v1833
      %v3358 = vpop.f32.mrb[0].mxu0
      %v3359 = vadd.f32 0.0, %v3358
      %v3360 = vpop.f32.mrb[0].mxu0
      %v3361 = vpop.f32.mrb[0].mxu0
      %v3362 = vadd.f32 0.0, %v3361
      %v3363 = vpop.f32.mrb[0].mxu0
      %3364 = vmatprep.mubr.bf16.mxu0 0
      %3365 = vmatmul.mubr.bf16.gmra.mrb[0].mxu0 %v1834
      %v3366 = vpop.f32.mrb[0].mxu0
      %v3367 = vadd.f32 0.0, %v3366
      %v3368 = vpop.f32.mrb[0].mxu0
      %v3369 = vpop.f32.mrb[0].mxu0
      %v3370 = vadd.f32 0.0, %v3369
      %v3371 = vpop.f32.mrb[0].mxu0
      %3372 = vmatprep.mubr.bf16.mxu0 0
      %3373 = vmatmul.mubr.bf16.gmra.mrb[0].mxu0 %v1835
      %v3374 = vpop.f32.mrb[0].mxu0
      %v3375 = vadd.f32 0.0, %v3374
      %v3376 = vpop.f32.mrb[0].mxu0
      %v3377 = vpop.f32.mrb[0].mxu0
      %v3378 = vadd.f32 0.0, %v3377
      %v3379 = vpop.f32.mrb[0].mxu0
      %3380 = vmatprep.mubr.bf16.mxu0 0
      %3381 = vmatmul.mubr.bf16.gmra.mrb[0].mxu0 %v1836
      %v3382 = vpop.f32.mrb[0].mxu0
      %v3383 = vadd.f32 0.0, %v3382
      %v3384 = vpop.f32.mrb[0].mxu0
      %v3385 = vpop.f32.mrb[0].mxu0
      %v3386 = vadd.f32 0.0, %v3385
      %v3387 = vpop.f32.mrb[0].mxu0
      %3388 = vmatprep.mubr.bf16.mxu0 0
      %3389 = vmatmul.mubr.bf16.gmra.mrb[0].mxu0 %v1837
      %v3390 = vpop.f32.mrb[0].mxu0
      %v3391 = vadd.f32 0.0, %v3390
      %v3392 = vpop.f32.mrb[0].mxu0
      %v3393 = vpop.f32.mrb[0].mxu0
      %v3394 = vadd.f32 0.0, %v3393
      %v3395 = vpop.f32.mrb[0].mxu0
      %3396 = vmatprep.mubr.bf16.mxu0 0
      %3397 = vmatmul.mubr.bf16.gmra.mrb[0].mxu0 %v1838
      %v3398 = vpop.f32.mrb[0].mxu0
      %v3399 = vadd.f32 0.0, %v3398
      %v3400 = vpop.f32.mrb[0].mxu0
      %v3401 = vpop.f32.mrb[0].mxu0
      %v3402 = vadd.f32 0.0, %v3401
      %v3403 = vpop.f32.mrb[0].mxu0
      %3404 = vmatprep.mubr.bf16.mxu0 0
      %3405 = vmatmul.mubr.bf16.gmra.mrb[0].mxu0 %v1839
      %v3406 = vpop.f32.mrb[0].mxu0
      %v3407 = vadd.f32 0.0, %v3406
      %v3408 = vpop.f32.mrb[0].mxu0
      %v3409 = vpop.f32.mrb[0].mxu0
      %v3410 = vadd.f32 0.0, %v3409
      %v3411 = vpop.f32.mrb[0].mxu0
      %3412 = vmatprep.mubr.bf16.mxu0 0
      %3413 = vmatmul.mubr.bf16.gmra.mrb[0].mxu0 %v1840
      %v3414 = vpop.f32.mrb[0].mxu0
      %v3415 = vadd.f32 0.0, %v3414
      %v3416 = vpop.f32.mrb[0].mxu0
      %v3417 = vpop.f32.mrb[0].mxu0
      %v3418 = vadd.f32 0.0, %v3417
      %v3419 = vpop.f32.mrb[0].mxu0
      %3420 = vmatprep.mubr.bf16.mxu0 0
      %3421 = vmatmul.mubr.bf16.gmra.mrb[0].mxu0 %v1841
      %v3422 = vpop.f32.mrb[0].mxu0
      %v3423 = vadd.f32 0.0, %v3422
      %v3424 = vpop.f32.mrb[0].mxu0
      %v3425 = vpop.f32.mrb[0].mxu0
      %v3426 = vadd.f32 0.0, %v3425
      %v3427 = vpop.f32.mrb[0].mxu0
      %3428 = vmatprep.mubr.bf16.mxu0 0
      %3429 = vmatmul.mubr.bf16.gmra.mrb[0].mxu0 %v1842
      %v3430 = vpop.f32.mrb[0].mxu0
      %v3431 = vadd.f32 0.0, %v3430
      %v3432 = vpop.f32.mrb[0].mxu0
      %v3433 = vpop.f32.mrb[0].mxu0
      %v3434 = vadd.f32 0.0, %v3433
      %v3435 = vpop.f32.mrb[0].mxu0
      %3436 = vmatprep.mubr.bf16.mxu0 0
      %3437 = vmatmul.mubr.bf16.gmra.mrb[0].mxu0 %v1843
      %v3438 = vpop.f32.mrb[0].mxu0
      %v3439 = vadd.f32 0.0, %v3438
      %v3440 = vpop.f32.mrb[0].mxu0
      %v3441 = vpop.f32.mrb[0].mxu0
      %v3442 = vadd.f32 0.0, %v3441
      %v3443 = vpop.f32.mrb[0].mxu0
      %3444 = vmatprep.mubr.bf16.mxu0 0
      %3445 = vmatmul.mubr.bf16.gmra.mrb[0].mxu0 %v1844
      %v3446 = vpop.f32.mrb[0].mxu0
      %v3447 = vadd.f32 0.0, %v3446
      %v3448 = vpop.f32.mrb[0].mxu0
      %v3449 = vpop.f32.mrb[0].mxu0
      %v3450 = vadd.f32 0.0, %v3449
      %v3451 = vpop.f32.mrb[0].mxu0
      %3452 = vmatprep.mubr.bf16.mxu0 0
      %3453 = vmatmul.mubr.bf16.gmra.mrb[0].mxu0 %v1845
      %v3454 = vpop.f32.mrb[0].mxu0
      %v3455 = vadd.f32 0.0, %v3454
      %v3456 = vpop.f32.mrb[0].mxu0
      %v3457 = vpop.f32.mrb[0].mxu0
      %v3458 = vadd.f32 0.0, %v3457
      %v3459 = vpop.f32.mrb[0].mxu0
      %3460 = vmatprep.mubr.bf16.mxu0 0
      %3461 = vmatmul.mubr.bf16.gmra.mrb[0].mxu0 %v1846
      %v3462 = vpop.f32.mrb[0].mxu0
      %v3463 = vadd.f32 0.0, %v3462
      %v3464 = vpop.f32.mrb[0].mxu0
      %v3465 = vpop.f32.mrb[0].mxu0
      %v3466 = vadd.f32 0.0, %v3465
      %v3467 = vpop.f32.mrb[0].mxu0
      %3468 = vmatprep.mubr.bf16.mxu0 0
      %3469 = vmatmul.mubr.bf16.gmra.mrb[0].mxu0 %v1847
      %v3470 = vpop.f32.mrb[0].mxu0
      %v3471 = vadd.f32 0.0, %v3470
      %v3472 = vpop.f32.mrb[0].mxu0
      %v3473 = vpop.f32.mrb[0].mxu0
      %v3474 = vadd.f32 0.0, %v3473
      %v3475 = vpop.f32.mrb[0].mxu0
      %3476 = vmatprep.mubr.bf16.mxu0 0
      %3477 = vmatmul.mubr.bf16.gmra.mrb[0].mxu0 %v1848
      %v3478 = vpop.f32.mrb[0].mxu0
      %v3479 = vadd.f32 0.0, %v3478
      %v3480 = vpop.f32.mrb[0].mxu0
      %v3481 = vpop.f32.mrb[0].mxu0
      %v3482 = vadd.f32 0.0, %v3481
      %v3483 = vpop.f32.mrb[0].mxu0
      %3484 = vmatprep.mubr.bf16.mxu0 0
      %3485 = vmatmul.mubr.bf16.gmra.mrb[0].mxu0 %v1849
      %v3486 = vpop.f32.mrb[0].mxu0
      %v3487 = vadd.f32 0.0, %v3486
      %v3488 = vpop.f32.mrb[0].mxu0
      %v3489 = vpop.f32.mrb[0].mxu0
      %v3490 = vadd.f32 0.0, %v3489
      %v3491 = vpop.f32.mrb[0].mxu0
      %3492 = vmatprep.mubr.bf16.mxu0 0
      %3493 = vmatmul.mubr.bf16.gmra.mrb[0].mxu0 %v1850
      %v3494 = vpop.f32.mrb[0].mxu0
      %v3495 = vadd.f32 0.0, %v3494
      %v3496 = vpop.f32.mrb[0].mxu0
      %v3497 = vpop.f32.mrb[0].mxu0
      %v3498 = vadd.f32 0.0, %v3497
      %v3499 = vpop.f32.mrb[0].mxu0
      %3500 = vmatprep.mubr.bf16.mxu0 0
      %3501 = vmatmul.mubr.bf16.gmra.mrb[0].mxu0 %v1851
      %v3502 = vpop.f32.mrb[0].mxu0
      %v3503 = vadd.f32 0.0, %v3502
      %v3504 = vpop.f32.mrb[0].mxu0
      %v3505 = vpop.f32.mrb[0].mxu0
      %v3506 = vadd.f32 0.0, %v3505
      %v3507 = vpop.f32.mrb[0].mxu0
      %3508 = vmatprep.mubr.bf16.mxu0 0
      %3509 = vmatmul.mubr.bf16.gmra.mrb[0].mxu0 %v1852
      %v3510 = vpop.f32.mrb[0].mxu0
      %v3511 = vadd.f32 0.0, %v3510
      %v3512 = vpop.f32.mrb[0].mxu0
      %v3513 = vpop.f32.mrb[0].mxu0
      %v3514 = vadd.f32 0.0, %v3513
      %v3515 = vpop.f32.mrb[0].mxu0
      %3516 = vmatprep.mubr.bf16.mxu0 0
      %3517 = vmatmul.mubr.bf16.gmra.mrb[0].mxu0 %v1853
      %v3518 = vpop.f32.mrb[0].mxu0
      %v3519 = vadd.f32 0.0, %v3518
      %v3520 = vpop.f32.mrb[0].mxu0
      %v3521 = vpop.f32.mrb[0].mxu0
      %v3522 = vadd.f32 0.0, %v3521
      %v3523 = vpop.f32.mrb[0].mxu0
      %3524 = vmatprep.mubr.bf16.mxu0 0
      %3525 = vmatmul.mubr.bf16.gmra.mrb[0].mxu0 %v1854
      %v3526 = vpop.f32.mrb[0].mxu0
      %v3527 = vadd.f32 0.0, %v3526
      %v3528 = vpop.f32.mrb[0].mxu0
      %v3529 = vpop.f32.mrb[0].mxu0
      %v3530 = vadd.f32 0.0, %v3529
      %v3531 = vpop.f32.mrb[0].mxu0
      %3532 = vmatprep.mubr.bf16.mxu0 0
      %3533 = vmatmul.mubr.bf16.gmra.mrb[0].mxu0 %v1855
      %v3534 = vpop.f32.mrb[0].mxu0
      %v3535 = vadd.f32 0.0, %v3534
      %v3536 = vpop.f32.mrb[0].mxu0
      %v3537 = vpop.f32.mrb[0].mxu0
      %v3538 = vadd.f32 0.0, %v3537
      %v3539 = vpop.f32.mrb[0].mxu0
      %3540 = vmatprep.mubr.bf16.mxu0 0
      %3541 = vmatmul.mubr.bf16.gmra.mrb[0].mxu0 %v1856
      %v3542 = vpop.f32.mrb[0].mxu0
      %v3543 = vadd.f32 0.0, %v3542
      %v3544 = vpop.f32.mrb[0].mxu0
      %v3545 = vpop.f32.mrb[0].mxu0
      %v3546 = vadd.f32 0.0, %v3545
      %v3547 = vpop.f32.mrb[0].mxu0
      %3548 = vmatprep.mubr.bf16.mxu0 0
      %3549 = vmatmul.mubr.bf16.gmra.mrb[0].mxu0 %v1857
      %v3550 = vpop.f32.mrb[0].mxu0
      %v3551 = vadd.f32 0.0, %v3550
      %v3552 = vpop.f32.mrb[0].mxu0
      %v3553 = vpop.f32.mrb[0].mxu0
      %v3554 = vadd.f32 0.0, %v3553
      %v3555 = vpop.f32.mrb[0].mxu0
      %3556 = vmatprep.mubr.bf16.mxu0 0
      %3557 = vmatmul.mubr.bf16.gmra.mrb[0].mxu0 %v1858
      %v3558 = vpop.f32.mrb[0].mxu0
      %v3559 = vadd.f32 0.0, %v3558
      %v3560 = vpop.f32.mrb[0].mxu0
      %v3561 = vpop.f32.mrb[0].mxu0
      %v3562 = vadd.f32 0.0, %v3561
      %v3563 = vpop.f32.mrb[0].mxu0
      %3564 = vmatprep.mubr.bf16.mxu0 0
      %3565 = vmatmul.mubr.bf16.gmra.mrb[0].mxu0 %v1859
      %v3566 = vpop.f32.mrb[0].mxu0
      %v3567 = vadd.f32 0.0, %v3566
      %v3568 = vpop.f32.mrb[0].mxu0
      %v3569 = vpop.f32.mrb[0].mxu0
      %v3570 = vadd.f32 0.0, %v3569
      %v3571 = vpop.f32.mrb[0].mxu0
      %3572 = vmatprep.mubr.bf16.mxu0 0
      %3573 = vmatmul.mubr.bf16.gmra.mrb[0].mxu0 %v1860
      %v3574 = vpop.f32.mrb[0].mxu0
      %v3575 = vadd.f32 0.0, %v3574
      %v3576 = vpop.f32.mrb[0].mxu0
      %v3577 = vpop.f32.mrb[0].mxu0
      %v3578 = vadd.f32 0.0, %v3577
      %v3579 = vpop.f32.mrb[0].mxu0
      %3580 = vmatprep.mubr.bf16.mxu0 0
      %3581 = vmatmul.mubr.bf16.gmra.mrb[0].mxu0 %v1861
      %v3582 = vpop.f32.mrb[0].mxu0
      %v3583 = vadd.f32 0.0, %v3582
      %v3584 = vpop.f32.mrb[0].mxu0
      %v3585 = vpop.f32.mrb[0].mxu0
      %v3586 = vadd.f32 0.0, %v3585
      %v3587 = vpop.f32.mrb[0].mxu0
      %3588 = vmatprep.mubr.bf16.mxu0 0
      %3589 = vmatmul.mubr.bf16.gmra.mrb[0].mxu0 %v1862
      %v3590 = vpop.f32.mrb[0].mxu0
      %v3591 = vadd.f32 0.0, %v3590
      %v3592 = vpop.f32.mrb[0].mxu0
      %v3593 = vpop.f32.mrb[0].mxu0
      %v3594 = vadd.f32 0.0, %v3593
      %v3595 = vpop.f32.mrb[0].mxu0
      %3596 = vmatprep.mubr.bf16.mxu0 0
      %3597 = vmatmul.mubr.bf16.gmra.mrb[0].mxu0 %v1863
      %v3598 = vpop.f32.mrb[0].mxu0
      %v3599 = vadd.f32 0.0, %v3598
      %v3600 = vpop.f32.mrb[0].mxu0
      %v3601 = vpop.f32.mrb[0].mxu0
      %v3602 = vadd.f32 0.0, %v3601
      %v3603 = vpop.f32.mrb[0].mxu0
      %3604 = vmatprep.mubr.bf16.mxu0 0
      %3605 = vmatmul.mubr.bf16.gmra.mrb[0].mxu0 %v1864
      %v3606 = vpop.f32.mrb[0].mxu0
      %v3607 = vadd.f32 0.0, %v3606
      %v3608 = vpop.f32.mrb[0].mxu0
      %v3609 = vpop.f32.mrb[0].mxu0
      %v3610 = vadd.f32 0.0, %v3609
      %v3611 = vpop.f32.mrb[0].mxu0
      %3612 = vmatprep.mubr.bf16.mxu0 0
      %3613 = vmatmul.mubr.bf16.gmra.mrb[0].mxu0 %v1865
      %v3614 = vpop.f32.mrb[0].mxu0
      %v3615 = vadd.f32 0.0, %v3614
      %v3616 = vpop.f32.mrb[0].mxu0
      %v3617 = vpop.f32.mrb[0].mxu0
      %v3618 = vadd.f32 0.0, %v3617
      %v3619 = vpop.f32.mrb[0].mxu0
      %3620 = vmatprep.mubr.bf16.mxu0 0
      %3621 = vmatmul.mubr.bf16.gmra.mrb[0].mxu0 %v1866
      %v3622 = vpop.f32.mrb[0].mxu0
      %v3623 = vadd.f32 0.0, %v3622
      %v3624 = vpop.f32.mrb[0].mxu0
      %v3625 = vpop.f32.mrb[0].mxu0
      %v3626 = vadd.f32 0.0, %v3625
      %v3627 = vpop.f32.mrb[0].mxu0
      %3628 = vmatprep.mubr.bf16.mxu0 0
      %3629 = vmatmul.mubr.bf16.gmra.mrb[0].mxu0 %v1867
      %v3630 = vpop.f32.mrb[0].mxu0
      %v3631 = vadd.f32 0.0, %v3630
      %v3632 = vpop.f32.mrb[0].mxu0
      %v3633 = vpop.f32.mrb[0].mxu0
      %v3634 = vadd.f32 0.0, %v3633
      %v3635 = vpop.f32.mrb[0].mxu0
      %3636 = vmatprep.mubr.bf16.mxu0 0
      %3637 = vmatmul.mubr.bf16.gmra.mrb[0].mxu0 %v1868
      %v3638 = vpop.f32.mrb[0].mxu0
      %v3639 = vadd.f32 0.0, %v3638
      %v3640 = vpop.f32.mrb[0].mxu0
      %v3641 = vpop.f32.mrb[0].mxu0
      %v3642 = vadd.f32 0.0, %v3641
      %v3643 = vpop.f32.mrb[0].mxu0
      %3644 = vmatprep.mubr.bf16.mxu0 0
      %3645 = vmatmul.mubr.bf16.gmra.mrb[0].mxu0 %v1869
      %v3646 = vpop.f32.mrb[0].mxu0
      %v3647 = vadd.f32 0.0, %v3646
      %v3648 = vpop.f32.mrb[0].mxu0
      %v3649 = vpop.f32.mrb[0].mxu0
      %v3650 = vadd.f32 0.0, %v3649
      %v3651 = vpop.f32.mrb[0].mxu0
      %3652 = vmatprep.mubr.bf16.mxu0 0
      %3653 = vmatmul.mubr.bf16.gmra.mrb[0].mxu0 %v1870
      %v3654 = vpop.f32.mrb[0].mxu0
      %v3655 = vadd.f32 0.0, %v3654
      %v3656 = vpop.f32.mrb[0].mxu0
      %v3657 = vpop.f32.mrb[0].mxu0
      %v3658 = vadd.f32 0.0, %v3657
      %v3659 = vpop.f32.mrb[0].mxu0
      %3660 = vmatprep.mubr.bf16.mxu0 0
      %3661 = vmatmul.mubr.bf16.gmra.mrb[0].mxu0 %v1871
      %v3662 = vpop.f32.mrb[0].mxu0
      %v3663 = vadd.f32 0.0, %v3662
      %v3664 = vpop.f32.mrb[0].mxu0
      %v3665 = vpop.f32.mrb[0].mxu0
      %v3666 = vadd.f32 0.0, %v3665
      %v3667 = vpop.f32.mrb[0].mxu0
      %3668 = vmatprep.mubr.bf16.mxu0 0
      %3669 = vmatmul.mubr.bf16.gmra.mrb[0].mxu0 %v1872
      %v3670 = vpop.f32.mrb[0].mxu0
      %v3671 = vadd.f32 0.0, %v3670
      %v3672 = vpop.f32.mrb[0].mxu0
      %v3673 = vpop.f32.mrb[0].mxu0
      %v3674 = vadd.f32 0.0, %v3673
      %v3675 = vpop.f32.mrb[0].mxu0
      %3676 = vmatprep.mubr.bf16.mxu0 0
      %3677 = vmatmul.mubr.bf16.gmra.mrb[0].mxu0 %v1873
      %v3678 = vpop.f32.mrb[0].mxu0
      %v3679 = vadd.f32 0.0, %v3678
      %v3680 = vpop.f32.mrb[0].mxu0
      %v3681 = vpop.f32.mrb[0].mxu0
      %v3682 = vadd.f32 0.0, %v3681
      %v3683 = vpop.f32.mrb[0].mxu0
      %3684 = vmatprep.mubr.bf16.mxu0 0
      %3685 = vmatmul.mubr.bf16.gmra.mrb[0].mxu0 %v1874
      %v3686 = vpop.f32.mrb[0].mxu0
      %v3687 = vadd.f32 0.0, %v3686
      %v3688 = vpop.f32.mrb[0].mxu0
      %v3689 = vpop.f32.mrb[0].mxu0
      %v3690 = vadd.f32 0.0, %v3689
      %v3691 = vpop.f32.mrb[0].mxu0
      %3692 = vmatprep.mubr.bf16.mxu0 0
      %3693 = vmatmul.mubr.bf16.gmra.mrb[0].mxu0 %v1875
      %v3694 = vpop.f32.mrb[0].mxu0
      %v3695 = vadd.f32 0.0, %v3694
      %v3696 = vpop.f32.mrb[0].mxu0
      %v3697 = vpop.f32.mrb[0].mxu0
      %v3698 = vadd.f32 0.0, %v3697
      %v3699 = vpop.f32.mrb[0].mxu0
      %3700 = vmatprep.mubr.bf16.mxu0 0
      %3701 = vmatmul.mubr.bf16.gmra.mrb[0].mxu0 %v1876
      %v3702 = vpop.f32.mrb[0].mxu0
      %v3703 = vadd.f32 0.0, %v3702
      %v3704 = vpop.f32.mrb[0].mxu0
      %v3705 = vpop.f32.mrb[0].mxu0
      %v3706 = vadd.f32 0.0, %v3705
      %v3707 = vpop.f32.mrb[0].mxu0
      %3708 = vmatprep.mubr.bf16.mxu0 0
      %3709 = vmatmul.mubr.bf16.gmra.mrb[0].mxu0 %v1877
      %v3710 = vpop.f32.mrb[0].mxu0
      %v3711 = vadd.f32 0.0, %v3710
      %v3712 = vpop.f32.mrb[0].mxu0
      %v3713 = vpop.f32.mrb[0].mxu0
      %v3714 = vadd.f32 0.0, %v3713
      %v3715 = vpop.f32.mrb[0].mxu0
      %3716 = vmatprep.mubr.bf16.mxu0 0
      %3717 = vmatmul.mubr.bf16.gmra.mrb[0].mxu0 %v1878
      %v3718 = vpop.f32.mrb[0].mxu0
      %v3719 = vadd.f32 0.0, %v3718
      %v3720 = vpop.f32.mrb[0].mxu0
      %v3721 = vpop.f32.mrb[0].mxu0
      %v3722 = vadd.f32 0.0, %v3721
      %v3723 = vpop.f32.mrb[0].mxu0
      %3724 = vmatprep.mubr.bf16.mxu0 0
      %3725 = vmatmul.mubr.bf16.gmra.mrb[0].mxu0 %v1879
      %v3726 = vpop.f32.mrb[0].mxu0
      %v3727 = vadd.f32 0.0, %v3726
      %v3728 = vpop.f32.mrb[0].mxu0
      %v3729 = vpop.f32.mrb[0].mxu0
      %v3730 = vadd.f32 0.0, %v3729
      %v3731 = vpop.f32.mrb[0].mxu0
      %3732 = vmatprep.mubr.bf16.mxu0 0
      %3733 = vmatmul.mubr.bf16.gmra.mrb[0].mxu0 %v1880
      %v3734 = vpop.f32.mrb[0].mxu0
      %v3735 = vadd.f32 0.0, %v3734
      %v3736 = vpop.f32.mrb[0].mxu0
      %v3737 = vpop.f32.mrb[0].mxu0
      %v3738 = vadd.f32 0.0, %v3737
      %v3739 = vpop.f32.mrb[0].mxu0
      %3740 = vmatprep.mubr.bf16.mxu0 0
      %3741 = vmatmul.mubr.bf16.gmra.mrb[0].mxu0 %v1881
      %v3742 = vpop.f32.mrb[0].mxu0
      %v3743 = vadd.f32 0.0, %v3742
      %v3744 = vpop.f32.mrb[0].mxu0
      %v3745 = vpop.f32.mrb[0].mxu0
      %v3746 = vadd.f32 0.0, %v3745
      %v3747 = vpop.f32.mrb[0].mxu0
      %3748 = vmatprep.mubr.bf16.mxu0 0
      %3749 = vmatmul.mubr.bf16.gmra.mrb[0].mxu0 %v1882
      %v3750 = vpop.f32.mrb[0].mxu0
      %v3751 = vadd.f32 0.0, %v3750
      %v3752 = vpop.f32.mrb[0].mxu0
      %v3753 = vpop.f32.mrb[0].mxu0
      %v3754 = vadd.f32 0.0, %v3753
      %v3755 = vpop.f32.mrb[0].mxu0
      %3756 = vmatprep.mubr.bf16.mxu0 0
      %3757 = vmatmul.mubr.bf16.gmra.mrb[0].mxu0 %v1883
      %v3758 = vpop.f32.mrb[0].mxu0
      %v3759 = vadd.f32 0.0, %v3758
      %v3760 = vpop.f32.mrb[0].mxu0
      %v3761 = vpop.f32.mrb[0].mxu0
      %v3762 = vadd.f32 0.0, %v3761
      %v3763 = vpop.f32.mrb[0].mxu0
      %3764 = vmatprep.mubr.bf16.mxu0 0
      %3765 = vmatmul.mubr.bf16.gmra.mrb[0].mxu0 %v1884
      %v3766 = vpop.f32.mrb[0].mxu0
      %v3767 = vadd.f32 0.0, %v3766
      %v3768 = vpop.f32.mrb[0].mxu0
      %v3769 = vpop.f32.mrb[0].mxu0
      %v3770 = vadd.f32 0.0, %v3769
      %v3771 = vpop.f32.mrb[0].mxu0
      %3772 = vmatprep.mubr.bf16.mxu0 0
      %3773 = vmatmul.mubr.bf16.gmra.mrb[0].mxu0 %v1885
      %v3774 = vpop.f32.mrb[0].mxu0
      %v3775 = vadd.f32 0.0, %v3774
      %v3776 = vpop.f32.mrb[0].mxu0
      %v3777 = vpop.f32.mrb[0].mxu0
      %v3778 = vadd.f32 0.0, %v3777
      %v3779 = vpop.f32.mrb[0].mxu0
      %3780 = vmatprep.mubr.bf16.mxu0 0
      %3781 = vmatmul.mubr.bf16.gmra.mrb[0].mxu0 %v1886
      %v3782 = vpop.f32.mrb[0].mxu0
      %v3783 = vadd.f32 0.0, %v3782
      %v3784 = vpop.f32.mrb[0].mxu0
      %v3785 = vpop.f32.mrb[0].mxu0
      %v3786 = vadd.f32 0.0, %v3785
      %v3787 = vpop.f32.mrb[0].mxu0
      %3788 = vmatprep.mubr.bf16.mxu0 0
      %3789 = vmatmul.mubr.bf16.gmra.mrb[0].mxu0 %v1887
      %v3790 = vpop.f32.mrb[0].mxu0
      %v3791 = vadd.f32 0.0, %v3790
      %v3792 = vpop.f32.mrb[0].mxu0
      %v3793 = vpop.f32.mrb[0].mxu0
      %v3794 = vadd.f32 0.0, %v3793
      %v3795 = vpop.f32.mrb[0].mxu0
      %3796 = vmatprep.mubr.bf16.mxu0 0
      %3797 = vmatmul.mubr.bf16.gmra.mrb[0].mxu0 %v1888
      %v3798 = vpop.f32.mrb[0].mxu0
      %v3799 = vadd.f32 0.0, %v3798
      %v3800 = vpop.f32.mrb[0].mxu0
      %v3801 = vpop.f32.mrb[0].mxu0
      %v3802 = vadd.f32 0.0, %v3801
      %v3803 = vpop.f32.mrb[0].mxu0
      %3804 = vmatprep.mubr.bf16.mxu0 0
      %3805 = vmatmul.mubr.bf16.gmra.mrb[0].mxu0 %v1889
      %v3806 = vpop.f32.mrb[0].mxu0
      %v3807 = vadd.f32 0.0, %v3806
      %v3808 = vpop.f32.mrb[0].mxu0
      %v3809 = vpop.f32.mrb[0].mxu0
      %v3810 = vadd.f32 0.0, %v3809
      %v3811 = vpop.f32.mrb[0].mxu0
      %3812 = vmatprep.mubr.bf16.mxu0 0
      %3813 = vmatmul.mubr.bf16.gmra.mrb[0].mxu0 %v1890
      %v3814 = vpop.f32.mrb[0].mxu0
      %v3815 = vadd.f32 0.0, %v3814
      %v3816 = vpop.f32.mrb[0].mxu0
      %v3817 = vpop.f32.mrb[0].mxu0
      %v3818 = vadd.f32 0.0, %v3817
      %v3819 = vpop.f32.mrb[0].mxu0
      %3820 = vmatprep.mubr.bf16.mxu0 0
      %3821 = vmatmul.mubr.bf16.gmra.mrb[0].mxu0 %v1891
      %v3822 = vpop.f32.mrb[0].mxu0
      %v3823 = vadd.f32 0.0, %v3822
      %v3824 = vpop.f32.mrb[0].mxu0
      %v3825 = vpop.f32.mrb[0].mxu0
      %v3826 = vadd.f32 0.0, %v3825
      %v3827 = vpop.f32.mrb[0].mxu0
      %3828 = vmatprep.mubr.bf16.mxu0 0
      %3829 = vmatmul.mubr.bf16.gmra.mrb[0].mxu0 %v1892
      %v3830 = vpop.f32.mrb[0].mxu0
      %v3831 = vadd.f32 0.0, %v3830
      %v3832 = vpop.f32.mrb[0].mxu0
      %v3833 = vpop.f32.mrb[0].mxu0
      %v3834 = vadd.f32 0.0, %v3833
      %v3835 = vpop.f32.mrb[0].mxu0
      %3836 = vmatprep.mubr.bf16.mxu0 0
      %3837 = vmatmul.mubr.bf16.gmra.mrb[0].mxu0 %v1893
      %v3838 = vpop.f32.mrb[0].mxu0
      %v3839 = vadd.f32 0.0, %v3838
      %v3840 = vpop.f32.mrb[0].mxu0
      %v3841 = vpop.f32.mrb[0].mxu0
      %v3842 = vadd.f32 0.0, %v3841
      %v3843 = vpop.f32.mrb[0].mxu0
      %3844 = vmatprep.mubr.bf16.mxu0 0
      %3845 = vmatmul.mubr.bf16.gmra.mrb[0].mxu0 %v1894
      %v3846 = vpop.f32.mrb[0].mxu0
      %v3847 = vadd.f32 0.0, %v3846
      %v3848 = vpop.f32.mrb[0].mxu0
      %v3849 = vpop.f32.mrb[0].mxu0
      %v3850 = vadd.f32 0.0, %v3849
      %v3851 = vpop.f32.mrb[0].mxu0
      %3852 = vmatprep.mubr.bf16.mxu0 0
      %3853 = vmatmul.mubr.bf16.gmra.mrb[0].mxu0 %v1895
      %v3854 = vpop.f32.mrb[0].mxu0
      %v3855 = vadd.f32 0.0, %v3854
      %v3856 = vpop.f32.mrb[0].mxu0
      %v3857 = vpop.f32.mrb[0].mxu0
      %v3858 = vadd.f32 0.0, %v3857
      %v3859 = vpop.f32.mrb[0].mxu0
      %3860 = vmatprep.mubr.bf16.mxu0 0
      %3861 = vmatmul.mubr.bf16.gmra.mrb[0].mxu0 %v1896
      %v3862 = vpop.f32.mrb[0].mxu0
      %v3863 = vadd.f32 0.0, %v3862
      %v3864 = vpop.f32.mrb[0].mxu0
      %v3865 = vpop.f32.mrb[0].mxu0
      %v3866 = vadd.f32 0.0, %v3865
      %v3867 = vpop.f32.mrb[0].mxu0
      %3868 = vmatprep.mubr.bf16.mxu0 0
      %3869 = vmatmul.mubr.bf16.gmra.mrb[0].mxu0 %v1897
      %v3870 = vpop.f32.mrb[0].mxu0
      %v3871 = vadd.f32 0.0, %v3870
      %v3872 = vpop.f32.mrb[0].mxu0
      %v3873 = vpop.f32.mrb[0].mxu0
      %v3874 = vadd.f32 0.0, %v3873
      %v3875 = vpop.f32.mrb[0].mxu0
      %3876 = vmatprep.mubr.bf16.mxu0 0
      %3877 = vmatmul.mubr.bf16.gmra.mrb[0].mxu0 %v1898
      %v3878 = vpop.f32.mrb[0].mxu0
      %v3879 = vadd.f32 0.0, %v3878
      %v3880 = vpop.f32.mrb[0].mxu0
      %v3881 = vpop.f32.mrb[0].mxu0
      %v3882 = vadd.f32 0.0, %v3881
      %v3883 = vpop.f32.mrb[0].mxu0
      %3884 = vmatprep.mubr.bf16.mxu0 0
      %3885 = vmatmul.mubr.bf16.gmra.mrb[0].mxu0 %v1899
      %v3886 = vpop.f32.mrb[0].mxu0
      %v3887 = vadd.f32 0.0, %v3886
      %v3888 = vpop.f32.mrb[0].mxu0
      %v3889 = vpop.f32.mrb[0].mxu0
      %v3890 = vadd.f32 0.0, %v3889
      %v3891 = vpop.f32.mrb[0].mxu0
      %3892 = vmatprep.mubr.bf16.mxu0 0
      %3893 = vmatmul.mubr.bf16.gmra.mrb[0].mxu0 %v1900
      %v3894 = vpop.f32.mrb[0].mxu0
      %v3895 = vadd.f32 0.0, %v3894
      %v3896 = vpop.f32.mrb[0].mxu0
      %v3897 = vpop.f32.mrb[0].mxu0
      %v3898 = vadd.f32 0.0, %v3897
      %v3899 = vpop.f32.mrb[0].mxu0
      %3900 = vmatprep.mubr.bf16.mxu0 0
      %3901 = vmatmul.mubr.bf16.gmra.mrb[0].mxu0 %v1901
      %v3902 = vpop.f32.mrb[0].mxu0
      %v3903 = vadd.f32 0.0, %v3902
      %v3904 = vpop.f32.mrb[0].mxu0
      %v3905 = vpop.f32.mrb[0].mxu0
      %v3906 = vadd.f32 0.0, %v3905
      %v3907 = vpop.f32.mrb[0].mxu0
      %3908 = vmatprep.mubr.bf16.mxu0 0
      %3909 = vmatmul.mubr.bf16.gmra.mrb[0].mxu0 %v1902
      %v3910 = vpop.f32.mrb[0].mxu0
      %v3911 = vadd.f32 0.0, %v3910
      %v3912 = vpop.f32.mrb[0].mxu0
      %v3913 = vpop.f32.mrb[0].mxu0
      %v3914 = vadd.f32 0.0, %v3913
      %v3915 = vpop.f32.mrb[0].mxu0
      %3916 = vmatprep.mubr.bf16.mxu0 0
      %3917 = vmatmul.mubr.bf16.gmra.mrb[0].mxu0 %v1903
      %v3918 = vpop.f32.mrb[0].mxu0
      %v3919 = vadd.f32 0.0, %v3918
      %v3920 = vpop.f32.mrb[0].mxu0
      %v3921 = vpop.f32.mrb[0].mxu0
      %v3922 = vadd.f32 0.0, %v3921
      %v3923 = vpop.f32.mrb[0].mxu0
      %3924 = vmatprep.mubr.bf16.mxu0 0
      %3925 = vmatmul.mubr.bf16.gmra.mrb[0].mxu0 %v1904
      %v3926 = vpop.f32.mrb[0].mxu0
      %v3927 = vadd.f32 0.0, %v3926
      %v3928 = vpop.f32.mrb[0].mxu0
      %v3929 = vpop.f32.mrb[0].mxu0
      %v3930 = vadd.f32 0.0, %v3929
      %v3931 = vpop.f32.mrb[0].mxu0
      %3932 = vmatprep.mubr.bf16.mxu0 0
      %3933 = vmatmul.mubr.bf16.gmra.mrb[0].mxu0 %v1905
      %v3934 = vpop.f32.mrb[0].mxu0
      %v3935 = vadd.f32 0.0, %v3934
      %v3936 = vpop.f32.mrb[0].mxu0
      %v3937 = vpop.f32.mrb[0].mxu0
      %v3938 = vadd.f32 0.0, %v3937
      %v3939 = vpop.f32.mrb[0].mxu0
      %3940 = vmatprep.mubr.bf16.mxu0 0
      %3941 = vmatmul.mubr.bf16.gmra.mrb[0].mxu0 %v1906
      %v3942 = vpop.f32.mrb[0].mxu0
      %v3943 = vadd.f32 0.0, %v3942
      %v3944 = vpop.f32.mrb[0].mxu0
      %v3945 = vpop.f32.mrb[0].mxu0
      %v3946 = vadd.f32 0.0, %v3945
      %v3947 = vpop.f32.mrb[0].mxu0
      %3948 = vmatprep.mubr.bf16.mxu0 0
      %3949 = vmatmul.mubr.bf16.gmra.mrb[0].mxu0 %v1907
      %v3950 = vpop.f32.mrb[0].mxu0
      %v3951 = vadd.f32 0.0, %v3950
      %v3952 = vpop.f32.mrb[0].mxu0
      %v3953 = vpop.f32.mrb[0].mxu0
      %v3954 = vadd.f32 0.0, %v3953
      %v3955 = vpop.f32.mrb[0].mxu0
      %3956 = vmatprep.mubr.bf16.mxu0 0
      %3957 = vmatmul.mubr.bf16.gmra.mrb[0].mxu0 %v1908
      %v3958 = vpop.f32.mrb[0].mxu0
      %v3959 = vadd.f32 0.0, %v3958
      %v3960 = vpop.f32.mrb[0].mxu0
      %v3961 = vpop.f32.mrb[0].mxu0
      %v3962 = vadd.f32 0.0, %v3961
      %v3963 = vpop.f32.mrb[0].mxu0
      %3964 = vmatprep.mubr.bf16.mxu0 0
      %3965 = vmatmul.mubr.bf16.gmra.mrb[0].mxu0 %v1909
      %v3966 = vpop.f32.mrb[0].mxu0
      %v3967 = vadd.f32 0.0, %v3966
      %v3968 = vpop.f32.mrb[0].mxu0
      %v3969 = vpop.f32.mrb[0].mxu0
      %v3970 = vadd.f32 0.0, %v3969
      %v3971 = vpop.f32.mrb[0].mxu0
      %3972 = vmatprep.mubr.bf16.mxu0 0
      %3973 = vmatmul.mubr.bf16.gmra.mrb[0].mxu0 %v1910
      %v3974 = vpop.f32.mrb[0].mxu0
      %v3975 = vadd.f32 0.0, %v3974
      %v3976 = vpop.f32.mrb[0].mxu0
      %v3977 = vpop.f32.mrb[0].mxu0
      %v3978 = vadd.f32 0.0, %v3977
      %v3979 = vpop.f32.mrb[0].mxu0
      %3980 = vmatprep.mubr.bf16.mxu0 0
      %3981 = vmatmul.mubr.bf16.gmra.mrb[0].mxu0 %v1911
      %v3982 = vpop.f32.mrb[0].mxu0
      %v3983 = vadd.f32 0.0, %v3982
      %v3984 = vpop.f32.mrb[0].mxu0
      %v3985 = vpop.f32.mrb[0].mxu0
      %v3986 = vadd.f32 0.0, %v3985
      %v3987 = vpop.f32.mrb[0].mxu0
      %3988 = vmatprep.mubr.bf16.mxu0 0
      %3989 = vmatmul.mubr.bf16.gmra.mrb[0].mxu0 %v1912
      %v3990 = vpop.f32.mrb[0].mxu0
      %v3991 = vadd.f32 0.0, %v3990
      %v3992 = vpop.f32.mrb[0].mxu0
      %v3993 = vpop.f32.mrb[0].mxu0
      %v3994 = vadd.f32 0.0, %v3993
      %v3995 = vpop.f32.mrb[0].mxu0
      %3996 = vmatprep.mubr.bf16.mxu0 0
      %3997 = vmatmul.mubr.bf16.gmra.mrb[0].mxu0 %v1913
      %v3998 = vpop.f32.mrb[0].mxu0
      %v3999 = vadd.f32 0.0, %v3998
      %v4000 = vpop.f32.mrb[0].mxu0
      %v4001 = vpop.f32.mrb[0].mxu0
      %v4002 = vadd.f32 0.0, %v4001
      %v4003 = vpop.f32.mrb[0].mxu0
      %4004 = vmatprep.mubr.bf16.mxu0 0
      %4005 = vmatmul.mubr.bf16.gmra.mrb[0].mxu0 %v1914
      %v4006 = vpop.f32.mrb[0].mxu0
      %v4007 = vadd.f32 0.0, %v4006
      %v4008 = vpop.f32.mrb[0].mxu0
      %v4009 = vpop.f32.mrb[0].mxu0
      %v4010 = vadd.f32 0.0, %v4009
      %v4011 = vpop.f32.mrb[0].mxu0
      %4012 = vmatprep.mubr.bf16.mxu0 0
      %4013 = vmatmul.mubr.bf16.gmra.mrb[0].mxu0 %v1915
      %v4014 = vpop.f32.mrb[0].mxu0
      %v4015 = vadd.f32 0.0, %v4014
      %v4016 = vpop.f32.mrb[0].mxu0
      %v4017 = vpop.f32.mrb[0].mxu0
      %v4018 = vadd.f32 0.0, %v4017
      %v4019 = vpop.f32.mrb[0].mxu0
      %4020 = vmatprep.mubr.bf16.mxu0 0
      %4021 = vmatmul.mubr.bf16.gmra.mrb[0].mxu0 %v1916
      %v4022 = vpop.f32.mrb[0].mxu0
      %v4023 = vadd.f32 0.0, %v4022
      %v4024 = vpop.f32.mrb[0].mxu0
      %v4025 = vpop.f32.mrb[0].mxu0
      %v4026 = vadd.f32 0.0, %v4025
      %v4027 = vpop.f32.mrb[0].mxu0
      %4028 = vmatprep.mubr.bf16.mxu0 0
      %4029 = vmatmul.mubr.bf16.gmra.mrb[0].mxu0 %v1917
      %v4030 = vpop.f32.mrb[0].mxu0
      %v4031 = vadd.f32 0.0, %v4030
      %v4032 = vpop.f32.mrb[0].mxu0
      %v4033 = vpop.f32.mrb[0].mxu0
      %v4034 = vadd.f32 0.0, %v4033
      %v4035 = vpop.f32.mrb[0].mxu0
      %4036 = vmatprep.mubr.bf16.mxu0 0
      %4037 = vmatmul.mubr.bf16.gmra.mrb[0].mxu0 %v1918
      %v4038 = vpop.f32.mrb[0].mxu0
      %v4039 = vadd.f32 0.0, %v4038
      %v4040 = vpop.f32.mrb[0].mxu0
      %v4041 = vpop.f32.mrb[0].mxu0
      %v4042 = vadd.f32 0.0, %v4041
      %v4043 = vpop.f32.mrb[0].mxu0
      %4044 = vmatprep.mubr.bf16.mxu0 0
      %4045 = vmatmul.mubr.bf16.gmra.mrb[0].mxu0 %v1919
      %v4046 = vpop.f32.mrb[0].mxu0
      %v4047 = vadd.f32 0.0, %v4046
      %v4048 = vpop.f32.mrb[0].mxu0
      %v4049 = vpop.f32.mrb[0].mxu0
      %v4050 = vadd.f32 0.0, %v4049
      %v4051 = vpop.f32.mrb[0].mxu0
      %4052 = vmatprep.mubr.bf16.mxu0 0
      %4053 = vmatmul.mubr.bf16.gmra.mrb[0].mxu0 %v1920
      %v4054 = vpop.f32.mrb[0].mxu0
      %v4055 = vadd.f32 0.0, %v4054
      %v4056 = vpop.f32.mrb[0].mxu0
      %v4057 = vpop.f32.mrb[0].mxu0
      %v4058 = vadd.f32 0.0, %v4057
      %v4059 = vpop.f32.mrb[0].mxu0
      %4060 = vmatprep.mubr.bf16.mxu0 0
      %4061 = vmatmul.mubr.bf16.gmra.mrb[0].mxu0 %v1921
      %v4062 = vpop.f32.mrb[0].mxu0
      %v4063 = vadd.f32 0.0, %v4062
      %v4064 = vpop.f32.mrb[0].mxu0
      %v4065 = vpop.f32.mrb[0].mxu0
      %v4066 = vadd.f32 0.0, %v4065
      %v4067 = vpop.f32.mrb[0].mxu0
      %4068 = vmatprep.mubr.bf16.mxu0 0
      %4069 = vmatmul.mubr.bf16.gmra.mrb[0].mxu0 %v1922
      %v4070 = vpop.f32.mrb[0].mxu0
      %v4071 = vadd.f32 0.0, %v4070
      %v4072 = vpop.f32.mrb[0].mxu0
      %v4073 = vpop.f32.mrb[0].mxu0
      %v4074 = vadd.f32 0.0, %v4073
      %v4075 = vpop.f32.mrb[0].mxu0
      %4076 = vmatprep.mubr.bf16.mxu0 0
      %4077 = vmatmul.mubr.bf16.gmra.mrb[0].mxu0 %v1923
      %v4078 = vpop.f32.mrb[0].mxu0
      %v4079 = vadd.f32 0.0, %v4078
      %v4080 = vpop.f32.mrb[0].mxu0
      %v4081 = vpop.f32.mrb[0].mxu0
      %v4082 = vadd.f32 0.0, %v4081
      %v4083 = vpop.f32.mrb[0].mxu0
      %4084 = vmatprep.mubr.bf16.mxu0 0
      %4085 = vmatmul.mubr.bf16.gmra.mrb[0].mxu0 %v1924
      %v4086 = vpop.f32.mrb[0].mxu0
      %v4087 = vadd.f32 0.0, %v4086
      %v4088 = vpop.f32.mrb[0].mxu0
      %v4089 = vpop.f32.mrb[0].mxu0
      %v4090 = vadd.f32 0.0, %v4089
      %v4091 = vpop.f32.mrb[0].mxu0
      %4092 = vmatprep.mubr.bf16.mxu0 0
      %4093 = vmatmul.mubr.bf16.gmra.mrb[0].mxu0 %v1925
      %v4094 = vpop.f32.mrb[0].mxu0
      %v4095 = vadd.f32 0.0, %v4094
      %v4096 = vpop.f32.mrb[0].mxu0
      %v4097 = vpop.f32.mrb[0].mxu0
      %v4098 = vadd.f32 0.0, %v4097
      %v4099 = vpop.f32.mrb[0].mxu0
      %4100 = vmatprep.mubr.bf16.mxu0 0
      %4101 = vmatmul.mubr.bf16.gmra.mrb[0].mxu0 %v1926
      %v4102 = vpop.f32.mrb[0].mxu0
      %v4103 = vadd.f32 0.0, %v4102
      %v4104 = vpop.f32.mrb[0].mxu0
      %v4105 = vpop.f32.mrb[0].mxu0
      %v4106 = vadd.f32 0.0, %v4105
      %v4107 = vpop.f32.mrb[0].mxu0
      %4108 = vmatprep.mubr.bf16.mxu0 0
      %4109 = vmatmul.mubr.bf16.gmra.mrb[0].mxu0 %v1927
      %v4110 = vpop.f32.mrb[0].mxu0
      %v4111 = vadd.f32 0.0, %v4110
      %v4112 = vpop.f32.mrb[0].mxu0
      %v4113 = vpop.f32.mrb[0].mxu0
      %v4114 = vadd.f32 0.0, %v4113
      %v4115 = vpop.f32.mrb[0].mxu0
      %4116 = vmatprep.mubr.bf16.mxu0 0
      %4117 = vmatmul.mubr.bf16.gmra.mrb[0].mxu0 %v1928
      %v4118 = vpop.f32.mrb[0].mxu0
      %v4119 = vadd.f32 0.0, %v4118
      %v4120 = vpop.f32.mrb[0].mxu0
      %v4121 = vpop.f32.mrb[0].mxu0
      %v4122 = vadd.f32 0.0, %v4121
      %v4123 = vpop.f32.mrb[0].mxu0
      %4124 = vmatprep.mubr.bf16.mxu0 0
      %4125 = vmatmul.mubr.bf16.gmra.mrb[0].mxu0 %v1929
      %v4126 = vpop.f32.mrb[0].mxu0
      %v4127 = vadd.f32 0.0, %v4126
      %v4128 = vpop.f32.mrb[0].mxu0
      %v4129 = vpop.f32.mrb[0].mxu0
      %v4130 = vadd.f32 0.0, %v4129
      %v4131 = vpop.f32.mrb[0].mxu0
      %4132 = vmatprep.mubr.bf16.mxu0 0
      %4133 = vmatmul.mubr.bf16.gmra.mrb[0].mxu0 %v1930
      %v4134 = vpop.f32.mrb[0].mxu0
      %v4135 = vadd.f32 0.0, %v4134
      %v4136 = vpop.f32.mrb[0].mxu0
      %v4137 = vpop.f32.mrb[0].mxu0
      %v4138 = vadd.f32 0.0, %v4137
      %v4139 = vpop.f32.mrb[0].mxu0
      %4140 = vmatprep.mubr.bf16.mxu0 0
      %4141 = vmatmul.mubr.bf16.gmra.mrb[0].mxu0 %v1931
      %v4142 = vpop.f32.mrb[0].mxu0
      %v4143 = vadd.f32 0.0, %v4142
      %v4144 = vpop.f32.mrb[0].mxu0
      %v4145 = vpop.f32.mrb[0].mxu0
      %v4146 = vadd.f32 0.0, %v4145
      %v4147 = vpop.f32.mrb[0].mxu0
      %4148 = vmatprep.mubr.bf16.mxu0 0
      %4149 = vmatmul.mubr.bf16.gmra.mrb[0].mxu0 %v1932
      %v4150 = vpop.f32.mrb[0].mxu0
      %v4151 = vadd.f32 0.0, %v4150
      %v4152 = vpop.f32.mrb[0].mxu0
      %v4153 = vpop.f32.mrb[0].mxu0
      %v4154 = vadd.f32 0.0, %v4153
      %v4155 = vpop.f32.mrb[0].mxu0
      %4156 = vmatprep.mubr.bf16.mxu0 0
      %4157 = vmatmul.mubr.bf16.gmra.mrb[0].mxu0 %v1933
      %v4158 = vpop.f32.mrb[0].mxu0
      %v4159 = vadd.f32 0.0, %v4158
      %v4160 = vpop.f32.mrb[0].mxu0
      %v4161 = vpop.f32.mrb[0].mxu0
      %v4162 = vadd.f32 0.0, %v4161
      %v4163 = vpop.f32.mrb[0].mxu0
      %4164 = vmatprep.mubr.bf16.mxu0 0
      %4165 = vmatmul.mubr.bf16.gmra.mrb[0].mxu0 %v1934
      %v4166 = vpop.f32.mrb[0].mxu0
      %v4167 = vadd.f32 0.0, %v4166
      %v4168 = vpop.f32.mrb[0].mxu0
      %v4169 = vpop.f32.mrb[0].mxu0
      %v4170 = vadd.f32 0.0, %v4169
      %v4171 = vpop.f32.mrb[0].mxu0
      %4172 = vmatprep.mubr.bf16.mxu0 0
      %4173 = vmatmul.mubr.bf16.gmra.mrb[0].mxu0 %v1935
      %v4174 = vpop.f32.mrb[0].mxu0
      %v4175 = vadd.f32 0.0, %v4174
      %v4176 = vpop.f32.mrb[0].mxu0
      %v4177 = vpop.f32.mrb[0].mxu0
      %v4178 = vadd.f32 0.0, %v4177
      %v4179 = vpop.f32.mrb[0].mxu0
      %4180 = vmatprep.mubr.bf16.mxu0 0
      %4181 = vmatmul.mubr.bf16.gmra.mrb[0].mxu0 %v1936
      %v4182 = vpop.f32.mrb[0].mxu0
      %v4183 = vadd.f32 0.0, %v4182
      %v4184 = vpop.f32.mrb[0].mxu0
      %v4185 = vpop.f32.mrb[0].mxu0
      %v4186 = vadd.f32 0.0, %v4185
      %v4187 = vpop.f32.mrb[0].mxu0
      %4188 = vmatprep.mubr.bf16.mxu0 0
      %4189 = vmatmul.mubr.bf16.gmra.mrb[0].mxu0 %v1937
      %v4190 = vpop.f32.mrb[0].mxu0
      %v4191 = vadd.f32 0.0, %v4190
      %v4192 = vpop.f32.mrb[0].mxu0
      %v4193 = vpop.f32.mrb[0].mxu0
      %v4194 = vadd.f32 0.0, %v4193
      %v4195 = vpop.f32.mrb[0].mxu0
      %4196 = vmatprep.mubr.bf16.mxu0 0
      %4197 = vmatmul.mubr.bf16.gmra.mrb[0].mxu0 %v1938
      %v4198 = vpop.f32.mrb[0].mxu0
      %v4199 = vadd.f32 0.0, %v4198
      %v4200 = vpop.f32.mrb[0].mxu0
      %v4201 = vpop.f32.mrb[0].mxu0
      %v4202 = vadd.f32 0.0, %v4201
      %v4203 = vpop.f32.mrb[0].mxu0
      %4204 = vmatprep.mubr.bf16.mxu0 0
      %4205 = vmatmul.mubr.bf16.gmra.mrb[0].mxu0 %v1939
      %v4206 = vpop.f32.mrb[0].mxu0
      %v4207 = vadd.f32 0.0, %v4206
      %v4208 = vpop.f32.mrb[0].mxu0
      %v4209 = vpop.f32.mrb[0].mxu0
      %v4210 = vadd.f32 0.0, %v4209
      %v4211 = vpop.f32.mrb[0].mxu0
      %4212 = vmatprep.mubr.bf16.mxu0 0
      %4213 = vmatmul.mubr.bf16.gmra.mrb[0].mxu0 %v1940
      %v4214 = vpop.f32.mrb[0].mxu0
      %v4215 = vadd.f32 0.0, %v4214
      %v4216 = vpop.f32.mrb[0].mxu0
      %v4217 = vpop.f32.mrb[0].mxu0
      %v4218 = vadd.f32 0.0, %v4217
      %v4219 = vpop.f32.mrb[0].mxu0
      %4220 = vmatprep.mubr.bf16.mxu0 0
      %4221 = vmatmul.mubr.bf16.gmra.mrb[0].mxu0 %v1941
      %v4222 = vpop.f32.mrb[0].mxu0
      %v4223 = vadd.f32 0.0, %v4222
      %v4224 = vpop.f32.mrb[0].mxu0
      %v4225 = vpop.f32.mrb[0].mxu0
      %v4226 = vadd.f32 0.0, %v4225
      %v4227 = vpop.f32.mrb[0].mxu0
      %4228 = vmatprep.mubr.bf16.mxu0 0
      %4229 = vmatmul.mubr.bf16.gmra.mrb[0].mxu0 %v1942
      %v4230 = vpop.f32.mrb[0].mxu0
      %v4231 = vadd.f32 0.0, %v4230
      %v4232 = vpop.f32.mrb[0].mxu0
      %v4233 = vpop.f32.mrb[0].mxu0
      %v4234 = vadd.f32 0.0, %v4233
      %v4235 = vpop.f32.mrb[0].mxu0
      %4236 = vmatprep.mubr.bf16.mxu0 0
      %4237 = vmatmul.mubr.bf16.gmra.mrb[0].mxu0 %v1943
      %v4238 = vpop.f32.mrb[0].mxu0
      %v4239 = vadd.f32 0.0, %v4238
      %v4240 = vpop.f32.mrb[0].mxu0
      %v4241 = vpop.f32.mrb[0].mxu0
      %v4242 = vadd.f32 0.0, %v4241
      %v4243 = vpop.f32.mrb[0].mxu0
      %4244 = vmatprep.mubr.bf16.mxu0 0
      %4245 = vmatmul.mubr.bf16.gmra.mrb[0].mxu0 %v1944
      %v4246 = vpop.f32.mrb[0].mxu0
      %v4247 = vadd.f32 0.0, %v4246
      %v4248 = vpop.f32.mrb[0].mxu0
      %v4249 = vpop.f32.mrb[0].mxu0
      %v4250 = vadd.f32 0.0, %v4249
      %v4251 = vpop.f32.mrb[0].mxu0
      %4252 = vmatprep.mubr.bf16.mxu0 0
      %4253 = vmatmul.mubr.bf16.gmra.mrb[0].mxu0 %v1945
      %v4254 = vpop.f32.mrb[0].mxu0
      %v4255 = vadd.f32 0.0, %v4254
      %v4256 = vpop.f32.mrb[0].mxu0
      %v4257 = vpop.f32.mrb[0].mxu0
      %v4258 = vadd.f32 0.0, %v4257
      %v4259 = vpop.f32.mrb[0].mxu0
      %4260 = vmatprep.mubr.bf16.mxu0 0
      %4261 = vmatmul.mubr.bf16.gmra.mrb[0].mxu0 %v1946
      %v4262 = vpop.f32.mrb[0].mxu0
      %v4263 = vadd.f32 0.0, %v4262
      %v4264 = vpop.f32.mrb[0].mxu0
      %v4265 = vpop.f32.mrb[0].mxu0
      %v4266 = vadd.f32 0.0, %v4265
      %v4267 = vpop.f32.mrb[0].mxu0
      %4268 = vmatprep.mubr.bf16.mxu0 0
      %4269 = vmatmul.mubr.bf16.gmra.mrb[0].mxu0 %v1947
      %v4270 = vpop.f32.mrb[0].mxu0
      %v4271 = vadd.f32 0.0, %v4270
      %v4272 = vpop.f32.mrb[0].mxu0
      %v4273 = vpop.f32.mrb[0].mxu0
      %v4274 = vadd.f32 0.0, %v4273
      %v4275 = vpop.f32.mrb[0].mxu0
      %4276 = vmatprep.mubr.bf16.mxu0 0
      %4277 = vmatmul.mubr.bf16.gmra.mrb[0].mxu0 %v1948
      %v4278 = vpop.f32.mrb[0].mxu0
      %v4279 = vadd.f32 0.0, %v4278
      %v4280 = vpop.f32.mrb[0].mxu0
      %v4281 = vpop.f32.mrb[0].mxu0
      %v4282 = vadd.f32 0.0, %v4281
      %v4283 = vpop.f32.mrb[0].mxu0
      %4284 = vmatprep.mubr.bf16.mxu0 0
      %4285 = vmatmul.mubr.bf16.gmra.mrb[0].mxu0 %v1949
      %v4286 = vpop.f32.mrb[0].mxu0
      %v4287 = vadd.f32 0.0, %v4286
      %v4288 = vpop.f32.mrb[0].mxu0
      %v4289 = vpop.f32.mrb[0].mxu0
      %v4290 = vadd.f32 0.0, %v4289
      %v4291 = vpop.f32.mrb[0].mxu0
      %4292 = vmatprep.mubr.bf16.mxu0 0
      %4293 = vmatmul.mubr.bf16.gmra.mrb[0].mxu0 %v1950
      %v4294 = vpop.f32.mrb[0].mxu0
      %v4295 = vadd.f32 0.0, %v4294
      %v4296 = vpop.f32.mrb[0].mxu0
      %v4297 = vpop.f32.mrb[0].mxu0
      %v4298 = vadd.f32 0.0, %v4297
      %v4299 = vpop.f32.mrb[0].mxu0
      %4300 = vmatprep.mubr.bf16.mxu0 0
      %4301 = vmatmul.mubr.bf16.gmra.mrb[0].mxu0 %v1951
      %v4302 = vpop.f32.mrb[0].mxu0
      %v4303 = vadd.f32 0.0, %v4302
      %v4304 = vpop.f32.mrb[0].mxu0
      %v4305 = vpop.f32.mrb[0].mxu0
      %v4306 = vadd.f32 0.0, %v4305
      %v4307 = vpop.f32.mrb[0].mxu0
      %4308 = vmatprep.mubr.bf16.mxu0 0
      %4309 = vmatmul.mubr.bf16.gmra.mrb[0].mxu0 %v1952
      %v4310 = vpop.f32.mrb[0].mxu0
      %v4311 = vadd.f32 0.0, %v4310
      %v4312 = vpop.f32.mrb[0].mxu0
      %v4313 = vpop.f32.mrb[0].mxu0
      %v4314 = vadd.f32 0.0, %v4313
      %v4315 = vpop.f32.mrb[0].mxu0
      %4316 = vmatprep.mubr.bf16.mxu0 0
      %4317 = vmatmul.mubr.bf16.gmra.mrb[0].mxu0 %v1953
      %v4318 = vpop.f32.mrb[0].mxu0
      %v4319 = vadd.f32 0.0, %v4318
      %v4320 = vpop.f32.mrb[0].mxu0
      %v4321 = vpop.f32.mrb[0].mxu0
      %v4322 = vadd.f32 0.0, %v4321
      %v4323 = vpop.f32.mrb[0].mxu0
      %4324 = vmatprep.mubr.bf16.mxu0 0
      %4325 = vmatmul.mubr.bf16.gmra.mrb[0].mxu0 %v1954
      %v4326 = vpop.f32.mrb[0].mxu0
      %v4327 = vadd.f32 0.0, %v4326
      %v4328 = vpop.f32.mrb[0].mxu0
      %v4329 = vpop.f32.mrb[0].mxu0
      %v4330 = vadd.f32 0.0, %v4329
      %v4331 = vpop.f32.mrb[0].mxu0
      %4332 = vmatprep.mubr.bf16.mxu0 0
      %4333 = vmatmul.mubr.bf16.gmra.mrb[0].mxu0 %v1955
      %v4334 = vpop.f32.mrb[0].mxu0
      %v4335 = vadd.f32 0.0, %v4334
      %v4336 = vpop.f32.mrb[0].mxu0
      %v4337 = vpop.f32.mrb[0].mxu0
      %v4338 = vadd.f32 0.0, %v4337
      %v4339 = vpop.f32.mrb[0].mxu0
      %4340 = vdwg.mxu0
      %vm4341 = vcmp.ge.f32.partialorder %v2295, 0.0
      %vm4342 = vcmp.ge.f32.partialorder %v2298, 0.0
      %vm4343 = vcmp.ge.f32.partialorder %v2303, 0.0
      %vm4344 = vcmp.ge.f32.partialorder %v2306, 0.0
      %vm4345 = vcmp.ge.f32.partialorder %v2311, 0.0
      %vm4346 = vcmp.ge.f32.partialorder %v2314, 0.0
      %vm4347 = vcmp.ge.f32.partialorder %v2319, 0.0
      %vm4348 = vcmp.ge.f32.partialorder %v2322, 0.0
      %vm4349 = vcmp.ge.f32.partialorder %v2327, 0.0
      %vm4350 = vcmp.ge.f32.partialorder %v2330, 0.0
      %vm4351 = vcmp.ge.f32.partialorder %v2335, 0.0
      %vm4352 = vcmp.ge.f32.partialorder %v2338, 0.0
      %vm4353 = vcmp.ge.f32.partialorder %v2343, 0.0
      %vm4354 = vcmp.ge.f32.partialorder %v2346, 0.0
      %vm4355 = vcmp.ge.f32.partialorder %v2351, 0.0
      %vm4356 = vcmp.ge.f32.partialorder %v2354, 0.0
      %vm4357 = vcmp.ge.f32.partialorder %v2359, 0.0
      %vm4358 = vcmp.ge.f32.partialorder %v2362, 0.0
      %vm4359 = vcmp.ge.f32.partialorder %v2367, 0.0
      %vm4360 = vcmp.ge.f32.partialorder %v2370, 0.0
      %vm4361 = vcmp.ge.f32.partialorder %v2375, 0.0
      %vm4362 = vcmp.ge.f32.partialorder %v2378, 0.0
      %vm4363 = vcmp.ge.f32.partialorder %v2383, 0.0
      %vm4364 = vcmp.ge.f32.partialorder %v2386, 0.0
      %vm4365 = vcmp.ge.f32.partialorder %v2391, 0.0
      %vm4366 = vcmp.ge.f32.partialorder %v2394, 0.0
      %vm4367 = vcmp.ge.f32.partialorder %v2399, 0.0
      %vm4368 = vcmp.ge.f32.partialorder %v2402, 0.0
      %vm4369 = vcmp.ge.f32.partialorder %v2407, 0.0
      %vm4370 = vcmp.ge.f32.partialorder %v2410, 0.0
      %vm4371 = vcmp.ge.f32.partialorder %v2415, 0.0
      %vm4372 = vcmp.ge.f32.partialorder %v2418, 0.0
      %vm4373 = vcmp.ge.f32.partialorder %v2423, 0.0
      %vm4374 = vcmp.ge.f32.partialorder %v2426, 0.0
      %vm4375 = vcmp.ge.f32.partialorder %v2431, 0.0
      %vm4376 = vcmp.ge.f32.partialorder %v2434, 0.0
      %vm4377 = vcmp.ge.f32.partialorder %v2439, 0.0
      %vm4378 = vcmp.ge.f32.partialorder %v2442, 0.0
      %vm4379 = vcmp.ge.f32.partialorder %v2447, 0.0
      %vm4380 = vcmp.ge.f32.partialorder %v2450, 0.0
      %vm4381 = vcmp.ge.f32.partialorder %v2455, 0.0
      %vm4382 = vcmp.ge.f32.partialorder %v2458, 0.0
      %vm4383 = vcmp.ge.f32.partialorder %v2463, 0.0
      %vm4384 = vcmp.ge.f32.partialorder %v2466, 0.0
      %vm4385 = vcmp.ge.f32.partialorder %v2471, 0.0
      %vm4386 = vcmp.ge.f32.partialorder %v2474, 0.0
      %vm4387 = vcmp.ge.f32.partialorder %v2479, 0.0
      %vm4388 = vcmp.ge.f32.partialorder %v2482, 0.0
      %vm4389 = vcmp.ge.f32.partialorder %v2487, 0.0
      %vm4390 = vcmp.ge.f32.partialorder %v2490, 0.0
      %vm4391 = vcmp.ge.f32.partialorder %v2495, 0.0
      %vm4392 = vcmp.ge.f32.partialorder %v2498, 0.0
      %vm4393 = vcmp.ge.f32.partialorder %v2503, 0.0
      %vm4394 = vcmp.ge.f32.partialorder %v2506, 0.0
      %vm4395 = vcmp.ge.f32.partialorder %v2511, 0.0
      %vm4396 = vcmp.ge.f32.partialorder %v2514, 0.0
      %vm4397 = vcmp.ge.f32.partialorder %v2519, 0.0
      %vm4398 = vcmp.ge.f32.partialorder %v2522, 0.0
      %vm4399 = vcmp.ge.f32.partialorder %v2527, 0.0
      %vm4400 = vcmp.ge.f32.partialorder %v2530, 0.0
      %vm4401 = vcmp.ge.f32.partialorder %v2535, 0.0
      %vm4402 = vcmp.ge.f32.partialorder %v2538, 0.0
      %vm4403 = vcmp.ge.f32.partialorder %v2543, 0.0
      %vm4404 = vcmp.ge.f32.partialorder %v2546, 0.0
      %vm4405 = vcmp.ge.f32.partialorder %v2551, 0.0
      %vm4406 = vcmp.ge.f32.partialorder %v2554, 0.0
      %vm4407 = vcmp.ge.f32.partialorder %v2559, 0.0
      %vm4408 = vcmp.ge.f32.partialorder %v2562, 0.0
      %vm4409 = vcmp.ge.f32.partialorder %v2567, 0.0
      %vm4410 = vcmp.ge.f32.partialorder %v2570, 0.0
      %vm4411 = vcmp.ge.f32.partialorder %v2575, 0.0
      %vm4412 = vcmp.ge.f32.partialorder %v2578, 0.0
      %vm4413 = vcmp.ge.f32.partialorder %v2583, 0.0
      %vm4414 = vcmp.ge.f32.partialorder %v2586, 0.0
      %vm4415 = vcmp.ge.f32.partialorder %v2591, 0.0
      %vm4416 = vcmp.ge.f32.partialorder %v2594, 0.0
      %vm4417 = vcmp.ge.f32.partialorder %v2599, 0.0
      %vm4418 = vcmp.ge.f32.partialorder %v2602, 0.0
      %vm4419 = vcmp.ge.f32.partialorder %v2607, 0.0
      %vm4420 = vcmp.ge.f32.partialorder %v2610, 0.0
      %vm4421 = vcmp.ge.f32.partialorder %v2615, 0.0
      %vm4422 = vcmp.ge.f32.partialorder %v2618, 0.0
      %vm4423 = vcmp.ge.f32.partialorder %v2623, 0.0
      %vm4424 = vcmp.ge.f32.partialorder %v2626, 0.0
      %vm4425 = vcmp.ge.f32.partialorder %v2631, 0.0
      %vm4426 = vcmp.ge.f32.partialorder %v2634, 0.0
      %vm4427 = vcmp.ge.f32.partialorder %v2639, 0.0
      %vm4428 = vcmp.ge.f32.partialorder %v2642, 0.0
      %vm4429 = vcmp.ge.f32.partialorder %v2647, 0.0
      %vm4430 = vcmp.ge.f32.partialorder %v2650, 0.0
      %vm4431 = vcmp.ge.f32.partialorder %v2655, 0.0
      %vm4432 = vcmp.ge.f32.partialorder %v2658, 0.0
      %vm4433 = vcmp.ge.f32.partialorder %v2663, 0.0
      %vm4434 = vcmp.ge.f32.partialorder %v2666, 0.0
      %vm4435 = vcmp.ge.f32.partialorder %v2671, 0.0
      %vm4436 = vcmp.ge.f32.partialorder %v2674, 0.0
      %vm4437 = vcmp.ge.f32.partialorder %v2679, 0.0
      %vm4438 = vcmp.ge.f32.partialorder %v2682, 0.0
      %vm4439 = vcmp.ge.f32.partialorder %v2687, 0.0
      %vm4440 = vcmp.ge.f32.partialorder %v2690, 0.0
      %vm4441 = vcmp.ge.f32.partialorder %v2695, 0.0
      %vm4442 = vcmp.ge.f32.partialorder %v2698, 0.0
      %vm4443 = vcmp.ge.f32.partialorder %v2703, 0.0
      %vm4444 = vcmp.ge.f32.partialorder %v2706, 0.0
      %vm4445 = vcmp.ge.f32.partialorder %v2711, 0.0
      %vm4446 = vcmp.ge.f32.partialorder %v2714, 0.0
      %vm4447 = vcmp.ge.f32.partialorder %v2719, 0.0
      %vm4448 = vcmp.ge.f32.partialorder %v2722, 0.0
      %vm4449 = vcmp.ge.f32.partialorder %v2727, 0.0
      %vm4450 = vcmp.ge.f32.partialorder %v2730, 0.0
      %vm4451 = vcmp.ge.f32.partialorder %v2735, 0.0
      %vm4452 = vcmp.ge.f32.partialorder %v2738, 0.0
      %vm4453 = vcmp.ge.f32.partialorder %v2743, 0.0
      %vm4454 = vcmp.ge.f32.partialorder %v2746, 0.0
      %vm4455 = vcmp.ge.f32.partialorder %v2751, 0.0
      %vm4456 = vcmp.ge.f32.partialorder %v2754, 0.0
      %vm4457 = vcmp.ge.f32.partialorder %v2759, 0.0
      %vm4458 = vcmp.ge.f32.partialorder %v2762, 0.0
      %vm4459 = vcmp.ge.f32.partialorder %v2767, 0.0
      %vm4460 = vcmp.ge.f32.partialorder %v2770, 0.0
      %vm4461 = vcmp.ge.f32.partialorder %v2775, 0.0
      %vm4462 = vcmp.ge.f32.partialorder %v2778, 0.0
      %vm4463 = vcmp.ge.f32.partialorder %v2783, 0.0
      %vm4464 = vcmp.ge.f32.partialorder %v2786, 0.0
      %vm4465 = vcmp.ge.f32.partialorder %v2791, 0.0
      %vm4466 = vcmp.ge.f32.partialorder %v2794, 0.0
      %vm4467 = vcmp.ge.f32.partialorder %v2799, 0.0
      %vm4468 = vcmp.ge.f32.partialorder %v2802, 0.0
      %vm4469 = vcmp.ge.f32.partialorder %v2807, 0.0
      %vm4470 = vcmp.ge.f32.partialorder %v2810, 0.0
      %vm4471 = vcmp.ge.f32.partialorder %v2815, 0.0
      %vm4472 = vcmp.ge.f32.partialorder %v2818, 0.0
      %vm4473 = vcmp.ge.f32.partialorder %v2823, 0.0
      %vm4474 = vcmp.ge.f32.partialorder %v2826, 0.0
      %vm4475 = vcmp.ge.f32.partialorder %v2831, 0.0
      %vm4476 = vcmp.ge.f32.partialorder %v2834, 0.0
      %vm4477 = vcmp.ge.f32.partialorder %v2839, 0.0
      %vm4478 = vcmp.ge.f32.partialorder %v2842, 0.0
      %vm4479 = vcmp.ge.f32.partialorder %v2847, 0.0
      %vm4480 = vcmp.ge.f32.partialorder %v2850, 0.0
      %vm4481 = vcmp.ge.f32.partialorder %v2855, 0.0
      %vm4482 = vcmp.ge.f32.partialorder %v2858, 0.0
      %vm4483 = vcmp.ge.f32.partialorder %v2863, 0.0
      %vm4484 = vcmp.ge.f32.partialorder %v2866, 0.0
      %vm4485 = vcmp.ge.f32.partialorder %v2871, 0.0
      %vm4486 = vcmp.ge.f32.partialorder %v2874, 0.0
      %vm4487 = vcmp.ge.f32.partialorder %v2879, 0.0
      %vm4488 = vcmp.ge.f32.partialorder %v2882, 0.0
      %vm4489 = vcmp.ge.f32.partialorder %v2887, 0.0
      %vm4490 = vcmp.ge.f32.partialorder %v2890, 0.0
      %vm4491 = vcmp.ge.f32.partialorder %v2895, 0.0
      %vm4492 = vcmp.ge.f32.partialorder %v2898, 0.0
      %vm4493 = vcmp.ge.f32.partialorder %v2903, 0.0
      %vm4494 = vcmp.ge.f32.partialorder %v2906, 0.0
      %vm4495 = vcmp.ge.f32.partialorder %v2911, 0.0
      %vm4496 = vcmp.ge.f32.partialorder %v2914, 0.0
      %vm4497 = vcmp.ge.f32.partialorder %v2919, 0.0
      %vm4498 = vcmp.ge.f32.partialorder %v2922, 0.0
      %vm4499 = vcmp.ge.f32.partialorder %v2927, 0.0
      %vm4500 = vcmp.ge.f32.partialorder %v2930, 0.0
      %vm4501 = vcmp.ge.f32.partialorder %v2935, 0.0
      %vm4502 = vcmp.ge.f32.partialorder %v2938, 0.0
      %vm4503 = vcmp.ge.f32.partialorder %v2943, 0.0
      %vm4504 = vcmp.ge.f32.partialorder %v2946, 0.0
      %vm4505 = vcmp.ge.f32.partialorder %v2951, 0.0
      %vm4506 = vcmp.ge.f32.partialorder %v2954, 0.0
      %vm4507 = vcmp.ge.f32.partialorder %v2959, 0.0
      %vm4508 = vcmp.ge.f32.partialorder %v2962, 0.0
      %vm4509 = vcmp.ge.f32.partialorder %v2967, 0.0
      %vm4510 = vcmp.ge.f32.partialorder %v2970, 0.0
      %vm4511 = vcmp.ge.f32.partialorder %v2975, 0.0
      %vm4512 = vcmp.ge.f32.partialorder %v2978, 0.0
      %vm4513 = vcmp.ge.f32.partialorder %v2983, 0.0
      %vm4514 = vcmp.ge.f32.partialorder %v2986, 0.0
      %vm4515 = vcmp.ge.f32.partialorder %v2991, 0.0
      %vm4516 = vcmp.ge.f32.partialorder %v2994, 0.0
      %vm4517 = vcmp.ge.f32.partialorder %v2999, 0.0
      %vm4518 = vcmp.ge.f32.partialorder %v3002, 0.0
      %vm4519 = vcmp.ge.f32.partialorder %v3007, 0.0
      %vm4520 = vcmp.ge.f32.partialorder %v3010, 0.0
      %vm4521 = vcmp.ge.f32.partialorder %v3015, 0.0
      %vm4522 = vcmp.ge.f32.partialorder %v3018, 0.0
      %vm4523 = vcmp.ge.f32.partialorder %v3023, 0.0
      %vm4524 = vcmp.ge.f32.partialorder %v3026, 0.0
      %vm4525 = vcmp.ge.f32.partialorder %v3031, 0.0
      %vm4526 = vcmp.ge.f32.partialorder %v3034, 0.0
      %vm4527 = vcmp.ge.f32.partialorder %v3039, 0.0
      %vm4528 = vcmp.ge.f32.partialorder %v3042, 0.0
      %vm4529 = vcmp.ge.f32.partialorder %v3047, 0.0
      %vm4530 = vcmp.ge.f32.partialorder %v3050, 0.0
      %vm4531 = vcmp.ge.f32.partialorder %v3055, 0.0
      %vm4532 = vcmp.ge.f32.partialorder %v3058, 0.0
      %vm4533 = vcmp.ge.f32.partialorder %v3063, 0.0
      %vm4534 = vcmp.ge.f32.partialorder %v3066, 0.0
      %vm4535 = vcmp.ge.f32.partialorder %v3071, 0.0
      %vm4536 = vcmp.ge.f32.partialorder %v3074, 0.0
      %vm4537 = vcmp.ge.f32.partialorder %v3079, 0.0
      %vm4538 = vcmp.ge.f32.partialorder %v3082, 0.0
      %vm4539 = vcmp.ge.f32.partialorder %v3087, 0.0
      %vm4540 = vcmp.ge.f32.partialorder %v3090, 0.0
      %vm4541 = vcmp.ge.f32.partialorder %v3095, 0.0
      %vm4542 = vcmp.ge.f32.partialorder %v3098, 0.0
      %vm4543 = vcmp.ge.f32.partialorder %v3103, 0.0
      %vm4544 = vcmp.ge.f32.partialorder %v3106, 0.0
      %vm4545 = vcmp.ge.f32.partialorder %v3111, 0.0
      %vm4546 = vcmp.ge.f32.partialorder %v3114, 0.0
      %vm4547 = vcmp.ge.f32.partialorder %v3119, 0.0
      %vm4548 = vcmp.ge.f32.partialorder %v3122, 0.0
      %vm4549 = vcmp.ge.f32.partialorder %v3127, 0.0
      %vm4550 = vcmp.ge.f32.partialorder %v3130, 0.0
      %vm4551 = vcmp.ge.f32.partialorder %v3135, 0.0
      %vm4552 = vcmp.ge.f32.partialorder %v3138, 0.0
      %vm4553 = vcmp.ge.f32.partialorder %v3143, 0.0
      %vm4554 = vcmp.ge.f32.partialorder %v3146, 0.0
      %vm4555 = vcmp.ge.f32.partialorder %v3151, 0.0
      %vm4556 = vcmp.ge.f32.partialorder %v3154, 0.0
      %vm4557 = vcmp.ge.f32.partialorder %v3159, 0.0
      %vm4558 = vcmp.ge.f32.partialorder %v3162, 0.0
      %vm4559 = vcmp.ge.f32.partialorder %v3167, 0.0
      %vm4560 = vcmp.ge.f32.partialorder %v3170, 0.0
      %vm4561 = vcmp.ge.f32.partialorder %v3175, 0.0
      %vm4562 = vcmp.ge.f32.partialorder %v3178, 0.0
      %vm4563 = vcmp.ge.f32.partialorder %v3183, 0.0
      %vm4564 = vcmp.ge.f32.partialorder %v3186, 0.0
      %vm4565 = vcmp.ge.f32.partialorder %v3191, 0.0
      %vm4566 = vcmp.ge.f32.partialorder %v3194, 0.0
      %vm4567 = vcmp.ge.f32.partialorder %v3199, 0.0
      %vm4568 = vcmp.ge.f32.partialorder %v3202, 0.0
      %vm4569 = vcmp.ge.f32.partialorder %v3207, 0.0
      %vm4570 = vcmp.ge.f32.partialorder %v3210, 0.0
      %vm4571 = vcmp.ge.f32.partialorder %v3215, 0.0
      %vm4572 = vcmp.ge.f32.partialorder %v3218, 0.0
      %vm4573 = vcmp.ge.f32.partialorder %v3223, 0.0
      %vm4574 = vcmp.ge.f32.partialorder %v3226, 0.0
      %vm4575 = vcmp.ge.f32.partialorder %v3231, 0.0
      %vm4576 = vcmp.ge.f32.partialorder %v3234, 0.0
      %vm4577 = vcmp.ge.f32.partialorder %v3239, 0.0
      %vm4578 = vcmp.ge.f32.partialorder %v3242, 0.0
      %vm4579 = vcmp.ge.f32.partialorder %v3247, 0.0
      %vm4580 = vcmp.ge.f32.partialorder %v3250, 0.0
      %vm4581 = vcmp.ge.f32.partialorder %v3255, 0.0
      %vm4582 = vcmp.ge.f32.partialorder %v3258, 0.0
      %vm4583 = vcmp.ge.f32.partialorder %v3263, 0.0
      %vm4584 = vcmp.ge.f32.partialorder %v3266, 0.0
      %vm4585 = vcmp.ge.f32.partialorder %v3271, 0.0
      %vm4586 = vcmp.ge.f32.partialorder %v3274, 0.0
      %vm4587 = vcmp.ge.f32.partialorder %v3279, 0.0
      %vm4588 = vcmp.ge.f32.partialorder %v3282, 0.0
      %vm4589 = vcmp.ge.f32.partialorder %v3287, 0.0
      %vm4590 = vcmp.ge.f32.partialorder %v3290, 0.0
      %vm4591 = vcmp.ge.f32.partialorder %v3295, 0.0
      %vm4592 = vcmp.ge.f32.partialorder %v3298, 0.0
      %vm4593 = vcmp.ge.f32.partialorder %v3303, 0.0
      %vm4594 = vcmp.ge.f32.partialorder %v3306, 0.0
      %vm4595 = vcmp.ge.f32.partialorder %v3311, 0.0
      %vm4596 = vcmp.ge.f32.partialorder %v3314, 0.0
      %vm4597 = vcmp.ge.f32.partialorder %v3319, 0.0
      %vm4598 = vcmp.ge.f32.partialorder %v3322, 0.0
      %vm4599 = vcmp.ge.f32.partialorder %v3327, 0.0
      %vm4600 = vcmp.ge.f32.partialorder %v3330, 0.0
      %vm4601 = vcmp.ge.f32.partialorder %v3335, 0.0
      %vm4602 = vcmp.ge.f32.partialorder %v3338, 0.0
      %vm4603 = vcmp.ge.f32.partialorder %v3343, 0.0
      %vm4604 = vcmp.ge.f32.partialorder %v3346, 0.0
      %vm4605 = vcmp.ge.f32.partialorder %v3351, 0.0
      %vm4606 = vcmp.ge.f32.partialorder %v3354, 0.0
      %vm4607 = vcmp.ge.f32.partialorder %v3359, 0.0
      %vm4608 = vcmp.ge.f32.partialorder %v3362, 0.0
      %vm4609 = vcmp.ge.f32.partialorder %v3367, 0.0
      %vm4610 = vcmp.ge.f32.partialorder %v3370, 0.0
      %vm4611 = vcmp.ge.f32.partialorder %v3375, 0.0
      %vm4612 = vcmp.ge.f32.partialorder %v3378, 0.0
      %vm4613 = vcmp.ge.f32.partialorder %v3383, 0.0
      %vm4614 = vcmp.ge.f32.partialorder %v3386, 0.0
      %vm4615 = vcmp.ge.f32.partialorder %v3391, 0.0
      %vm4616 = vcmp.ge.f32.partialorder %v3394, 0.0
      %vm4617 = vcmp.ge.f32.partialorder %v3399, 0.0
      %vm4618 = vcmp.ge.f32.partialorder %v3402, 0.0
      %vm4619 = vcmp.ge.f32.partialorder %v3407, 0.0
      %vm4620 = vcmp.ge.f32.partialorder %v3410, 0.0
      %vm4621 = vcmp.ge.f32.partialorder %v3415, 0.0
      %vm4622 = vcmp.ge.f32.partialorder %v3418, 0.0
      %vm4623 = vcmp.ge.f32.partialorder %v3423, 0.0
      %vm4624 = vcmp.ge.f32.partialorder %v3426, 0.0
      %vm4625 = vcmp.ge.f32.partialorder %v3431, 0.0
      %vm4626 = vcmp.ge.f32.partialorder %v3434, 0.0
      %vm4627 = vcmp.ge.f32.partialorder %v3439, 0.0
      %vm4628 = vcmp.ge.f32.partialorder %v3442, 0.0
      %vm4629 = vcmp.ge.f32.partialorder %v3447, 0.0
      %vm4630 = vcmp.ge.f32.partialorder %v3450, 0.0
      %vm4631 = vcmp.ge.f32.partialorder %v3455, 0.0
      %vm4632 = vcmp.ge.f32.partialorder %v3458, 0.0
      %vm4633 = vcmp.ge.f32.partialorder %v3463, 0.0
      %vm4634 = vcmp.ge.f32.partialorder %v3466, 0.0
      %vm4635 = vcmp.ge.f32.partialorder %v3471, 0.0
      %vm4636 = vcmp.ge.f32.partialorder %v3474, 0.0
      %vm4637 = vcmp.ge.f32.partialorder %v3479, 0.0
      %vm4638 = vcmp.ge.f32.partialorder %v3482, 0.0
      %vm4639 = vcmp.ge.f32.partialorder %v3487, 0.0
      %vm4640 = vcmp.ge.f32.partialorder %v3490, 0.0
      %vm4641 = vcmp.ge.f32.partialorder %v3495, 0.0
      %vm4642 = vcmp.ge.f32.partialorder %v3498, 0.0
      %vm4643 = vcmp.ge.f32.partialorder %v3503, 0.0
      %vm4644 = vcmp.ge.f32.partialorder %v3506, 0.0
      %vm4645 = vcmp.ge.f32.partialorder %v3511, 0.0
      %vm4646 = vcmp.ge.f32.partialorder %v3514, 0.0
      %vm4647 = vcmp.ge.f32.partialorder %v3519, 0.0
      %vm4648 = vcmp.ge.f32.partialorder %v3522, 0.0
      %vm4649 = vcmp.ge.f32.partialorder %v3527, 0.0
      %vm4650 = vcmp.ge.f32.partialorder %v3530, 0.0
      %vm4651 = vcmp.ge.f32.partialorder %v3535, 0.0
      %vm4652 = vcmp.ge.f32.partialorder %v3538, 0.0
      %vm4653 = vcmp.ge.f32.partialorder %v3543, 0.0
      %vm4654 = vcmp.ge.f32.partialorder %v3546, 0.0
      %vm4655 = vcmp.ge.f32.partialorder %v3551, 0.0
      %vm4656 = vcmp.ge.f32.partialorder %v3554, 0.0
      %vm4657 = vcmp.ge.f32.partialorder %v3559, 0.0
      %vm4658 = vcmp.ge.f32.partialorder %v3562, 0.0
      %vm4659 = vcmp.ge.f32.partialorder %v3567, 0.0
      %vm4660 = vcmp.ge.f32.partialorder %v3570, 0.0
      %vm4661 = vcmp.ge.f32.partialorder %v3575, 0.0
      %vm4662 = vcmp.ge.f32.partialorder %v3578, 0.0
      %vm4663 = vcmp.ge.f32.partialorder %v3583, 0.0
      %vm4664 = vcmp.ge.f32.partialorder %v3586, 0.0
      %vm4665 = vcmp.ge.f32.partialorder %v3591, 0.0
      %vm4666 = vcmp.ge.f32.partialorder %v3594, 0.0
      %vm4667 = vcmp.ge.f32.partialorder %v3599, 0.0
      %vm4668 = vcmp.ge.f32.partialorder %v3602, 0.0
      %vm4669 = vcmp.ge.f32.partialorder %v3607, 0.0
      %vm4670 = vcmp.ge.f32.partialorder %v3610, 0.0
      %vm4671 = vcmp.ge.f32.partialorder %v3615, 0.0
      %vm4672 = vcmp.ge.f32.partialorder %v3618, 0.0
      %vm4673 = vcmp.ge.f32.partialorder %v3623, 0.0
      %vm4674 = vcmp.ge.f32.partialorder %v3626, 0.0
      %vm4675 = vcmp.ge.f32.partialorder %v3631, 0.0
      %vm4676 = vcmp.ge.f32.partialorder %v3634, 0.0
      %vm4677 = vcmp.ge.f32.partialorder %v3639, 0.0
      %vm4678 = vcmp.ge.f32.partialorder %v3642, 0.0
      %vm4679 = vcmp.ge.f32.partialorder %v3647, 0.0
      %vm4680 = vcmp.ge.f32.partialorder %v3650, 0.0
      %vm4681 = vcmp.ge.f32.partialorder %v3655, 0.0
      %vm4682 = vcmp.ge.f32.partialorder %v3658, 0.0
      %vm4683 = vcmp.ge.f32.partialorder %v3663, 0.0
      %vm4684 = vcmp.ge.f32.partialorder %v3666, 0.0
      %vm4685 = vcmp.ge.f32.partialorder %v3671, 0.0
      %vm4686 = vcmp.ge.f32.partialorder %v3674, 0.0
      %vm4687 = vcmp.ge.f32.partialorder %v3679, 0.0
      %vm4688 = vcmp.ge.f32.partialorder %v3682, 0.0
      %vm4689 = vcmp.ge.f32.partialorder %v3687, 0.0
      %vm4690 = vcmp.ge.f32.partialorder %v3690, 0.0
      %vm4691 = vcmp.ge.f32.partialorder %v3695, 0.0
      %vm4692 = vcmp.ge.f32.partialorder %v3698, 0.0
      %vm4693 = vcmp.ge.f32.partialorder %v3703, 0.0
      %vm4694 = vcmp.ge.f32.partialorder %v3706, 0.0
      %vm4695 = vcmp.ge.f32.partialorder %v3711, 0.0
      %vm4696 = vcmp.ge.f32.partialorder %v3714, 0.0
      %vm4697 = vcmp.ge.f32.partialorder %v3719, 0.0
      %vm4698 = vcmp.ge.f32.partialorder %v3722, 0.0
      %vm4699 = vcmp.ge.f32.partialorder %v3727, 0.0
      %vm4700 = vcmp.ge.f32.partialorder %v3730, 0.0
      %vm4701 = vcmp.ge.f32.partialorder %v3735, 0.0
      %vm4702 = vcmp.ge.f32.partialorder %v3738, 0.0
      %vm4703 = vcmp.ge.f32.partialorder %v3743, 0.0
      %vm4704 = vcmp.ge.f32.partialorder %v3746, 0.0
      %vm4705 = vcmp.ge.f32.partialorder %v3751, 0.0
      %vm4706 = vcmp.ge.f32.partialorder %v3754, 0.0
      %vm4707 = vcmp.ge.f32.partialorder %v3759, 0.0
      %vm4708 = vcmp.ge.f32.partialorder %v3762, 0.0
      %vm4709 = vcmp.ge.f32.partialorder %v3767, 0.0
      %vm4710 = vcmp.ge.f32.partialorder %v3770, 0.0
      %vm4711 = vcmp.ge.f32.partialorder %v3775, 0.0
      %vm4712 = vcmp.ge.f32.partialorder %v3778, 0.0
      %vm4713 = vcmp.ge.f32.partialorder %v3783, 0.0
      %vm4714 = vcmp.ge.f32.partialorder %v3786, 0.0
      %vm4715 = vcmp.ge.f32.partialorder %v3791, 0.0
      %vm4716 = vcmp.ge.f32.partialorder %v3794, 0.0
      %vm4717 = vcmp.ge.f32.partialorder %v3799, 0.0
      %vm4718 = vcmp.ge.f32.partialorder %v3802, 0.0
      %vm4719 = vcmp.ge.f32.partialorder %v3807, 0.0
      %vm4720 = vcmp.ge.f32.partialorder %v3810, 0.0
      %vm4721 = vcmp.ge.f32.partialorder %v3815, 0.0
      %vm4722 = vcmp.ge.f32.partialorder %v3818, 0.0
      %vm4723 = vcmp.ge.f32.partialorder %v3823, 0.0
      %vm4724 = vcmp.ge.f32.partialorder %v3826, 0.0
      %vm4725 = vcmp.ge.f32.partialorder %v3831, 0.0
      %vm4726 = vcmp.ge.f32.partialorder %v3834, 0.0
      %vm4727 = vcmp.ge.f32.partialorder %v3839, 0.0
      %vm4728 = vcmp.ge.f32.partialorder %v3842, 0.0
      %vm4729 = vcmp.ge.f32.partialorder %v3847, 0.0
      %vm4730 = vcmp.ge.f32.partialorder %v3850, 0.0
      %vm4731 = vcmp.ge.f32.partialorder %v3855, 0.0
      %vm4732 = vcmp.ge.f32.partialorder %v3858, 0.0
      %vm4733 = vcmp.ge.f32.partialorder %v3863, 0.0
      %vm4734 = vcmp.ge.f32.partialorder %v3866, 0.0
      %vm4735 = vcmp.ge.f32.partialorder %v3871, 0.0
      %vm4736 = vcmp.ge.f32.partialorder %v3874, 0.0
      %vm4737 = vcmp.ge.f32.partialorder %v3879, 0.0
      %vm4738 = vcmp.ge.f32.partialorder %v3882, 0.0
      %vm4739 = vcmp.ge.f32.partialorder %v3887, 0.0
      %vm4740 = vcmp.ge.f32.partialorder %v3890, 0.0
      %vm4741 = vcmp.ge.f32.partialorder %v3895, 0.0
      %vm4742 = vcmp.ge.f32.partialorder %v3898, 0.0
      %vm4743 = vcmp.ge.f32.partialorder %v3903, 0.0
      %vm4744 = vcmp.ge.f32.partialorder %v3906, 0.0
      %vm4745 = vcmp.ge.f32.partialorder %v3911, 0.0
      %vm4746 = vcmp.ge.f32.partialorder %v3914, 0.0
      %vm4747 = vcmp.ge.f32.partialorder %v3919, 0.0
      %vm4748 = vcmp.ge.f32.partialorder %v3922, 0.0
      %vm4749 = vcmp.ge.f32.partialorder %v3927, 0.0
      %vm4750 = vcmp.ge.f32.partialorder %v3930, 0.0
      %vm4751 = vcmp.ge.f32.partialorder %v3935, 0.0
      %vm4752 = vcmp.ge.f32.partialorder %v3938, 0.0
      %vm4753 = vcmp.ge.f32.partialorder %v3943, 0.0
      %vm4754 = vcmp.ge.f32.partialorder %v3946, 0.0
      %vm4755 = vcmp.ge.f32.partialorder %v3951, 0.0
      %vm4756 = vcmp.ge.f32.partialorder %v3954, 0.0
      %vm4757 = vcmp.ge.f32.partialorder %v3959, 0.0
      %vm4758 = vcmp.ge.f32.partialorder %v3962, 0.0
      %vm4759 = vcmp.ge.f32.partialorder %v3967, 0.0
      %vm4760 = vcmp.ge.f32.partialorder %v3970, 0.0
      %vm4761 = vcmp.ge.f32.partialorder %v3975, 0.0
      %vm4762 = vcmp.ge.f32.partialorder %v3978, 0.0
      %vm4763 = vcmp.ge.f32.partialorder %v3983, 0.0
      %vm4764 = vcmp.ge.f32.partialorder %v3986, 0.0
      %vm4765 = vcmp.ge.f32.partialorder %v3991, 0.0
      %vm4766 = vcmp.ge.f32.partialorder %v3994, 0.0
      %vm4767 = vcmp.ge.f32.partialorder %v3999, 0.0
      %vm4768 = vcmp.ge.f32.partialorder %v4002, 0.0
      %vm4769 = vcmp.ge.f32.partialorder %v4007, 0.0
      %vm4770 = vcmp.ge.f32.partialorder %v4010, 0.0
      %vm4771 = vcmp.ge.f32.partialorder %v4015, 0.0
      %vm4772 = vcmp.ge.f32.partialorder %v4018, 0.0
      %vm4773 = vcmp.ge.f32.partialorder %v4023, 0.0
      %vm4774 = vcmp.ge.f32.partialorder %v4026, 0.0
      %vm4775 = vcmp.ge.f32.partialorder %v4031, 0.0
      %vm4776 = vcmp.ge.f32.partialorder %v4034, 0.0
      %vm4777 = vcmp.ge.f32.partialorder %v4039, 0.0
      %vm4778 = vcmp.ge.f32.partialorder %v4042, 0.0
      %vm4779 = vcmp.ge.f32.partialorder %v4047, 0.0
      %vm4780 = vcmp.ge.f32.partialorder %v4050, 0.0
      %vm4781 = vcmp.ge.f32.partialorder %v4055, 0.0
      %vm4782 = vcmp.ge.f32.partialorder %v4058, 0.0
      %vm4783 = vcmp.ge.f32.partialorder %v4063, 0.0
      %vm4784 = vcmp.ge.f32.partialorder %v4066, 0.0
      %vm4785 = vcmp.ge.f32.partialorder %v4071, 0.0
      %vm4786 = vcmp.ge.f32.partialorder %v4074, 0.0
      %vm4787 = vcmp.ge.f32.partialorder %v4079, 0.0
      %vm4788 = vcmp.ge.f32.partialorder %v4082, 0.0
      %vm4789 = vcmp.ge.f32.partialorder %v4087, 0.0
      %vm4790 = vcmp.ge.f32.partialorder %v4090, 0.0
      %vm4791 = vcmp.ge.f32.partialorder %v4095, 0.0
      %vm4792 = vcmp.ge.f32.partialorder %v4098, 0.0
      %vm4793 = vcmp.ge.f32.partialorder %v4103, 0.0
      %vm4794 = vcmp.ge.f32.partialorder %v4106, 0.0
      %vm4795 = vcmp.ge.f32.partialorder %v4111, 0.0
      %vm4796 = vcmp.ge.f32.partialorder %v4114, 0.0
      %vm4797 = vcmp.ge.f32.partialorder %v4119, 0.0
      %vm4798 = vcmp.ge.f32.partialorder %v4122, 0.0
      %vm4799 = vcmp.ge.f32.partialorder %v4127, 0.0
      %vm4800 = vcmp.ge.f32.partialorder %v4130, 0.0
      %vm4801 = vcmp.ge.f32.partialorder %v4135, 0.0
      %vm4802 = vcmp.ge.f32.partialorder %v4138, 0.0
      %vm4803 = vcmp.ge.f32.partialorder %v4143, 0.0
      %vm4804 = vcmp.ge.f32.partialorder %v4146, 0.0
      %vm4805 = vcmp.ge.f32.partialorder %v4151, 0.0
      %vm4806 = vcmp.ge.f32.partialorder %v4154, 0.0
      %vm4807 = vcmp.ge.f32.partialorder %v4159, 0.0
      %vm4808 = vcmp.ge.f32.partialorder %v4162, 0.0
      %vm4809 = vcmp.ge.f32.partialorder %v4167, 0.0
      %vm4810 = vcmp.ge.f32.partialorder %v4170, 0.0
      %vm4811 = vcmp.ge.f32.partialorder %v4175, 0.0
      %vm4812 = vcmp.ge.f32.partialorder %v4178, 0.0
      %vm4813 = vcmp.ge.f32.partialorder %v4183, 0.0
      %vm4814 = vcmp.ge.f32.partialorder %v4186, 0.0
      %vm4815 = vcmp.ge.f32.partialorder %v4191, 0.0
      %vm4816 = vcmp.ge.f32.partialorder %v4194, 0.0
      %vm4817 = vcmp.ge.f32.partialorder %v4199, 0.0
      %vm4818 = vcmp.ge.f32.partialorder %v4202, 0.0
      %vm4819 = vcmp.ge.f32.partialorder %v4207, 0.0
      %vm4820 = vcmp.ge.f32.partialorder %v4210, 0.0
      %vm4821 = vcmp.ge.f32.partialorder %v4215, 0.0
      %vm4822 = vcmp.ge.f32.partialorder %v4218, 0.0
      %vm4823 = vcmp.ge.f32.partialorder %v4223, 0.0
      %vm4824 = vcmp.ge.f32.partialorder %v4226, 0.0
      %vm4825 = vcmp.ge.f32.partialorder %v4231, 0.0
      %vm4826 = vcmp.ge.f32.partialorder %v4234, 0.0
      %vm4827 = vcmp.ge.f32.partialorder %v4239, 0.0
      %vm4828 = vcmp.ge.f32.partialorder %v4242, 0.0
      %vm4829 = vcmp.ge.f32.partialorder %v4247, 0.0
      %vm4830 = vcmp.ge.f32.partialorder %v4250, 0.0
      %vm4831 = vcmp.ge.f32.partialorder %v4255, 0.0
      %vm4832 = vcmp.ge.f32.partialorder %v4258, 0.0
      %vm4833 = vcmp.ge.f32.partialorder %v4263, 0.0
      %vm4834 = vcmp.ge.f32.partialorder %v4266, 0.0
      %vm4835 = vcmp.ge.f32.partialorder %v4271, 0.0
      %vm4836 = vcmp.ge.f32.partialorder %v4274, 0.0
      %vm4837 = vcmp.ge.f32.partialorder %v4279, 0.0
      %vm4838 = vcmp.ge.f32.partialorder %v4282, 0.0
      %vm4839 = vcmp.ge.f32.partialorder %v4287, 0.0
      %vm4840 = vcmp.ge.f32.partialorder %v4290, 0.0
      %vm4841 = vcmp.ge.f32.partialorder %v4295, 0.0
      %vm4842 = vcmp.ge.f32.partialorder %v4298, 0.0
      %vm4843 = vcmp.ge.f32.partialorder %v4303, 0.0
      %vm4844 = vcmp.ge.f32.partialorder %v4306, 0.0
      %vm4845 = vcmp.ge.f32.partialorder %v4311, 0.0
      %vm4846 = vcmp.ge.f32.partialorder %v4314, 0.0
      %vm4847 = vcmp.ge.f32.partialorder %v4319, 0.0
      %vm4848 = vcmp.ge.f32.partialorder %v4322, 0.0
      %vm4849 = vcmp.ge.f32.partialorder %v4327, 0.0
      %vm4850 = vcmp.ge.f32.partialorder %v4330, 0.0
      %vm4851 = vcmp.ge.f32.partialorder %v4335, 0.0
      %vm4852 = vcmp.ge.f32.partialorder %v4338, 0.0
      %v4853 = vmul.f32 %v2295, 0.2
      %v4854 = vmul.f32 %v2298, 0.2
      %v4855 = vmul.f32 %v2303, 0.2
      %v4856 = vmul.f32 %v2306, 0.2
      %v4857 = vmul.f32 %v2311, 0.2
      %v4858 = vmul.f32 %v2314, 0.2
      %v4859 = vmul.f32 %v2319, 0.2
      %v4860 = vmul.f32 %v2322, 0.2
      %v4861 = vmul.f32 %v2327, 0.2
      %v4862 = vmul.f32 %v2330, 0.2
      %v4863 = vmul.f32 %v2335, 0.2
      %v4864 = vmul.f32 %v2338, 0.2
      %v4865 = vmul.f32 %v2343, 0.2
      %v4866 = vmul.f32 %v2346, 0.2
      %v4867 = vmul.f32 %v2351, 0.2
      %v4868 = vmul.f32 %v2354, 0.2
      %v4869 = vmul.f32 %v2359, 0.2
      %v4870 = vmul.f32 %v2362, 0.2
      %v4871 = vmul.f32 %v2367, 0.2
      %v4872 = vmul.f32 %v2370, 0.2
      %v4873 = vmul.f32 %v2375, 0.2
      %v4874 = vmul.f32 %v2378, 0.2
      %v4875 = vmul.f32 %v2383, 0.2
      %v4876 = vmul.f32 %v2386, 0.2
      %v4877 = vmul.f32 %v2391, 0.2
      %v4878 = vmul.f32 %v2394, 0.2
      %v4879 = vmul.f32 %v2399, 0.2
      %v4880 = vmul.f32 %v2402, 0.2
      %v4881 = vmul.f32 %v2407, 0.2
      %v4882 = vmul.f32 %v2410, 0.2
      %v4883 = vmul.f32 %v2415, 0.2
      %v4884 = vmul.f32 %v2418, 0.2
      %v4885 = vmul.f32 %v2423, 0.2
      %v4886 = vmul.f32 %v2426, 0.2
      %v4887 = vmul.f32 %v2431, 0.2
      %v4888 = vmul.f32 %v2434, 0.2
      %v4889 = vmul.f32 %v2439, 0.2
      %v4890 = vmul.f32 %v2442, 0.2
      %v4891 = vmul.f32 %v2447, 0.2
      %v4892 = vmul.f32 %v2450, 0.2
      %v4893 = vmul.f32 %v2455, 0.2
      %v4894 = vmul.f32 %v2458, 0.2
      %v4895 = vmul.f32 %v2463, 0.2
      %v4896 = vmul.f32 %v2466, 0.2
      %v4897 = vmul.f32 %v2471, 0.2
      %v4898 = vmul.f32 %v2474, 0.2
      %v4899 = vmul.f32 %v2479, 0.2
      %v4900 = vmul.f32 %v2482, 0.2
      %v4901 = vmul.f32 %v2487, 0.2
      %v4902 = vmul.f32 %v2490, 0.2
      %v4903 = vmul.f32 %v2495, 0.2
      %v4904 = vmul.f32 %v2498, 0.2
      %v4905 = vmul.f32 %v2503, 0.2
      %v4906 = vmul.f32 %v2506, 0.2
      %v4907 = vmul.f32 %v2511, 0.2
      %v4908 = vmul.f32 %v2514, 0.2
      %v4909 = vmul.f32 %v2519, 0.2
      %v4910 = vmul.f32 %v2522, 0.2
      %v4911 = vmul.f32 %v2527, 0.2
      %v4912 = vmul.f32 %v2530, 0.2
      %v4913 = vmul.f32 %v2535, 0.2
      %v4914 = vmul.f32 %v2538, 0.2
      %v4915 = vmul.f32 %v2543, 0.2
      %v4916 = vmul.f32 %v2546, 0.2
      %v4917 = vmul.f32 %v2551, 0.2
      %v4918 = vmul.f32 %v2554, 0.2
      %v4919 = vmul.f32 %v2559, 0.2
      %v4920 = vmul.f32 %v2562, 0.2
      %v4921 = vmul.f32 %v2567, 0.2
      %v4922 = vmul.f32 %v2570, 0.2
      %v4923 = vmul.f32 %v2575, 0.2
      %v4924 = vmul.f32 %v2578, 0.2
      %v4925 = vmul.f32 %v2583, 0.2
      %v4926 = vmul.f32 %v2586, 0.2
      %v4927 = vmul.f32 %v2591, 0.2
      %v4928 = vmul.f32 %v2594, 0.2
      %v4929 = vmul.f32 %v2599, 0.2
      %v4930 = vmul.f32 %v2602, 0.2
      %v4931 = vmul.f32 %v2607, 0.2
      %v4932 = vmul.f32 %v2610, 0.2
      %v4933 = vmul.f32 %v2615, 0.2
      %v4934 = vmul.f32 %v2618, 0.2
      %v4935 = vmul.f32 %v2623, 0.2
      %v4936 = vmul.f32 %v2626, 0.2
      %v4937 = vmul.f32 %v2631, 0.2
      %v4938 = vmul.f32 %v2634, 0.2
      %v4939 = vmul.f32 %v2639, 0.2
      %v4940 = vmul.f32 %v2642, 0.2
      %v4941 = vmul.f32 %v2647, 0.2
      %v4942 = vmul.f32 %v2650, 0.2
      %v4943 = vmul.f32 %v2655, 0.2
      %v4944 = vmul.f32 %v2658, 0.2
      %v4945 = vmul.f32 %v2663, 0.2
      %v4946 = vmul.f32 %v2666, 0.2
      %v4947 = vmul.f32 %v2671, 0.2
      %v4948 = vmul.f32 %v2674, 0.2
      %v4949 = vmul.f32 %v2679, 0.2
      %v4950 = vmul.f32 %v2682, 0.2
      %v4951 = vmul.f32 %v2687, 0.2
      %v4952 = vmul.f32 %v2690, 0.2
      %v4953 = vmul.f32 %v2695, 0.2
      %v4954 = vmul.f32 %v2698, 0.2
      %v4955 = vmul.f32 %v2703, 0.2
      %v4956 = vmul.f32 %v2706, 0.2
      %v4957 = vmul.f32 %v2711, 0.2
      %v4958 = vmul.f32 %v2714, 0.2
      %v4959 = vmul.f32 %v2719, 0.2
      %v4960 = vmul.f32 %v2722, 0.2
      %v4961 = vmul.f32 %v2727, 0.2
      %v4962 = vmul.f32 %v2730, 0.2
      %v4963 = vmul.f32 %v2735, 0.2
      %v4964 = vmul.f32 %v2738, 0.2
      %v4965 = vmul.f32 %v2743, 0.2
      %v4966 = vmul.f32 %v2746, 0.2
      %v4967 = vmul.f32 %v2751, 0.2
      %v4968 = vmul.f32 %v2754, 0.2
      %v4969 = vmul.f32 %v2759, 0.2
      %v4970 = vmul.f32 %v2762, 0.2
      %v4971 = vmul.f32 %v2767, 0.2
      %v4972 = vmul.f32 %v2770, 0.2
      %v4973 = vmul.f32 %v2775, 0.2
      %v4974 = vmul.f32 %v2778, 0.2
      %v4975 = vmul.f32 %v2783, 0.2
      %v4976 = vmul.f32 %v2786, 0.2
      %v4977 = vmul.f32 %v2791, 0.2
      %v4978 = vmul.f32 %v2794, 0.2
      %v4979 = vmul.f32 %v2799, 0.2
      %v4980 = vmul.f32 %v2802, 0.2
      %v4981 = vmul.f32 %v2807, 0.2
      %v4982 = vmul.f32 %v2810, 0.2
      %v4983 = vmul.f32 %v2815, 0.2
      %v4984 = vmul.f32 %v2818, 0.2
      %v4985 = vmul.f32 %v2823, 0.2
      %v4986 = vmul.f32 %v2826, 0.2
      %v4987 = vmul.f32 %v2831, 0.2
      %v4988 = vmul.f32 %v2834, 0.2
      %v4989 = vmul.f32 %v2839, 0.2
      %v4990 = vmul.f32 %v2842, 0.2
      %v4991 = vmul.f32 %v2847, 0.2
      %v4992 = vmul.f32 %v2850, 0.2
      %v4993 = vmul.f32 %v2855, 0.2
      %v4994 = vmul.f32 %v2858, 0.2
      %v4995 = vmul.f32 %v2863, 0.2
      %v4996 = vmul.f32 %v2866, 0.2
      %v4997 = vmul.f32 %v2871, 0.2
      %v4998 = vmul.f32 %v2874, 0.2
      %v4999 = vmul.f32 %v2879, 0.2
      %v5000 = vmul.f32 %v2882, 0.2
      %v5001 = vmul.f32 %v2887, 0.2
      %v5002 = vmul.f32 %v2890, 0.2
      %v5003 = vmul.f32 %v2895, 0.2
      %v5004 = vmul.f32 %v2898, 0.2
      %v5005 = vmul.f32 %v2903, 0.2
      %v5006 = vmul.f32 %v2906, 0.2
      %v5007 = vmul.f32 %v2911, 0.2
      %v5008 = vmul.f32 %v2914, 0.2
      %v5009 = vmul.f32 %v2919, 0.2
      %v5010 = vmul.f32 %v2922, 0.2
      %v5011 = vmul.f32 %v2927, 0.2
      %v5012 = vmul.f32 %v2930, 0.2
      %v5013 = vmul.f32 %v2935, 0.2
      %v5014 = vmul.f32 %v2938, 0.2
      %v5015 = vmul.f32 %v2943, 0.2
      %v5016 = vmul.f32 %v2946, 0.2
      %v5017 = vmul.f32 %v2951, 0.2
      %v5018 = vmul.f32 %v2954, 0.2
      %v5019 = vmul.f32 %v2959, 0.2
      %v5020 = vmul.f32 %v2962, 0.2
      %v5021 = vmul.f32 %v2967, 0.2
      %v5022 = vmul.f32 %v2970, 0.2
      %v5023 = vmul.f32 %v2975, 0.2
      %v5024 = vmul.f32 %v2978, 0.2
      %v5025 = vmul.f32 %v2983, 0.2
      %v5026 = vmul.f32 %v2986, 0.2
      %v5027 = vmul.f32 %v2991, 0.2
      %v5028 = vmul.f32 %v2994, 0.2
      %v5029 = vmul.f32 %v2999, 0.2
      %v5030 = vmul.f32 %v3002, 0.2
      %v5031 = vmul.f32 %v3007, 0.2
      %v5032 = vmul.f32 %v3010, 0.2
      %v5033 = vmul.f32 %v3015, 0.2
      %v5034 = vmul.f32 %v3018, 0.2
      %v5035 = vmul.f32 %v3023, 0.2
      %v5036 = vmul.f32 %v3026, 0.2
      %v5037 = vmul.f32 %v3031, 0.2
      %v5038 = vmul.f32 %v3034, 0.2
      %v5039 = vmul.f32 %v3039, 0.2
      %v5040 = vmul.f32 %v3042, 0.2
      %v5041 = vmul.f32 %v3047, 0.2
      %v5042 = vmul.f32 %v3050, 0.2
      %v5043 = vmul.f32 %v3055, 0.2
      %v5044 = vmul.f32 %v3058, 0.2
      %v5045 = vmul.f32 %v3063, 0.2
      %v5046 = vmul.f32 %v3066, 0.2
      %v5047 = vmul.f32 %v3071, 0.2
      %v5048 = vmul.f32 %v3074, 0.2
      %v5049 = vmul.f32 %v3079, 0.2
      %v5050 = vmul.f32 %v3082, 0.2
      %v5051 = vmul.f32 %v3087, 0.2
      %v5052 = vmul.f32 %v3090, 0.2
      %v5053 = vmul.f32 %v3095, 0.2
      %v5054 = vmul.f32 %v3098, 0.2
      %v5055 = vmul.f32 %v3103, 0.2
      %v5056 = vmul.f32 %v3106, 0.2
      %v5057 = vmul.f32 %v3111, 0.2
      %v5058 = vmul.f32 %v3114, 0.2
      %v5059 = vmul.f32 %v3119, 0.2
      %v5060 = vmul.f32 %v3122, 0.2
      %v5061 = vmul.f32 %v3127, 0.2
      %v5062 = vmul.f32 %v3130, 0.2
      %v5063 = vmul.f32 %v3135, 0.2
      %v5064 = vmul.f32 %v3138, 0.2
      %v5065 = vmul.f32 %v3143, 0.2
      %v5066 = vmul.f32 %v3146, 0.2
      %v5067 = vmul.f32 %v3151, 0.2
      %v5068 = vmul.f32 %v3154, 0.2
      %v5069 = vmul.f32 %v3159, 0.2
      %v5070 = vmul.f32 %v3162, 0.2
      %v5071 = vmul.f32 %v3167, 0.2
      %v5072 = vmul.f32 %v3170, 0.2
      %v5073 = vmul.f32 %v3175, 0.2
      %v5074 = vmul.f32 %v3178, 0.2
      %v5075 = vmul.f32 %v3183, 0.2
      %v5076 = vmul.f32 %v3186, 0.2
      %v5077 = vmul.f32 %v3191, 0.2
      %v5078 = vmul.f32 %v3194, 0.2
      %v5079 = vmul.f32 %v3199, 0.2
      %v5080 = vmul.f32 %v3202, 0.2
      %v5081 = vmul.f32 %v3207, 0.2
      %v5082 = vmul.f32 %v3210, 0.2
      %v5083 = vmul.f32 %v3215, 0.2
      %v5084 = vmul.f32 %v3218, 0.2
      %v5085 = vmul.f32 %v3223, 0.2
      %v5086 = vmul.f32 %v3226, 0.2
      %v5087 = vmul.f32 %v3231, 0.2
      %v5088 = vmul.f32 %v3234, 0.2
      %v5089 = vmul.f32 %v3239, 0.2
      %v5090 = vmul.f32 %v3242, 0.2
      %v5091 = vmul.f32 %v3247, 0.2
      %v5092 = vmul.f32 %v3250, 0.2
      %v5093 = vmul.f32 %v3255, 0.2
      %v5094 = vmul.f32 %v3258, 0.2
      %v5095 = vmul.f32 %v3263, 0.2
      %v5096 = vmul.f32 %v3266, 0.2
      %v5097 = vmul.f32 %v3271, 0.2
      %v5098 = vmul.f32 %v3274, 0.2
      %v5099 = vmul.f32 %v3279, 0.2
      %v5100 = vmul.f32 %v3282, 0.2
      %v5101 = vmul.f32 %v3287, 0.2
      %v5102 = vmul.f32 %v3290, 0.2
      %v5103 = vmul.f32 %v3295, 0.2
      %v5104 = vmul.f32 %v3298, 0.2
      %v5105 = vmul.f32 %v3303, 0.2
      %v5106 = vmul.f32 %v3306, 0.2
      %v5107 = vmul.f32 %v3311, 0.2
      %v5108 = vmul.f32 %v3314, 0.2
      %v5109 = vmul.f32 %v3319, 0.2
      %v5110 = vmul.f32 %v3322, 0.2
      %v5111 = vmul.f32 %v3327, 0.2
      %v5112 = vmul.f32 %v3330, 0.2
      %v5113 = vmul.f32 %v3335, 0.2
      %v5114 = vmul.f32 %v3338, 0.2
      %v5115 = vmul.f32 %v3343, 0.2
      %v5116 = vmul.f32 %v3346, 0.2
      %v5117 = vmul.f32 %v3351, 0.2
      %v5118 = vmul.f32 %v3354, 0.2
      %v5119 = vmul.f32 %v3359, 0.2
      %v5120 = vmul.f32 %v3362, 0.2
      %v5121 = vmul.f32 %v3367, 0.2
      %v5122 = vmul.f32 %v3370, 0.2
      %v5123 = vmul.f32 %v3375, 0.2
      %v5124 = vmul.f32 %v3378, 0.2
      %v5125 = vmul.f32 %v3383, 0.2
      %v5126 = vmul.f32 %v3386, 0.2
      %v5127 = vmul.f32 %v3391, 0.2
      %v5128 = vmul.f32 %v3394, 0.2
      %v5129 = vmul.f32 %v3399, 0.2
      %v5130 = vmul.f32 %v3402, 0.2
      %v5131 = vmul.f32 %v3407, 0.2
      %v5132 = vmul.f32 %v3410, 0.2
      %v5133 = vmul.f32 %v3415, 0.2
      %v5134 = vmul.f32 %v3418, 0.2
      %v5135 = vmul.f32 %v3423, 0.2
      %v5136 = vmul.f32 %v3426, 0.2
      %v5137 = vmul.f32 %v3431, 0.2
      %v5138 = vmul.f32 %v3434, 0.2
      %v5139 = vmul.f32 %v3439, 0.2
      %v5140 = vmul.f32 %v3442, 0.2
      %v5141 = vmul.f32 %v3447, 0.2
      %v5142 = vmul.f32 %v3450, 0.2
      %v5143 = vmul.f32 %v3455, 0.2
      %v5144 = vmul.f32 %v3458, 0.2
      %v5145 = vmul.f32 %v3463, 0.2
      %v5146 = vmul.f32 %v3466, 0.2
      %v5147 = vmul.f32 %v3471, 0.2
      %v5148 = vmul.f32 %v3474, 0.2
      %v5149 = vmul.f32 %v3479, 0.2
      %v5150 = vmul.f32 %v3482, 0.2
      %v5151 = vmul.f32 %v3487, 0.2
      %v5152 = vmul.f32 %v3490, 0.2
      %v5153 = vmul.f32 %v3495, 0.2
      %v5154 = vmul.f32 %v3498, 0.2
      %v5155 = vmul.f32 %v3503, 0.2
      %v5156 = vmul.f32 %v3506, 0.2
      %v5157 = vmul.f32 %v3511, 0.2
      %v5158 = vmul.f32 %v3514, 0.2
      %v5159 = vmul.f32 %v3519, 0.2
      %v5160 = vmul.f32 %v3522, 0.2
      %v5161 = vmul.f32 %v3527, 0.2
      %v5162 = vmul.f32 %v3530, 0.2
      %v5163 = vmul.f32 %v3535, 0.2
      %v5164 = vmul.f32 %v3538, 0.2
      %v5165 = vmul.f32 %v3543, 0.2
      %v5166 = vmul.f32 %v3546, 0.2
      %v5167 = vmul.f32 %v3551, 0.2
      %v5168 = vmul.f32 %v3554, 0.2
      %v5169 = vmul.f32 %v3559, 0.2
      %v5170 = vmul.f32 %v3562, 0.2
      %v5171 = vmul.f32 %v3567, 0.2
      %v5172 = vmul.f32 %v3570, 0.2
      %v5173 = vmul.f32 %v3575, 0.2
      %v5174 = vmul.f32 %v3578, 0.2
      %v5175 = vmul.f32 %v3583, 0.2
      %v5176 = vmul.f32 %v3586, 0.2
      %v5177 = vmul.f32 %v3591, 0.2
      %v5178 = vmul.f32 %v3594, 0.2
      %v5179 = vmul.f32 %v3599, 0.2
      %v5180 = vmul.f32 %v3602, 0.2
      %v5181 = vmul.f32 %v3607, 0.2
      %v5182 = vmul.f32 %v3610, 0.2
      %v5183 = vmul.f32 %v3615, 0.2
      %v5184 = vmul.f32 %v3618, 0.2
      %v5185 = vmul.f32 %v3623, 0.2
      %v5186 = vmul.f32 %v3626, 0.2
      %v5187 = vmul.f32 %v3631, 0.2
      %v5188 = vmul.f32 %v3634, 0.2
      %v5189 = vmul.f32 %v3639, 0.2
      %v5190 = vmul.f32 %v3642, 0.2
      %v5191 = vmul.f32 %v3647, 0.2
      %v5192 = vmul.f32 %v3650, 0.2
      %v5193 = vmul.f32 %v3655, 0.2
      %v5194 = vmul.f32 %v3658, 0.2
      %v5195 = vmul.f32 %v3663, 0.2
      %v5196 = vmul.f32 %v3666, 0.2
      %v5197 = vmul.f32 %v3671, 0.2
      %v5198 = vmul.f32 %v3674, 0.2
      %v5199 = vmul.f32 %v3679, 0.2
      %v5200 = vmul.f32 %v3682, 0.2
      %v5201 = vmul.f32 %v3687, 0.2
      %v5202 = vmul.f32 %v3690, 0.2
      %v5203 = vmul.f32 %v3695, 0.2
      %v5204 = vmul.f32 %v3698, 0.2
      %v5205 = vmul.f32 %v3703, 0.2
      %v5206 = vmul.f32 %v3706, 0.2
      %v5207 = vmul.f32 %v3711, 0.2
      %v5208 = vmul.f32 %v3714, 0.2
      %v5209 = vmul.f32 %v3719, 0.2
      %v5210 = vmul.f32 %v3722, 0.2
      %v5211 = vmul.f32 %v3727, 0.2
      %v5212 = vmul.f32 %v3730, 0.2
      %v5213 = vmul.f32 %v3735, 0.2
      %v5214 = vmul.f32 %v3738, 0.2
      %v5215 = vmul.f32 %v3743, 0.2
      %v5216 = vmul.f32 %v3746, 0.2
      %v5217 = vmul.f32 %v3751, 0.2
      %v5218 = vmul.f32 %v3754, 0.2
      %v5219 = vmul.f32 %v3759, 0.2
      %v5220 = vmul.f32 %v3762, 0.2
      %v5221 = vmul.f32 %v3767, 0.2
      %v5222 = vmul.f32 %v3770, 0.2
      %v5223 = vmul.f32 %v3775, 0.2
      %v5224 = vmul.f32 %v3778, 0.2
      %v5225 = vmul.f32 %v3783, 0.2
      %v5226 = vmul.f32 %v3786, 0.2
      %v5227 = vmul.f32 %v3791, 0.2
      %v5228 = vmul.f32 %v3794, 0.2
      %v5229 = vmul.f32 %v3799, 0.2
      %v5230 = vmul.f32 %v3802, 0.2
      %v5231 = vmul.f32 %v3807, 0.2
      %v5232 = vmul.f32 %v3810, 0.2
      %v5233 = vmul.f32 %v3815, 0.2
      %v5234 = vmul.f32 %v3818, 0.2
      %v5235 = vmul.f32 %v3823, 0.2
      %v5236 = vmul.f32 %v3826, 0.2
      %v5237 = vmul.f32 %v3831, 0.2
      %v5238 = vmul.f32 %v3834, 0.2
      %v5239 = vmul.f32 %v3839, 0.2
      %v5240 = vmul.f32 %v3842, 0.2
      %v5241 = vmul.f32 %v3847, 0.2
      %v5242 = vmul.f32 %v3850, 0.2
      %v5243 = vmul.f32 %v3855, 0.2
      %v5244 = vmul.f32 %v3858, 0.2
      %v5245 = vmul.f32 %v3863, 0.2
      %v5246 = vmul.f32 %v3866, 0.2
      %v5247 = vmul.f32 %v3871, 0.2
      %v5248 = vmul.f32 %v3874, 0.2
      %v5249 = vmul.f32 %v3879, 0.2
      %v5250 = vmul.f32 %v3882, 0.2
      %v5251 = vmul.f32 %v3887, 0.2
      %v5252 = vmul.f32 %v3890, 0.2
      %v5253 = vmul.f32 %v3895, 0.2
      %v5254 = vmul.f32 %v3898, 0.2
      %v5255 = vmul.f32 %v3903, 0.2
      %v5256 = vmul.f32 %v3906, 0.2
      %v5257 = vmul.f32 %v3911, 0.2
      %v5258 = vmul.f32 %v3914, 0.2
      %v5259 = vmul.f32 %v3919, 0.2
      %v5260 = vmul.f32 %v3922, 0.2
      %v5261 = vmul.f32 %v3927, 0.2
      %v5262 = vmul.f32 %v3930, 0.2
      %v5263 = vmul.f32 %v3935, 0.2
      %v5264 = vmul.f32 %v3938, 0.2
      %v5265 = vmul.f32 %v3943, 0.2
      %v5266 = vmul.f32 %v3946, 0.2
      %v5267 = vmul.f32 %v3951, 0.2
      %v5268 = vmul.f32 %v3954, 0.2
      %v5269 = vmul.f32 %v3959, 0.2
      %v5270 = vmul.f32 %v3962, 0.2
      %v5271 = vmul.f32 %v3967, 0.2
      %v5272 = vmul.f32 %v3970, 0.2
      %v5273 = vmul.f32 %v3975, 0.2
      %v5274 = vmul.f32 %v3978, 0.2
      %v5275 = vmul.f32 %v3983, 0.2
      %v5276 = vmul.f32 %v3986, 0.2
      %v5277 = vmul.f32 %v3991, 0.2
      %v5278 = vmul.f32 %v3994, 0.2
      %v5279 = vmul.f32 %v3999, 0.2
      %v5280 = vmul.f32 %v4002, 0.2
      %v5281 = vmul.f32 %v4007, 0.2
      %v5282 = vmul.f32 %v4010, 0.2
      %v5283 = vmul.f32 %v4015, 0.2
      %v5284 = vmul.f32 %v4018, 0.2
      %v5285 = vmul.f32 %v4023, 0.2
      %v5286 = vmul.f32 %v4026, 0.2
      %v5287 = vmul.f32 %v4031, 0.2
      %v5288 = vmul.f32 %v4034, 0.2
      %v5289 = vmul.f32 %v4039, 0.2
      %v5290 = vmul.f32 %v4042, 0.2
      %v5291 = vmul.f32 %v4047, 0.2
      %v5292 = vmul.f32 %v4050, 0.2
      %v5293 = vmul.f32 %v4055, 0.2
      %v5294 = vmul.f32 %v4058, 0.2
      %v5295 = vmul.f32 %v4063, 0.2
      %v5296 = vmul.f32 %v4066, 0.2
      %v5297 = vmul.f32 %v4071, 0.2
      %v5298 = vmul.f32 %v4074, 0.2
      %v5299 = vmul.f32 %v4079, 0.2
      %v5300 = vmul.f32 %v4082, 0.2
      %v5301 = vmul.f32 %v4087, 0.2
      %v5302 = vmul.f32 %v4090, 0.2
      %v5303 = vmul.f32 %v4095, 0.2
      %v5304 = vmul.f32 %v4098, 0.2
      %v5305 = vmul.f32 %v4103, 0.2
      %v5306 = vmul.f32 %v4106, 0.2
      %v5307 = vmul.f32 %v4111, 0.2
      %v5308 = vmul.f32 %v4114, 0.2
      %v5309 = vmul.f32 %v4119, 0.2
      %v5310 = vmul.f32 %v4122, 0.2
      %v5311 = vmul.f32 %v4127, 0.2
      %v5312 = vmul.f32 %v4130, 0.2
      %v5313 = vmul.f32 %v4135, 0.2
      %v5314 = vmul.f32 %v4138, 0.2
      %v5315 = vmul.f32 %v4143, 0.2
      %v5316 = vmul.f32 %v4146, 0.2
      %v5317 = vmul.f32 %v4151, 0.2
      %v5318 = vmul.f32 %v4154, 0.2
      %v5319 = vmul.f32 %v4159, 0.2
      %v5320 = vmul.f32 %v4162, 0.2
      %v5321 = vmul.f32 %v4167, 0.2
      %v5322 = vmul.f32 %v4170, 0.2
      %v5323 = vmul.f32 %v4175, 0.2
      %v5324 = vmul.f32 %v4178, 0.2
      %v5325 = vmul.f32 %v4183, 0.2
      %v5326 = vmul.f32 %v4186, 0.2
      %v5327 = vmul.f32 %v4191, 0.2
      %v5328 = vmul.f32 %v4194, 0.2
      %v5329 = vmul.f32 %v4199, 0.2
      %v5330 = vmul.f32 %v4202, 0.2
      %v5331 = vmul.f32 %v4207, 0.2
      %v5332 = vmul.f32 %v4210, 0.2
      %v5333 = vmul.f32 %v4215, 0.2
      %v5334 = vmul.f32 %v4218, 0.2
      %v5335 = vmul.f32 %v4223, 0.2
      %v5336 = vmul.f32 %v4226, 0.2
      %v5337 = vmul.f32 %v4231, 0.2
      %v5338 = vmul.f32 %v4234, 0.2
      %v5339 = vmul.f32 %v4239, 0.2
      %v5340 = vmul.f32 %v4242, 0.2
      %v5341 = vmul.f32 %v4247, 0.2
      %v5342 = vmul.f32 %v4250, 0.2
      %v5343 = vmul.f32 %v4255, 0.2
      %v5344 = vmul.f32 %v4258, 0.2
      %v5345 = vmul.f32 %v4263, 0.2
      %v5346 = vmul.f32 %v4266, 0.2
      %v5347 = vmul.f32 %v4271, 0.2
      %v5348 = vmul.f32 %v4274, 0.2
      %v5349 = vmul.f32 %v4279, 0.2
      %v5350 = vmul.f32 %v4282, 0.2
      %v5351 = vmul.f32 %v4287, 0.2
      %v5352 = vmul.f32 %v4290, 0.2
      %v5353 = vmul.f32 %v4295, 0.2
      %v5354 = vmul.f32 %v4298, 0.2
      %v5355 = vmul.f32 %v4303, 0.2
      %v5356 = vmul.f32 %v4306, 0.2
      %v5357 = vmul.f32 %v4311, 0.2
      %v5358 = vmul.f32 %v4314, 0.2
      %v5359 = vmul.f32 %v4319, 0.2
      %v5360 = vmul.f32 %v4322, 0.2
      %v5361 = vmul.f32 %v4327, 0.2
      %v5362 = vmul.f32 %v4330, 0.2
      %v5363 = vmul.f32 %v4335, 0.2
      %v5364 = vmul.f32 %v4338, 0.2
      %v5365 = vsel %vm4341, %v2295, %v4853
      %v5366 = vsel %vm4342, %v2298, %v4854
      %v5367 = vsel %vm4343, %v2303, %v4855
      %v5368 = vsel %vm4344, %v2306, %v4856
      %v5369 = vsel %vm4345, %v2311, %v4857
      %v5370 = vsel %vm4346, %v2314, %v4858
      %v5371 = vsel %vm4347, %v2319, %v4859
      %v5372 = vsel %vm4348, %v2322, %v4860
      %v5373 = vsel %vm4349, %v2327, %v4861
      %v5374 = vsel %vm4350, %v2330, %v4862
      %v5375 = vsel %vm4351, %v2335, %v4863
      %v5376 = vsel %vm4352, %v2338, %v4864
      %v5377 = vsel %vm4353, %v2343, %v4865
      %v5378 = vsel %vm4354, %v2346, %v4866
      %v5379 = vsel %vm4355, %v2351, %v4867
      %v5380 = vsel %vm4356, %v2354, %v4868
      %v5381 = vsel %vm4357, %v2359, %v4869
      %v5382 = vsel %vm4358, %v2362, %v4870
      %v5383 = vsel %vm4359, %v2367, %v4871
      %v5384 = vsel %vm4360, %v2370, %v4872
      %v5385 = vsel %vm4361, %v2375, %v4873
      %v5386 = vsel %vm4362, %v2378, %v4874
      %v5387 = vsel %vm4363, %v2383, %v4875
      %v5388 = vsel %vm4364, %v2386, %v4876
      %v5389 = vsel %vm4365, %v2391, %v4877
      %v5390 = vsel %vm4366, %v2394, %v4878
      %v5391 = vsel %vm4367, %v2399, %v4879
      %v5392 = vsel %vm4368, %v2402, %v4880
      %v5393 = vsel %vm4369, %v2407, %v4881
      %v5394 = vsel %vm4370, %v2410, %v4882
      %v5395 = vsel %vm4371, %v2415, %v4883
      %v5396 = vsel %vm4372, %v2418, %v4884
      %v5397 = vsel %vm4373, %v2423, %v4885
      %v5398 = vsel %vm4374, %v2426, %v4886
      %v5399 = vsel %vm4375, %v2431, %v4887
      %v5400 = vsel %vm4376, %v2434, %v4888
      %v5401 = vsel %vm4377, %v2439, %v4889
      %v5402 = vsel %vm4378, %v2442, %v4890
      %v5403 = vsel %vm4379, %v2447, %v4891
      %v5404 = vsel %vm4380, %v2450, %v4892
      %v5405 = vsel %vm4381, %v2455, %v4893
      %v5406 = vsel %vm4382, %v2458, %v4894
      %v5407 = vsel %vm4383, %v2463, %v4895
      %v5408 = vsel %vm4384, %v2466, %v4896
      %v5409 = vsel %vm4385, %v2471, %v4897
      %v5410 = vsel %vm4386, %v2474, %v4898
      %v5411 = vsel %vm4387, %v2479, %v4899
      %v5412 = vsel %vm4388, %v2482, %v4900
      %v5413 = vsel %vm4389, %v2487, %v4901
      %v5414 = vsel %vm4390, %v2490, %v4902
      %v5415 = vsel %vm4391, %v2495, %v4903
      %v5416 = vsel %vm4392, %v2498, %v4904
      %v5417 = vsel %vm4393, %v2503, %v4905
      %v5418 = vsel %vm4394, %v2506, %v4906
      %v5419 = vsel %vm4395, %v2511, %v4907
      %v5420 = vsel %vm4396, %v2514, %v4908
      %v5421 = vsel %vm4397, %v2519, %v4909
      %v5422 = vsel %vm4398, %v2522, %v4910
      %v5423 = vsel %vm4399, %v2527, %v4911
      %v5424 = vsel %vm4400, %v2530, %v4912
      %v5425 = vsel %vm4401, %v2535, %v4913
      %v5426 = vsel %vm4402, %v2538, %v4914
      %v5427 = vsel %vm4403, %v2543, %v4915
      %v5428 = vsel %vm4404, %v2546, %v4916
      %v5429 = vsel %vm4405, %v2551, %v4917
      %v5430 = vsel %vm4406, %v2554, %v4918
      %v5431 = vsel %vm4407, %v2559, %v4919
      %v5432 = vsel %vm4408, %v2562, %v4920
      %v5433 = vsel %vm4409, %v2567, %v4921
      %v5434 = vsel %vm4410, %v2570, %v4922
      %v5435 = vsel %vm4411, %v2575, %v4923
      %v5436 = vsel %vm4412, %v2578, %v4924
      %v5437 = vsel %vm4413, %v2583, %v4925
      %v5438 = vsel %vm4414, %v2586, %v4926
      %v5439 = vsel %vm4415, %v2591, %v4927
      %v5440 = vsel %vm4416, %v2594, %v4928
      %v5441 = vsel %vm4417, %v2599, %v4929
      %v5442 = vsel %vm4418, %v2602, %v4930
      %v5443 = vsel %vm4419, %v2607, %v4931
      %v5444 = vsel %vm4420, %v2610, %v4932
      %v5445 = vsel %vm4421, %v2615, %v4933
      %v5446 = vsel %vm4422, %v2618, %v4934
      %v5447 = vsel %vm4423, %v2623, %v4935
      %v5448 = vsel %vm4424, %v2626, %v4936
      %v5449 = vsel %vm4425, %v2631, %v4937
      %v5450 = vsel %vm4426, %v2634, %v4938
      %v5451 = vsel %vm4427, %v2639, %v4939
      %v5452 = vsel %vm4428, %v2642, %v4940
      %v5453 = vsel %vm4429, %v2647, %v4941
      %v5454 = vsel %vm4430, %v2650, %v4942
      %v5455 = vsel %vm4431, %v2655, %v4943
      %v5456 = vsel %vm4432, %v2658, %v4944
      %v5457 = vsel %vm4433, %v2663, %v4945
      %v5458 = vsel %vm4434, %v2666, %v4946
      %v5459 = vsel %vm4435, %v2671, %v4947
      %v5460 = vsel %vm4436, %v2674, %v4948
      %v5461 = vsel %vm4437, %v2679, %v4949
      %v5462 = vsel %vm4438, %v2682, %v4950
      %v5463 = vsel %vm4439, %v2687, %v4951
      %v5464 = vsel %vm4440, %v2690, %v4952
      %v5465 = vsel %vm4441, %v2695, %v4953
      %v5466 = vsel %vm4442, %v2698, %v4954
      %v5467 = vsel %vm4443, %v2703, %v4955
      %v5468 = vsel %vm4444, %v2706, %v4956
      %v5469 = vsel %vm4445, %v2711, %v4957
      %v5470 = vsel %vm4446, %v2714, %v4958
      %v5471 = vsel %vm4447, %v2719, %v4959
      %v5472 = vsel %vm4448, %v2722, %v4960
      %v5473 = vsel %vm4449, %v2727, %v4961
      %v5474 = vsel %vm4450, %v2730, %v4962
      %v5475 = vsel %vm4451, %v2735, %v4963
      %v5476 = vsel %vm4452, %v2738, %v4964
      %v5477 = vsel %vm4453, %v2743, %v4965
      %v5478 = vsel %vm4454, %v2746, %v4966
      %v5479 = vsel %vm4455, %v2751, %v4967
      %v5480 = vsel %vm4456, %v2754, %v4968
      %v5481 = vsel %vm4457, %v2759, %v4969
      %v5482 = vsel %vm4458, %v2762, %v4970
      %v5483 = vsel %vm4459, %v2767, %v4971
      %v5484 = vsel %vm4460, %v2770, %v4972
      %v5485 = vsel %vm4461, %v2775, %v4973
      %v5486 = vsel %vm4462, %v2778, %v4974
      %v5487 = vsel %vm4463, %v2783, %v4975
      %v5488 = vsel %vm4464, %v2786, %v4976
      %v5489 = vsel %vm4465, %v2791, %v4977
      %v5490 = vsel %vm4466, %v2794, %v4978
      %v5491 = vsel %vm4467, %v2799, %v4979
      %v5492 = vsel %vm4468, %v2802, %v4980
      %v5493 = vsel %vm4469, %v2807, %v4981
      %v5494 = vsel %vm4470, %v2810, %v4982
      %v5495 = vsel %vm4471, %v2815, %v4983
      %v5496 = vsel %vm4472, %v2818, %v4984
      %v5497 = vsel %vm4473, %v2823, %v4985
      %v5498 = vsel %vm4474, %v2826, %v4986
      %v5499 = vsel %vm4475, %v2831, %v4987
      %v5500 = vsel %vm4476, %v2834, %v4988
      %v5501 = vsel %vm4477, %v2839, %v4989
      %v5502 = vsel %vm4478, %v2842, %v4990
      %v5503 = vsel %vm4479, %v2847, %v4991
      %v5504 = vsel %vm4480, %v2850, %v4992
      %v5505 = vsel %vm4481, %v2855, %v4993
      %v5506 = vsel %vm4482, %v2858, %v4994
      %v5507 = vsel %vm4483, %v2863, %v4995
      %v5508 = vsel %vm4484, %v2866, %v4996
      %v5509 = vsel %vm4485, %v2871, %v4997
      %v5510 = vsel %vm4486, %v2874, %v4998
      %v5511 = vsel %vm4487, %v2879, %v4999
      %v5512 = vsel %vm4488, %v2882, %v5000
      %v5513 = vsel %vm4489, %v2887, %v5001
      %v5514 = vsel %vm4490, %v2890, %v5002
      %v5515 = vsel %vm4491, %v2895, %v5003
      %v5516 = vsel %vm4492, %v2898, %v5004
      %v5517 = vsel %vm4493, %v2903, %v5005
      %v5518 = vsel %vm4494, %v2906, %v5006
      %v5519 = vsel %vm4495, %v2911, %v5007
      %v5520 = vsel %vm4496, %v2914, %v5008
      %v5521 = vsel %vm4497, %v2919, %v5009
      %v5522 = vsel %vm4498, %v2922, %v5010
      %v5523 = vsel %vm4499, %v2927, %v5011
      %v5524 = vsel %vm4500, %v2930, %v5012
      %v5525 = vsel %vm4501, %v2935, %v5013
      %v5526 = vsel %vm4502, %v2938, %v5014
      %v5527 = vsel %vm4503, %v2943, %v5015
      %v5528 = vsel %vm4504, %v2946, %v5016
      %v5529 = vsel %vm4505, %v2951, %v5017
      %v5530 = vsel %vm4506, %v2954, %v5018
      %v5531 = vsel %vm4507, %v2959, %v5019
      %v5532 = vsel %vm4508, %v2962, %v5020
      %v5533 = vsel %vm4509, %v2967, %v5021
      %v5534 = vsel %vm4510, %v2970, %v5022
      %v5535 = vsel %vm4511, %v2975, %v5023
      %v5536 = vsel %vm4512, %v2978, %v5024
      %v5537 = vsel %vm4513, %v2983, %v5025
      %v5538 = vsel %vm4514, %v2986, %v5026
      %v5539 = vsel %vm4515, %v2991, %v5027
      %v5540 = vsel %vm4516, %v2994, %v5028
      %v5541 = vsel %vm4517, %v2999, %v5029
      %v5542 = vsel %vm4518, %v3002, %v5030
      %v5543 = vsel %vm4519, %v3007, %v5031
      %v5544 = vsel %vm4520, %v3010, %v5032
      %v5545 = vsel %vm4521, %v3015, %v5033
      %v5546 = vsel %vm4522, %v3018, %v5034
      %v5547 = vsel %vm4523, %v3023, %v5035
      %v5548 = vsel %vm4524, %v3026, %v5036
      %v5549 = vsel %vm4525, %v3031, %v5037
      %v5550 = vsel %vm4526, %v3034, %v5038
      %v5551 = vsel %vm4527, %v3039, %v5039
      %v5552 = vsel %vm4528, %v3042, %v5040
      %v5553 = vsel %vm4529, %v3047, %v5041
      %v5554 = vsel %vm4530, %v3050, %v5042
      %v5555 = vsel %vm4531, %v3055, %v5043
      %v5556 = vsel %vm4532, %v3058, %v5044
      %v5557 = vsel %vm4533, %v3063, %v5045
      %v5558 = vsel %vm4534, %v3066, %v5046
      %v5559 = vsel %vm4535, %v3071, %v5047
      %v5560 = vsel %vm4536, %v3074, %v5048
      %v5561 = vsel %vm4537, %v3079, %v5049
      %v5562 = vsel %vm4538, %v3082, %v5050
      %v5563 = vsel %vm4539, %v3087, %v5051
      %v5564 = vsel %vm4540, %v3090, %v5052
      %v5565 = vsel %vm4541, %v3095, %v5053
      %v5566 = vsel %vm4542, %v3098, %v5054
      %v5567 = vsel %vm4543, %v3103, %v5055
      %v5568 = vsel %vm4544, %v3106, %v5056
      %v5569 = vsel %vm4545, %v3111, %v5057
      %v5570 = vsel %vm4546, %v3114, %v5058
      %v5571 = vsel %vm4547, %v3119, %v5059
      %v5572 = vsel %vm4548, %v3122, %v5060
      %v5573 = vsel %vm4549, %v3127, %v5061
      %v5574 = vsel %vm4550, %v3130, %v5062
      %v5575 = vsel %vm4551, %v3135, %v5063
      %v5576 = vsel %vm4552, %v3138, %v5064
      %v5577 = vsel %vm4553, %v3143, %v5065
      %v5578 = vsel %vm4554, %v3146, %v5066
      %v5579 = vsel %vm4555, %v3151, %v5067
      %v5580 = vsel %vm4556, %v3154, %v5068
      %v5581 = vsel %vm4557, %v3159, %v5069
      %v5582 = vsel %vm4558, %v3162, %v5070
      %v5583 = vsel %vm4559, %v3167, %v5071
      %v5584 = vsel %vm4560, %v3170, %v5072
      %v5585 = vsel %vm4561, %v3175, %v5073
      %v5586 = vsel %vm4562, %v3178, %v5074
      %v5587 = vsel %vm4563, %v3183, %v5075
      %v5588 = vsel %vm4564, %v3186, %v5076
      %v5589 = vsel %vm4565, %v3191, %v5077
      %v5590 = vsel %vm4566, %v3194, %v5078
      %v5591 = vsel %vm4567, %v3199, %v5079
      %v5592 = vsel %vm4568, %v3202, %v5080
      %v5593 = vsel %vm4569, %v3207, %v5081
      %v5594 = vsel %vm4570, %v3210, %v5082
      %v5595 = vsel %vm4571, %v3215, %v5083
      %v5596 = vsel %vm4572, %v3218, %v5084
      %v5597 = vsel %vm4573, %v3223, %v5085
      %v5598 = vsel %vm4574, %v3226, %v5086
      %v5599 = vsel %vm4575, %v3231, %v5087
      %v5600 = vsel %vm4576, %v3234, %v5088
      %v5601 = vsel %vm4577, %v3239, %v5089
      %v5602 = vsel %vm4578, %v3242, %v5090
      %v5603 = vsel %vm4579, %v3247, %v5091
      %v5604 = vsel %vm4580, %v3250, %v5092
      %v5605 = vsel %vm4581, %v3255, %v5093
      %v5606 = vsel %vm4582, %v3258, %v5094
      %v5607 = vsel %vm4583, %v3263, %v5095
      %v5608 = vsel %vm4584, %v3266, %v5096
      %v5609 = vsel %vm4585, %v3271, %v5097
      %v5610 = vsel %vm4586, %v3274, %v5098
      %v5611 = vsel %vm4587, %v3279, %v5099
      %v5612 = vsel %vm4588, %v3282, %v5100
      %v5613 = vsel %vm4589, %v3287, %v5101
      %v5614 = vsel %vm4590, %v3290, %v5102
      %v5615 = vsel %vm4591, %v3295, %v5103
      %v5616 = vsel %vm4592, %v3298, %v5104
      %v5617 = vsel %vm4593, %v3303, %v5105
      %v5618 = vsel %vm4594, %v3306, %v5106
      %v5619 = vsel %vm4595, %v3311, %v5107
      %v5620 = vsel %vm4596, %v3314, %v5108
      %v5621 = vsel %vm4597, %v3319, %v5109
      %v5622 = vsel %vm4598, %v3322, %v5110
      %v5623 = vsel %vm4599, %v3327, %v5111
      %v5624 = vsel %vm4600, %v3330, %v5112
      %v5625 = vsel %vm4601, %v3335, %v5113
      %v5626 = vsel %vm4602, %v3338, %v5114
      %v5627 = vsel %vm4603, %v3343, %v5115
      %v5628 = vsel %vm4604, %v3346, %v5116
      %v5629 = vsel %vm4605, %v3351, %v5117
      %v5630 = vsel %vm4606, %v3354, %v5118
      %v5631 = vsel %vm4607, %v3359, %v5119
      %v5632 = vsel %vm4608, %v3362, %v5120
      %v5633 = vsel %vm4609, %v3367, %v5121
      %v5634 = vsel %vm4610, %v3370, %v5122
      %v5635 = vsel %vm4611, %v3375, %v5123
      %v5636 = vsel %vm4612, %v3378, %v5124
      %v5637 = vsel %vm4613, %v3383, %v5125
      %v5638 = vsel %vm4614, %v3386, %v5126
      %v5639 = vsel %vm4615, %v3391, %v5127
      %v5640 = vsel %vm4616, %v3394, %v5128
      %v5641 = vsel %vm4617, %v3399, %v5129
      %v5642 = vsel %vm4618, %v3402, %v5130
      %v5643 = vsel %vm4619, %v3407, %v5131
      %v5644 = vsel %vm4620, %v3410, %v5132
      %v5645 = vsel %vm4621, %v3415, %v5133
      %v5646 = vsel %vm4622, %v3418, %v5134
      %v5647 = vsel %vm4623, %v3423, %v5135
      %v5648 = vsel %vm4624, %v3426, %v5136
      %v5649 = vsel %vm4625, %v3431, %v5137
      %v5650 = vsel %vm4626, %v3434, %v5138
      %v5651 = vsel %vm4627, %v3439, %v5139
      %v5652 = vsel %vm4628, %v3442, %v5140
      %v5653 = vsel %vm4629, %v3447, %v5141
      %v5654 = vsel %vm4630, %v3450, %v5142
      %v5655 = vsel %vm4631, %v3455, %v5143
      %v5656 = vsel %vm4632, %v3458, %v5144
      %v5657 = vsel %vm4633, %v3463, %v5145
      %v5658 = vsel %vm4634, %v3466, %v5146
      %v5659 = vsel %vm4635, %v3471, %v5147
      %v5660 = vsel %vm4636, %v3474, %v5148
      %v5661 = vsel %vm4637, %v3479, %v5149
      %v5662 = vsel %vm4638, %v3482, %v5150
      %v5663 = vsel %vm4639, %v3487, %v5151
      %v5664 = vsel %vm4640, %v3490, %v5152
      %v5665 = vsel %vm4641, %v3495, %v5153
      %v5666 = vsel %vm4642, %v3498, %v5154
      %v5667 = vsel %vm4643, %v3503, %v5155
      %v5668 = vsel %vm4644, %v3506, %v5156
      %v5669 = vsel %vm4645, %v3511, %v5157
      %v5670 = vsel %vm4646, %v3514, %v5158
      %v5671 = vsel %vm4647, %v3519, %v5159
      %v5672 = vsel %vm4648, %v3522, %v5160
      %v5673 = vsel %vm4649, %v3527, %v5161
      %v5674 = vsel %vm4650, %v3530, %v5162
      %v5675 = vsel %vm4651, %v3535, %v5163
      %v5676 = vsel %vm4652, %v3538, %v5164
      %v5677 = vsel %vm4653, %v3543, %v5165
      %v5678 = vsel %vm4654, %v3546, %v5166
      %v5679 = vsel %vm4655, %v3551, %v5167
      %v5680 = vsel %vm4656, %v3554, %v5168
      %v5681 = vsel %vm4657, %v3559, %v5169
      %v5682 = vsel %vm4658, %v3562, %v5170
      %v5683 = vsel %vm4659, %v3567, %v5171
      %v5684 = vsel %vm4660, %v3570, %v5172
      %v5685 = vsel %vm4661, %v3575, %v5173
      %v5686 = vsel %vm4662, %v3578, %v5174
      %v5687 = vsel %vm4663, %v3583, %v5175
      %v5688 = vsel %vm4664, %v3586, %v5176
      %v5689 = vsel %vm4665, %v3591, %v5177
      %v5690 = vsel %vm4666, %v3594, %v5178
      %v5691 = vsel %vm4667, %v3599, %v5179
      %v5692 = vsel %vm4668, %v3602, %v5180
      %v5693 = vsel %vm4669, %v3607, %v5181
      %v5694 = vsel %vm4670, %v3610, %v5182
      %v5695 = vsel %vm4671, %v3615, %v5183
      %v5696 = vsel %vm4672, %v3618, %v5184
      %v5697 = vsel %vm4673, %v3623, %v5185
      %v5698 = vsel %vm4674, %v3626, %v5186
      %v5699 = vsel %vm4675, %v3631, %v5187
      %v5700 = vsel %vm4676, %v3634, %v5188
      %v5701 = vsel %vm4677, %v3639, %v5189
      %v5702 = vsel %vm4678, %v3642, %v5190
      %v5703 = vsel %vm4679, %v3647, %v5191
      %v5704 = vsel %vm4680, %v3650, %v5192
      %v5705 = vsel %vm4681, %v3655, %v5193
      %v5706 = vsel %vm4682, %v3658, %v5194
      %v5707 = vsel %vm4683, %v3663, %v5195
      %v5708 = vsel %vm4684, %v3666, %v5196
      %v5709 = vsel %vm4685, %v3671, %v5197
      %v5710 = vsel %vm4686, %v3674, %v5198
      %v5711 = vsel %vm4687, %v3679, %v5199
      %v5712 = vsel %vm4688, %v3682, %v5200
      %v5713 = vsel %vm4689, %v3687, %v5201
      %v5714 = vsel %vm4690, %v3690, %v5202
      %v5715 = vsel %vm4691, %v3695, %v5203
      %v5716 = vsel %vm4692, %v3698, %v5204
      %v5717 = vsel %vm4693, %v3703, %v5205
      %v5718 = vsel %vm4694, %v3706, %v5206
      %v5719 = vsel %vm4695, %v3711, %v5207
      %v5720 = vsel %vm4696, %v3714, %v5208
      %v5721 = vsel %vm4697, %v3719, %v5209
      %v5722 = vsel %vm4698, %v3722, %v5210
      %v5723 = vsel %vm4699, %v3727, %v5211
      %v5724 = vsel %vm4700, %v3730, %v5212
      %v5725 = vsel %vm4701, %v3735, %v5213
      %v5726 = vsel %vm4702, %v3738, %v5214
      %v5727 = vsel %vm4703, %v3743, %v5215
      %v5728 = vsel %vm4704, %v3746, %v5216
      %v5729 = vsel %vm4705, %v3751, %v5217
      %v5730 = vsel %vm4706, %v3754, %v5218
      %v5731 = vsel %vm4707, %v3759, %v5219
      %v5732 = vsel %vm4708, %v3762, %v5220
      %v5733 = vsel %vm4709, %v3767, %v5221
      %v5734 = vsel %vm4710, %v3770, %v5222
      %v5735 = vsel %vm4711, %v3775, %v5223
      %v5736 = vsel %vm4712, %v3778, %v5224
      %v5737 = vsel %vm4713, %v3783, %v5225
      %v5738 = vsel %vm4714, %v3786, %v5226
      %v5739 = vsel %vm4715, %v3791, %v5227
      %v5740 = vsel %vm4716, %v3794, %v5228
      %v5741 = vsel %vm4717, %v3799, %v5229
      %v5742 = vsel %vm4718, %v3802, %v5230
      %v5743 = vsel %vm4719, %v3807, %v5231
      %v5744 = vsel %vm4720, %v3810, %v5232
      %v5745 = vsel %vm4721, %v3815, %v5233
      %v5746 = vsel %vm4722, %v3818, %v5234
      %v5747 = vsel %vm4723, %v3823, %v5235
      %v5748 = vsel %vm4724, %v3826, %v5236
      %v5749 = vsel %vm4725, %v3831, %v5237
      %v5750 = vsel %vm4726, %v3834, %v5238
      %v5751 = vsel %vm4727, %v3839, %v5239
      %v5752 = vsel %vm4728, %v3842, %v5240
      %v5753 = vsel %vm4729, %v3847, %v5241
      %v5754 = vsel %vm4730, %v3850, %v5242
      %v5755 = vsel %vm4731, %v3855, %v5243
      %v5756 = vsel %vm4732, %v3858, %v5244
      %v5757 = vsel %vm4733, %v3863, %v5245
      %v5758 = vsel %vm4734, %v3866, %v5246
      %v5759 = vsel %vm4735, %v3871, %v5247
      %v5760 = vsel %vm4736, %v3874, %v5248
      %v5761 = vsel %vm4737, %v3879, %v5249
      %v5762 = vsel %vm4738, %v3882, %v5250
      %v5763 = vsel %vm4739, %v3887, %v5251
      %v5764 = vsel %vm4740, %v3890, %v5252
      %v5765 = vsel %vm4741, %v3895, %v5253
      %v5766 = vsel %vm4742, %v3898, %v5254
      %v5767 = vsel %vm4743, %v3903, %v5255
      %v5768 = vsel %vm4744, %v3906, %v5256
      %v5769 = vsel %vm4745, %v3911, %v5257
      %v5770 = vsel %vm4746, %v3914, %v5258
      %v5771 = vsel %vm4747, %v3919, %v5259
      %v5772 = vsel %vm4748, %v3922, %v5260
      %v5773 = vsel %vm4749, %v3927, %v5261
      %v5774 = vsel %vm4750, %v3930, %v5262
      %v5775 = vsel %vm4751, %v3935, %v5263
      %v5776 = vsel %vm4752, %v3938, %v5264
      %v5777 = vsel %vm4753, %v3943, %v5265
      %v5778 = vsel %vm4754, %v3946, %v5266
      %v5779 = vsel %vm4755, %v3951, %v5267
      %v5780 = vsel %vm4756, %v3954, %v5268
      %v5781 = vsel %vm4757, %v3959, %v5269
      %v5782 = vsel %vm4758, %v3962, %v5270
      %v5783 = vsel %vm4759, %v3967, %v5271
      %v5784 = vsel %vm4760, %v3970, %v5272
      %v5785 = vsel %vm4761, %v3975, %v5273
      %v5786 = vsel %vm4762, %v3978, %v5274
      %v5787 = vsel %vm4763, %v3983, %v5275
      %v5788 = vsel %vm4764, %v3986, %v5276
      %v5789 = vsel %vm4765, %v3991, %v5277
      %v5790 = vsel %vm4766, %v3994, %v5278
      %v5791 = vsel %vm4767, %v3999, %v5279
      %v5792 = vsel %vm4768, %v4002, %v5280
      %v5793 = vsel %vm4769, %v4007, %v5281
      %v5794 = vsel %vm4770, %v4010, %v5282
      %v5795 = vsel %vm4771, %v4015, %v5283
      %v5796 = vsel %vm4772, %v4018, %v5284
      %v5797 = vsel %vm4773, %v4023, %v5285
      %v5798 = vsel %vm4774, %v4026, %v5286
      %v5799 = vsel %vm4775, %v4031, %v5287
      %v5800 = vsel %vm4776, %v4034, %v5288
      %v5801 = vsel %vm4777, %v4039, %v5289
      %v5802 = vsel %vm4778, %v4042, %v5290
      %v5803 = vsel %vm4779, %v4047, %v5291
      %v5804 = vsel %vm4780, %v4050, %v5292
      %v5805 = vsel %vm4781, %v4055, %v5293
      %v5806 = vsel %vm4782, %v4058, %v5294
      %v5807 = vsel %vm4783, %v4063, %v5295
      %v5808 = vsel %vm4784, %v4066, %v5296
      %v5809 = vsel %vm4785, %v4071, %v5297
      %v5810 = vsel %vm4786, %v4074, %v5298
      %v5811 = vsel %vm4787, %v4079, %v5299
      %v5812 = vsel %vm4788, %v4082, %v5300
      %v5813 = vsel %vm4789, %v4087, %v5301
      %v5814 = vsel %vm4790, %v4090, %v5302
      %v5815 = vsel %vm4791, %v4095, %v5303
      %v5816 = vsel %vm4792, %v4098, %v5304
      %v5817 = vsel %vm4793, %v4103, %v5305
      %v5818 = vsel %vm4794, %v4106, %v5306
      %v5819 = vsel %vm4795, %v4111, %v5307
      %v5820 = vsel %vm4796, %v4114, %v5308
      %v5821 = vsel %vm4797, %v4119, %v5309
      %v5822 = vsel %vm4798, %v4122, %v5310
      %v5823 = vsel %vm4799, %v4127, %v5311
      %v5824 = vsel %vm4800, %v4130, %v5312
      %v5825 = vsel %vm4801, %v4135, %v5313
      %v5826 = vsel %vm4802, %v4138, %v5314
      %v5827 = vsel %vm4803, %v4143, %v5315
      %v5828 = vsel %vm4804, %v4146, %v5316
      %v5829 = vsel %vm4805, %v4151, %v5317
      %v5830 = vsel %vm4806, %v4154, %v5318
      %v5831 = vsel %vm4807, %v4159, %v5319
      %v5832 = vsel %vm4808, %v4162, %v5320
      %v5833 = vsel %vm4809, %v4167, %v5321
      %v5834 = vsel %vm4810, %v4170, %v5322
      %v5835 = vsel %vm4811, %v4175, %v5323
      %v5836 = vsel %vm4812, %v4178, %v5324
      %v5837 = vsel %vm4813, %v4183, %v5325
      %v5838 = vsel %vm4814, %v4186, %v5326
      %v5839 = vsel %vm4815, %v4191, %v5327
      %v5840 = vsel %vm4816, %v4194, %v5328
      %v5841 = vsel %vm4817, %v4199, %v5329
      %v5842 = vsel %vm4818, %v4202, %v5330
      %v5843 = vsel %vm4819, %v4207, %v5331
      %v5844 = vsel %vm4820, %v4210, %v5332
      %v5845 = vsel %vm4821, %v4215, %v5333
      %v5846 = vsel %vm4822, %v4218, %v5334
      %v5847 = vsel %vm4823, %v4223, %v5335
      %v5848 = vsel %vm4824, %v4226, %v5336
      %v5849 = vsel %vm4825, %v4231, %v5337
      %v5850 = vsel %vm4826, %v4234, %v5338
      %v5851 = vsel %vm4827, %v4239, %v5339
      %v5852 = vsel %vm4828, %v4242, %v5340
      %v5853 = vsel %vm4829, %v4247, %v5341
      %v5854 = vsel %vm4830, %v4250, %v5342
      %v5855 = vsel %vm4831, %v4255, %v5343
      %v5856 = vsel %vm4832, %v4258, %v5344
      %v5857 = vsel %vm4833, %v4263, %v5345
      %v5858 = vsel %vm4834, %v4266, %v5346
      %v5859 = vsel %vm4835, %v4271, %v5347
      %v5860 = vsel %vm4836, %v4274, %v5348
      %v5861 = vsel %vm4837, %v4279, %v5349
      %v5862 = vsel %vm4838, %v4282, %v5350
      %v5863 = vsel %vm4839, %v4287, %v5351
      %v5864 = vsel %vm4840, %v4290, %v5352
      %v5865 = vsel %vm4841, %v4295, %v5353
      %v5866 = vsel %vm4842, %v4298, %v5354
      %v5867 = vsel %vm4843, %v4303, %v5355
      %v5868 = vsel %vm4844, %v4306, %v5356
      %v5869 = vsel %vm4845, %v4311, %v5357
      %v5870 = vsel %vm4846, %v4314, %v5358
      %v5871 = vsel %vm4847, %v4319, %v5359
      %v5872 = vsel %vm4848, %v4322, %v5360
      %v5873 = vsel %vm4849, %v4327, %v5361
      %v5874 = vsel %vm4850, %v4330, %v5362
      %v5875 = vsel %vm4851, %v4335, %v5363
      %v5876 = vsel %vm4852, %v4338, %v5364
      %v5877 = vpack.c.bf16 %v5366, %v5365
      %v5878 = vpack.c.bf16 %v5368, %v5367
      %v5879 = vpack.c.bf16 %v5370, %v5369
      %v5880 = vpack.c.bf16 %v5372, %v5371
      %v5881 = vpack.c.bf16 %v5374, %v5373
      %v5882 = vpack.c.bf16 %v5376, %v5375
      %v5883 = vpack.c.bf16 %v5378, %v5377
      %v5884 = vpack.c.bf16 %v5380, %v5379
      %v5885 = vpack.c.bf16 %v5382, %v5381
      %v5886 = vpack.c.bf16 %v5384, %v5383
      %v5887 = vpack.c.bf16 %v5386, %v5385
      %v5888 = vpack.c.bf16 %v5388, %v5387
      %v5889 = vpack.c.bf16 %v5390, %v5389
      %v5890 = vpack.c.bf16 %v5392, %v5391
      %v5891 = vpack.c.bf16 %v5394, %v5393
      %v5892 = vpack.c.bf16 %v5396, %v5395
      %v5893 = vpack.c.bf16 %v5398, %v5397
      %v5894 = vpack.c.bf16 %v5400, %v5399
      %v5895 = vpack.c.bf16 %v5402, %v5401
      %v5896 = vpack.c.bf16 %v5404, %v5403
      %v5897 = vpack.c.bf16 %v5406, %v5405
      %v5898 = vpack.c.bf16 %v5408, %v5407
      %v5899 = vpack.c.bf16 %v5410, %v5409
      %v5900 = vpack.c.bf16 %v5412, %v5411
      %v5901 = vpack.c.bf16 %v5414, %v5413
      %v5902 = vpack.c.bf16 %v5416, %v5415
      %v5903 = vpack.c.bf16 %v5418, %v5417
      %v5904 = vpack.c.bf16 %v5420, %v5419
      %v5905 = vpack.c.bf16 %v5422, %v5421
      %v5906 = vpack.c.bf16 %v5424, %v5423
      %v5907 = vpack.c.bf16 %v5426, %v5425
      %v5908 = vpack.c.bf16 %v5428, %v5427
      %v5909 = vpack.c.bf16 %v5430, %v5429
      %v5910 = vpack.c.bf16 %v5432, %v5431
      %v5911 = vpack.c.bf16 %v5434, %v5433
      %v5912 = vpack.c.bf16 %v5436, %v5435
      %v5913 = vpack.c.bf16 %v5438, %v5437
      %v5914 = vpack.c.bf16 %v5440, %v5439
      %v5915 = vpack.c.bf16 %v5442, %v5441
      %v5916 = vpack.c.bf16 %v5444, %v5443
      %v5917 = vpack.c.bf16 %v5446, %v5445
      %v5918 = vpack.c.bf16 %v5448, %v5447
      %v5919 = vpack.c.bf16 %v5450, %v5449
      %v5920 = vpack.c.bf16 %v5452, %v5451
      %v5921 = vpack.c.bf16 %v5454, %v5453
      %v5922 = vpack.c.bf16 %v5456, %v5455
      %v5923 = vpack.c.bf16 %v5458, %v5457
      %v5924 = vpack.c.bf16 %v5460, %v5459
      %v5925 = vpack.c.bf16 %v5462, %v5461
      %v5926 = vpack.c.bf16 %v5464, %v5463
      %v5927 = vpack.c.bf16 %v5466, %v5465
      %v5928 = vpack.c.bf16 %v5468, %v5467
      %v5929 = vpack.c.bf16 %v5470, %v5469
      %v5930 = vpack.c.bf16 %v5472, %v5471
      %v5931 = vpack.c.bf16 %v5474, %v5473
      %v5932 = vpack.c.bf16 %v5476, %v5475
      %v5933 = vpack.c.bf16 %v5478, %v5477
      %v5934 = vpack.c.bf16 %v5480, %v5479
      %v5935 = vpack.c.bf16 %v5482, %v5481
      %v5936 = vpack.c.bf16 %v5484, %v5483
      %v5937 = vpack.c.bf16 %v5486, %v5485
      %v5938 = vpack.c.bf16 %v5488, %v5487
      %v5939 = vpack.c.bf16 %v5490, %v5489
      %v5940 = vpack.c.bf16 %v5492, %v5491
      %v5941 = vpack.c.bf16 %v5494, %v5493
      %v5942 = vpack.c.bf16 %v5496, %v5495
      %v5943 = vpack.c.bf16 %v5498, %v5497
      %v5944 = vpack.c.bf16 %v5500, %v5499
      %v5945 = vpack.c.bf16 %v5502, %v5501
      %v5946 = vpack.c.bf16 %v5504, %v5503
      %v5947 = vpack.c.bf16 %v5506, %v5505
      %v5948 = vpack.c.bf16 %v5508, %v5507
      %v5949 = vpack.c.bf16 %v5510, %v5509
      %v5950 = vpack.c.bf16 %v5512, %v5511
      %v5951 = vpack.c.bf16 %v5514, %v5513
      %v5952 = vpack.c.bf16 %v5516, %v5515
      %v5953 = vpack.c.bf16 %v5518, %v5517
      %v5954 = vpack.c.bf16 %v5520, %v5519
      %v5955 = vpack.c.bf16 %v5522, %v5521
      %v5956 = vpack.c.bf16 %v5524, %v5523
      %v5957 = vpack.c.bf16 %v5526, %v5525
      %v5958 = vpack.c.bf16 %v5528, %v5527
      %v5959 = vpack.c.bf16 %v5530, %v5529
      %v5960 = vpack.c.bf16 %v5532, %v5531
      %v5961 = vpack.c.bf16 %v5534, %v5533
      %v5962 = vpack.c.bf16 %v5536, %v5535
      %v5963 = vpack.c.bf16 %v5538, %v5537
      %v5964 = vpack.c.bf16 %v5540, %v5539
      %v5965 = vpack.c.bf16 %v5542, %v5541
      %v5966 = vpack.c.bf16 %v5544, %v5543
      %v5967 = vpack.c.bf16 %v5546, %v5545
      %v5968 = vpack.c.bf16 %v5548, %v5547
      %v5969 = vpack.c.bf16 %v5550, %v5549
      %v5970 = vpack.c.bf16 %v5552, %v5551
      %v5971 = vpack.c.bf16 %v5554, %v5553
      %v5972 = vpack.c.bf16 %v5556, %v5555
      %v5973 = vpack.c.bf16 %v5558, %v5557
      %v5974 = vpack.c.bf16 %v5560, %v5559
      %v5975 = vpack.c.bf16 %v5562, %v5561
      %v5976 = vpack.c.bf16 %v5564, %v5563
      %v5977 = vpack.c.bf16 %v5566, %v5565
      %v5978 = vpack.c.bf16 %v5568, %v5567
      %v5979 = vpack.c.bf16 %v5570, %v5569
      %v5980 = vpack.c.bf16 %v5572, %v5571
      %v5981 = vpack.c.bf16 %v5574, %v5573
      %v5982 = vpack.c.bf16 %v5576, %v5575
      %v5983 = vpack.c.bf16 %v5578, %v5577
      %v5984 = vpack.c.bf16 %v5580, %v5579
      %v5985 = vpack.c.bf16 %v5582, %v5581
      %v5986 = vpack.c.bf16 %v5584, %v5583
      %v5987 = vpack.c.bf16 %v5586, %v5585
      %v5988 = vpack.c.bf16 %v5588, %v5587
      %v5989 = vpack.c.bf16 %v5590, %v5589
      %v5990 = vpack.c.bf16 %v5592, %v5591
      %v5991 = vpack.c.bf16 %v5594, %v5593
      %v5992 = vpack.c.bf16 %v5596, %v5595
      %v5993 = vpack.c.bf16 %v5598, %v5597
      %v5994 = vpack.c.bf16 %v5600, %v5599
      %v5995 = vpack.c.bf16 %v5602, %v5601
      %v5996 = vpack.c.bf16 %v5604, %v5603
      %v5997 = vpack.c.bf16 %v5606, %v5605
      %v5998 = vpack.c.bf16 %v5608, %v5607
      %v5999 = vpack.c.bf16 %v5610, %v5609
      %v6000 = vpack.c.bf16 %v5612, %v5611
      %v6001 = vpack.c.bf16 %v5614, %v5613
      %v6002 = vpack.c.bf16 %v5616, %v5615
      %v6003 = vpack.c.bf16 %v5618, %v5617
      %v6004 = vpack.c.bf16 %v5620, %v5619
      %v6005 = vpack.c.bf16 %v5622, %v5621
      %v6006 = vpack.c.bf16 %v5624, %v5623
      %v6007 = vpack.c.bf16 %v5626, %v5625
      %v6008 = vpack.c.bf16 %v5628, %v5627
      %v6009 = vpack.c.bf16 %v5630, %v5629
      %v6010 = vpack.c.bf16 %v5632, %v5631
      %v6011 = vpack.c.bf16 %v5634, %v5633
      %v6012 = vpack.c.bf16 %v5636, %v5635
      %v6013 = vpack.c.bf16 %v5638, %v5637
      %v6014 = vpack.c.bf16 %v5640, %v5639
      %v6015 = vpack.c.bf16 %v5642, %v5641
      %v6016 = vpack.c.bf16 %v5644, %v5643
      %v6017 = vpack.c.bf16 %v5646, %v5645
      %v6018 = vpack.c.bf16 %v5648, %v5647
      %v6019 = vpack.c.bf16 %v5650, %v5649
      %v6020 = vpack.c.bf16 %v5652, %v5651
      %v6021 = vpack.c.bf16 %v5654, %v5653
      %v6022 = vpack.c.bf16 %v5656, %v5655
      %v6023 = vpack.c.bf16 %v5658, %v5657
      %v6024 = vpack.c.bf16 %v5660, %v5659
      %v6025 = vpack.c.bf16 %v5662, %v5661
      %v6026 = vpack.c.bf16 %v5664, %v5663
      %v6027 = vpack.c.bf16 %v5666, %v5665
      %v6028 = vpack.c.bf16 %v5668, %v5667
      %v6029 = vpack.c.bf16 %v5670, %v5669
      %v6030 = vpack.c.bf16 %v5672, %v5671
      %v6031 = vpack.c.bf16 %v5674, %v5673
      %v6032 = vpack.c.bf16 %v5676, %v5675
      %v6033 = vpack.c.bf16 %v5678, %v5677
      %v6034 = vpack.c.bf16 %v5680, %v5679
      %v6035 = vpack.c.bf16 %v5682, %v5681
      %v6036 = vpack.c.bf16 %v5684, %v5683
      %v6037 = vpack.c.bf16 %v5686, %v5685
      %v6038 = vpack.c.bf16 %v5688, %v5687
      %v6039 = vpack.c.bf16 %v5690, %v5689
      %v6040 = vpack.c.bf16 %v5692, %v5691
      %v6041 = vpack.c.bf16 %v5694, %v5693
      %v6042 = vpack.c.bf16 %v5696, %v5695
      %v6043 = vpack.c.bf16 %v5698, %v5697
      %v6044 = vpack.c.bf16 %v5700, %v5699
      %v6045 = vpack.c.bf16 %v5702, %v5701
      %v6046 = vpack.c.bf16 %v5704, %v5703
      %v6047 = vpack.c.bf16 %v5706, %v5705
      %v6048 = vpack.c.bf16 %v5708, %v5707
      %v6049 = vpack.c.bf16 %v5710, %v5709
      %v6050 = vpack.c.bf16 %v5712, %v5711
      %v6051 = vpack.c.bf16 %v5714, %v5713
      %v6052 = vpack.c.bf16 %v5716, %v5715
      %v6053 = vpack.c.bf16 %v5718, %v5717
      %v6054 = vpack.c.bf16 %v5720, %v5719
      %v6055 = vpack.c.bf16 %v5722, %v5721
      %v6056 = vpack.c.bf16 %v5724, %v5723
      %v6057 = vpack.c.bf16 %v5726, %v5725
      %v6058 = vpack.c.bf16 %v5728, %v5727
      %v6059 = vpack.c.bf16 %v5730, %v5729
      %v6060 = vpack.c.bf16 %v5732, %v5731
      %v6061 = vpack.c.bf16 %v5734, %v5733
      %v6062 = vpack.c.bf16 %v5736, %v5735
      %v6063 = vpack.c.bf16 %v5738, %v5737
      %v6064 = vpack.c.bf16 %v5740, %v5739
      %v6065 = vpack.c.bf16 %v5742, %v5741
      %v6066 = vpack.c.bf16 %v5744, %v5743
      %v6067 = vpack.c.bf16 %v5746, %v5745
      %v6068 = vpack.c.bf16 %v5748, %v5747
      %v6069 = vpack.c.bf16 %v5750, %v5749
      %v6070 = vpack.c.bf16 %v5752, %v5751
      %v6071 = vpack.c.bf16 %v5754, %v5753
      %v6072 = vpack.c.bf16 %v5756, %v5755
      %v6073 = vpack.c.bf16 %v5758, %v5757
      %v6074 = vpack.c.bf16 %v5760, %v5759
      %v6075 = vpack.c.bf16 %v5762, %v5761
      %v6076 = vpack.c.bf16 %v5764, %v5763
      %v6077 = vpack.c.bf16 %v5766, %v5765
      %v6078 = vpack.c.bf16 %v5768, %v5767
      %v6079 = vpack.c.bf16 %v5770, %v5769
      %v6080 = vpack.c.bf16 %v5772, %v5771
      %v6081 = vpack.c.bf16 %v5774, %v5773
      %v6082 = vpack.c.bf16 %v5776, %v5775
      %v6083 = vpack.c.bf16 %v5778, %v5777
      %v6084 = vpack.c.bf16 %v5780, %v5779
      %v6085 = vpack.c.bf16 %v5782, %v5781
      %v6086 = vpack.c.bf16 %v5784, %v5783
      %v6087 = vpack.c.bf16 %v5786, %v5785
      %v6088 = vpack.c.bf16 %v5788, %v5787
      %v6089 = vpack.c.bf16 %v5790, %v5789
      %v6090 = vpack.c.bf16 %v5792, %v5791
      %v6091 = vpack.c.bf16 %v5794, %v5793
      %v6092 = vpack.c.bf16 %v5796, %v5795
      %v6093 = vpack.c.bf16 %v5798, %v5797
      %v6094 = vpack.c.bf16 %v5800, %v5799
      %v6095 = vpack.c.bf16 %v5802, %v5801
      %v6096 = vpack.c.bf16 %v5804, %v5803
      %v6097 = vpack.c.bf16 %v5806, %v5805
      %v6098 = vpack.c.bf16 %v5808, %v5807
      %v6099 = vpack.c.bf16 %v5810, %v5809
      %v6100 = vpack.c.bf16 %v5812, %v5811
      %v6101 = vpack.c.bf16 %v5814, %v5813
      %v6102 = vpack.c.bf16 %v5816, %v5815
      %v6103 = vpack.c.bf16 %v5818, %v5817
      %v6104 = vpack.c.bf16 %v5820, %v5819
      %v6105 = vpack.c.bf16 %v5822, %v5821
      %v6106 = vpack.c.bf16 %v5824, %v5823
      %v6107 = vpack.c.bf16 %v5826, %v5825
      %v6108 = vpack.c.bf16 %v5828, %v5827
      %v6109 = vpack.c.bf16 %v5830, %v5829
      %v6110 = vpack.c.bf16 %v5832, %v5831
      %v6111 = vpack.c.bf16 %v5834, %v5833
      %v6112 = vpack.c.bf16 %v5836, %v5835
      %v6113 = vpack.c.bf16 %v5838, %v5837
      %v6114 = vpack.c.bf16 %v5840, %v5839
      %v6115 = vpack.c.bf16 %v5842, %v5841
      %v6116 = vpack.c.bf16 %v5844, %v5843
      %v6117 = vpack.c.bf16 %v5846, %v5845
      %v6118 = vpack.c.bf16 %v5848, %v5847
      %v6119 = vpack.c.bf16 %v5850, %v5849
      %v6120 = vpack.c.bf16 %v5852, %v5851
      %v6121 = vpack.c.bf16 %v5854, %v5853
      %v6122 = vpack.c.bf16 %v5856, %v5855
      %v6123 = vpack.c.bf16 %v5858, %v5857
      %v6124 = vpack.c.bf16 %v5860, %v5859
      %v6125 = vpack.c.bf16 %v5862, %v5861
      %v6126 = vpack.c.bf16 %v5864, %v5863
      %v6127 = vpack.c.bf16 %v5866, %v5865
      %v6128 = vpack.c.bf16 %v5868, %v5867
      %v6129 = vpack.c.bf16 %v5870, %v5869
      %v6130 = vpack.c.bf16 %v5872, %v5871
      %v6131 = vpack.c.bf16 %v5874, %v5873
      %v6132 = vpack.c.bf16 %v5876, %v5875
      %v6389 = vunpack.c.l.b16 %v5877
      %v6390 = vunpack.c.h.b16 %v5877
      %v6391 = vunpack.c.l.b16 %v5878
      %v6392 = vunpack.c.h.b16 %v5878
      %v6393 = vunpack.c.l.b16 %v5879
      %v6394 = vunpack.c.h.b16 %v5879
      %v6395 = vunpack.c.l.b16 %v5880
      %v6396 = vunpack.c.h.b16 %v5880
      %v6397 = vunpack.c.l.b16 %v5881
      %v6398 = vunpack.c.h.b16 %v5881
      %v6399 = vunpack.c.l.b16 %v5882
      %v6400 = vunpack.c.h.b16 %v5882
      %v6401 = vunpack.c.l.b16 %v5883
      %v6402 = vunpack.c.h.b16 %v5883
      %v6403 = vunpack.c.l.b16 %v5884
      %v6404 = vunpack.c.h.b16 %v5884
      %v6405 = vunpack.c.l.b16 %v5885
      %v6406 = vunpack.c.h.b16 %v5885
      %v6407 = vunpack.c.l.b16 %v5886
      %v6408 = vunpack.c.h.b16 %v5886
      %v6409 = vunpack.c.l.b16 %v5887
      %v6410 = vunpack.c.h.b16 %v5887
      %v6411 = vunpack.c.l.b16 %v5888
      %v6412 = vunpack.c.h.b16 %v5888
      %v6413 = vunpack.c.l.b16 %v5889
      %v6414 = vunpack.c.h.b16 %v5889
      %v6415 = vunpack.c.l.b16 %v5890
      %v6416 = vunpack.c.h.b16 %v5890
      %v6417 = vunpack.c.l.b16 %v5891
      %v6418 = vunpack.c.h.b16 %v5891
      %v6419 = vunpack.c.l.b16 %v5892
      %v6420 = vunpack.c.h.b16 %v5892
      %v6421 = vunpack.c.l.b16 %v5893
      %v6422 = vunpack.c.h.b16 %v5893
      %v6423 = vunpack.c.l.b16 %v5894
      %v6424 = vunpack.c.h.b16 %v5894
      %v6425 = vunpack.c.l.b16 %v5895
      %v6426 = vunpack.c.h.b16 %v5895
      %v6427 = vunpack.c.l.b16 %v5896
      %v6428 = vunpack.c.h.b16 %v5896
      %v6429 = vunpack.c.l.b16 %v5897
      %v6430 = vunpack.c.h.b16 %v5897
      %v6431 = vunpack.c.l.b16 %v5898
      %v6432 = vunpack.c.h.b16 %v5898
      %v6433 = vunpack.c.l.b16 %v5899
      %v6434 = vunpack.c.h.b16 %v5899
      %v6435 = vunpack.c.l.b16 %v5900
      %v6436 = vunpack.c.h.b16 %v5900
      %v6437 = vunpack.c.l.b16 %v5901
      %v6438 = vunpack.c.h.b16 %v5901
      %v6439 = vunpack.c.l.b16 %v5902
      %v6440 = vunpack.c.h.b16 %v5902
      %v6441 = vunpack.c.l.b16 %v5903
      %v6442 = vunpack.c.h.b16 %v5903
      %v6443 = vunpack.c.l.b16 %v5904
      %v6444 = vunpack.c.h.b16 %v5904
      %v6445 = vunpack.c.l.b16 %v5905
      %v6446 = vunpack.c.h.b16 %v5905
      %v6447 = vunpack.c.l.b16 %v5906
      %v6448 = vunpack.c.h.b16 %v5906
      %v6449 = vunpack.c.l.b16 %v5907
      %v6450 = vunpack.c.h.b16 %v5907
      %v6451 = vunpack.c.l.b16 %v5908
      %v6452 = vunpack.c.h.b16 %v5908
      %v6453 = vunpack.c.l.b16 %v5909
      %v6454 = vunpack.c.h.b16 %v5909
      %v6455 = vunpack.c.l.b16 %v5910
      %v6456 = vunpack.c.h.b16 %v5910
      %v6457 = vunpack.c.l.b16 %v5911
      %v6458 = vunpack.c.h.b16 %v5911
      %v6459 = vunpack.c.l.b16 %v5912
      %v6460 = vunpack.c.h.b16 %v5912
      %v6461 = vunpack.c.l.b16 %v5913
      %v6462 = vunpack.c.h.b16 %v5913
      %v6463 = vunpack.c.l.b16 %v5914
      %v6464 = vunpack.c.h.b16 %v5914
      %v6465 = vunpack.c.l.b16 %v5915
      %v6466 = vunpack.c.h.b16 %v5915
      %v6467 = vunpack.c.l.b16 %v5916
      %v6468 = vunpack.c.h.b16 %v5916
      %v6469 = vunpack.c.l.b16 %v5917
      %v6470 = vunpack.c.h.b16 %v5917
      %v6471 = vunpack.c.l.b16 %v5918
      %v6472 = vunpack.c.h.b16 %v5918
      %v6473 = vunpack.c.l.b16 %v5919
      %v6474 = vunpack.c.h.b16 %v5919
      %v6475 = vunpack.c.l.b16 %v5920
      %v6476 = vunpack.c.h.b16 %v5920
      %v6477 = vunpack.c.l.b16 %v5921
      %v6478 = vunpack.c.h.b16 %v5921
      %v6479 = vunpack.c.l.b16 %v5922
      %v6480 = vunpack.c.h.b16 %v5922
      %v6481 = vunpack.c.l.b16 %v5923
      %v6482 = vunpack.c.h.b16 %v5923
      %v6483 = vunpack.c.l.b16 %v5924
      %v6484 = vunpack.c.h.b16 %v5924
      %v6485 = vunpack.c.l.b16 %v5925
      %v6486 = vunpack.c.h.b16 %v5925
      %v6487 = vunpack.c.l.b16 %v5926
      %v6488 = vunpack.c.h.b16 %v5926
      %v6489 = vunpack.c.l.b16 %v5927
      %v6490 = vunpack.c.h.b16 %v5927
      %v6491 = vunpack.c.l.b16 %v5928
      %v6492 = vunpack.c.h.b16 %v5928
      %v6493 = vunpack.c.l.b16 %v5929
      %v6494 = vunpack.c.h.b16 %v5929
      %v6495 = vunpack.c.l.b16 %v5930
      %v6496 = vunpack.c.h.b16 %v5930
      %v6497 = vunpack.c.l.b16 %v5931
      %v6498 = vunpack.c.h.b16 %v5931
      %v6499 = vunpack.c.l.b16 %v5932
      %v6500 = vunpack.c.h.b16 %v5932
      %v6501 = vunpack.c.l.b16 %v5933
      %v6502 = vunpack.c.h.b16 %v5933
      %v6503 = vunpack.c.l.b16 %v5934
      %v6504 = vunpack.c.h.b16 %v5934
      %v6505 = vunpack.c.l.b16 %v5935
      %v6506 = vunpack.c.h.b16 %v5935
      %v6507 = vunpack.c.l.b16 %v5936
      %v6508 = vunpack.c.h.b16 %v5936
      %v6509 = vunpack.c.l.b16 %v5937
      %v6510 = vunpack.c.h.b16 %v5937
      %v6511 = vunpack.c.l.b16 %v5938
      %v6512 = vunpack.c.h.b16 %v5938
      %v6513 = vunpack.c.l.b16 %v5939
      %v6514 = vunpack.c.h.b16 %v5939
      %v6515 = vunpack.c.l.b16 %v5940
      %v6516 = vunpack.c.h.b16 %v5940
      %v6517 = vunpack.c.l.b16 %v5941
      %v6518 = vunpack.c.h.b16 %v5941
      %v6519 = vunpack.c.l.b16 %v5942
      %v6520 = vunpack.c.h.b16 %v5942
      %v6521 = vunpack.c.l.b16 %v5943
      %v6522 = vunpack.c.h.b16 %v5943
      %v6523 = vunpack.c.l.b16 %v5944
      %v6524 = vunpack.c.h.b16 %v5944
      %v6525 = vunpack.c.l.b16 %v5945
      %v6526 = vunpack.c.h.b16 %v5945
      %v6527 = vunpack.c.l.b16 %v5946
      %v6528 = vunpack.c.h.b16 %v5946
      %v6529 = vunpack.c.l.b16 %v5947
      %v6530 = vunpack.c.h.b16 %v5947
      %v6531 = vunpack.c.l.b16 %v5948
      %v6532 = vunpack.c.h.b16 %v5948
      %v6533 = vunpack.c.l.b16 %v5949
      %v6534 = vunpack.c.h.b16 %v5949
      %v6535 = vunpack.c.l.b16 %v5950
      %v6536 = vunpack.c.h.b16 %v5950
      %v6537 = vunpack.c.l.b16 %v5951
      %v6538 = vunpack.c.h.b16 %v5951
      %v6539 = vunpack.c.l.b16 %v5952
      %v6540 = vunpack.c.h.b16 %v5952
      %v6541 = vunpack.c.l.b16 %v5953
      %v6542 = vunpack.c.h.b16 %v5953
      %v6543 = vunpack.c.l.b16 %v5954
      %v6544 = vunpack.c.h.b16 %v5954
      %v6545 = vunpack.c.l.b16 %v5955
      %v6546 = vunpack.c.h.b16 %v5955
      %v6547 = vunpack.c.l.b16 %v5956
      %v6548 = vunpack.c.h.b16 %v5956
      %v6549 = vunpack.c.l.b16 %v5957
      %v6550 = vunpack.c.h.b16 %v5957
      %v6551 = vunpack.c.l.b16 %v5958
      %v6552 = vunpack.c.h.b16 %v5958
      %v6553 = vunpack.c.l.b16 %v5959
      %v6554 = vunpack.c.h.b16 %v5959
      %v6555 = vunpack.c.l.b16 %v5960
      %v6556 = vunpack.c.h.b16 %v5960
      %v6557 = vunpack.c.l.b16 %v5961
      %v6558 = vunpack.c.h.b16 %v5961
      %v6559 = vunpack.c.l.b16 %v5962
      %v6560 = vunpack.c.h.b16 %v5962
      %v6561 = vunpack.c.l.b16 %v5963
      %v6562 = vunpack.c.h.b16 %v5963
      %v6563 = vunpack.c.l.b16 %v5964
      %v6564 = vunpack.c.h.b16 %v5964
      %v6565 = vunpack.c.l.b16 %v5965
      %v6566 = vunpack.c.h.b16 %v5965
      %v6567 = vunpack.c.l.b16 %v5966
      %v6568 = vunpack.c.h.b16 %v5966
      %v6569 = vunpack.c.l.b16 %v5967
      %v6570 = vunpack.c.h.b16 %v5967
      %v6571 = vunpack.c.l.b16 %v5968
      %v6572 = vunpack.c.h.b16 %v5968
      %v6573 = vunpack.c.l.b16 %v5969
      %v6574 = vunpack.c.h.b16 %v5969
      %v6575 = vunpack.c.l.b16 %v5970
      %v6576 = vunpack.c.h.b16 %v5970
      %v6577 = vunpack.c.l.b16 %v5971
      %v6578 = vunpack.c.h.b16 %v5971
      %v6579 = vunpack.c.l.b16 %v5972
      %v6580 = vunpack.c.h.b16 %v5972
      %v6581 = vunpack.c.l.b16 %v5973
      %v6582 = vunpack.c.h.b16 %v5973
      %v6583 = vunpack.c.l.b16 %v5974
      %v6584 = vunpack.c.h.b16 %v5974
      %v6585 = vunpack.c.l.b16 %v5975
      %v6586 = vunpack.c.h.b16 %v5975
      %v6587 = vunpack.c.l.b16 %v5976
      %v6588 = vunpack.c.h.b16 %v5976
      %v6589 = vunpack.c.l.b16 %v5977
      %v6590 = vunpack.c.h.b16 %v5977
      %v6591 = vunpack.c.l.b16 %v5978
      %v6592 = vunpack.c.h.b16 %v5978
      %v6593 = vunpack.c.l.b16 %v5979
      %v6594 = vunpack.c.h.b16 %v5979
      %v6595 = vunpack.c.l.b16 %v5980
      %v6596 = vunpack.c.h.b16 %v5980
      %v6597 = vunpack.c.l.b16 %v5981
      %v6598 = vunpack.c.h.b16 %v5981
      %v6599 = vunpack.c.l.b16 %v5982
      %v6600 = vunpack.c.h.b16 %v5982
      %v6601 = vunpack.c.l.b16 %v5983
      %v6602 = vunpack.c.h.b16 %v5983
      %v6603 = vunpack.c.l.b16 %v5984
      %v6604 = vunpack.c.h.b16 %v5984
      %v6605 = vunpack.c.l.b16 %v5985
      %v6606 = vunpack.c.h.b16 %v5985
      %v6607 = vunpack.c.l.b16 %v5986
      %v6608 = vunpack.c.h.b16 %v5986
      %v6609 = vunpack.c.l.b16 %v5987
      %v6610 = vunpack.c.h.b16 %v5987
      %v6611 = vunpack.c.l.b16 %v5988
      %v6612 = vunpack.c.h.b16 %v5988
      %v6613 = vunpack.c.l.b16 %v5989
      %v6614 = vunpack.c.h.b16 %v5989
      %v6615 = vunpack.c.l.b16 %v5990
      %v6616 = vunpack.c.h.b16 %v5990
      %v6617 = vunpack.c.l.b16 %v5991
      %v6618 = vunpack.c.h.b16 %v5991
      %v6619 = vunpack.c.l.b16 %v5992
      %v6620 = vunpack.c.h.b16 %v5992
      %v6621 = vunpack.c.l.b16 %v5993
      %v6622 = vunpack.c.h.b16 %v5993
      %v6623 = vunpack.c.l.b16 %v5994
      %v6624 = vunpack.c.h.b16 %v5994
      %v6625 = vunpack.c.l.b16 %v5995
      %v6626 = vunpack.c.h.b16 %v5995
      %v6627 = vunpack.c.l.b16 %v5996
      %v6628 = vunpack.c.h.b16 %v5996
      %v6629 = vunpack.c.l.b16 %v5997
      %v6630 = vunpack.c.h.b16 %v5997
      %v6631 = vunpack.c.l.b16 %v5998
      %v6632 = vunpack.c.h.b16 %v5998
      %v6633 = vunpack.c.l.b16 %v5999
      %v6634 = vunpack.c.h.b16 %v5999
      %v6635 = vunpack.c.l.b16 %v6000
      %v6636 = vunpack.c.h.b16 %v6000
      %v6637 = vunpack.c.l.b16 %v6001
      %v6638 = vunpack.c.h.b16 %v6001
      %v6639 = vunpack.c.l.b16 %v6002
      %v6640 = vunpack.c.h.b16 %v6002
      %v6641 = vunpack.c.l.b16 %v6003
      %v6642 = vunpack.c.h.b16 %v6003
      %v6643 = vunpack.c.l.b16 %v6004
      %v6644 = vunpack.c.h.b16 %v6004
      %v6645 = vunpack.c.l.b16 %v6005
      %v6646 = vunpack.c.h.b16 %v6005
      %v6647 = vunpack.c.l.b16 %v6006
      %v6648 = vunpack.c.h.b16 %v6006
      %v6649 = vunpack.c.l.b16 %v6007
      %v6650 = vunpack.c.h.b16 %v6007
      %v6651 = vunpack.c.l.b16 %v6008
      %v6652 = vunpack.c.h.b16 %v6008
      %v6653 = vunpack.c.l.b16 %v6009
      %v6654 = vunpack.c.h.b16 %v6009
      %v6655 = vunpack.c.l.b16 %v6010
      %v6656 = vunpack.c.h.b16 %v6010
      %v6657 = vunpack.c.l.b16 %v6011
      %v6658 = vunpack.c.h.b16 %v6011
      %v6659 = vunpack.c.l.b16 %v6012
      %v6660 = vunpack.c.h.b16 %v6012
      %v6661 = vunpack.c.l.b16 %v6013
      %v6662 = vunpack.c.h.b16 %v6013
      %v6663 = vunpack.c.l.b16 %v6014
      %v6664 = vunpack.c.h.b16 %v6014
      %v6665 = vunpack.c.l.b16 %v6015
      %v6666 = vunpack.c.h.b16 %v6015
      %v6667 = vunpack.c.l.b16 %v6016
      %v6668 = vunpack.c.h.b16 %v6016
      %v6669 = vunpack.c.l.b16 %v6017
      %v6670 = vunpack.c.h.b16 %v6017
      %v6671 = vunpack.c.l.b16 %v6018
      %v6672 = vunpack.c.h.b16 %v6018
      %v6673 = vunpack.c.l.b16 %v6019
      %v6674 = vunpack.c.h.b16 %v6019
      %v6675 = vunpack.c.l.b16 %v6020
      %v6676 = vunpack.c.h.b16 %v6020
      %v6677 = vunpack.c.l.b16 %v6021
      %v6678 = vunpack.c.h.b16 %v6021
      %v6679 = vunpack.c.l.b16 %v6022
      %v6680 = vunpack.c.h.b16 %v6022
      %v6681 = vunpack.c.l.b16 %v6023
      %v6682 = vunpack.c.h.b16 %v6023
      %v6683 = vunpack.c.l.b16 %v6024
      %v6684 = vunpack.c.h.b16 %v6024
      %v6685 = vunpack.c.l.b16 %v6025
      %v6686 = vunpack.c.h.b16 %v6025
      %v6687 = vunpack.c.l.b16 %v6026
      %v6688 = vunpack.c.h.b16 %v6026
      %v6689 = vunpack.c.l.b16 %v6027
      %v6690 = vunpack.c.h.b16 %v6027
      %v6691 = vunpack.c.l.b16 %v6028
      %v6692 = vunpack.c.h.b16 %v6028
      %v6693 = vunpack.c.l.b16 %v6029
      %v6694 = vunpack.c.h.b16 %v6029
      %v6695 = vunpack.c.l.b16 %v6030
      %v6696 = vunpack.c.h.b16 %v6030
      %v6697 = vunpack.c.l.b16 %v6031
      %v6698 = vunpack.c.h.b16 %v6031
      %v6699 = vunpack.c.l.b16 %v6032
      %v6700 = vunpack.c.h.b16 %v6032
      %v6701 = vunpack.c.l.b16 %v6033
      %v6702 = vunpack.c.h.b16 %v6033
      %v6703 = vunpack.c.l.b16 %v6034
      %v6704 = vunpack.c.h.b16 %v6034
      %v6705 = vunpack.c.l.b16 %v6035
      %v6706 = vunpack.c.h.b16 %v6035
      %v6707 = vunpack.c.l.b16 %v6036
      %v6708 = vunpack.c.h.b16 %v6036
      %v6709 = vunpack.c.l.b16 %v6037
      %v6710 = vunpack.c.h.b16 %v6037
      %v6711 = vunpack.c.l.b16 %v6038
      %v6712 = vunpack.c.h.b16 %v6038
      %v6713 = vunpack.c.l.b16 %v6039
      %v6714 = vunpack.c.h.b16 %v6039
      %v6715 = vunpack.c.l.b16 %v6040
      %v6716 = vunpack.c.h.b16 %v6040
      %v6717 = vunpack.c.l.b16 %v6041
      %v6718 = vunpack.c.h.b16 %v6041
      %v6719 = vunpack.c.l.b16 %v6042
      %v6720 = vunpack.c.h.b16 %v6042
      %v6721 = vunpack.c.l.b16 %v6043
      %v6722 = vunpack.c.h.b16 %v6043
      %v6723 = vunpack.c.l.b16 %v6044
      %v6724 = vunpack.c.h.b16 %v6044
      %v6725 = vunpack.c.l.b16 %v6045
      %v6726 = vunpack.c.h.b16 %v6045
      %v6727 = vunpack.c.l.b16 %v6046
      %v6728 = vunpack.c.h.b16 %v6046
      %v6729 = vunpack.c.l.b16 %v6047
      %v6730 = vunpack.c.h.b16 %v6047
      %v6731 = vunpack.c.l.b16 %v6048
      %v6732 = vunpack.c.h.b16 %v6048
      %v6733 = vunpack.c.l.b16 %v6049
      %v6734 = vunpack.c.h.b16 %v6049
      %v6735 = vunpack.c.l.b16 %v6050
      %v6736 = vunpack.c.h.b16 %v6050
      %v6737 = vunpack.c.l.b16 %v6051
      %v6738 = vunpack.c.h.b16 %v6051
      %v6739 = vunpack.c.l.b16 %v6052
      %v6740 = vunpack.c.h.b16 %v6052
      %v6741 = vunpack.c.l.b16 %v6053
      %v6742 = vunpack.c.h.b16 %v6053
      %v6743 = vunpack.c.l.b16 %v6054
      %v6744 = vunpack.c.h.b16 %v6054
      %v6745 = vunpack.c.l.b16 %v6055
      %v6746 = vunpack.c.h.b16 %v6055
      %v6747 = vunpack.c.l.b16 %v6056
      %v6748 = vunpack.c.h.b16 %v6056
      %v6749 = vunpack.c.l.b16 %v6057
      %v6750 = vunpack.c.h.b16 %v6057
      %v6751 = vunpack.c.l.b16 %v6058
      %v6752 = vunpack.c.h.b16 %v6058
      %v6753 = vunpack.c.l.b16 %v6059
      %v6754 = vunpack.c.h.b16 %v6059
      %v6755 = vunpack.c.l.b16 %v6060
      %v6756 = vunpack.c.h.b16 %v6060
      %v6757 = vunpack.c.l.b16 %v6061
      %v6758 = vunpack.c.h.b16 %v6061
      %v6759 = vunpack.c.l.b16 %v6062
      %v6760 = vunpack.c.h.b16 %v6062
      %v6761 = vunpack.c.l.b16 %v6063
      %v6762 = vunpack.c.h.b16 %v6063
      %v6763 = vunpack.c.l.b16 %v6064
      %v6764 = vunpack.c.h.b16 %v6064
      %v6765 = vunpack.c.l.b16 %v6065
      %v6766 = vunpack.c.h.b16 %v6065
      %v6767 = vunpack.c.l.b16 %v6066
      %v6768 = vunpack.c.h.b16 %v6066
      %v6769 = vunpack.c.l.b16 %v6067
      %v6770 = vunpack.c.h.b16 %v6067
      %v6771 = vunpack.c.l.b16 %v6068
      %v6772 = vunpack.c.h.b16 %v6068
      %v6773 = vunpack.c.l.b16 %v6069
      %v6774 = vunpack.c.h.b16 %v6069
      %v6775 = vunpack.c.l.b16 %v6070
      %v6776 = vunpack.c.h.b16 %v6070
      %v6777 = vunpack.c.l.b16 %v6071
      %v6778 = vunpack.c.h.b16 %v6071
      %v6779 = vunpack.c.l.b16 %v6072
      %v6780 = vunpack.c.h.b16 %v6072
      %v6781 = vunpack.c.l.b16 %v6073
      %v6782 = vunpack.c.h.b16 %v6073
      %v6783 = vunpack.c.l.b16 %v6074
      %v6784 = vunpack.c.h.b16 %v6074
      %v6785 = vunpack.c.l.b16 %v6075
      %v6786 = vunpack.c.h.b16 %v6075
      %v6787 = vunpack.c.l.b16 %v6076
      %v6788 = vunpack.c.h.b16 %v6076
      %v6789 = vunpack.c.l.b16 %v6077
      %v6790 = vunpack.c.h.b16 %v6077
      %v6791 = vunpack.c.l.b16 %v6078
      %v6792 = vunpack.c.h.b16 %v6078
      %v6793 = vunpack.c.l.b16 %v6079
      %v6794 = vunpack.c.h.b16 %v6079
      %v6795 = vunpack.c.l.b16 %v6080
      %v6796 = vunpack.c.h.b16 %v6080
      %v6797 = vunpack.c.l.b16 %v6081
      %v6798 = vunpack.c.h.b16 %v6081
      %v6799 = vunpack.c.l.b16 %v6082
      %v6800 = vunpack.c.h.b16 %v6082
      %v6801 = vunpack.c.l.b16 %v6083
      %v6802 = vunpack.c.h.b16 %v6083
      %v6803 = vunpack.c.l.b16 %v6084
      %v6804 = vunpack.c.h.b16 %v6084
      %v6805 = vunpack.c.l.b16 %v6085
      %v6806 = vunpack.c.h.b16 %v6085
      %v6807 = vunpack.c.l.b16 %v6086
      %v6808 = vunpack.c.h.b16 %v6086
      %v6809 = vunpack.c.l.b16 %v6087
      %v6810 = vunpack.c.h.b16 %v6087
      %v6811 = vunpack.c.l.b16 %v6088
      %v6812 = vunpack.c.h.b16 %v6088
      %v6813 = vunpack.c.l.b16 %v6089
      %v6814 = vunpack.c.h.b16 %v6089
      %v6815 = vunpack.c.l.b16 %v6090
      %v6816 = vunpack.c.h.b16 %v6090
      %v6817 = vunpack.c.l.b16 %v6091
      %v6818 = vunpack.c.h.b16 %v6091
      %v6819 = vunpack.c.l.b16 %v6092
      %v6820 = vunpack.c.h.b16 %v6092
      %v6821 = vunpack.c.l.b16 %v6093
      %v6822 = vunpack.c.h.b16 %v6093
      %v6823 = vunpack.c.l.b16 %v6094
      %v6824 = vunpack.c.h.b16 %v6094
      %v6825 = vunpack.c.l.b16 %v6095
      %v6826 = vunpack.c.h.b16 %v6095
      %v6827 = vunpack.c.l.b16 %v6096
      %v6828 = vunpack.c.h.b16 %v6096
      %v6829 = vunpack.c.l.b16 %v6097
      %v6830 = vunpack.c.h.b16 %v6097
      %v6831 = vunpack.c.l.b16 %v6098
      %v6832 = vunpack.c.h.b16 %v6098
      %v6833 = vunpack.c.l.b16 %v6099
      %v6834 = vunpack.c.h.b16 %v6099
      %v6835 = vunpack.c.l.b16 %v6100
      %v6836 = vunpack.c.h.b16 %v6100
      %v6837 = vunpack.c.l.b16 %v6101
      %v6838 = vunpack.c.h.b16 %v6101
      %v6839 = vunpack.c.l.b16 %v6102
      %v6840 = vunpack.c.h.b16 %v6102
      %v6841 = vunpack.c.l.b16 %v6103
      %v6842 = vunpack.c.h.b16 %v6103
      %v6843 = vunpack.c.l.b16 %v6104
      %v6844 = vunpack.c.h.b16 %v6104
      %v6845 = vunpack.c.l.b16 %v6105
      %v6846 = vunpack.c.h.b16 %v6105
      %v6847 = vunpack.c.l.b16 %v6106
      %v6848 = vunpack.c.h.b16 %v6106
      %v6849 = vunpack.c.l.b16 %v6107
      %v6850 = vunpack.c.h.b16 %v6107
      %v6851 = vunpack.c.l.b16 %v6108
      %v6852 = vunpack.c.h.b16 %v6108
      %v6853 = vunpack.c.l.b16 %v6109
      %v6854 = vunpack.c.h.b16 %v6109
      %v6855 = vunpack.c.l.b16 %v6110
      %v6856 = vunpack.c.h.b16 %v6110
      %v6857 = vunpack.c.l.b16 %v6111
      %v6858 = vunpack.c.h.b16 %v6111
      %v6859 = vunpack.c.l.b16 %v6112
      %v6860 = vunpack.c.h.b16 %v6112
      %v6861 = vunpack.c.l.b16 %v6113
      %v6862 = vunpack.c.h.b16 %v6113
      %v6863 = vunpack.c.l.b16 %v6114
      %v6864 = vunpack.c.h.b16 %v6114
      %v6865 = vunpack.c.l.b16 %v6115
      %v6866 = vunpack.c.h.b16 %v6115
      %v6867 = vunpack.c.l.b16 %v6116
      %v6868 = vunpack.c.h.b16 %v6116
      %v6869 = vunpack.c.l.b16 %v6117
      %v6870 = vunpack.c.h.b16 %v6117
      %v6871 = vunpack.c.l.b16 %v6118
      %v6872 = vunpack.c.h.b16 %v6118
      %v6873 = vunpack.c.l.b16 %v6119
      %v6874 = vunpack.c.h.b16 %v6119
      %v6875 = vunpack.c.l.b16 %v6120
      %v6876 = vunpack.c.h.b16 %v6120
      %v6877 = vunpack.c.l.b16 %v6121
      %v6878 = vunpack.c.h.b16 %v6121
      %v6879 = vunpack.c.l.b16 %v6122
      %v6880 = vunpack.c.h.b16 %v6122
      %v6881 = vunpack.c.l.b16 %v6123
      %v6882 = vunpack.c.h.b16 %v6123
      %v6883 = vunpack.c.l.b16 %v6124
      %v6884 = vunpack.c.h.b16 %v6124
      %v6885 = vunpack.c.l.b16 %v6125
      %v6886 = vunpack.c.h.b16 %v6125
      %v6887 = vunpack.c.l.b16 %v6126
      %v6888 = vunpack.c.h.b16 %v6126
      %v6889 = vunpack.c.l.b16 %v6127
      %v6890 = vunpack.c.h.b16 %v6127
      %v6891 = vunpack.c.l.b16 %v6128
      %v6892 = vunpack.c.h.b16 %v6128
      %v6893 = vunpack.c.l.b16 %v6129
      %v6894 = vunpack.c.h.b16 %v6129
      %v6895 = vunpack.c.l.b16 %v6130
      %v6896 = vunpack.c.h.b16 %v6130
      %v6897 = vunpack.c.l.b16 %v6131
      %v6898 = vunpack.c.h.b16 %v6131
      %v6899 = vunpack.c.l.b16 %v6132
      %v6900 = vunpack.c.h.b16 %v6132
      %v6901 = vpack.c.b16 %v6389, %v6389
      %v6902 = vpack.c.b16 %v6390, %v6390
      %v6903 = vpack.c.b16 %v6391, %v6391
      %v6904 = vpack.c.b16 %v6392, %v6392
      %v6905 = vpack.c.b16 %v6393, %v6393
      %v6906 = vpack.c.b16 %v6394, %v6394
      %v6907 = vpack.c.b16 %v6395, %v6395
      %v6908 = vpack.c.b16 %v6396, %v6396
      %v6909 = vpack.c.b16 %v6397, %v6397
      %v6910 = vpack.c.b16 %v6398, %v6398
      %v6911 = vpack.c.b16 %v6399, %v6399
      %v6912 = vpack.c.b16 %v6400, %v6400
      %v6913 = vpack.c.b16 %v6401, %v6401
      %v6914 = vpack.c.b16 %v6402, %v6402
      %v6915 = vpack.c.b16 %v6403, %v6403
      %v6916 = vpack.c.b16 %v6404, %v6404
      %v6917 = vpack.c.b16 %v6405, %v6405
      %v6918 = vpack.c.b16 %v6406, %v6406
      %v6919 = vpack.c.b16 %v6407, %v6407
      %v6920 = vpack.c.b16 %v6408, %v6408
      %v6921 = vpack.c.b16 %v6409, %v6409
      %v6922 = vpack.c.b16 %v6410, %v6410
      %v6923 = vpack.c.b16 %v6411, %v6411
      %v6924 = vpack.c.b16 %v6412, %v6412
      %v6925 = vpack.c.b16 %v6413, %v6413
      %v6926 = vpack.c.b16 %v6414, %v6414
      %v6927 = vpack.c.b16 %v6415, %v6415
      %v6928 = vpack.c.b16 %v6416, %v6416
      %v6929 = vpack.c.b16 %v6417, %v6417
      %v6930 = vpack.c.b16 %v6418, %v6418
      %v6931 = vpack.c.b16 %v6419, %v6419
      %v6932 = vpack.c.b16 %v6420, %v6420
      %v6933 = vpack.c.b16 %v6421, %v6421
      %v6934 = vpack.c.b16 %v6422, %v6422
      %v6935 = vpack.c.b16 %v6423, %v6423
      %v6936 = vpack.c.b16 %v6424, %v6424
      %v6937 = vpack.c.b16 %v6425, %v6425
      %v6938 = vpack.c.b16 %v6426, %v6426
      %v6939 = vpack.c.b16 %v6427, %v6427
      %v6940 = vpack.c.b16 %v6428, %v6428
      %v6941 = vpack.c.b16 %v6429, %v6429
      %v6942 = vpack.c.b16 %v6430, %v6430
      %v6943 = vpack.c.b16 %v6431, %v6431
      %v6944 = vpack.c.b16 %v6432, %v6432
      %v6945 = vpack.c.b16 %v6433, %v6433
      %v6946 = vpack.c.b16 %v6434, %v6434
      %v6947 = vpack.c.b16 %v6435, %v6435
      %v6948 = vpack.c.b16 %v6436, %v6436
      %v6949 = vpack.c.b16 %v6437, %v6437
      %v6950 = vpack.c.b16 %v6438, %v6438
      %v6951 = vpack.c.b16 %v6439, %v6439
      %v6952 = vpack.c.b16 %v6440, %v6440
      %v6953 = vpack.c.b16 %v6441, %v6441
      %v6954 = vpack.c.b16 %v6442, %v6442
      %v6955 = vpack.c.b16 %v6443, %v6443
      %v6956 = vpack.c.b16 %v6444, %v6444
      %v6957 = vpack.c.b16 %v6445, %v6445
      %v6958 = vpack.c.b16 %v6446, %v6446
      %v6959 = vpack.c.b16 %v6447, %v6447
      %v6960 = vpack.c.b16 %v6448, %v6448
      %v6961 = vpack.c.b16 %v6449, %v6449
      %v6962 = vpack.c.b16 %v6450, %v6450
      %v6963 = vpack.c.b16 %v6451, %v6451
      %v6964 = vpack.c.b16 %v6452, %v6452
      %v6965 = vpack.c.b16 %v6453, %v6453
      %v6966 = vpack.c.b16 %v6454, %v6454
      %v6967 = vpack.c.b16 %v6455, %v6455
      %v6968 = vpack.c.b16 %v6456, %v6456
      %v6969 = vpack.c.b16 %v6457, %v6457
      %v6970 = vpack.c.b16 %v6458, %v6458
      %v6971 = vpack.c.b16 %v6459, %v6459
      %v6972 = vpack.c.b16 %v6460, %v6460
      %v6973 = vpack.c.b16 %v6461, %v6461
      %v6974 = vpack.c.b16 %v6462, %v6462
      %v6975 = vpack.c.b16 %v6463, %v6463
      %v6976 = vpack.c.b16 %v6464, %v6464
      %v6977 = vpack.c.b16 %v6465, %v6465
      %v6978 = vpack.c.b16 %v6466, %v6466
      %v6979 = vpack.c.b16 %v6467, %v6467
      %v6980 = vpack.c.b16 %v6468, %v6468
      %v6981 = vpack.c.b16 %v6469, %v6469
      %v6982 = vpack.c.b16 %v6470, %v6470
      %v6983 = vpack.c.b16 %v6471, %v6471
      %v6984 = vpack.c.b16 %v6472, %v6472
      %v6985 = vpack.c.b16 %v6473, %v6473
      %v6986 = vpack.c.b16 %v6474, %v6474
      %v6987 = vpack.c.b16 %v6475, %v6475
      %v6988 = vpack.c.b16 %v6476, %v6476
      %v6989 = vpack.c.b16 %v6477, %v6477
      %v6990 = vpack.c.b16 %v6478, %v6478
      %v6991 = vpack.c.b16 %v6479, %v6479
      %v6992 = vpack.c.b16 %v6480, %v6480
      %v6993 = vpack.c.b16 %v6481, %v6481
      %v6994 = vpack.c.b16 %v6482, %v6482
      %v6995 = vpack.c.b16 %v6483, %v6483
      %v6996 = vpack.c.b16 %v6484, %v6484
      %v6997 = vpack.c.b16 %v6485, %v6485
      %v6998 = vpack.c.b16 %v6486, %v6486
      %v6999 = vpack.c.b16 %v6487, %v6487
      %v7000 = vpack.c.b16 %v6488, %v6488
      %v7001 = vpack.c.b16 %v6489, %v6489
      %v7002 = vpack.c.b16 %v6490, %v6490
      %v7003 = vpack.c.b16 %v6491, %v6491
      %v7004 = vpack.c.b16 %v6492, %v6492
      %v7005 = vpack.c.b16 %v6493, %v6493
      %v7006 = vpack.c.b16 %v6494, %v6494
      %v7007 = vpack.c.b16 %v6495, %v6495
      %v7008 = vpack.c.b16 %v6496, %v6496
      %v7009 = vpack.c.b16 %v6497, %v6497
      %v7010 = vpack.c.b16 %v6498, %v6498
      %v7011 = vpack.c.b16 %v6499, %v6499
      %v7012 = vpack.c.b16 %v6500, %v6500
      %v7013 = vpack.c.b16 %v6501, %v6501
      %v7014 = vpack.c.b16 %v6502, %v6502
      %v7015 = vpack.c.b16 %v6503, %v6503
      %v7016 = vpack.c.b16 %v6504, %v6504
      %v7017 = vpack.c.b16 %v6505, %v6505
      %v7018 = vpack.c.b16 %v6506, %v6506
      %v7019 = vpack.c.b16 %v6507, %v6507
      %v7020 = vpack.c.b16 %v6508, %v6508
      %v7021 = vpack.c.b16 %v6509, %v6509
      %v7022 = vpack.c.b16 %v6510, %v6510
      %v7023 = vpack.c.b16 %v6511, %v6511
      %v7024 = vpack.c.b16 %v6512, %v6512
      %v7025 = vpack.c.b16 %v6513, %v6513
      %v7026 = vpack.c.b16 %v6514, %v6514
      %v7027 = vpack.c.b16 %v6515, %v6515
      %v7028 = vpack.c.b16 %v6516, %v6516
      %v7029 = vpack.c.b16 %v6517, %v6517
      %v7030 = vpack.c.b16 %v6518, %v6518
      %v7031 = vpack.c.b16 %v6519, %v6519
      %v7032 = vpack.c.b16 %v6520, %v6520
      %v7033 = vpack.c.b16 %v6521, %v6521
      %v7034 = vpack.c.b16 %v6522, %v6522
      %v7035 = vpack.c.b16 %v6523, %v6523
      %v7036 = vpack.c.b16 %v6524, %v6524
      %v7037 = vpack.c.b16 %v6525, %v6525
      %v7038 = vpack.c.b16 %v6526, %v6526
      %v7039 = vpack.c.b16 %v6527, %v6527
      %v7040 = vpack.c.b16 %v6528, %v6528
      %v7041 = vpack.c.b16 %v6529, %v6529
      %v7042 = vpack.c.b16 %v6530, %v6530
      %v7043 = vpack.c.b16 %v6531, %v6531
      %v7044 = vpack.c.b16 %v6532, %v6532
      %v7045 = vpack.c.b16 %v6533, %v6533
      %v7046 = vpack.c.b16 %v6534, %v6534
      %v7047 = vpack.c.b16 %v6535, %v6535
      %v7048 = vpack.c.b16 %v6536, %v6536
      %v7049 = vpack.c.b16 %v6537, %v6537
      %v7050 = vpack.c.b16 %v6538, %v6538
      %v7051 = vpack.c.b16 %v6539, %v6539
      %v7052 = vpack.c.b16 %v6540, %v6540
      %v7053 = vpack.c.b16 %v6541, %v6541
      %v7054 = vpack.c.b16 %v6542, %v6542
      %v7055 = vpack.c.b16 %v6543, %v6543
      %v7056 = vpack.c.b16 %v6544, %v6544
      %v7057 = vpack.c.b16 %v6545, %v6545
      %v7058 = vpack.c.b16 %v6546, %v6546
      %v7059 = vpack.c.b16 %v6547, %v6547
      %v7060 = vpack.c.b16 %v6548, %v6548
      %v7061 = vpack.c.b16 %v6549, %v6549
      %v7062 = vpack.c.b16 %v6550, %v6550
      %v7063 = vpack.c.b16 %v6551, %v6551
      %v7064 = vpack.c.b16 %v6552, %v6552
      %v7065 = vpack.c.b16 %v6553, %v6553
      %v7066 = vpack.c.b16 %v6554, %v6554
      %v7067 = vpack.c.b16 %v6555, %v6555
      %v7068 = vpack.c.b16 %v6556, %v6556
      %v7069 = vpack.c.b16 %v6557, %v6557
      %v7070 = vpack.c.b16 %v6558, %v6558
      %v7071 = vpack.c.b16 %v6559, %v6559
      %v7072 = vpack.c.b16 %v6560, %v6560
      %v7073 = vpack.c.b16 %v6561, %v6561
      %v7074 = vpack.c.b16 %v6562, %v6562
      %v7075 = vpack.c.b16 %v6563, %v6563
      %v7076 = vpack.c.b16 %v6564, %v6564
      %v7077 = vpack.c.b16 %v6565, %v6565
      %v7078 = vpack.c.b16 %v6566, %v6566
      %v7079 = vpack.c.b16 %v6567, %v6567
      %v7080 = vpack.c.b16 %v6568, %v6568
      %v7081 = vpack.c.b16 %v6569, %v6569
      %v7082 = vpack.c.b16 %v6570, %v6570
      %v7083 = vpack.c.b16 %v6571, %v6571
      %v7084 = vpack.c.b16 %v6572, %v6572
      %v7085 = vpack.c.b16 %v6573, %v6573
      %v7086 = vpack.c.b16 %v6574, %v6574
      %v7087 = vpack.c.b16 %v6575, %v6575
      %v7088 = vpack.c.b16 %v6576, %v6576
      %v7089 = vpack.c.b16 %v6577, %v6577
      %v7090 = vpack.c.b16 %v6578, %v6578
      %v7091 = vpack.c.b16 %v6579, %v6579
      %v7092 = vpack.c.b16 %v6580, %v6580
      %v7093 = vpack.c.b16 %v6581, %v6581
      %v7094 = vpack.c.b16 %v6582, %v6582
      %v7095 = vpack.c.b16 %v6583, %v6583
      %v7096 = vpack.c.b16 %v6584, %v6584
      %v7097 = vpack.c.b16 %v6585, %v6585
      %v7098 = vpack.c.b16 %v6586, %v6586
      %v7099 = vpack.c.b16 %v6587, %v6587
      %v7100 = vpack.c.b16 %v6588, %v6588
      %v7101 = vpack.c.b16 %v6589, %v6589
      %v7102 = vpack.c.b16 %v6590, %v6590
      %v7103 = vpack.c.b16 %v6591, %v6591
      %v7104 = vpack.c.b16 %v6592, %v6592
      %v7105 = vpack.c.b16 %v6593, %v6593
      %v7106 = vpack.c.b16 %v6594, %v6594
      %v7107 = vpack.c.b16 %v6595, %v6595
      %v7108 = vpack.c.b16 %v6596, %v6596
      %v7109 = vpack.c.b16 %v6597, %v6597
      %v7110 = vpack.c.b16 %v6598, %v6598
      %v7111 = vpack.c.b16 %v6599, %v6599
      %v7112 = vpack.c.b16 %v6600, %v6600
      %v7113 = vpack.c.b16 %v6601, %v6601
      %v7114 = vpack.c.b16 %v6602, %v6602
      %v7115 = vpack.c.b16 %v6603, %v6603
      %v7116 = vpack.c.b16 %v6604, %v6604
      %v7117 = vpack.c.b16 %v6605, %v6605
      %v7118 = vpack.c.b16 %v6606, %v6606
      %v7119 = vpack.c.b16 %v6607, %v6607
      %v7120 = vpack.c.b16 %v6608, %v6608
      %v7121 = vpack.c.b16 %v6609, %v6609
      %v7122 = vpack.c.b16 %v6610, %v6610
      %v7123 = vpack.c.b16 %v6611, %v6611
      %v7124 = vpack.c.b16 %v6612, %v6612
      %v7125 = vpack.c.b16 %v6613, %v6613
      %v7126 = vpack.c.b16 %v6614, %v6614
      %v7127 = vpack.c.b16 %v6615, %v6615
      %v7128 = vpack.c.b16 %v6616, %v6616
      %v7129 = vpack.c.b16 %v6617, %v6617
      %v7130 = vpack.c.b16 %v6618, %v6618
      %v7131 = vpack.c.b16 %v6619, %v6619
      %v7132 = vpack.c.b16 %v6620, %v6620
      %v7133 = vpack.c.b16 %v6621, %v6621
      %v7134 = vpack.c.b16 %v6622, %v6622
      %v7135 = vpack.c.b16 %v6623, %v6623
      %v7136 = vpack.c.b16 %v6624, %v6624
      %v7137 = vpack.c.b16 %v6625, %v6625
      %v7138 = vpack.c.b16 %v6626, %v6626
      %v7139 = vpack.c.b16 %v6627, %v6627
      %v7140 = vpack.c.b16 %v6628, %v6628
      %v7141 = vpack.c.b16 %v6629, %v6629
      %v7142 = vpack.c.b16 %v6630, %v6630
      %v7143 = vpack.c.b16 %v6631, %v6631
      %v7144 = vpack.c.b16 %v6632, %v6632
      %v7145 = vpack.c.b16 %v6633, %v6633
      %v7146 = vpack.c.b16 %v6634, %v6634
      %v7147 = vpack.c.b16 %v6635, %v6635
      %v7148 = vpack.c.b16 %v6636, %v6636
      %v7149 = vpack.c.b16 %v6637, %v6637
      %v7150 = vpack.c.b16 %v6638, %v6638
      %v7151 = vpack.c.b16 %v6639, %v6639
      %v7152 = vpack.c.b16 %v6640, %v6640
      %v7153 = vpack.c.b16 %v6641, %v6641
      %v7154 = vpack.c.b16 %v6642, %v6642
      %v7155 = vpack.c.b16 %v6643, %v6643
      %v7156 = vpack.c.b16 %v6644, %v6644
      %v7157 = vpack.c.b16 %v6645, %v6645
      %v7158 = vpack.c.b16 %v6646, %v6646
      %v7159 = vpack.c.b16 %v6647, %v6647
      %v7160 = vpack.c.b16 %v6648, %v6648
      %v7161 = vpack.c.b16 %v6649, %v6649
      %v7162 = vpack.c.b16 %v6650, %v6650
      %v7163 = vpack.c.b16 %v6651, %v6651
      %v7164 = vpack.c.b16 %v6652, %v6652
      %v7165 = vpack.c.b16 %v6653, %v6653
      %v7166 = vpack.c.b16 %v6654, %v6654
      %v7167 = vpack.c.b16 %v6655, %v6655
      %v7168 = vpack.c.b16 %v6656, %v6656
      %v7169 = vpack.c.b16 %v6657, %v6657
      %v7170 = vpack.c.b16 %v6658, %v6658
      %v7171 = vpack.c.b16 %v6659, %v6659
      %v7172 = vpack.c.b16 %v6660, %v6660
      %v7173 = vpack.c.b16 %v6661, %v6661
      %v7174 = vpack.c.b16 %v6662, %v6662
      %v7175 = vpack.c.b16 %v6663, %v6663
      %v7176 = vpack.c.b16 %v6664, %v6664
      %v7177 = vpack.c.b16 %v6665, %v6665
      %v7178 = vpack.c.b16 %v6666, %v6666
      %v7179 = vpack.c.b16 %v6667, %v6667
      %v7180 = vpack.c.b16 %v6668, %v6668
      %v7181 = vpack.c.b16 %v6669, %v6669
      %v7182 = vpack.c.b16 %v6670, %v6670
      %v7183 = vpack.c.b16 %v6671, %v6671
      %v7184 = vpack.c.b16 %v6672, %v6672
      %v7185 = vpack.c.b16 %v6673, %v6673
      %v7186 = vpack.c.b16 %v6674, %v6674
      %v7187 = vpack.c.b16 %v6675, %v6675
      %v7188 = vpack.c.b16 %v6676, %v6676
      %v7189 = vpack.c.b16 %v6677, %v6677
      %v7190 = vpack.c.b16 %v6678, %v6678
      %v7191 = vpack.c.b16 %v6679, %v6679
      %v7192 = vpack.c.b16 %v6680, %v6680
      %v7193 = vpack.c.b16 %v6681, %v6681
      %v7194 = vpack.c.b16 %v6682, %v6682
      %v7195 = vpack.c.b16 %v6683, %v6683
      %v7196 = vpack.c.b16 %v6684, %v6684
      %v7197 = vpack.c.b16 %v6685, %v6685
      %v7198 = vpack.c.b16 %v6686, %v6686
      %v7199 = vpack.c.b16 %v6687, %v6687
      %v7200 = vpack.c.b16 %v6688, %v6688
      %v7201 = vpack.c.b16 %v6689, %v6689
      %v7202 = vpack.c.b16 %v6690, %v6690
      %v7203 = vpack.c.b16 %v6691, %v6691
      %v7204 = vpack.c.b16 %v6692, %v6692
      %v7205 = vpack.c.b16 %v6693, %v6693
      %v7206 = vpack.c.b16 %v6694, %v6694
      %v7207 = vpack.c.b16 %v6695, %v6695
      %v7208 = vpack.c.b16 %v6696, %v6696
      %v7209 = vpack.c.b16 %v6697, %v6697
      %v7210 = vpack.c.b16 %v6698, %v6698
      %v7211 = vpack.c.b16 %v6699, %v6699
      %v7212 = vpack.c.b16 %v6700, %v6700
      %v7213 = vpack.c.b16 %v6701, %v6701
      %v7214 = vpack.c.b16 %v6702, %v6702
      %v7215 = vpack.c.b16 %v6703, %v6703
      %v7216 = vpack.c.b16 %v6704, %v6704
      %v7217 = vpack.c.b16 %v6705, %v6705
      %v7218 = vpack.c.b16 %v6706, %v6706
      %v7219 = vpack.c.b16 %v6707, %v6707
      %v7220 = vpack.c.b16 %v6708, %v6708
      %v7221 = vpack.c.b16 %v6709, %v6709
      %v7222 = vpack.c.b16 %v6710, %v6710
      %v7223 = vpack.c.b16 %v6711, %v6711
      %v7224 = vpack.c.b16 %v6712, %v6712
      %v7225 = vpack.c.b16 %v6713, %v6713
      %v7226 = vpack.c.b16 %v6714, %v6714
      %v7227 = vpack.c.b16 %v6715, %v6715
      %v7228 = vpack.c.b16 %v6716, %v6716
      %v7229 = vpack.c.b16 %v6717, %v6717
      %v7230 = vpack.c.b16 %v6718, %v6718
      %v7231 = vpack.c.b16 %v6719, %v6719
      %v7232 = vpack.c.b16 %v6720, %v6720
      %v7233 = vpack.c.b16 %v6721, %v6721
      %v7234 = vpack.c.b16 %v6722, %v6722
      %v7235 = vpack.c.b16 %v6723, %v6723
      %v7236 = vpack.c.b16 %v6724, %v6724
      %v7237 = vpack.c.b16 %v6725, %v6725
      %v7238 = vpack.c.b16 %v6726, %v6726
      %v7239 = vpack.c.b16 %v6727, %v6727
      %v7240 = vpack.c.b16 %v6728, %v6728
      %v7241 = vpack.c.b16 %v6729, %v6729
      %v7242 = vpack.c.b16 %v6730, %v6730
      %v7243 = vpack.c.b16 %v6731, %v6731
      %v7244 = vpack.c.b16 %v6732, %v6732
      %v7245 = vpack.c.b16 %v6733, %v6733
      %v7246 = vpack.c.b16 %v6734, %v6734
      %v7247 = vpack.c.b16 %v6735, %v6735
      %v7248 = vpack.c.b16 %v6736, %v6736
      %v7249 = vpack.c.b16 %v6737, %v6737
      %v7250 = vpack.c.b16 %v6738, %v6738
      %v7251 = vpack.c.b16 %v6739, %v6739
      %v7252 = vpack.c.b16 %v6740, %v6740
      %v7253 = vpack.c.b16 %v6741, %v6741
      %v7254 = vpack.c.b16 %v6742, %v6742
      %v7255 = vpack.c.b16 %v6743, %v6743
      %v7256 = vpack.c.b16 %v6744, %v6744
      %v7257 = vpack.c.b16 %v6745, %v6745
      %v7258 = vpack.c.b16 %v6746, %v6746
      %v7259 = vpack.c.b16 %v6747, %v6747
      %v7260 = vpack.c.b16 %v6748, %v6748
      %v7261 = vpack.c.b16 %v6749, %v6749
      %v7262 = vpack.c.b16 %v6750, %v6750
      %v7263 = vpack.c.b16 %v6751, %v6751
      %v7264 = vpack.c.b16 %v6752, %v6752
      %v7265 = vpack.c.b16 %v6753, %v6753
      %v7266 = vpack.c.b16 %v6754, %v6754
      %v7267 = vpack.c.b16 %v6755, %v6755
      %v7268 = vpack.c.b16 %v6756, %v6756
      %v7269 = vpack.c.b16 %v6757, %v6757
      %v7270 = vpack.c.b16 %v6758, %v6758
      %v7271 = vpack.c.b16 %v6759, %v6759
      %v7272 = vpack.c.b16 %v6760, %v6760
      %v7273 = vpack.c.b16 %v6761, %v6761
      %v7274 = vpack.c.b16 %v6762, %v6762
      %v7275 = vpack.c.b16 %v6763, %v6763
      %v7276 = vpack.c.b16 %v6764, %v6764
      %v7277 = vpack.c.b16 %v6765, %v6765
      %v7278 = vpack.c.b16 %v6766, %v6766
      %v7279 = vpack.c.b16 %v6767, %v6767
      %v7280 = vpack.c.b16 %v6768, %v6768
      %v7281 = vpack.c.b16 %v6769, %v6769
      %v7282 = vpack.c.b16 %v6770, %v6770
      %v7283 = vpack.c.b16 %v6771, %v6771
      %v7284 = vpack.c.b16 %v6772, %v6772
      %v7285 = vpack.c.b16 %v6773, %v6773
      %v7286 = vpack.c.b16 %v6774, %v6774
      %v7287 = vpack.c.b16 %v6775, %v6775
      %v7288 = vpack.c.b16 %v6776, %v6776
      %v7289 = vpack.c.b16 %v6777, %v6777
      %v7290 = vpack.c.b16 %v6778, %v6778
      %v7291 = vpack.c.b16 %v6779, %v6779
      %v7292 = vpack.c.b16 %v6780, %v6780
      %v7293 = vpack.c.b16 %v6781, %v6781
      %v7294 = vpack.c.b16 %v6782, %v6782
      %v7295 = vpack.c.b16 %v6783, %v6783
      %v7296 = vpack.c.b16 %v6784, %v6784
      %v7297 = vpack.c.b16 %v6785, %v6785
      %v7298 = vpack.c.b16 %v6786, %v6786
      %v7299 = vpack.c.b16 %v6787, %v6787
      %v7300 = vpack.c.b16 %v6788, %v6788
      %v7301 = vpack.c.b16 %v6789, %v6789
      %v7302 = vpack.c.b16 %v6790, %v6790
      %v7303 = vpack.c.b16 %v6791, %v6791
      %v7304 = vpack.c.b16 %v6792, %v6792
      %v7305 = vpack.c.b16 %v6793, %v6793
      %v7306 = vpack.c.b16 %v6794, %v6794
      %v7307 = vpack.c.b16 %v6795, %v6795
      %v7308 = vpack.c.b16 %v6796, %v6796
      %v7309 = vpack.c.b16 %v6797, %v6797
      %v7310 = vpack.c.b16 %v6798, %v6798
      %v7311 = vpack.c.b16 %v6799, %v6799
      %v7312 = vpack.c.b16 %v6800, %v6800
      %v7313 = vpack.c.b16 %v6801, %v6801
      %v7314 = vpack.c.b16 %v6802, %v6802
      %v7315 = vpack.c.b16 %v6803, %v6803
      %v7316 = vpack.c.b16 %v6804, %v6804
      %v7317 = vpack.c.b16 %v6805, %v6805
      %v7318 = vpack.c.b16 %v6806, %v6806
      %v7319 = vpack.c.b16 %v6807, %v6807
      %v7320 = vpack.c.b16 %v6808, %v6808
      %v7321 = vpack.c.b16 %v6809, %v6809
      %v7322 = vpack.c.b16 %v6810, %v6810
      %v7323 = vpack.c.b16 %v6811, %v6811
      %v7324 = vpack.c.b16 %v6812, %v6812
      %v7325 = vpack.c.b16 %v6813, %v6813
      %v7326 = vpack.c.b16 %v6814, %v6814
      %v7327 = vpack.c.b16 %v6815, %v6815
      %v7328 = vpack.c.b16 %v6816, %v6816
      %v7329 = vpack.c.b16 %v6817, %v6817
      %v7330 = vpack.c.b16 %v6818, %v6818
      %v7331 = vpack.c.b16 %v6819, %v6819
      %v7332 = vpack.c.b16 %v6820, %v6820
      %v7333 = vpack.c.b16 %v6821, %v6821
      %v7334 = vpack.c.b16 %v6822, %v6822
      %v7335 = vpack.c.b16 %v6823, %v6823
      %v7336 = vpack.c.b16 %v6824, %v6824
      %v7337 = vpack.c.b16 %v6825, %v6825
      %v7338 = vpack.c.b16 %v6826, %v6826
      %v7339 = vpack.c.b16 %v6827, %v6827
      %v7340 = vpack.c.b16 %v6828, %v6828
      %v7341 = vpack.c.b16 %v6829, %v6829
      %v7342 = vpack.c.b16 %v6830, %v6830
      %v7343 = vpack.c.b16 %v6831, %v6831
      %v7344 = vpack.c.b16 %v6832, %v6832
      %v7345 = vpack.c.b16 %v6833, %v6833
      %v7346 = vpack.c.b16 %v6834, %v6834
      %v7347 = vpack.c.b16 %v6835, %v6835
      %v7348 = vpack.c.b16 %v6836, %v6836
      %v7349 = vpack.c.b16 %v6837, %v6837
      %v7350 = vpack.c.b16 %v6838, %v6838
      %v7351 = vpack.c.b16 %v6839, %v6839
      %v7352 = vpack.c.b16 %v6840, %v6840
      %v7353 = vpack.c.b16 %v6841, %v6841
      %v7354 = vpack.c.b16 %v6842, %v6842
      %v7355 = vpack.c.b16 %v6843, %v6843
      %v7356 = vpack.c.b16 %v6844, %v6844
      %v7357 = vpack.c.b16 %v6845, %v6845
      %v7358 = vpack.c.b16 %v6846, %v6846
      %v7359 = vpack.c.b16 %v6847, %v6847
      %v7360 = vpack.c.b16 %v6848, %v6848
      %v7361 = vpack.c.b16 %v6849, %v6849
      %v7362 = vpack.c.b16 %v6850, %v6850
      %v7363 = vpack.c.b16 %v6851, %v6851
      %v7364 = vpack.c.b16 %v6852, %v6852
      %v7365 = vpack.c.b16 %v6853, %v6853
      %v7366 = vpack.c.b16 %v6854, %v6854
      %v7367 = vpack.c.b16 %v6855, %v6855
      %v7368 = vpack.c.b16 %v6856, %v6856
      %v7369 = vpack.c.b16 %v6857, %v6857
      %v7370 = vpack.c.b16 %v6858, %v6858
      %v7371 = vpack.c.b16 %v6859, %v6859
      %v7372 = vpack.c.b16 %v6860, %v6860
      %v7373 = vpack.c.b16 %v6861, %v6861
      %v7374 = vpack.c.b16 %v6862, %v6862
      %v7375 = vpack.c.b16 %v6863, %v6863
      %v7376 = vpack.c.b16 %v6864, %v6864
      %v7377 = vpack.c.b16 %v6865, %v6865
      %v7378 = vpack.c.b16 %v6866, %v6866
      %v7379 = vpack.c.b16 %v6867, %v6867
      %v7380 = vpack.c.b16 %v6868, %v6868
      %v7381 = vpack.c.b16 %v6869, %v6869
      %v7382 = vpack.c.b16 %v6870, %v6870
      %v7383 = vpack.c.b16 %v6871, %v6871
      %v7384 = vpack.c.b16 %v6872, %v6872
      %v7385 = vpack.c.b16 %v6873, %v6873
      %v7386 = vpack.c.b16 %v6874, %v6874
      %v7387 = vpack.c.b16 %v6875, %v6875
      %v7388 = vpack.c.b16 %v6876, %v6876
      %v7389 = vpack.c.b16 %v6877, %v6877
      %v7390 = vpack.c.b16 %v6878, %v6878
      %v7391 = vpack.c.b16 %v6879, %v6879
      %v7392 = vpack.c.b16 %v6880, %v6880
      %v7393 = vpack.c.b16 %v6881, %v6881
      %v7394 = vpack.c.b16 %v6882, %v6882
      %v7395 = vpack.c.b16 %v6883, %v6883
      %v7396 = vpack.c.b16 %v6884, %v6884
      %v7397 = vpack.c.b16 %v6885, %v6885
      %v7398 = vpack.c.b16 %v6886, %v6886
      %v7399 = vpack.c.b16 %v6887, %v6887
      %v7400 = vpack.c.b16 %v6888, %v6888
      %v7401 = vpack.c.b16 %v6889, %v6889
      %v7402 = vpack.c.b16 %v6890, %v6890
      %v7403 = vpack.c.b16 %v6891, %v6891
      %v7404 = vpack.c.b16 %v6892, %v6892
      %v7405 = vpack.c.b16 %v6893, %v6893
      %v7406 = vpack.c.b16 %v6894, %v6894
      %v7407 = vpack.c.b16 %v6895, %v6895
      %v7408 = vpack.c.b16 %v6896, %v6896
      %v7409 = vpack.c.b16 %v6897, %v6897
      %v7410 = vpack.c.b16 %v6898, %v6898
      %v7411 = vpack.c.b16 %v6899, %v6899
      %v7412 = vpack.c.b16 %v6900, %v6900
      %7925 = vst [vmem:[%s145] sm:$0xf] %v6901
      %7926 = vst [vmem:[%s145 + $0x4] sm:$0xf] %v6902
      %7927 = vst [vmem:[%s145 + $0x8] sm:$0xf] %v6903
      %7928 = vst [vmem:[%s145 + $0xc] sm:$0xf] %v6904
      %7929 = vst [vmem:[%s145 + $0x10] sm:$0xf] %v6905
      %7930 = vst [vmem:[%s145 + $0x14] sm:$0xf] %v6906
      %7931 = vst [vmem:[%s145 + $0x18] sm:$0xf] %v6907
      %7932 = vst [vmem:[%s145 + $0x1c] sm:$0xf] %v6908
      %7933 = vst [vmem:[%s145 + $0x20] sm:$0xf] %v6909
      %7934 = vst [vmem:[%s145 + $0x24] sm:$0xf] %v6910
      %7935 = vst [vmem:[%s145 + $0x28] sm:$0xf] %v6911
      %7936 = vst [vmem:[%s145 + $0x2c] sm:$0xf] %v6912
      %7937 = vst [vmem:[%s145 + $0x30] sm:$0xf] %v6913
      %7938 = vst [vmem:[%s145 + $0x34] sm:$0xf] %v6914
      %7939 = vst [vmem:[%s145 + $0x38] sm:$0xf] %v6915
      %7940 = vst [vmem:[%s145 + $0x3c] sm:$0xf] %v6916
      %7941 = vst [vmem:[%s145 + $0x40] sm:$0xf] %v6917
      %7942 = vst [vmem:[%s145 + $0x44] sm:$0xf] %v6918
      %7943 = vst [vmem:[%s145 + $0x48] sm:$0xf] %v6919
      %7944 = vst [vmem:[%s145 + $0x4c] sm:$0xf] %v6920
      %7945 = vst [vmem:[%s145 + $0x50] sm:$0xf] %v6921
      %7946 = vst [vmem:[%s145 + $0x54] sm:$0xf] %v6922
      %7947 = vst [vmem:[%s145 + $0x58] sm:$0xf] %v6923
      %7948 = vst [vmem:[%s145 + $0x5c] sm:$0xf] %v6924
      %7949 = vst [vmem:[%s145 + $0x60] sm:$0xf] %v6925
      %7950 = vst [vmem:[%s145 + $0x64] sm:$0xf] %v6926
      %7951 = vst [vmem:[%s145 + $0x68] sm:$0xf] %v6927
      %7952 = vst [vmem:[%s145 + $0x6c] sm:$0xf] %v6928
      %7953 = vst [vmem:[%s145 + $0x70] sm:$0xf] %v6929
      %7954 = vst [vmem:[%s145 + $0x74] sm:$0xf] %v6930
      %7955 = vst [vmem:[%s145 + $0x78] sm:$0xf] %v6931
      %7956 = vst [vmem:[%s145 + $0x7c] sm:$0xf] %v6932
      %7957 = vst [vmem:[%s145 + $0x80] sm:$0xf] %v6933
      %7958 = vst [vmem:[%s145 + $0x84] sm:$0xf] %v6934
      %7959 = vst [vmem:[%s145 + $0x88] sm:$0xf] %v6935
      %7960 = vst [vmem:[%s145 + $0x8c] sm:$0xf] %v6936
      %7961 = vst [vmem:[%s145 + $0x90] sm:$0xf] %v6937
      %7962 = vst [vmem:[%s145 + $0x94] sm:$0xf] %v6938
      %7963 = vst [vmem:[%s145 + $0x98] sm:$0xf] %v6939
      %7964 = vst [vmem:[%s145 + $0x9c] sm:$0xf] %v6940
      %7965 = vst [vmem:[%s145 + $0xa0] sm:$0xf] %v6941
      %7966 = vst [vmem:[%s145 + $0xa4] sm:$0xf] %v6942
      %7967 = vst [vmem:[%s145 + $0xa8] sm:$0xf] %v6943
      %7968 = vst [vmem:[%s145 + $0xac] sm:$0xf] %v6944
      %7969 = vst [vmem:[%s145 + $0xb0] sm:$0xf] %v6945
      %7970 = vst [vmem:[%s145 + $0xb4] sm:$0xf] %v6946
      %7971 = vst [vmem:[%s145 + $0xb8] sm:$0xf] %v6947
      %7972 = vst [vmem:[%s145 + $0xbc] sm:$0xf] %v6948
      %7973 = vst [vmem:[%s145 + $0xc0] sm:$0xf] %v6949
      %7974 = vst [vmem:[%s145 + $0xc4] sm:$0xf] %v6950
      %7975 = vst [vmem:[%s145 + $0xc8] sm:$0xf] %v6951
      %7976 = vst [vmem:[%s145 + $0xcc] sm:$0xf] %v6952
      %7977 = vst [vmem:[%s145 + $0xd0] sm:$0xf] %v6953
      %7978 = vst [vmem:[%s145 + $0xd4] sm:$0xf] %v6954
      %7979 = vst [vmem:[%s145 + $0xd8] sm:$0xf] %v6955
      %7980 = vst [vmem:[%s145 + $0xdc] sm:$0xf] %v6956
      %7981 = vst [vmem:[%s145 + $0xe0] sm:$0xf] %v6957
      %7982 = vst [vmem:[%s145 + $0xe4] sm:$0xf] %v6958
      %7983 = vst [vmem:[%s145 + $0xe8] sm:$0xf] %v6959
      %7984 = vst [vmem:[%s145 + $0xec] sm:$0xf] %v6960
      %7985 = vst [vmem:[%s145 + $0xf0] sm:$0xf] %v6961
      %7986 = vst [vmem:[%s145 + $0xf4] sm:$0xf] %v6962
      %7987 = vst [vmem:[%s145 + $0xf8] sm:$0xf] %v6963
      %7988 = vst [vmem:[%s145 + $0xfc] sm:$0xf] %v6964
      %7989 = vst [vmem:[%s145 + $0x100] sm:$0xf] %v6965
      %7990 = vst [vmem:[%s145 + $0x104] sm:$0xf] %v6966
      %7991 = vst [vmem:[%s145 + $0x108] sm:$0xf] %v6967
      %7992 = vst [vmem:[%s145 + $0x10c] sm:$0xf] %v6968
      %7993 = vst [vmem:[%s145 + $0x110] sm:$0xf] %v6969
      %7994 = vst [vmem:[%s145 + $0x114] sm:$0xf] %v6970
      %7995 = vst [vmem:[%s145 + $0x118] sm:$0xf] %v6971
      %7996 = vst [vmem:[%s145 + $0x11c] sm:$0xf] %v6972
      %7997 = vst [vmem:[%s145 + $0x120] sm:$0xf] %v6973
      %7998 = vst [vmem:[%s145 + $0x124] sm:$0xf] %v6974
      %7999 = vst [vmem:[%s145 + $0x128] sm:$0xf] %v6975
      %8000 = vst [vmem:[%s145 + $0x12c] sm:$0xf] %v6976
      %8001 = vst [vmem:[%s145 + $0x130] sm:$0xf] %v6977
      %8002 = vst [vmem:[%s145 + $0x134] sm:$0xf] %v6978
      %8003 = vst [vmem:[%s145 + $0x138] sm:$0xf] %v6979
      %8004 = vst [vmem:[%s145 + $0x13c] sm:$0xf] %v6980
      %8005 = vst [vmem:[%s145 + $0x140] sm:$0xf] %v6981
      %8006 = vst [vmem:[%s145 + $0x144] sm:$0xf] %v6982
      %8007 = vst [vmem:[%s145 + $0x148] sm:$0xf] %v6983
      %8008 = vst [vmem:[%s145 + $0x14c] sm:$0xf] %v6984
      %8009 = vst [vmem:[%s145 + $0x150] sm:$0xf] %v6985
      %8010 = vst [vmem:[%s145 + $0x154] sm:$0xf] %v6986
      %8011 = vst [vmem:[%s145 + $0x158] sm:$0xf] %v6987
      %8012 = vst [vmem:[%s145 + $0x15c] sm:$0xf] %v6988
      %8013 = vst [vmem:[%s145 + $0x160] sm:$0xf] %v6989
      %8014 = vst [vmem:[%s145 + $0x164] sm:$0xf] %v6990
      %8015 = vst [vmem:[%s145 + $0x168] sm:$0xf] %v6991
      %8016 = vst [vmem:[%s145 + $0x16c] sm:$0xf] %v6992
      %8017 = vst [vmem:[%s145 + $0x170] sm:$0xf] %v6993
      %8018 = vst [vmem:[%s145 + $0x174] sm:$0xf] %v6994
      %8019 = vst [vmem:[%s145 + $0x178] sm:$0xf] %v6995
      %8020 = vst [vmem:[%s145 + $0x17c] sm:$0xf] %v6996
      %8021 = vst [vmem:[%s145 + $0x180] sm:$0xf] %v6997
      %8022 = vst [vmem:[%s145 + $0x184] sm:$0xf] %v6998
      %8023 = vst [vmem:[%s145 + $0x188] sm:$0xf] %v6999
      %8024 = vst [vmem:[%s145 + $0x18c] sm:$0xf] %v7000
      %8025 = vst [vmem:[%s145 + $0x190] sm:$0xf] %v7001
      %8026 = vst [vmem:[%s145 + $0x194] sm:$0xf] %v7002
      %8027 = vst [vmem:[%s145 + $0x198] sm:$0xf] %v7003
      %8028 = vst [vmem:[%s145 + $0x19c] sm:$0xf] %v7004
      %8029 = vst [vmem:[%s145 + $0x1a0] sm:$0xf] %v7005
      %8030 = vst [vmem:[%s145 + $0x1a4] sm:$0xf] %v7006
      %8031 = vst [vmem:[%s145 + $0x1a8] sm:$0xf] %v7007
      %8032 = vst [vmem:[%s145 + $0x1ac] sm:$0xf] %v7008
      %8033 = vst [vmem:[%s145 + $0x1b0] sm:$0xf] %v7009
      %8034 = vst [vmem:[%s145 + $0x1b4] sm:$0xf] %v7010
      %8035 = vst [vmem:[%s145 + $0x1b8] sm:$0xf] %v7011
      %8036 = vst [vmem:[%s145 + $0x1bc] sm:$0xf] %v7012
      %8037 = vst [vmem:[%s145 + $0x1c0] sm:$0xf] %v7013
      %8038 = vst [vmem:[%s145 + $0x1c4] sm:$0xf] %v7014
      %8039 = vst [vmem:[%s145 + $0x1c8] sm:$0xf] %v7015
      %8040 = vst [vmem:[%s145 + $0x1cc] sm:$0xf] %v7016
      %8041 = vst [vmem:[%s145 + $0x1d0] sm:$0xf] %v7017
      %8042 = vst [vmem:[%s145 + $0x1d4] sm:$0xf] %v7018
      %8043 = vst [vmem:[%s145 + $0x1d8] sm:$0xf] %v7019
      %8044 = vst [vmem:[%s145 + $0x1dc] sm:$0xf] %v7020
      %8045 = vst [vmem:[%s145 + $0x1e0] sm:$0xf] %v7021
      %8046 = vst [vmem:[%s145 + $0x1e4] sm:$0xf] %v7022
      %8047 = vst [vmem:[%s145 + $0x1e8] sm:$0xf] %v7023
      %8048 = vst [vmem:[%s145 + $0x1ec] sm:$0xf] %v7024
      %8049 = vst [vmem:[%s145 + $0x1f0] sm:$0xf] %v7025
      %8050 = vst [vmem:[%s145 + $0x1f4] sm:$0xf] %v7026
      %8051 = vst [vmem:[%s145 + $0x1f8] sm:$0xf] %v7027
      %8052 = vst [vmem:[%s145 + $0x1fc] sm:$0xf] %v7028
      %8053 = vst [vmem:[%s145 + $0x200] sm:$0xf] %v7029
      %8054 = vst [vmem:[%s145 + $0x204] sm:$0xf] %v7030
      %8055 = vst [vmem:[%s145 + $0x208] sm:$0xf] %v7031
      %8056 = vst [vmem:[%s145 + $0x20c] sm:$0xf] %v7032
      %8057 = vst [vmem:[%s145 + $0x210] sm:$0xf] %v7033
      %8058 = vst [vmem:[%s145 + $0x214] sm:$0xf] %v7034
      %8059 = vst [vmem:[%s145 + $0x218] sm:$0xf] %v7035
      %8060 = vst [vmem:[%s145 + $0x21c] sm:$0xf] %v7036
      %8061 = vst [vmem:[%s145 + $0x220] sm:$0xf] %v7037
      %8062 = vst [vmem:[%s145 + $0x224] sm:$0xf] %v7038
      %8063 = vst [vmem:[%s145 + $0x228] sm:$0xf] %v7039
      %8064 = vst [vmem:[%s145 + $0x22c] sm:$0xf] %v7040
      %8065 = vst [vmem:[%s145 + $0x230] sm:$0xf] %v7041
      %8066 = vst [vmem:[%s145 + $0x234] sm:$0xf] %v7042
      %8067 = vst [vmem:[%s145 + $0x238] sm:$0xf] %v7043
      %8068 = vst [vmem:[%s145 + $0x23c] sm:$0xf] %v7044
      %8069 = vst [vmem:[%s145 + $0x240] sm:$0xf] %v7045
      %8070 = vst [vmem:[%s145 + $0x244] sm:$0xf] %v7046
      %8071 = vst [vmem:[%s145 + $0x248] sm:$0xf] %v7047
      %8072 = vst [vmem:[%s145 + $0x24c] sm:$0xf] %v7048
      %8073 = vst [vmem:[%s145 + $0x250] sm:$0xf] %v7049
      %8074 = vst [vmem:[%s145 + $0x254] sm:$0xf] %v7050
      %8075 = vst [vmem:[%s145 + $0x258] sm:$0xf] %v7051
      %8076 = vst [vmem:[%s145 + $0x25c] sm:$0xf] %v7052
      %8077 = vst [vmem:[%s145 + $0x260] sm:$0xf] %v7053
      %8078 = vst [vmem:[%s145 + $0x264] sm:$0xf] %v7054
      %8079 = vst [vmem:[%s145 + $0x268] sm:$0xf] %v7055
      %8080 = vst [vmem:[%s145 + $0x26c] sm:$0xf] %v7056
      %8081 = vst [vmem:[%s145 + $0x270] sm:$0xf] %v7057
      %8082 = vst [vmem:[%s145 + $0x274] sm:$0xf] %v7058
      %8083 = vst [vmem:[%s145 + $0x278] sm:$0xf] %v7059
      %8084 = vst [vmem:[%s145 + $0x27c] sm:$0xf] %v7060
      %8085 = vst [vmem:[%s145 + $0x280] sm:$0xf] %v7061
      %8086 = vst [vmem:[%s145 + $0x284] sm:$0xf] %v7062
      %8087 = vst [vmem:[%s145 + $0x288] sm:$0xf] %v7063
      %8088 = vst [vmem:[%s145 + $0x28c] sm:$0xf] %v7064
      %8089 = vst [vmem:[%s145 + $0x290] sm:$0xf] %v7065
      %8090 = vst [vmem:[%s145 + $0x294] sm:$0xf] %v7066
      %8091 = vst [vmem:[%s145 + $0x298] sm:$0xf] %v7067
      %8092 = vst [vmem:[%s145 + $0x29c] sm:$0xf] %v7068
      %8093 = vst [vmem:[%s145 + $0x2a0] sm:$0xf] %v7069
      %8094 = vst [vmem:[%s145 + $0x2a4] sm:$0xf] %v7070
      %8095 = vst [vmem:[%s145 + $0x2a8] sm:$0xf] %v7071
      %8096 = vst [vmem:[%s145 + $0x2ac] sm:$0xf] %v7072
      %8097 = vst [vmem:[%s145 + $0x2b0] sm:$0xf] %v7073
      %8098 = vst [vmem:[%s145 + $0x2b4] sm:$0xf] %v7074
      %8099 = vst [vmem:[%s145 + $0x2b8] sm:$0xf] %v7075
      %8100 = vst [vmem:[%s145 + $0x2bc] sm:$0xf] %v7076
      %8101 = vst [vmem:[%s145 + $0x2c0] sm:$0xf] %v7077
      %8102 = vst [vmem:[%s145 + $0x2c4] sm:$0xf] %v7078
      %8103 = vst [vmem:[%s145 + $0x2c8] sm:$0xf] %v7079
      %8104 = vst [vmem:[%s145 + $0x2cc] sm:$0xf] %v7080
      %8105 = vst [vmem:[%s145 + $0x2d0] sm:$0xf] %v7081
      %8106 = vst [vmem:[%s145 + $0x2d4] sm:$0xf] %v7082
      %8107 = vst [vmem:[%s145 + $0x2d8] sm:$0xf] %v7083
      %8108 = vst [vmem:[%s145 + $0x2dc] sm:$0xf] %v7084
      %8109 = vst [vmem:[%s145 + $0x2e0] sm:$0xf] %v7085
      %8110 = vst [vmem:[%s145 + $0x2e4] sm:$0xf] %v7086
      %8111 = vst [vmem:[%s145 + $0x2e8] sm:$0xf] %v7087
      %8112 = vst [vmem:[%s145 + $0x2ec] sm:$0xf] %v7088
      %8113 = vst [vmem:[%s145 + $0x2f0] sm:$0xf] %v7089
      %8114 = vst [vmem:[%s145 + $0x2f4] sm:$0xf] %v7090
      %8115 = vst [vmem:[%s145 + $0x2f8] sm:$0xf] %v7091
      %8116 = vst [vmem:[%s145 + $0x2fc] sm:$0xf] %v7092
      %8117 = vst [vmem:[%s145 + $0x300] sm:$0xf] %v7093
      %8118 = vst [vmem:[%s145 + $0x304] sm:$0xf] %v7094
      %8119 = vst [vmem:[%s145 + $0x308] sm:$0xf] %v7095
      %8120 = vst [vmem:[%s145 + $0x30c] sm:$0xf] %v7096
      %8121 = vst [vmem:[%s145 + $0x310] sm:$0xf] %v7097
      %8122 = vst [vmem:[%s145 + $0x314] sm:$0xf] %v7098
      %8123 = vst [vmem:[%s145 + $0x318] sm:$0xf] %v7099
      %8124 = vst [vmem:[%s145 + $0x31c] sm:$0xf] %v7100
      %8125 = vst [vmem:[%s145 + $0x320] sm:$0xf] %v7101
      %8126 = vst [vmem:[%s145 + $0x324] sm:$0xf] %v7102
      %8127 = vst [vmem:[%s145 + $0x328] sm:$0xf] %v7103
      %8128 = vst [vmem:[%s145 + $0x32c] sm:$0xf] %v7104
      %8129 = vst [vmem:[%s145 + $0x330] sm:$0xf] %v7105
      %8130 = vst [vmem:[%s145 + $0x334] sm:$0xf] %v7106
      %8131 = vst [vmem:[%s145 + $0x338] sm:$0xf] %v7107
      %8132 = vst [vmem:[%s145 + $0x33c] sm:$0xf] %v7108
      %8133 = vst [vmem:[%s145 + $0x340] sm:$0xf] %v7109
      %8134 = vst [vmem:[%s145 + $0x344] sm:$0xf] %v7110
      %8135 = vst [vmem:[%s145 + $0x348] sm:$0xf] %v7111
      %8136 = vst [vmem:[%s145 + $0x34c] sm:$0xf] %v7112
      %8137 = vst [vmem:[%s145 + $0x350] sm:$0xf] %v7113
      %8138 = vst [vmem:[%s145 + $0x354] sm:$0xf] %v7114
      %8139 = vst [vmem:[%s145 + $0x358] sm:$0xf] %v7115
      %8140 = vst [vmem:[%s145 + $0x35c] sm:$0xf] %v7116
      %8141 = vst [vmem:[%s145 + $0x360] sm:$0xf] %v7117
      %8142 = vst [vmem:[%s145 + $0x364] sm:$0xf] %v7118
      %8143 = vst [vmem:[%s145 + $0x368] sm:$0xf] %v7119
      %8144 = vst [vmem:[%s145 + $0x36c] sm:$0xf] %v7120
      %8145 = vst [vmem:[%s145 + $0x370] sm:$0xf] %v7121
      %8146 = vst [vmem:[%s145 + $0x374] sm:$0xf] %v7122
      %8147 = vst [vmem:[%s145 + $0x378] sm:$0xf] %v7123
      %8148 = vst [vmem:[%s145 + $0x37c] sm:$0xf] %v7124
      %8149 = vst [vmem:[%s145 + $0x380] sm:$0xf] %v7125
      %8150 = vst [vmem:[%s145 + $0x384] sm:$0xf] %v7126
      %8151 = vst [vmem:[%s145 + $0x388] sm:$0xf] %v7127
      %8152 = vst [vmem:[%s145 + $0x38c] sm:$0xf] %v7128
      %8153 = vst [vmem:[%s145 + $0x390] sm:$0xf] %v7129
      %8154 = vst [vmem:[%s145 + $0x394] sm:$0xf] %v7130
      %8155 = vst [vmem:[%s145 + $0x398] sm:$0xf] %v7131
      %8156 = vst [vmem:[%s145 + $0x39c] sm:$0xf] %v7132
      %8157 = vst [vmem:[%s145 + $0x3a0] sm:$0xf] %v7133
      %8158 = vst [vmem:[%s145 + $0x3a4] sm:$0xf] %v7134
      %8159 = vst [vmem:[%s145 + $0x3a8] sm:$0xf] %v7135
      %8160 = vst [vmem:[%s145 + $0x3ac] sm:$0xf] %v7136
      %8161 = vst [vmem:[%s145 + $0x3b0] sm:$0xf] %v7137
      %8162 = vst [vmem:[%s145 + $0x3b4] sm:$0xf] %v7138
      %8163 = vst [vmem:[%s145 + $0x3b8] sm:$0xf] %v7139
      %8164 = vst [vmem:[%s145 + $0x3bc] sm:$0xf] %v7140
      %8165 = vst [vmem:[%s145 + $0x3c0] sm:$0xf] %v7141
      %8166 = vst [vmem:[%s145 + $0x3c4] sm:$0xf] %v7142
      %8167 = vst [vmem:[%s145 + $0x3c8] sm:$0xf] %v7143
      %8168 = vst [vmem:[%s145 + $0x3cc] sm:$0xf] %v7144
      %8169 = vst [vmem:[%s145 + $0x3d0] sm:$0xf] %v7145
      %8170 = vst [vmem:[%s145 + $0x3d4] sm:$0xf] %v7146
      %8171 = vst [vmem:[%s145 + $0x3d8] sm:$0xf] %v7147
      %8172 = vst [vmem:[%s145 + $0x3dc] sm:$0xf] %v7148
      %8173 = vst [vmem:[%s145 + $0x3e0] sm:$0xf] %v7149
      %8174 = vst [vmem:[%s145 + $0x3e4] sm:$0xf] %v7150
      %8175 = vst [vmem:[%s145 + $0x3e8] sm:$0xf] %v7151
      %8176 = vst [vmem:[%s145 + $0x3ec] sm:$0xf] %v7152
      %8177 = vst [vmem:[%s145 + $0x3f0] sm:$0xf] %v7153
      %8178 = vst [vmem:[%s145 + $0x3f4] sm:$0xf] %v7154
      %8179 = vst [vmem:[%s145 + $0x3f8] sm:$0xf] %v7155
      %8180 = vst [vmem:[%s145 + $0x3fc] sm:$0xf] %v7156
      %8181 = vst [vmem:[%s145 + $0x400] sm:$0xf] %v7157
      %8182 = vst [vmem:[%s145 + $0x404] sm:$0xf] %v7158
      %8183 = vst [vmem:[%s145 + $0x408] sm:$0xf] %v7159
      %8184 = vst [vmem:[%s145 + $0x40c] sm:$0xf] %v7160
      %8185 = vst [vmem:[%s145 + $0x410] sm:$0xf] %v7161
      %8186 = vst [vmem:[%s145 + $0x414] sm:$0xf] %v7162
      %8187 = vst [vmem:[%s145 + $0x418] sm:$0xf] %v7163
      %8188 = vst [vmem:[%s145 + $0x41c] sm:$0xf] %v7164
      %8189 = vst [vmem:[%s145 + $0x420] sm:$0xf] %v7165
      %8190 = vst [vmem:[%s145 + $0x424] sm:$0xf] %v7166
      %8191 = vst [vmem:[%s145 + $0x428] sm:$0xf] %v7167
      %8192 = vst [vmem:[%s145 + $0x42c] sm:$0xf] %v7168
      %8193 = vst [vmem:[%s145 + $0x430] sm:$0xf] %v7169
      %8194 = vst [vmem:[%s145 + $0x434] sm:$0xf] %v7170
      %8195 = vst [vmem:[%s145 + $0x438] sm:$0xf] %v7171
      %8196 = vst [vmem:[%s145 + $0x43c] sm:$0xf] %v7172
      %8197 = vst [vmem:[%s145 + $0x440] sm:$0xf] %v7173
      %8198 = vst [vmem:[%s145 + $0x444] sm:$0xf] %v7174
      %8199 = vst [vmem:[%s145 + $0x448] sm:$0xf] %v7175
      %8200 = vst [vmem:[%s145 + $0x44c] sm:$0xf] %v7176
      %8201 = vst [vmem:[%s145 + $0x450] sm:$0xf] %v7177
      %8202 = vst [vmem:[%s145 + $0x454] sm:$0xf] %v7178
      %8203 = vst [vmem:[%s145 + $0x458] sm:$0xf] %v7179
      %8204 = vst [vmem:[%s145 + $0x45c] sm:$0xf] %v7180
      %8205 = vst [vmem:[%s145 + $0x460] sm:$0xf] %v7181
      %8206 = vst [vmem:[%s145 + $0x464] sm:$0xf] %v7182
      %8207 = vst [vmem:[%s145 + $0x468] sm:$0xf] %v7183
      %8208 = vst [vmem:[%s145 + $0x46c] sm:$0xf] %v7184
      %8209 = vst [vmem:[%s145 + $0x470] sm:$0xf] %v7185
      %8210 = vst [vmem:[%s145 + $0x474] sm:$0xf] %v7186
      %8211 = vst [vmem:[%s145 + $0x478] sm:$0xf] %v7187
      %8212 = vst [vmem:[%s145 + $0x47c] sm:$0xf] %v7188
      %8213 = vst [vmem:[%s145 + $0x480] sm:$0xf] %v7189
      %8214 = vst [vmem:[%s145 + $0x484] sm:$0xf] %v7190
      %8215 = vst [vmem:[%s145 + $0x488] sm:$0xf] %v7191
      %8216 = vst [vmem:[%s145 + $0x48c] sm:$0xf] %v7192
      %8217 = vst [vmem:[%s145 + $0x490] sm:$0xf] %v7193
      %8218 = vst [vmem:[%s145 + $0x494] sm:$0xf] %v7194
      %8219 = vst [vmem:[%s145 + $0x498] sm:$0xf] %v7195
      %8220 = vst [vmem:[%s145 + $0x49c] sm:$0xf] %v7196
      %8221 = vst [vmem:[%s145 + $0x4a0] sm:$0xf] %v7197
      %8222 = vst [vmem:[%s145 + $0x4a4] sm:$0xf] %v7198
      %8223 = vst [vmem:[%s145 + $0x4a8] sm:$0xf] %v7199
      %8224 = vst [vmem:[%s145 + $0x4ac] sm:$0xf] %v7200
      %8225 = vst [vmem:[%s145 + $0x4b0] sm:$0xf] %v7201
      %8226 = vst [vmem:[%s145 + $0x4b4] sm:$0xf] %v7202
      %8227 = vst [vmem:[%s145 + $0x4b8] sm:$0xf] %v7203
      %8228 = vst [vmem:[%s145 + $0x4bc] sm:$0xf] %v7204
      %8229 = vst [vmem:[%s145 + $0x4c0] sm:$0xf] %v7205
      %8230 = vst [vmem:[%s145 + $0x4c4] sm:$0xf] %v7206
      %8231 = vst [vmem:[%s145 + $0x4c8] sm:$0xf] %v7207
      %8232 = vst [vmem:[%s145 + $0x4cc] sm:$0xf] %v7208
      %8233 = vst [vmem:[%s145 + $0x4d0] sm:$0xf] %v7209
      %8234 = vst [vmem:[%s145 + $0x4d4] sm:$0xf] %v7210
      %8235 = vst [vmem:[%s145 + $0x4d8] sm:$0xf] %v7211
      %8236 = vst [vmem:[%s145 + $0x4dc] sm:$0xf] %v7212
      %8237 = vst [vmem:[%s145 + $0x4e0] sm:$0xf] %v7213
      %8238 = vst [vmem:[%s145 + $0x4e4] sm:$0xf] %v7214
      %8239 = vst [vmem:[%s145 + $0x4e8] sm:$0xf] %v7215
      %8240 = vst [vmem:[%s145 + $0x4ec] sm:$0xf] %v7216
      %8241 = vst [vmem:[%s145 + $0x4f0] sm:$0xf] %v7217
      %8242 = vst [vmem:[%s145 + $0x4f4] sm:$0xf] %v7218
      %8243 = vst [vmem:[%s145 + $0x4f8] sm:$0xf] %v7219
      %8244 = vst [vmem:[%s145 + $0x4fc] sm:$0xf] %v7220
      %8245 = vst [vmem:[%s145 + $0x500] sm:$0xf] %v7221
      %8246 = vst [vmem:[%s145 + $0x504] sm:$0xf] %v7222
      %8247 = vst [vmem:[%s145 + $0x508] sm:$0xf] %v7223
      %8248 = vst [vmem:[%s145 + $0x50c] sm:$0xf] %v7224
      %8249 = vst [vmem:[%s145 + $0x510] sm:$0xf] %v7225
      %8250 = vst [vmem:[%s145 + $0x514] sm:$0xf] %v7226
      %8251 = vst [vmem:[%s145 + $0x518] sm:$0xf] %v7227
      %8252 = vst [vmem:[%s145 + $0x51c] sm:$0xf] %v7228
      %8253 = vst [vmem:[%s145 + $0x520] sm:$0xf] %v7229
      %8254 = vst [vmem:[%s145 + $0x524] sm:$0xf] %v7230
      %8255 = vst [vmem:[%s145 + $0x528] sm:$0xf] %v7231
      %8256 = vst [vmem:[%s145 + $0x52c] sm:$0xf] %v7232
      %8257 = vst [vmem:[%s145 + $0x530] sm:$0xf] %v7233
      %8258 = vst [vmem:[%s145 + $0x534] sm:$0xf] %v7234
      %8259 = vst [vmem:[%s145 + $0x538] sm:$0xf] %v7235
      %8260 = vst [vmem:[%s145 + $0x53c] sm:$0xf] %v7236
      %8261 = vst [vmem:[%s145 + $0x540] sm:$0xf] %v7237
      %8262 = vst [vmem:[%s145 + $0x544] sm:$0xf] %v7238
      %8263 = vst [vmem:[%s145 + $0x548] sm:$0xf] %v7239
      %8264 = vst [vmem:[%s145 + $0x54c] sm:$0xf] %v7240
      %8265 = vst [vmem:[%s145 + $0x550] sm:$0xf] %v7241
      %8266 = vst [vmem:[%s145 + $0x554] sm:$0xf] %v7242
      %8267 = vst [vmem:[%s145 + $0x558] sm:$0xf] %v7243
      %8268 = vst [vmem:[%s145 + $0x55c] sm:$0xf] %v7244
      %8269 = vst [vmem:[%s145 + $0x560] sm:$0xf] %v7245
      %8270 = vst [vmem:[%s145 + $0x564] sm:$0xf] %v7246
      %8271 = vst [vmem:[%s145 + $0x568] sm:$0xf] %v7247
      %8272 = vst [vmem:[%s145 + $0x56c] sm:$0xf] %v7248
      %8273 = vst [vmem:[%s145 + $0x570] sm:$0xf] %v7249
      %8274 = vst [vmem:[%s145 + $0x574] sm:$0xf] %v7250
      %8275 = vst [vmem:[%s145 + $0x578] sm:$0xf] %v7251
      %8276 = vst [vmem:[%s145 + $0x57c] sm:$0xf] %v7252
      %8277 = vst [vmem:[%s145 + $0x580] sm:$0xf] %v7253
      %8278 = vst [vmem:[%s145 + $0x584] sm:$0xf] %v7254
      %8279 = vst [vmem:[%s145 + $0x588] sm:$0xf] %v7255
      %8280 = vst [vmem:[%s145 + $0x58c] sm:$0xf] %v7256
      %8281 = vst [vmem:[%s145 + $0x590] sm:$0xf] %v7257
      %8282 = vst [vmem:[%s145 + $0x594] sm:$0xf] %v7258
      %8283 = vst [vmem:[%s145 + $0x598] sm:$0xf] %v7259
      %8284 = vst [vmem:[%s145 + $0x59c] sm:$0xf] %v7260
      %8285 = vst [vmem:[%s145 + $0x5a0] sm:$0xf] %v7261
      %8286 = vst [vmem:[%s145 + $0x5a4] sm:$0xf] %v7262
      %8287 = vst [vmem:[%s145 + $0x5a8] sm:$0xf] %v7263
      %8288 = vst [vmem:[%s145 + $0x5ac] sm:$0xf] %v7264
      %8289 = vst [vmem:[%s145 + $0x5b0] sm:$0xf] %v7265
      %8290 = vst [vmem:[%s145 + $0x5b4] sm:$0xf] %v7266
      %8291 = vst [vmem:[%s145 + $0x5b8] sm:$0xf] %v7267
      %8292 = vst [vmem:[%s145 + $0x5bc] sm:$0xf] %v7268
      %8293 = vst [vmem:[%s145 + $0x5c0] sm:$0xf] %v7269
      %8294 = vst [vmem:[%s145 + $0x5c4] sm:$0xf] %v7270
      %8295 = vst [vmem:[%s145 + $0x5c8] sm:$0xf] %v7271
      %8296 = vst [vmem:[%s145 + $0x5cc] sm:$0xf] %v7272
      %8297 = vst [vmem:[%s145 + $0x5d0] sm:$0xf] %v7273
      %8298 = vst [vmem:[%s145 + $0x5d4] sm:$0xf] %v7274
      %8299 = vst [vmem:[%s145 + $0x5d8] sm:$0xf] %v7275
      %8300 = vst [vmem:[%s145 + $0x5dc] sm:$0xf] %v7276
      %8301 = vst [vmem:[%s145 + $0x5e0] sm:$0xf] %v7277
      %8302 = vst [vmem:[%s145 + $0x5e4] sm:$0xf] %v7278
      %8303 = vst [vmem:[%s145 + $0x5e8] sm:$0xf] %v7279
      %8304 = vst [vmem:[%s145 + $0x5ec] sm:$0xf] %v7280
      %8305 = vst [vmem:[%s145 + $0x5f0] sm:$0xf] %v7281
      %8306 = vst [vmem:[%s145 + $0x5f4] sm:$0xf] %v7282
      %8307 = vst [vmem:[%s145 + $0x5f8] sm:$0xf] %v7283
      %8308 = vst [vmem:[%s145 + $0x5fc] sm:$0xf] %v7284
      %8309 = vst [vmem:[%s145 + $0x600] sm:$0xf] %v7285
      %8310 = vst [vmem:[%s145 + $0x604] sm:$0xf] %v7286
      %8311 = vst [vmem:[%s145 + $0x608] sm:$0xf] %v7287
      %8312 = vst [vmem:[%s145 + $0x60c] sm:$0xf] %v7288
      %8313 = vst [vmem:[%s145 + $0x610] sm:$0xf] %v7289
      %8314 = vst [vmem:[%s145 + $0x614] sm:$0xf] %v7290
      %8315 = vst [vmem:[%s145 + $0x618] sm:$0xf] %v7291
      %8316 = vst [vmem:[%s145 + $0x61c] sm:$0xf] %v7292
      %8317 = vst [vmem:[%s145 + $0x620] sm:$0xf] %v7293
      %8318 = vst [vmem:[%s145 + $0x624] sm:$0xf] %v7294
      %8319 = vst [vmem:[%s145 + $0x628] sm:$0xf] %v7295
      %8320 = vst [vmem:[%s145 + $0x62c] sm:$0xf] %v7296
      %8321 = vst [vmem:[%s145 + $0x630] sm:$0xf] %v7297
      %8322 = vst [vmem:[%s145 + $0x634] sm:$0xf] %v7298
      %8323 = vst [vmem:[%s145 + $0x638] sm:$0xf] %v7299
      %8324 = vst [vmem:[%s145 + $0x63c] sm:$0xf] %v7300
      %8325 = vst [vmem:[%s145 + $0x640] sm:$0xf] %v7301
      %8326 = vst [vmem:[%s145 + $0x644] sm:$0xf] %v7302
      %8327 = vst [vmem:[%s145 + $0x648] sm:$0xf] %v7303
      %8328 = vst [vmem:[%s145 + $0x64c] sm:$0xf] %v7304
      %8329 = vst [vmem:[%s145 + $0x650] sm:$0xf] %v7305
      %8330 = vst [vmem:[%s145 + $0x654] sm:$0xf] %v7306
      %8331 = vst [vmem:[%s145 + $0x658] sm:$0xf] %v7307
      %8332 = vst [vmem:[%s145 + $0x65c] sm:$0xf] %v7308
      %8333 = vst [vmem:[%s145 + $0x660] sm:$0xf] %v7309
      %8334 = vst [vmem:[%s145 + $0x664] sm:$0xf] %v7310
      %8335 = vst [vmem:[%s145 + $0x668] sm:$0xf] %v7311
      %8336 = vst [vmem:[%s145 + $0x66c] sm:$0xf] %v7312
      %8337 = vst [vmem:[%s145 + $0x670] sm:$0xf] %v7313
      %8338 = vst [vmem:[%s145 + $0x674] sm:$0xf] %v7314
      %8339 = vst [vmem:[%s145 + $0x678] sm:$0xf] %v7315
      %8340 = vst [vmem:[%s145 + $0x67c] sm:$0xf] %v7316
      %8341 = vst [vmem:[%s145 + $0x680] sm:$0xf] %v7317
      %8342 = vst [vmem:[%s145 + $0x684] sm:$0xf] %v7318
      %8343 = vst [vmem:[%s145 + $0x688] sm:$0xf] %v7319
      %8344 = vst [vmem:[%s145 + $0x68c] sm:$0xf] %v7320
      %8345 = vst [vmem:[%s145 + $0x690] sm:$0xf] %v7321
      %8346 = vst [vmem:[%s145 + $0x694] sm:$0xf] %v7322
      %8347 = vst [vmem:[%s145 + $0x698] sm:$0xf] %v7323
      %8348 = vst [vmem:[%s145 + $0x69c] sm:$0xf] %v7324
      %8349 = vst [vmem:[%s145 + $0x6a0] sm:$0xf] %v7325
      %8350 = vst [vmem:[%s145 + $0x6a4] sm:$0xf] %v7326
      %8351 = vst [vmem:[%s145 + $0x6a8] sm:$0xf] %v7327
      %8352 = vst [vmem:[%s145 + $0x6ac] sm:$0xf] %v7328
      %8353 = vst [vmem:[%s145 + $0x6b0] sm:$0xf] %v7329
      %8354 = vst [vmem:[%s145 + $0x6b4] sm:$0xf] %v7330
      %8355 = vst [vmem:[%s145 + $0x6b8] sm:$0xf] %v7331
      %8356 = vst [vmem:[%s145 + $0x6bc] sm:$0xf] %v7332
      %8357 = vst [vmem:[%s145 + $0x6c0] sm:$0xf] %v7333
      %8358 = vst [vmem:[%s145 + $0x6c4] sm:$0xf] %v7334
      %8359 = vst [vmem:[%s145 + $0x6c8] sm:$0xf] %v7335
      %8360 = vst [vmem:[%s145 + $0x6cc] sm:$0xf] %v7336
      %8361 = vst [vmem:[%s145 + $0x6d0] sm:$0xf] %v7337
      %8362 = vst [vmem:[%s145 + $0x6d4] sm:$0xf] %v7338
      %8363 = vst [vmem:[%s145 + $0x6d8] sm:$0xf] %v7339
      %8364 = vst [vmem:[%s145 + $0x6dc] sm:$0xf] %v7340
      %8365 = vst [vmem:[%s145 + $0x6e0] sm:$0xf] %v7341
      %8366 = vst [vmem:[%s145 + $0x6e4] sm:$0xf] %v7342
      %8367 = vst [vmem:[%s145 + $0x6e8] sm:$0xf] %v7343
      %8368 = vst [vmem:[%s145 + $0x6ec] sm:$0xf] %v7344
      %8369 = vst [vmem:[%s145 + $0x6f0] sm:$0xf] %v7345
      %8370 = vst [vmem:[%s145 + $0x6f4] sm:$0xf] %v7346
      %8371 = vst [vmem:[%s145 + $0x6f8] sm:$0xf] %v7347
      %8372 = vst [vmem:[%s145 + $0x6fc] sm:$0xf] %v7348
      %8373 = vst [vmem:[%s145 + $0x700] sm:$0xf] %v7349
      %8374 = vst [vmem:[%s145 + $0x704] sm:$0xf] %v7350
      %8375 = vst [vmem:[%s145 + $0x708] sm:$0xf] %v7351
      %8376 = vst [vmem:[%s145 + $0x70c] sm:$0xf] %v7352
      %8377 = vst [vmem:[%s145 + $0x710] sm:$0xf] %v7353
      %8378 = vst [vmem:[%s145 + $0x714] sm:$0xf] %v7354
      %8379 = vst [vmem:[%s145 + $0x718] sm:$0xf] %v7355
      %8380 = vst [vmem:[%s145 + $0x71c] sm:$0xf] %v7356
      %8381 = vst [vmem:[%s145 + $0x720] sm:$0xf] %v7357
      %8382 = vst [vmem:[%s145 + $0x724] sm:$0xf] %v7358
      %8383 = vst [vmem:[%s145 + $0x728] sm:$0xf] %v7359
      %8384 = vst [vmem:[%s145 + $0x72c] sm:$0xf] %v7360
      %8385 = vst [vmem:[%s145 + $0x730] sm:$0xf] %v7361
      %8386 = vst [vmem:[%s145 + $0x734] sm:$0xf] %v7362
      %8387 = vst [vmem:[%s145 + $0x738] sm:$0xf] %v7363
      %8388 = vst [vmem:[%s145 + $0x73c] sm:$0xf] %v7364
      %8389 = vst [vmem:[%s145 + $0x740] sm:$0xf] %v7365
      %8390 = vst [vmem:[%s145 + $0x744] sm:$0xf] %v7366
      %8391 = vst [vmem:[%s145 + $0x748] sm:$0xf] %v7367
      %8392 = vst [vmem:[%s145 + $0x74c] sm:$0xf] %v7368
      %8393 = vst [vmem:[%s145 + $0x750] sm:$0xf] %v7369
      %8394 = vst [vmem:[%s145 + $0x754] sm:$0xf] %v7370
      %8395 = vst [vmem:[%s145 + $0x758] sm:$0xf] %v7371
      %8396 = vst [vmem:[%s145 + $0x75c] sm:$0xf] %v7372
      %8397 = vst [vmem:[%s145 + $0x760] sm:$0xf] %v7373
      %8398 = vst [vmem:[%s145 + $0x764] sm:$0xf] %v7374
      %8399 = vst [vmem:[%s145 + $0x768] sm:$0xf] %v7375
      %8400 = vst [vmem:[%s145 + $0x76c] sm:$0xf] %v7376
      %8401 = vst [vmem:[%s145 + $0x770] sm:$0xf] %v7377
      %8402 = vst [vmem:[%s145 + $0x774] sm:$0xf] %v7378
      %8403 = vst [vmem:[%s145 + $0x778] sm:$0xf] %v7379
      %8404 = vst [vmem:[%s145 + $0x77c] sm:$0xf] %v7380
      %8405 = vst [vmem:[%s145 + $0x780] sm:$0xf] %v7381
      %8406 = vst [vmem:[%s145 + $0x784] sm:$0xf] %v7382
      %8407 = vst [vmem:[%s145 + $0x788] sm:$0xf] %v7383
      %8408 = vst [vmem:[%s145 + $0x78c] sm:$0xf] %v7384
      %8409 = vst [vmem:[%s145 + $0x790] sm:$0xf] %v7385
      %8410 = vst [vmem:[%s145 + $0x794] sm:$0xf] %v7386
      %8411 = vst [vmem:[%s145 + $0x798] sm:$0xf] %v7387
      %8412 = vst [vmem:[%s145 + $0x79c] sm:$0xf] %v7388
      %8413 = vst [vmem:[%s145 + $0x7a0] sm:$0xf] %v7389
      %8414 = vst [vmem:[%s145 + $0x7a4] sm:$0xf] %v7390
      %8415 = vst [vmem:[%s145 + $0x7a8] sm:$0xf] %v7391
      %8416 = vst [vmem:[%s145 + $0x7ac] sm:$0xf] %v7392
      %8417 = vst [vmem:[%s145 + $0x7b0] sm:$0xf] %v7393
      %8418 = vst [vmem:[%s145 + $0x7b4] sm:$0xf] %v7394
      %8419 = vst [vmem:[%s145 + $0x7b8] sm:$0xf] %v7395
      %8420 = vst [vmem:[%s145 + $0x7bc] sm:$0xf] %v7396
      %8421 = vst [vmem:[%s145 + $0x7c0] sm:$0xf] %v7397
      %8422 = vst [vmem:[%s145 + $0x7c4] sm:$0xf] %v7398
      %8423 = vst [vmem:[%s145 + $0x7c8] sm:$0xf] %v7399
      %8424 = vst [vmem:[%s145 + $0x7cc] sm:$0xf] %v7400
      %8425 = vst [vmem:[%s145 + $0x7d0] sm:$0xf] %v7401
      %8426 = vst [vmem:[%s145 + $0x7d4] sm:$0xf] %v7402
      %8427 = vst [vmem:[%s145 + $0x7d8] sm:$0xf] %v7403
      %8428 = vst [vmem:[%s145 + $0x7dc] sm:$0xf] %v7404
      %8429 = vst [vmem:[%s145 + $0x7e0] sm:$0xf] %v7405
      %8430 = vst [vmem:[%s145 + $0x7e4] sm:$0xf] %v7406
      %8431 = vst [vmem:[%s145 + $0x7e8] sm:$0xf] %v7407
      %8432 = vst [vmem:[%s145 + $0x7ec] sm:$0xf] %v7408
      %8433 = vst [vmem:[%s145 + $0x7f0] sm:$0xf] %v7409
      %8434 = vst [vmem:[%s145 + $0x7f4] sm:$0xf] %v7410
      %8435 = vst [vmem:[%s145 + $0x7f8] sm:$0xf] %v7411
      %8436 = vst [vmem:[%s145 + $0x7fc] sm:$0xf] %v7412
      %s8437 = smul.u32 512, %s13
      %p8438 = scmp.lt.s32.totalorder %s8437, 1023
      %s8439 = scalar_select %p8438, %s8437, 1023
      %s8440 = smul.addr %s8439, 4
      %s8441 = scalar_lea.vmem %s2, %s8440
      // Predicated region
      $region29: #{_lambda_.6} parent=27 // pred_check
        %p8442 = pneg %p78
      $region30: #{_lambda_.6} parent=27 // pred_check_branch
        %8444 = sbr.rel (%p8442) target = $region32
      $region31: #{_lambda_.6} parent=27 // pred_region
        %s8445 = smul.u32 512, %s13
      $region32: #{_lambda_.6} parent=27 // pred_fallthru
        _
    $region28: #{_lambda_.6} parent=5 // pred_fallthru
      _
    %p8446 = scmp.le.s32.totalorder 2, %s8
    // Predicated region
    $region33: #{_lambda_.6} parent=5 // pred_check
      %p8447 = pneg %p8446
    $region34: #{_lambda_.6} parent=5 // pred_check_branch
      %8449 = sbr.rel (%p8447) target = $region36
    $region35: #{_lambda_.6} parent=5 // pred_region
      %s8450 = ssub.s32 %s8, 2
      // Predicated region
      $region37: #{_lambda_.6} parent=35 // pred_check
        %p8451 = pneg %p84
      $region38: #{_lambda_.6} parent=35 // pred_check_branch
        %8453 = sbr.rel (%p8451) target = $region40
      $region39: #{_lambda_.6} parent=35 // pred_region
        %s8454 = smul.u32 512, %s14
        %p8455 = scmp.lt.s32.totalorder %s8454, 1023
        %s8456 = scalar_select %p8455, %s8454, 1023
        %s8457 = smul.addr %s8456, 4
        %s8458 = scalar_lea.vmem %s2, %s8457
      $region40: #{_lambda_.6} parent=35 // pred_fallthru
        _
    $region36: #{_lambda_.6} parent=5 // pred_fallthru
      _
  $region6: #{_lambda_.6} parent=0 // loop_footer
    %s12 = sadd.s32 1, %s8
  $region7: #{_lambda_.6} parent=0 // loop_footer_branch
    %7 = sbr.rel target = $region3
  $region8: #{_lambda_.6} parent=0 // loop_exit
    _

// kernel: _lambda_.7
$region0: #{_lambda_.7}
  #allocation0 [shape = 'u32[]', space=smem, size = 0x4, offset = 0x4, fixed_abs, tag = 'smem constant byte address 0x4 - core index']
  #allocation1 [shape = 'u32[144,128]{1,0:T(1,128)}', space=vmem, size = 0x12000, scoped, tag = 'internal scratch']
  %s0 = inlined_call_operand.vmem [shape: bf16[2048,128], index: 0, kind: input, shape index: {}]
  %s1 = inlined_call_operand.vmem [shape: bf16[128,128], index: 1, kind: input, shape index: {}]
  %s2 = inlined_call_operand.vmem [shape: bf16[2048,128], index: 2, kind: output, shape index: {}]
  %s3 = sld [smem:[#allocation0]]
  $region41: #{_lambda_.7} parent=0
    _
  %s5 = ssub.s32 1, %s3
  %s6 = scalar_select 0, %s5, %s3
  loop: start=0, step=1, limit=4
  $region2: #{_lambda_.7} parent=0 // loop_pre_header
    _
  $region3: #{_lambda_.7} parent=0 // loop_header
    %s8 = sphi 0, %s12
    %p9 = scmp.ge.s32.totalorder %s8, 4
    %s18 = sphi 0, %s20
    %s21 = sphi 0, %s18
    %s22 = sphi 0, %s21
    %s38 = sphi 0, %s22
    %s42 = sphi 0, %s42
    %s44 = sphi 0, %s42
    %s45 = sphi 0, %s44
    %s59 = sphi 0, %s45
    %s65 = sphi 0, %s67
    %s68 = sphi 0, %s65
    %s69 = sphi 0, %s68
    %s85 = sphi 0, %s69
  $region4: #{_lambda_.7} parent=0 // loop_header_branch
    %11 = sbr.rel (%p9) target = $region8
  $region5: #{_lambda_.7} parent=0 // loop_body
    %s13 = ssub.s32 %s8, 1
    %s14 = ssub.s32 %s8, 2
    %s15 = sadd.s32 %s8, 1
    %s16 = ssub.s32 %s8, %s15
    %p17 = scmp.eq.s32.totalorder %s16, 0
    %s19 = sadd.s32 %s18, 1
    %s20 = scalar_select %p17, %s18, %s19
    %p23 = pneg %p17
    %p24 = scmp.eq.s32.totalorder %s8, 1
    %p25 = por %p23, %p24
    %p26 = scmp.ne.s32.totalorder %s18, %s21
    %p27 = scmp.eq.s32.totalorder %s8, 0
    %p28 = por %p26, %p27
    %p29 = scmp.ne.s32.totalorder %s18, %s21
    %p30 = scmp.eq.s32.totalorder %s13, 1
    %p31 = por %p29, %p30
    %p32 = scmp.ne.s32.totalorder %s21, %s22
    %p33 = scmp.eq.s32.totalorder %s13, 0
    %p34 = por %p32, %p33
    %p35 = scmp.ne.s32.totalorder %s21, %s22
    %p36 = scmp.eq.s32.totalorder %s14, 1
    %p37 = por %p35, %p36
    %p39 = scmp.ne.s32.totalorder %s22, %s38
    %p40 = scmp.eq.s32.totalorder %s14, 0
    %p41 = por %p39, %p40
    %s43 = sadd.s32 %s42, 1
    %p46 = scmp.eq.s32.totalorder %s8, 1
    %p47 = scmp.ne.s32.totalorder %s42, %s44
    %p48 = scmp.eq.s32.totalorder %s8, 0
    %p49 = por %p47, %p48
    %p50 = scmp.ne.s32.totalorder %s42, %s44
    %p51 = scmp.eq.s32.totalorder %s13, 1
    %p52 = por %p50, %p51
    %p53 = scmp.ne.s32.totalorder %s44, %s45
    %p54 = scmp.eq.s32.totalorder %s13, 0
    %p55 = por %p53, %p54
    %p56 = scmp.ne.s32.totalorder %s44, %s45
    %p57 = scmp.eq.s32.totalorder %s14, 1
    %p58 = por %p56, %p57
    %p60 = scmp.ne.s32.totalorder %s45, %s59
    %p61 = scmp.eq.s32.totalorder %s14, 0
    %p62 = por %p60, %p61
    %s63 = ssub.s32 %s8, %s15
    %p64 = scmp.eq.s32.totalorder %s63, 0
    %s66 = sadd.s32 %s65, 1
    %s67 = scalar_select %p64, %s65, %s66
    %p70 = pneg %p64
    %p71 = scmp.eq.s32.totalorder %s8, 1
    %p72 = por %p70, %p71
    %p73 = scmp.ne.s32.totalorder %s65, %s68
    %p74 = scmp.eq.s32.totalorder %s8, 0
    %p75 = por %p73, %p74
    %p76 = scmp.ne.s32.totalorder %s65, %s68
    %p77 = scmp.eq.s32.totalorder %s13, 1
    %p78 = por %p76, %p77
    %p79 = scmp.ne.s32.totalorder %s68, %s69
    %p80 = scmp.eq.s32.totalorder %s13, 0
    %p81 = por %p79, %p80
    %p82 = scmp.ne.s32.totalorder %s68, %s69
    %p83 = scmp.eq.s32.totalorder %s14, 1
    %p84 = por %p82, %p83
    %p86 = scmp.ne.s32.totalorder %s69, %s85
    %p87 = scmp.eq.s32.totalorder %s14, 0
    %p88 = por %p86, %p87
    %p89 = scmp.le.s32.totalorder 1, %s8
    %p90 = scmp.lt.s32.totalorder %s8, 3
    %p91 = pnand %p89, %p90
    %p92 = pneg %p91
    // Predicated region
    $region9: #{_lambda_.7} parent=5 // pred_check
      _
    $region10: #{_lambda_.7} parent=5 // pred_check_branch
      %94 = sbr.rel (%p91) target = $region12
    $region11: #{_lambda_.7} parent=5 // pred_region
      %s95 = ssub.s32 %s8, 1
      // Predicated region
      $region13: #{_lambda_.7} parent=11 // pred_check
        %p96 = pneg %p55
      $region14: #{_lambda_.7} parent=11 // pred_check_branch
        %98 = sbr.rel (%p96) target = $region16
      $region15: #{_lambda_.7} parent=11 // pred_region
        _
      $region16: #{_lambda_.7} parent=11 // pred_fallthru
        _
    $region12: #{_lambda_.7} parent=5 // pred_fallthru
      _
    %p99 = scmp.lt.s32.totalorder %s8, 2
    // Predicated region
    $region17: #{_lambda_.7} parent=5 // pred_check
      %p100 = pneg %p99
    $region18: #{_lambda_.7} parent=5 // pred_check_branch
      %102 = sbr.rel (%p100) target = $region20
    $region19: #{_lambda_.7} parent=5 // pred_region
      // Predicated region
      $region21: #{_lambda_.7} parent=19 // pred_check
        %p103 = pneg %p28
      $region22: #{_lambda_.7} parent=19 // pred_check_branch
        %105 = sbr.rel (%p103) target = $region24
      $region23: #{_lambda_.7} parent=19 // pred_region
        %s106 = smul.u32 128, %s8
        %p107 = scmp.lt.s32.totalorder %s106, 255
        %s108 = scalar_select %p107, %s106, 255
        %s109 = smul.addr %s108, 4
        %s110 = scalar_lea.vmem %s0, %s109
        %s111 = smul.u32 128, %s8
      $region24: #{_lambda_.7} parent=19 // pred_fallthru
        _
    $region20: #{_lambda_.7} parent=5 // pred_fallthru
      _
    %p112 = scmp.le.s32.totalorder 1, %s8
    %p113 = scmp.lt.s32.totalorder %s8, 3
    %p114 = pnand %p112, %p113
    %p115 = pneg %p114
    // Predicated region
    $region25: #{_lambda_.7} parent=5 // pred_check
      _
    $region26: #{_lambda_.7} parent=5 // pred_check_branch
      %117 = sbr.rel (%p114) target = $region28
    $region27: #{_lambda_.7} parent=5 // pred_region
      %s118 = ssub.s32 %s8, 1
      %s119 = smul.u32 128, %s13
      %p120 = scmp.lt.s32.totalorder %s119, 255
      %s121 = scalar_select %p120, %s119, 255
      %s122 = smul.addr %s121, 4
      %s123 = scalar_lea.vmem %s0, %s122
      %p124 = pneg %p34
      %p125 = pneg %p31
      %p126 = pneg %p55
      %p127 = pneg %p52
      %p128 = pneg %p81
      %p129 = pneg %p78
      %s130 = smul.u32 128, %s13
      %p131 = scmp.lt.s32.totalorder %s130, 255
      %s132 = scalar_select %p131, %s130, 255
      %s133 = smul.addr %s132, 4
      %s134 = scalar_lea.vmem %s2, %s133
      %s135 = smul.u32 128, %s13
      %p136 = scmp.lt.s32.totalorder %s135, 255
      %s137 = scalar_select %p136, %s135, 255
      %s138 = smul.addr %s137, 4
      %s139 = scalar_lea.vmem %s0, %s138
      %s140 = smul.u32 128, %s13
      %s141 = smul.u32 128, %s13
      %p142 = scmp.lt.s32.totalorder %s141, 255
      %s143 = scalar_select %p142, %s141, 255
      %s144 = smul.addr %s143, 4
      %s145 = scalar_lea.vmem %s2, %s144
      %s146 = smul.u32 128, %s13
      %v148 = vld [vmem:[%s139] sm:$0xf]
      %v149 = vld [vmem:[%s139 + $0x4] sm:$0xf]
      %v150 = vld [vmem:[%s139 + $0x8] sm:$0xf]
      %v151 = vld [vmem:[%s139 + $0xc] sm:$0xf]
      %v152 = vld [vmem:[%s139 + $0x10] sm:$0xf]
      %v153 = vld [vmem:[%s139 + $0x14] sm:$0xf]
      %v154 = vld [vmem:[%s139 + $0x18] sm:$0xf]
      %v155 = vld [vmem:[%s139 + $0x1c] sm:$0xf]
      %v156 = vld [vmem:[%s139 + $0x20] sm:$0xf]
      %v157 = vld [vmem:[%s139 + $0x24] sm:$0xf]
      %v158 = vld [vmem:[%s139 + $0x28] sm:$0xf]
      %v159 = vld [vmem:[%s139 + $0x2c] sm:$0xf]
      %v160 = vld [vmem:[%s139 + $0x30] sm:$0xf]
      %v161 = vld [vmem:[%s139 + $0x34] sm:$0xf]
      %v162 = vld [vmem:[%s139 + $0x38] sm:$0xf]
      %v163 = vld [vmem:[%s139 + $0x3c] sm:$0xf]
      %v164 = vld [vmem:[%s139 + $0x40] sm:$0xf]
      %v165 = vld [vmem:[%s139 + $0x44] sm:$0xf]
      %v166 = vld [vmem:[%s139 + $0x48] sm:$0xf]
      %v167 = vld [vmem:[%s139 + $0x4c] sm:$0xf]
      %v168 = vld [vmem:[%s139 + $0x50] sm:$0xf]
      %v169 = vld [vmem:[%s139 + $0x54] sm:$0xf]
      %v170 = vld [vmem:[%s139 + $0x58] sm:$0xf]
      %v171 = vld [vmem:[%s139 + $0x5c] sm:$0xf]
      %v172 = vld [vmem:[%s139 + $0x60] sm:$0xf]
      %v173 = vld [vmem:[%s139 + $0x64] sm:$0xf]
      %v174 = vld [vmem:[%s139 + $0x68] sm:$0xf]
      %v175 = vld [vmem:[%s139 + $0x6c] sm:$0xf]
      %v176 = vld [vmem:[%s139 + $0x70] sm:$0xf]
      %v177 = vld [vmem:[%s139 + $0x74] sm:$0xf]
      %v178 = vld [vmem:[%s139 + $0x78] sm:$0xf]
      %v179 = vld [vmem:[%s139 + $0x7c] sm:$0xf]
      %v180 = vld [vmem:[%s139 + $0x80] sm:$0xf]
      %v181 = vld [vmem:[%s139 + $0x84] sm:$0xf]
      %v182 = vld [vmem:[%s139 + $0x88] sm:$0xf]
      %v183 = vld [vmem:[%s139 + $0x8c] sm:$0xf]
      %v184 = vld [vmem:[%s139 + $0x90] sm:$0xf]
      %v185 = vld [vmem:[%s139 + $0x94] sm:$0xf]
      %v186 = vld [vmem:[%s139 + $0x98] sm:$0xf]
      %v187 = vld [vmem:[%s139 + $0x9c] sm:$0xf]
      %v188 = vld [vmem:[%s139 + $0xa0] sm:$0xf]
      %v189 = vld [vmem:[%s139 + $0xa4] sm:$0xf]
      %v190 = vld [vmem:[%s139 + $0xa8] sm:$0xf]
      %v191 = vld [vmem:[%s139 + $0xac] sm:$0xf]
      %v192 = vld [vmem:[%s139 + $0xb0] sm:$0xf]
      %v193 = vld [vmem:[%s139 + $0xb4] sm:$0xf]
      %v194 = vld [vmem:[%s139 + $0xb8] sm:$0xf]
      %v195 = vld [vmem:[%s139 + $0xbc] sm:$0xf]
      %v196 = vld [vmem:[%s139 + $0xc0] sm:$0xf]
      %v197 = vld [vmem:[%s139 + $0xc4] sm:$0xf]
      %v198 = vld [vmem:[%s139 + $0xc8] sm:$0xf]
      %v199 = vld [vmem:[%s139 + $0xcc] sm:$0xf]
      %v200 = vld [vmem:[%s139 + $0xd0] sm:$0xf]
      %v201 = vld [vmem:[%s139 + $0xd4] sm:$0xf]
      %v202 = vld [vmem:[%s139 + $0xd8] sm:$0xf]
      %v203 = vld [vmem:[%s139 + $0xdc] sm:$0xf]
      %v204 = vld [vmem:[%s139 + $0xe0] sm:$0xf]
      %v205 = vld [vmem:[%s139 + $0xe4] sm:$0xf]
      %v206 = vld [vmem:[%s139 + $0xe8] sm:$0xf]
      %v207 = vld [vmem:[%s139 + $0xec] sm:$0xf]
      %v208 = vld [vmem:[%s139 + $0xf0] sm:$0xf]
      %v209 = vld [vmem:[%s139 + $0xf4] sm:$0xf]
      %v210 = vld [vmem:[%s139 + $0xf8] sm:$0xf]
      %v211 = vld [vmem:[%s139 + $0xfc] sm:$0xf]
      %v212 = vld [vmem:[%s139 + $0x100] sm:$0xf]
      %v213 = vld [vmem:[%s139 + $0x104] sm:$0xf]
      %v214 = vld [vmem:[%s139 + $0x108] sm:$0xf]
      %v215 = vld [vmem:[%s139 + $0x10c] sm:$0xf]
      %v216 = vld [vmem:[%s139 + $0x110] sm:$0xf]
      %v217 = vld [vmem:[%s139 + $0x114] sm:$0xf]
      %v218 = vld [vmem:[%s139 + $0x118] sm:$0xf]
      %v219 = vld [vmem:[%s139 + $0x11c] sm:$0xf]
      %v220 = vld [vmem:[%s139 + $0x120] sm:$0xf]
      %v221 = vld [vmem:[%s139 + $0x124] sm:$0xf]
      %v222 = vld [vmem:[%s139 + $0x128] sm:$0xf]
      %v223 = vld [vmem:[%s139 + $0x12c] sm:$0xf]
      %v224 = vld [vmem:[%s139 + $0x130] sm:$0xf]
      %v225 = vld [vmem:[%s139 + $0x134] sm:$0xf]
      %v226 = vld [vmem:[%s139 + $0x138] sm:$0xf]
      %v227 = vld [vmem:[%s139 + $0x13c] sm:$0xf]
      %v228 = vld [vmem:[%s139 + $0x140] sm:$0xf]
      %v229 = vld [vmem:[%s139 + $0x144] sm:$0xf]
      %v230 = vld [vmem:[%s139 + $0x148] sm:$0xf]
      %v231 = vld [vmem:[%s139 + $0x14c] sm:$0xf]
      %v232 = vld [vmem:[%s139 + $0x150] sm:$0xf]
      %v233 = vld [vmem:[%s139 + $0x154] sm:$0xf]
      %v234 = vld [vmem:[%s139 + $0x158] sm:$0xf]
      %v235 = vld [vmem:[%s139 + $0x15c] sm:$0xf]
      %v236 = vld [vmem:[%s139 + $0x160] sm:$0xf]
      %v237 = vld [vmem:[%s139 + $0x164] sm:$0xf]
      %v238 = vld [vmem:[%s139 + $0x168] sm:$0xf]
      %v239 = vld [vmem:[%s139 + $0x16c] sm:$0xf]
      %v240 = vld [vmem:[%s139 + $0x170] sm:$0xf]
      %v241 = vld [vmem:[%s139 + $0x174] sm:$0xf]
      %v242 = vld [vmem:[%s139 + $0x178] sm:$0xf]
      %v243 = vld [vmem:[%s139 + $0x17c] sm:$0xf]
      %v244 = vld [vmem:[%s139 + $0x180] sm:$0xf]
      %v245 = vld [vmem:[%s139 + $0x184] sm:$0xf]
      %v246 = vld [vmem:[%s139 + $0x188] sm:$0xf]
      %v247 = vld [vmem:[%s139 + $0x18c] sm:$0xf]
      %v248 = vld [vmem:[%s139 + $0x190] sm:$0xf]
      %v249 = vld [vmem:[%s139 + $0x194] sm:$0xf]
      %v250 = vld [vmem:[%s139 + $0x198] sm:$0xf]
      %v251 = vld [vmem:[%s139 + $0x19c] sm:$0xf]
      %v252 = vld [vmem:[%s139 + $0x1a0] sm:$0xf]
      %v253 = vld [vmem:[%s139 + $0x1a4] sm:$0xf]
      %v254 = vld [vmem:[%s139 + $0x1a8] sm:$0xf]
      %v255 = vld [vmem:[%s139 + $0x1ac] sm:$0xf]
      %v256 = vld [vmem:[%s139 + $0x1b0] sm:$0xf]
      %v257 = vld [vmem:[%s139 + $0x1b4] sm:$0xf]
      %v258 = vld [vmem:[%s139 + $0x1b8] sm:$0xf]
      %v259 = vld [vmem:[%s139 + $0x1bc] sm:$0xf]
      %v260 = vld [vmem:[%s139 + $0x1c0] sm:$0xf]
      %v261 = vld [vmem:[%s139 + $0x1c4] sm:$0xf]
      %v262 = vld [vmem:[%s139 + $0x1c8] sm:$0xf]
      %v263 = vld [vmem:[%s139 + $0x1cc] sm:$0xf]
      %v264 = vld [vmem:[%s139 + $0x1d0] sm:$0xf]
      %v265 = vld [vmem:[%s139 + $0x1d4] sm:$0xf]
      %v266 = vld [vmem:[%s139 + $0x1d8] sm:$0xf]
      %v267 = vld [vmem:[%s139 + $0x1dc] sm:$0xf]
      %v268 = vld [vmem:[%s139 + $0x1e0] sm:$0xf]
      %v269 = vld [vmem:[%s139 + $0x1e4] sm:$0xf]
      %v270 = vld [vmem:[%s139 + $0x1e8] sm:$0xf]
      %v271 = vld [vmem:[%s139 + $0x1ec] sm:$0xf]
      %v272 = vld [vmem:[%s139 + $0x1f0] sm:$0xf]
      %v273 = vld [vmem:[%s139 + $0x1f4] sm:$0xf]
      %v274 = vld [vmem:[%s139 + $0x1f8] sm:$0xf]
      %v275 = vld [vmem:[%s139 + $0x1fc] sm:$0xf]
      %v276 = vld [vmem:[%s1] sm:$0xf]
      %v277 = vld [vmem:[%s1 + $0x4] sm:$0xf]
      %v278 = vld [vmem:[%s1 + $0x8] sm:$0xf]
      %v279 = vld [vmem:[%s1 + $0xc] sm:$0xf]
      %v280 = vld [vmem:[%s1 + $0x10] sm:$0xf]
      %v281 = vld [vmem:[%s1 + $0x14] sm:$0xf]
      %v282 = vld [vmem:[%s1 + $0x18] sm:$0xf]
      %v283 = vld [vmem:[%s1 + $0x1c] sm:$0xf]
      %v284 = vld [vmem:[%s1 + $0x20] sm:$0xf]
      %v285 = vld [vmem:[%s1 + $0x24] sm:$0xf]
      %v286 = vld [vmem:[%s1 + $0x28] sm:$0xf]
      %v287 = vld [vmem:[%s1 + $0x2c] sm:$0xf]
      %v288 = vld [vmem:[%s1 + $0x30] sm:$0xf]
      %v289 = vld [vmem:[%s1 + $0x34] sm:$0xf]
      %v290 = vld [vmem:[%s1 + $0x38] sm:$0xf]
      %v291 = vld [vmem:[%s1 + $0x3c] sm:$0xf]
      %v420 = vunpack.c.l.b16 %v148
      %v421 = vunpack.c.l.b16 %v149
      %v422 = vunpack.c.l.b16 %v150
      %v423 = vunpack.c.l.b16 %v151
      %v424 = vunpack.c.l.b16 %v152
      %v425 = vunpack.c.l.b16 %v153
      %v426 = vunpack.c.l.b16 %v154
      %v427 = vunpack.c.l.b16 %v155
      %v428 = vunpack.c.l.b16 %v156
      %v429 = vunpack.c.l.b16 %v157
      %v430 = vunpack.c.l.b16 %v158
      %v431 = vunpack.c.l.b16 %v159
      %v432 = vunpack.c.l.b16 %v160
      %v433 = vunpack.c.l.b16 %v161
      %v434 = vunpack.c.l.b16 %v162
      %v435 = vunpack.c.l.b16 %v163
      %v436 = vunpack.c.l.b16 %v164
      %v437 = vunpack.c.l.b16 %v165
      %v438 = vunpack.c.l.b16 %v166
      %v439 = vunpack.c.l.b16 %v167
      %v440 = vunpack.c.l.b16 %v168
      %v441 = vunpack.c.l.b16 %v169
      %v442 = vunpack.c.l.b16 %v170
      %v443 = vunpack.c.l.b16 %v171
      %v444 = vunpack.c.l.b16 %v172
      %v445 = vunpack.c.l.b16 %v173
      %v446 = vunpack.c.l.b16 %v174
      %v447 = vunpack.c.l.b16 %v175
      %v448 = vunpack.c.l.b16 %v176
      %v449 = vunpack.c.l.b16 %v177
      %v450 = vunpack.c.l.b16 %v178
      %v451 = vunpack.c.l.b16 %v179
      %v452 = vunpack.c.l.b16 %v180
      %v453 = vunpack.c.l.b16 %v181
      %v454 = vunpack.c.l.b16 %v182
      %v455 = vunpack.c.l.b16 %v183
      %v456 = vunpack.c.l.b16 %v184
      %v457 = vunpack.c.l.b16 %v185
      %v458 = vunpack.c.l.b16 %v186
      %v459 = vunpack.c.l.b16 %v187
      %v460 = vunpack.c.l.b16 %v188
      %v461 = vunpack.c.l.b16 %v189
      %v462 = vunpack.c.l.b16 %v190
      %v463 = vunpack.c.l.b16 %v191
      %v464 = vunpack.c.l.b16 %v192
      %v465 = vunpack.c.l.b16 %v193
      %v466 = vunpack.c.l.b16 %v194
      %v467 = vunpack.c.l.b16 %v195
      %v468 = vunpack.c.l.b16 %v196
      %v469 = vunpack.c.l.b16 %v197
      %v470 = vunpack.c.l.b16 %v198
      %v471 = vunpack.c.l.b16 %v199
      %v472 = vunpack.c.l.b16 %v200
      %v473 = vunpack.c.l.b16 %v201
      %v474 = vunpack.c.l.b16 %v202
      %v475 = vunpack.c.l.b16 %v203
      %v476 = vunpack.c.l.b16 %v204
      %v477 = vunpack.c.l.b16 %v205
      %v478 = vunpack.c.l.b16 %v206
      %v479 = vunpack.c.l.b16 %v207
      %v480 = vunpack.c.l.b16 %v208
      %v481 = vunpack.c.l.b16 %v209
      %v482 = vunpack.c.l.b16 %v210
      %v483 = vunpack.c.l.b16 %v211
      %v484 = vunpack.c.l.b16 %v212
      %v485 = vunpack.c.l.b16 %v213
      %v486 = vunpack.c.l.b16 %v214
      %v487 = vunpack.c.l.b16 %v215
      %v488 = vunpack.c.l.b16 %v216
      %v489 = vunpack.c.l.b16 %v217
      %v490 = vunpack.c.l.b16 %v218
      %v491 = vunpack.c.l.b16 %v219
      %v492 = vunpack.c.l.b16 %v220
      %v493 = vunpack.c.l.b16 %v221
      %v494 = vunpack.c.l.b16 %v222
      %v495 = vunpack.c.l.b16 %v223
      %v496 = vunpack.c.l.b16 %v224
      %v497 = vunpack.c.l.b16 %v225
      %v498 = vunpack.c.l.b16 %v226
      %v499 = vunpack.c.l.b16 %v227
      %v500 = vunpack.c.l.b16 %v228
      %v501 = vunpack.c.l.b16 %v229
      %v502 = vunpack.c.l.b16 %v230
      %v503 = vunpack.c.l.b16 %v231
      %v504 = vunpack.c.l.b16 %v232
      %v505 = vunpack.c.l.b16 %v233
      %v506 = vunpack.c.l.b16 %v234
      %v507 = vunpack.c.l.b16 %v235
      %v508 = vunpack.c.l.b16 %v236
      %v509 = vunpack.c.l.b16 %v237
      %v510 = vunpack.c.l.b16 %v238
      %v511 = vunpack.c.l.b16 %v239
      %v512 = vunpack.c.l.b16 %v240
      %v513 = vunpack.c.l.b16 %v241
      %v514 = vunpack.c.l.b16 %v242
      %v515 = vunpack.c.l.b16 %v243
      %v516 = vunpack.c.l.b16 %v244
      %v517 = vunpack.c.l.b16 %v245
      %v518 = vunpack.c.l.b16 %v246
      %v519 = vunpack.c.l.b16 %v247
      %v520 = vunpack.c.l.b16 %v248
      %v521 = vunpack.c.l.b16 %v249
      %v522 = vunpack.c.l.b16 %v250
      %v523 = vunpack.c.l.b16 %v251
      %v524 = vunpack.c.l.b16 %v252
      %v525 = vunpack.c.l.b16 %v253
      %v526 = vunpack.c.l.b16 %v254
      %v527 = vunpack.c.l.b16 %v255
      %v528 = vunpack.c.l.b16 %v256
      %v529 = vunpack.c.l.b16 %v257
      %v530 = vunpack.c.l.b16 %v258
      %v531 = vunpack.c.l.b16 %v259
      %v532 = vunpack.c.l.b16 %v260
      %v533 = vunpack.c.l.b16 %v261
      %v534 = vunpack.c.l.b16 %v262
      %v535 = vunpack.c.l.b16 %v263
      %v536 = vunpack.c.l.b16 %v264
      %v537 = vunpack.c.l.b16 %v265
      %v538 = vunpack.c.l.b16 %v266
      %v539 = vunpack.c.l.b16 %v267
      %v540 = vunpack.c.l.b16 %v268
      %v541 = vunpack.c.l.b16 %v269
      %v542 = vunpack.c.l.b16 %v270
      %v543 = vunpack.c.l.b16 %v271
      %v544 = vunpack.c.l.b16 %v272
      %v545 = vunpack.c.l.b16 %v273
      %v546 = vunpack.c.l.b16 %v274
      %v547 = vunpack.c.l.b16 %v275
      %v548 = vpack.c.b16 %v421, %v420
      %v549 = vpack.c.b16 %v423, %v422
      %v550 = vpack.c.b16 %v425, %v424
      %v551 = vpack.c.b16 %v427, %v426
      %v552 = vpack.c.b16 %v429, %v428
      %v553 = vpack.c.b16 %v431, %v430
      %v554 = vpack.c.b16 %v433, %v432
      %v555 = vpack.c.b16 %v435, %v434
      %v556 = vpack.c.b16 %v437, %v436
      %v557 = vpack.c.b16 %v439, %v438
      %v558 = vpack.c.b16 %v441, %v440
      %v559 = vpack.c.b16 %v443, %v442
      %v560 = vpack.c.b16 %v445, %v444
      %v561 = vpack.c.b16 %v447, %v446
      %v562 = vpack.c.b16 %v449, %v448
      %v563 = vpack.c.b16 %v451, %v450
      %v564 = vpack.c.b16 %v453, %v452
      %v565 = vpack.c.b16 %v455, %v454
      %v566 = vpack.c.b16 %v457, %v456
      %v567 = vpack.c.b16 %v459, %v458
      %v568 = vpack.c.b16 %v461, %v460
      %v569 = vpack.c.b16 %v463, %v462
      %v570 = vpack.c.b16 %v465, %v464
      %v571 = vpack.c.b16 %v467, %v466
      %v572 = vpack.c.b16 %v469, %v468
      %v573 = vpack.c.b16 %v471, %v470
      %v574 = vpack.c.b16 %v473, %v472
      %v575 = vpack.c.b16 %v475, %v474
      %v576 = vpack.c.b16 %v477, %v476
      %v577 = vpack.c.b16 %v479, %v478
      %v578 = vpack.c.b16 %v481, %v480
      %v579 = vpack.c.b16 %v483, %v482
      %v580 = vpack.c.b16 %v485, %v484
      %v581 = vpack.c.b16 %v487, %v486
      %v582 = vpack.c.b16 %v489, %v488
      %v583 = vpack.c.b16 %v491, %v490
      %v584 = vpack.c.b16 %v493, %v492
      %v585 = vpack.c.b16 %v495, %v494
      %v586 = vpack.c.b16 %v497, %v496
      %v587 = vpack.c.b16 %v499, %v498
      %v588 = vpack.c.b16 %v501, %v500
      %v589 = vpack.c.b16 %v503, %v502
      %v590 = vpack.c.b16 %v505, %v504
      %v591 = vpack.c.b16 %v507, %v506
      %v592 = vpack.c.b16 %v509, %v508
      %v593 = vpack.c.b16 %v511, %v510
      %v594 = vpack.c.b16 %v513, %v512
      %v595 = vpack.c.b16 %v515, %v514
      %v596 = vpack.c.b16 %v517, %v516
      %v597 = vpack.c.b16 %v519, %v518
      %v598 = vpack.c.b16 %v521, %v520
      %v599 = vpack.c.b16 %v523, %v522
      %v600 = vpack.c.b16 %v525, %v524
      %v601 = vpack.c.b16 %v527, %v526
      %v602 = vpack.c.b16 %v529, %v528
      %v603 = vpack.c.b16 %v531, %v530
      %v604 = vpack.c.b16 %v533, %v532
      %v605 = vpack.c.b16 %v535, %v534
      %v606 = vpack.c.b16 %v537, %v536
      %v607 = vpack.c.b16 %v539, %v538
      %v608 = vpack.c.b16 %v541, %v540
      %v609 = vpack.c.b16 %v543, %v542
      %v610 = vpack.c.b16 %v545, %v544
      %v611 = vpack.c.b16 %v547, %v546
      %v692 = vunpack.c.l.b16 %v276
      %v693 = vunpack.c.l.b16 %v277
      %v694 = vunpack.c.l.b16 %v278
      %v695 = vunpack.c.l.b16 %v279
      %v696 = vunpack.c.l.b16 %v280
      %v697 = vunpack.c.l.b16 %v281
      %v698 = vunpack.c.l.b16 %v282
      %v699 = vunpack.c.l.b16 %v283
      %v700 = vunpack.c.l.b16 %v284
      %v701 = vunpack.c.l.b16 %v285
      %v702 = vunpack.c.l.b16 %v286
      %v703 = vunpack.c.l.b16 %v287
      %v704 = vunpack.c.l.b16 %v288
      %v705 = vunpack.c.l.b16 %v289
      %v706 = vunpack.c.l.b16 %v290
      %v707 = vunpack.c.l.b16 %v291
      %v708 = vpack.c.b16 %v693, %v692
      %v709 = vpack.c.b16 %v695, %v694
      %v710 = vpack.c.b16 %v697, %v696
      %v711 = vpack.c.b16 %v699, %v698
      %v712 = vpack.c.b16 %v701, %v700
      %v713 = vpack.c.b16 %v703, %v702
      %v714 = vpack.c.b16 %v705, %v704
      %v715 = vpack.c.b16 %v707, %v706
      %724 = vmatprep.subr.bf16.mxu0 0
      %725 = vmatpush1.bf16.msra.mxu0 %v708
      %726 = vmatprep.subr.bf16.mxu0 0
      %727 = vmatpush1.bf16.msra.mxu0 %v709
      %728 = vmatprep.subr.bf16.mxu0 0
      %729 = vmatpush1.bf16.msra.mxu0 %v710
      %730 = vmatprep.subr.bf16.mxu0 0
      %731 = vmatpush1.bf16.msra.mxu0 %v711
      %732 = vmatprep.subr.bf16.mxu0 0
      %733 = vmatpush1.bf16.msra.mxu0 %v712
      %734 = vmatprep.subr.bf16.mxu0 0
      %735 = vmatpush1.bf16.msra.mxu0 %v713
      %736 = vmatprep.subr.bf16.mxu0 0
      %737 = vmatpush1.bf16.msra.mxu0 %v714
      %738 = vmatprep.subr.bf16.mxu0 0
      %739 = vmatpush1.bf16.msra.mxu0 %v715
      %740 = vmatprep.subr.bf16.mxu0 0
      %741 = vmatpush1.bf16.msra.mxu0 0
      %742 = vmatprep.subr.bf16.mxu0 0
      %743 = vmatpush1.bf16.msra.mxu0 0
      %744 = vmatprep.subr.bf16.mxu0 0
      %745 = vmatpush1.bf16.msra.mxu0 0
      %746 = vmatprep.subr.bf16.mxu0 0
      %747 = vmatpush1.bf16.msra.mxu0 0
      %748 = vmatprep.subr.bf16.mxu0 0
      %749 = vmatpush1.bf16.msra.mxu0 0
      %750 = vmatprep.subr.bf16.mxu0 0
      %751 = vmatpush1.bf16.msra.mxu0 0
      %752 = vmatprep.subr.bf16.mxu0 0
      %753 = vmatpush1.bf16.msra.mxu0 0
      %754 = vmatprep.subr.bf16.mxu0 0
      %755 = vmatpush1.bf16.msra.mxu0 0
      %756 = vmatprep.mubr.bf16.mxu0 0
      %757 = vmatmul.mubr.bf16.gmra.mrb[0].mxu0 %v548
      %v758 = vpop.f32.mrb[0].mxu0
      %v759 = vadd.f32 0.0, %v758
      %v760 = vpop.f32.mrb[0].mxu0
      %v761 = vpop.f32.mrb[0].mxu0
      %v762 = vadd.f32 0.0, %v761
      %v763 = vpop.f32.mrb[0].mxu0
      %764 = vmatprep.mubr.bf16.mxu0 0
      %765 = vmatmul.mubr.bf16.gmra.mrb[0].mxu0 %v549
      %v766 = vpop.f32.mrb[0].mxu0
      %v767 = vadd.f32 0.0, %v766
      %v768 = vpop.f32.mrb[0].mxu0
      %v769 = vpop.f32.mrb[0].mxu0
      %v770 = vadd.f32 0.0, %v769
      %v771 = vpop.f32.mrb[0].mxu0
      %772 = vmatprep.mubr.bf16.mxu0 0
      %773 = vmatmul.mubr.bf16.gmra.mrb[0].mxu0 %v550
      %v774 = vpop.f32.mrb[0].mxu0
      %v775 = vadd.f32 0.0, %v774
      %v776 = vpop.f32.mrb[0].mxu0
      %v777 = vpop.f32.mrb[0].mxu0
      %v778 = vadd.f32 0.0, %v777
      %v779 = vpop.f32.mrb[0].mxu0
      %780 = vmatprep.mubr.bf16.mxu0 0
      %781 = vmatmul.mubr.bf16.gmra.mrb[0].mxu0 %v551
      %v782 = vpop.f32.mrb[0].mxu0
      %v783 = vadd.f32 0.0, %v782
      %v784 = vpop.f32.mrb[0].mxu0
      %v785 = vpop.f32.mrb[0].mxu0
      %v786 = vadd.f32 0.0, %v785
      %v787 = vpop.f32.mrb[0].mxu0
      %788 = vmatprep.mubr.bf16.mxu0 0
      %789 = vmatmul.mubr.bf16.gmra.mrb[0].mxu0 %v552
      %v790 = vpop.f32.mrb[0].mxu0
      %v791 = vadd.f32 0.0, %v790
      %v792 = vpop.f32.mrb[0].mxu0
      %v793 = vpop.f32.mrb[0].mxu0
      %v794 = vadd.f32 0.0, %v793
      %v795 = vpop.f32.mrb[0].mxu0
      %796 = vmatprep.mubr.bf16.mxu0 0
      %797 = vmatmul.mubr.bf16.gmra.mrb[0].mxu0 %v553
      %v798 = vpop.f32.mrb[0].mxu0
      %v799 = vadd.f32 0.0, %v798
      %v800 = vpop.f32.mrb[0].mxu0
      %v801 = vpop.f32.mrb[0].mxu0
      %v802 = vadd.f32 0.0, %v801
      %v803 = vpop.f32.mrb[0].mxu0
      %804 = vmatprep.mubr.bf16.mxu0 0
      %805 = vmatmul.mubr.bf16.gmra.mrb[0].mxu0 %v554
      %v806 = vpop.f32.mrb[0].mxu0
      %v807 = vadd.f32 0.0, %v806
      %v808 = vpop.f32.mrb[0].mxu0
      %v809 = vpop.f32.mrb[0].mxu0
      %v810 = vadd.f32 0.0, %v809
      %v811 = vpop.f32.mrb[0].mxu0
      %812 = vmatprep.mubr.bf16.mxu0 0
      %813 = vmatmul.mubr.bf16.gmra.mrb[0].mxu0 %v555
      %v814 = vpop.f32.mrb[0].mxu0
      %v815 = vadd.f32 0.0, %v814
      %v816 = vpop.f32.mrb[0].mxu0
      %v817 = vpop.f32.mrb[0].mxu0
      %v818 = vadd.f32 0.0, %v817
      %v819 = vpop.f32.mrb[0].mxu0
      %820 = vmatprep.mubr.bf16.mxu0 0
      %821 = vmatmul.mubr.bf16.gmra.mrb[0].mxu0 %v556
      %v822 = vpop.f32.mrb[0].mxu0
      %v823 = vadd.f32 0.0, %v822
      %v824 = vpop.f32.mrb[0].mxu0
      %v825 = vpop.f32.mrb[0].mxu0
      %v826 = vadd.f32 0.0, %v825
      %v827 = vpop.f32.mrb[0].mxu0
      %828 = vmatprep.mubr.bf16.mxu0 0
      %829 = vmatmul.mubr.bf16.gmra.mrb[0].mxu0 %v557
      %v830 = vpop.f32.mrb[0].mxu0
      %v831 = vadd.f32 0.0, %v830
      %v832 = vpop.f32.mrb[0].mxu0
      %v833 = vpop.f32.mrb[0].mxu0
      %v834 = vadd.f32 0.0, %v833
      %v835 = vpop.f32.mrb[0].mxu0
      %836 = vmatprep.mubr.bf16.mxu0 0
      %837 = vmatmul.mubr.bf16.gmra.mrb[0].mxu0 %v558
      %v838 = vpop.f32.mrb[0].mxu0
      %v839 = vadd.f32 0.0, %v838
      %v840 = vpop.f32.mrb[0].mxu0
      %v841 = vpop.f32.mrb[0].mxu0
      %v842 = vadd.f32 0.0, %v841
      %v843 = vpop.f32.mrb[0].mxu0
      %844 = vmatprep.mubr.bf16.mxu0 0
      %845 = vmatmul.mubr.bf16.gmra.mrb[0].mxu0 %v559
      %v846 = vpop.f32.mrb[0].mxu0
      %v847 = vadd.f32 0.0, %v846
      %v848 = vpop.f32.mrb[0].mxu0
      %v849 = vpop.f32.mrb[0].mxu0
      %v850 = vadd.f32 0.0, %v849
      %v851 = vpop.f32.mrb[0].mxu0
      %852 = vmatprep.mubr.bf16.mxu0 0
      %853 = vmatmul.mubr.bf16.gmra.mrb[0].mxu0 %v560
      %v854 = vpop.f32.mrb[0].mxu0
      %v855 = vadd.f32 0.0, %v854
      %v856 = vpop.f32.mrb[0].mxu0
      %v857 = vpop.f32.mrb[0].mxu0
      %v858 = vadd.f32 0.0, %v857
      %v859 = vpop.f32.mrb[0].mxu0
      %860 = vmatprep.mubr.bf16.mxu0 0
      %861 = vmatmul.mubr.bf16.gmra.mrb[0].mxu0 %v561
      %v862 = vpop.f32.mrb[0].mxu0
      %v863 = vadd.f32 0.0, %v862
      %v864 = vpop.f32.mrb[0].mxu0
      %v865 = vpop.f32.mrb[0].mxu0
      %v866 = vadd.f32 0.0, %v865
      %v867 = vpop.f32.mrb[0].mxu0
      %868 = vmatprep.mubr.bf16.mxu0 0
      %869 = vmatmul.mubr.bf16.gmra.mrb[0].mxu0 %v562
      %v870 = vpop.f32.mrb[0].mxu0
      %v871 = vadd.f32 0.0, %v870
      %v872 = vpop.f32.mrb[0].mxu0
      %v873 = vpop.f32.mrb[0].mxu0
      %v874 = vadd.f32 0.0, %v873
      %v875 = vpop.f32.mrb[0].mxu0
      %876 = vmatprep.mubr.bf16.mxu0 0
      %877 = vmatmul.mubr.bf16.gmra.mrb[0].mxu0 %v563
      %v878 = vpop.f32.mrb[0].mxu0
      %v879 = vadd.f32 0.0, %v878
      %v880 = vpop.f32.mrb[0].mxu0
      %v881 = vpop.f32.mrb[0].mxu0
      %v882 = vadd.f32 0.0, %v881
      %v883 = vpop.f32.mrb[0].mxu0
      %884 = vmatprep.mubr.bf16.mxu0 0
      %885 = vmatmul.mubr.bf16.gmra.mrb[0].mxu0 %v564
      %v886 = vpop.f32.mrb[0].mxu0
      %v887 = vadd.f32 0.0, %v886
      %v888 = vpop.f32.mrb[0].mxu0
      %v889 = vpop.f32.mrb[0].mxu0
      %v890 = vadd.f32 0.0, %v889
      %v891 = vpop.f32.mrb[0].mxu0
      %892 = vmatprep.mubr.bf16.mxu0 0
      %893 = vmatmul.mubr.bf16.gmra.mrb[0].mxu0 %v565
      %v894 = vpop.f32.mrb[0].mxu0
      %v895 = vadd.f32 0.0, %v894
      %v896 = vpop.f32.mrb[0].mxu0
      %v897 = vpop.f32.mrb[0].mxu0
      %v898 = vadd.f32 0.0, %v897
      %v899 = vpop.f32.mrb[0].mxu0
      %900 = vmatprep.mubr.bf16.mxu0 0
      %901 = vmatmul.mubr.bf16.gmra.mrb[0].mxu0 %v566
      %v902 = vpop.f32.mrb[0].mxu0
      %v903 = vadd.f32 0.0, %v902
      %v904 = vpop.f32.mrb[0].mxu0
      %v905 = vpop.f32.mrb[0].mxu0
      %v906 = vadd.f32 0.0, %v905
      %v907 = vpop.f32.mrb[0].mxu0
      %908 = vmatprep.mubr.bf16.mxu0 0
      %909 = vmatmul.mubr.bf16.gmra.mrb[0].mxu0 %v567
      %v910 = vpop.f32.mrb[0].mxu0
      %v911 = vadd.f32 0.0, %v910
      %v912 = vpop.f32.mrb[0].mxu0
      %v913 = vpop.f32.mrb[0].mxu0
      %v914 = vadd.f32 0.0, %v913
      %v915 = vpop.f32.mrb[0].mxu0
      %916 = vmatprep.mubr.bf16.mxu0 0
      %917 = vmatmul.mubr.bf16.gmra.mrb[0].mxu0 %v568
      %v918 = vpop.f32.mrb[0].mxu0
      %v919 = vadd.f32 0.0, %v918
      %v920 = vpop.f32.mrb[0].mxu0
      %v921 = vpop.f32.mrb[0].mxu0
      %v922 = vadd.f32 0.0, %v921
      %v923 = vpop.f32.mrb[0].mxu0
      %924 = vmatprep.mubr.bf16.mxu0 0
      %925 = vmatmul.mubr.bf16.gmra.mrb[0].mxu0 %v569
      %v926 = vpop.f32.mrb[0].mxu0
      %v927 = vadd.f32 0.0, %v926
      %v928 = vpop.f32.mrb[0].mxu0
      %v929 = vpop.f32.mrb[0].mxu0
      %v930 = vadd.f32 0.0, %v929
      %v931 = vpop.f32.mrb[0].mxu0
      %932 = vmatprep.mubr.bf16.mxu0 0
      %933 = vmatmul.mubr.bf16.gmra.mrb[0].mxu0 %v570
      %v934 = vpop.f32.mrb[0].mxu0
      %v935 = vadd.f32 0.0, %v934
      %v936 = vpop.f32.mrb[0].mxu0
      %v937 = vpop.f32.mrb[0].mxu0
      %v938 = vadd.f32 0.0, %v937
      %v939 = vpop.f32.mrb[0].mxu0
      %940 = vmatprep.mubr.bf16.mxu0 0
      %941 = vmatmul.mubr.bf16.gmra.mrb[0].mxu0 %v571
      %v942 = vpop.f32.mrb[0].mxu0
      %v943 = vadd.f32 0.0, %v942
      %v944 = vpop.f32.mrb[0].mxu0
      %v945 = vpop.f32.mrb[0].mxu0
      %v946 = vadd.f32 0.0, %v945
      %v947 = vpop.f32.mrb[0].mxu0
      %948 = vmatprep.mubr.bf16.mxu0 0
      %949 = vmatmul.mubr.bf16.gmra.mrb[0].mxu0 %v572
      %v950 = vpop.f32.mrb[0].mxu0
      %v951 = vadd.f32 0.0, %v950
      %v952 = vpop.f32.mrb[0].mxu0
      %v953 = vpop.f32.mrb[0].mxu0
      %v954 = vadd.f32 0.0, %v953
      %v955 = vpop.f32.mrb[0].mxu0
      %956 = vmatprep.mubr.bf16.mxu0 0
      %957 = vmatmul.mubr.bf16.gmra.mrb[0].mxu0 %v573
      %v958 = vpop.f32.mrb[0].mxu0
      %v959 = vadd.f32 0.0, %v958
      %v960 = vpop.f32.mrb[0].mxu0
      %v961 = vpop.f32.mrb[0].mxu0
      %v962 = vadd.f32 0.0, %v961
      %v963 = vpop.f32.mrb[0].mxu0
      %964 = vmatprep.mubr.bf16.mxu0 0
      %965 = vmatmul.mubr.bf16.gmra.mrb[0].mxu0 %v574
      %v966 = vpop.f32.mrb[0].mxu0
      %v967 = vadd.f32 0.0, %v966
      %v968 = vpop.f32.mrb[0].mxu0
      %v969 = vpop.f32.mrb[0].mxu0
      %v970 = vadd.f32 0.0, %v969
      %v971 = vpop.f32.mrb[0].mxu0
      %972 = vmatprep.mubr.bf16.mxu0 0
      %973 = vmatmul.mubr.bf16.gmra.mrb[0].mxu0 %v575
      %v974 = vpop.f32.mrb[0].mxu0
      %v975 = vadd.f32 0.0, %v974
      %v976 = vpop.f32.mrb[0].mxu0
      %v977 = vpop.f32.mrb[0].mxu0
      %v978 = vadd.f32 0.0, %v977
      %v979 = vpop.f32.mrb[0].mxu0
      %980 = vmatprep.mubr.bf16.mxu0 0
      %981 = vmatmul.mubr.bf16.gmra.mrb[0].mxu0 %v576
      %v982 = vpop.f32.mrb[0].mxu0
      %v983 = vadd.f32 0.0, %v982
      %v984 = vpop.f32.mrb[0].mxu0
      %v985 = vpop.f32.mrb[0].mxu0
      %v986 = vadd.f32 0.0, %v985
      %v987 = vpop.f32.mrb[0].mxu0
      %988 = vmatprep.mubr.bf16.mxu0 0
      %989 = vmatmul.mubr.bf16.gmra.mrb[0].mxu0 %v577
      %v990 = vpop.f32.mrb[0].mxu0
      %v991 = vadd.f32 0.0, %v990
      %v992 = vpop.f32.mrb[0].mxu0
      %v993 = vpop.f32.mrb[0].mxu0
      %v994 = vadd.f32 0.0, %v993
      %v995 = vpop.f32.mrb[0].mxu0
      %996 = vmatprep.mubr.bf16.mxu0 0
      %997 = vmatmul.mubr.bf16.gmra.mrb[0].mxu0 %v578
      %v998 = vpop.f32.mrb[0].mxu0
      %v999 = vadd.f32 0.0, %v998
      %v1000 = vpop.f32.mrb[0].mxu0
      %v1001 = vpop.f32.mrb[0].mxu0
      %v1002 = vadd.f32 0.0, %v1001
      %v1003 = vpop.f32.mrb[0].mxu0
      %1004 = vmatprep.mubr.bf16.mxu0 0
      %1005 = vmatmul.mubr.bf16.gmra.mrb[0].mxu0 %v579
      %v1006 = vpop.f32.mrb[0].mxu0
      %v1007 = vadd.f32 0.0, %v1006
      %v1008 = vpop.f32.mrb[0].mxu0
      %v1009 = vpop.f32.mrb[0].mxu0
      %v1010 = vadd.f32 0.0, %v1009
      %v1011 = vpop.f32.mrb[0].mxu0
      %1012 = vmatprep.mubr.bf16.mxu0 0
      %1013 = vmatmul.mubr.bf16.gmra.mrb[0].mxu0 %v580
      %v1014 = vpop.f32.mrb[0].mxu0
      %v1015 = vadd.f32 0.0, %v1014
      %v1016 = vpop.f32.mrb[0].mxu0
      %v1017 = vpop.f32.mrb[0].mxu0
      %v1018 = vadd.f32 0.0, %v1017
      %v1019 = vpop.f32.mrb[0].mxu0
      %1020 = vmatprep.mubr.bf16.mxu0 0
      %1021 = vmatmul.mubr.bf16.gmra.mrb[0].mxu0 %v581
      %v1022 = vpop.f32.mrb[0].mxu0
      %v1023 = vadd.f32 0.0, %v1022
      %v1024 = vpop.f32.mrb[0].mxu0
      %v1025 = vpop.f32.mrb[0].mxu0
      %v1026 = vadd.f32 0.0, %v1025
      %v1027 = vpop.f32.mrb[0].mxu0
      %1028 = vmatprep.mubr.bf16.mxu0 0
      %1029 = vmatmul.mubr.bf16.gmra.mrb[0].mxu0 %v582
      %v1030 = vpop.f32.mrb[0].mxu0
      %v1031 = vadd.f32 0.0, %v1030
      %v1032 = vpop.f32.mrb[0].mxu0
      %v1033 = vpop.f32.mrb[0].mxu0
      %v1034 = vadd.f32 0.0, %v1033
      %v1035 = vpop.f32.mrb[0].mxu0
      %1036 = vmatprep.mubr.bf16.mxu0 0
      %1037 = vmatmul.mubr.bf16.gmra.mrb[0].mxu0 %v583
      %v1038 = vpop.f32.mrb[0].mxu0
      %v1039 = vadd.f32 0.0, %v1038
      %v1040 = vpop.f32.mrb[0].mxu0
      %v1041 = vpop.f32.mrb[0].mxu0
      %v1042 = vadd.f32 0.0, %v1041
      %v1043 = vpop.f32.mrb[0].mxu0
      %1044 = vmatprep.mubr.bf16.mxu0 0
      %1045 = vmatmul.mubr.bf16.gmra.mrb[0].mxu0 %v584
      %v1046 = vpop.f32.mrb[0].mxu0
      %v1047 = vadd.f32 0.0, %v1046
      %v1048 = vpop.f32.mrb[0].mxu0
      %v1049 = vpop.f32.mrb[0].mxu0
      %v1050 = vadd.f32 0.0, %v1049
      %v1051 = vpop.f32.mrb[0].mxu0
      %1052 = vmatprep.mubr.bf16.mxu0 0
      %1053 = vmatmul.mubr.bf16.gmra.mrb[0].mxu0 %v585
      %v1054 = vpop.f32.mrb[0].mxu0
      %v1055 = vadd.f32 0.0, %v1054
      %v1056 = vpop.f32.mrb[0].mxu0
      %v1057 = vpop.f32.mrb[0].mxu0
      %v1058 = vadd.f32 0.0, %v1057
      %v1059 = vpop.f32.mrb[0].mxu0
      %1060 = vmatprep.mubr.bf16.mxu0 0
      %1061 = vmatmul.mubr.bf16.gmra.mrb[0].mxu0 %v586
      %v1062 = vpop.f32.mrb[0].mxu0
      %v1063 = vadd.f32 0.0, %v1062
      %v1064 = vpop.f32.mrb[0].mxu0
      %v1065 = vpop.f32.mrb[0].mxu0
      %v1066 = vadd.f32 0.0, %v1065
      %v1067 = vpop.f32.mrb[0].mxu0
      %1068 = vmatprep.mubr.bf16.mxu0 0
      %1069 = vmatmul.mubr.bf16.gmra.mrb[0].mxu0 %v587
      %v1070 = vpop.f32.mrb[0].mxu0
      %v1071 = vadd.f32 0.0, %v1070
      %v1072 = vpop.f32.mrb[0].mxu0
      %v1073 = vpop.f32.mrb[0].mxu0
      %v1074 = vadd.f32 0.0, %v1073
      %v1075 = vpop.f32.mrb[0].mxu0
      %1076 = vmatprep.mubr.bf16.mxu0 0
      %1077 = vmatmul.mubr.bf16.gmra.mrb[0].mxu0 %v588
      %v1078 = vpop.f32.mrb[0].mxu0
      %v1079 = vadd.f32 0.0, %v1078
      %v1080 = vpop.f32.mrb[0].mxu0
      %v1081 = vpop.f32.mrb[0].mxu0
      %v1082 = vadd.f32 0.0, %v1081
      %v1083 = vpop.f32.mrb[0].mxu0
      %1084 = vmatprep.mubr.bf16.mxu0 0
      %1085 = vmatmul.mubr.bf16.gmra.mrb[0].mxu0 %v589
      %v1086 = vpop.f32.mrb[0].mxu0
      %v1087 = vadd.f32 0.0, %v1086
      %v1088 = vpop.f32.mrb[0].mxu0
      %v1089 = vpop.f32.mrb[0].mxu0
      %v1090 = vadd.f32 0.0, %v1089
      %v1091 = vpop.f32.mrb[0].mxu0
      %1092 = vmatprep.mubr.bf16.mxu0 0
      %1093 = vmatmul.mubr.bf16.gmra.mrb[0].mxu0 %v590
      %v1094 = vpop.f32.mrb[0].mxu0
      %v1095 = vadd.f32 0.0, %v1094
      %v1096 = vpop.f32.mrb[0].mxu0
      %v1097 = vpop.f32.mrb[0].mxu0
      %v1098 = vadd.f32 0.0, %v1097
      %v1099 = vpop.f32.mrb[0].mxu0
      %1100 = vmatprep.mubr.bf16.mxu0 0
      %1101 = vmatmul.mubr.bf16.gmra.mrb[0].mxu0 %v591
      %v1102 = vpop.f32.mrb[0].mxu0
      %v1103 = vadd.f32 0.0, %v1102
      %v1104 = vpop.f32.mrb[0].mxu0
      %v1105 = vpop.f32.mrb[0].mxu0
      %v1106 = vadd.f32 0.0, %v1105
      %v1107 = vpop.f32.mrb[0].mxu0
      %1108 = vmatprep.mubr.bf16.mxu0 0
      %1109 = vmatmul.mubr.bf16.gmra.mrb[0].mxu0 %v592
      %v1110 = vpop.f32.mrb[0].mxu0
      %v1111 = vadd.f32 0.0, %v1110
      %v1112 = vpop.f32.mrb[0].mxu0
      %v1113 = vpop.f32.mrb[0].mxu0
      %v1114 = vadd.f32 0.0, %v1113
      %v1115 = vpop.f32.mrb[0].mxu0
      %1116 = vmatprep.mubr.bf16.mxu0 0
      %1117 = vmatmul.mubr.bf16.gmra.mrb[0].mxu0 %v593
      %v1118 = vpop.f32.mrb[0].mxu0
      %v1119 = vadd.f32 0.0, %v1118
      %v1120 = vpop.f32.mrb[0].mxu0
      %v1121 = vpop.f32.mrb[0].mxu0
      %v1122 = vadd.f32 0.0, %v1121
      %v1123 = vpop.f32.mrb[0].mxu0
      %1124 = vmatprep.mubr.bf16.mxu0 0
      %1125 = vmatmul.mubr.bf16.gmra.mrb[0].mxu0 %v594
      %v1126 = vpop.f32.mrb[0].mxu0
      %v1127 = vadd.f32 0.0, %v1126
      %v1128 = vpop.f32.mrb[0].mxu0
      %v1129 = vpop.f32.mrb[0].mxu0
      %v1130 = vadd.f32 0.0, %v1129
      %v1131 = vpop.f32.mrb[0].mxu0
      %1132 = vmatprep.mubr.bf16.mxu0 0
      %1133 = vmatmul.mubr.bf16.gmra.mrb[0].mxu0 %v595
      %v1134 = vpop.f32.mrb[0].mxu0
      %v1135 = vadd.f32 0.0, %v1134
      %v1136 = vpop.f32.mrb[0].mxu0
      %v1137 = vpop.f32.mrb[0].mxu0
      %v1138 = vadd.f32 0.0, %v1137
      %v1139 = vpop.f32.mrb[0].mxu0
      %1140 = vmatprep.mubr.bf16.mxu0 0
      %1141 = vmatmul.mubr.bf16.gmra.mrb[0].mxu0 %v596
      %v1142 = vpop.f32.mrb[0].mxu0
      %v1143 = vadd.f32 0.0, %v1142
      %v1144 = vpop.f32.mrb[0].mxu0
      %v1145 = vpop.f32.mrb[0].mxu0
      %v1146 = vadd.f32 0.0, %v1145
      %v1147 = vpop.f32.mrb[0].mxu0
      %1148 = vmatprep.mubr.bf16.mxu0 0
      %1149 = vmatmul.mubr.bf16.gmra.mrb[0].mxu0 %v597
      %v1150 = vpop.f32.mrb[0].mxu0
      %v1151 = vadd.f32 0.0, %v1150
      %v1152 = vpop.f32.mrb[0].mxu0
      %v1153 = vpop.f32.mrb[0].mxu0
      %v1154 = vadd.f32 0.0, %v1153
      %v1155 = vpop.f32.mrb[0].mxu0
      %1156 = vmatprep.mubr.bf16.mxu0 0
      %1157 = vmatmul.mubr.bf16.gmra.mrb[0].mxu0 %v598
      %v1158 = vpop.f32.mrb[0].mxu0
      %v1159 = vadd.f32 0.0, %v1158
      %v1160 = vpop.f32.mrb[0].mxu0
      %v1161 = vpop.f32.mrb[0].mxu0
      %v1162 = vadd.f32 0.0, %v1161
      %v1163 = vpop.f32.mrb[0].mxu0
      %1164 = vmatprep.mubr.bf16.mxu0 0
      %1165 = vmatmul.mubr.bf16.gmra.mrb[0].mxu0 %v599
      %v1166 = vpop.f32.mrb[0].mxu0
      %v1167 = vadd.f32 0.0, %v1166
      %v1168 = vpop.f32.mrb[0].mxu0
      %v1169 = vpop.f32.mrb[0].mxu0
      %v1170 = vadd.f32 0.0, %v1169
      %v1171 = vpop.f32.mrb[0].mxu0
      %1172 = vmatprep.mubr.bf16.mxu0 0
      %1173 = vmatmul.mubr.bf16.gmra.mrb[0].mxu0 %v600
      %v1174 = vpop.f32.mrb[0].mxu0
      %v1175 = vadd.f32 0.0, %v1174
      %v1176 = vpop.f32.mrb[0].mxu0
      %v1177 = vpop.f32.mrb[0].mxu0
      %v1178 = vadd.f32 0.0, %v1177
      %v1179 = vpop.f32.mrb[0].mxu0
      %1180 = vmatprep.mubr.bf16.mxu0 0
      %1181 = vmatmul.mubr.bf16.gmra.mrb[0].mxu0 %v601
      %v1182 = vpop.f32.mrb[0].mxu0
      %v1183 = vadd.f32 0.0, %v1182
      %v1184 = vpop.f32.mrb[0].mxu0
      %v1185 = vpop.f32.mrb[0].mxu0
      %v1186 = vadd.f32 0.0, %v1185
      %v1187 = vpop.f32.mrb[0].mxu0
      %1188 = vmatprep.mubr.bf16.mxu0 0
      %1189 = vmatmul.mubr.bf16.gmra.mrb[0].mxu0 %v602
      %v1190 = vpop.f32.mrb[0].mxu0
      %v1191 = vadd.f32 0.0, %v1190
      %v1192 = vpop.f32.mrb[0].mxu0
      %v1193 = vpop.f32.mrb[0].mxu0
      %v1194 = vadd.f32 0.0, %v1193
      %v1195 = vpop.f32.mrb[0].mxu0
      %1196 = vmatprep.mubr.bf16.mxu0 0
      %1197 = vmatmul.mubr.bf16.gmra.mrb[0].mxu0 %v603
      %v1198 = vpop.f32.mrb[0].mxu0
      %v1199 = vadd.f32 0.0, %v1198
      %v1200 = vpop.f32.mrb[0].mxu0
      %v1201 = vpop.f32.mrb[0].mxu0
      %v1202 = vadd.f32 0.0, %v1201
      %v1203 = vpop.f32.mrb[0].mxu0
      %1204 = vmatprep.mubr.bf16.mxu0 0
      %1205 = vmatmul.mubr.bf16.gmra.mrb[0].mxu0 %v604
      %v1206 = vpop.f32.mrb[0].mxu0
      %v1207 = vadd.f32 0.0, %v1206
      %v1208 = vpop.f32.mrb[0].mxu0
      %v1209 = vpop.f32.mrb[0].mxu0
      %v1210 = vadd.f32 0.0, %v1209
      %v1211 = vpop.f32.mrb[0].mxu0
      %1212 = vmatprep.mubr.bf16.mxu0 0
      %1213 = vmatmul.mubr.bf16.gmra.mrb[0].mxu0 %v605
      %v1214 = vpop.f32.mrb[0].mxu0
      %v1215 = vadd.f32 0.0, %v1214
      %v1216 = vpop.f32.mrb[0].mxu0
      %v1217 = vpop.f32.mrb[0].mxu0
      %v1218 = vadd.f32 0.0, %v1217
      %v1219 = vpop.f32.mrb[0].mxu0
      %1220 = vmatprep.mubr.bf16.mxu0 0
      %1221 = vmatmul.mubr.bf16.gmra.mrb[0].mxu0 %v606
      %v1222 = vpop.f32.mrb[0].mxu0
      %v1223 = vadd.f32 0.0, %v1222
      %v1224 = vpop.f32.mrb[0].mxu0
      %v1225 = vpop.f32.mrb[0].mxu0
      %v1226 = vadd.f32 0.0, %v1225
      %v1227 = vpop.f32.mrb[0].mxu0
      %1228 = vmatprep.mubr.bf16.mxu0 0
      %1229 = vmatmul.mubr.bf16.gmra.mrb[0].mxu0 %v607
      %v1230 = vpop.f32.mrb[0].mxu0
      %v1231 = vadd.f32 0.0, %v1230
      %v1232 = vpop.f32.mrb[0].mxu0
      %v1233 = vpop.f32.mrb[0].mxu0
      %v1234 = vadd.f32 0.0, %v1233
      %v1235 = vpop.f32.mrb[0].mxu0
      %1236 = vmatprep.mubr.bf16.mxu0 0
      %1237 = vmatmul.mubr.bf16.gmra.mrb[0].mxu0 %v608
      %v1238 = vpop.f32.mrb[0].mxu0
      %v1239 = vadd.f32 0.0, %v1238
      %v1240 = vpop.f32.mrb[0].mxu0
      %v1241 = vpop.f32.mrb[0].mxu0
      %v1242 = vadd.f32 0.0, %v1241
      %v1243 = vpop.f32.mrb[0].mxu0
      %1244 = vmatprep.mubr.bf16.mxu0 0
      %1245 = vmatmul.mubr.bf16.gmra.mrb[0].mxu0 %v609
      %v1246 = vpop.f32.mrb[0].mxu0
      %v1247 = vadd.f32 0.0, %v1246
      %v1248 = vpop.f32.mrb[0].mxu0
      %v1249 = vpop.f32.mrb[0].mxu0
      %v1250 = vadd.f32 0.0, %v1249
      %v1251 = vpop.f32.mrb[0].mxu0
      %1252 = vmatprep.mubr.bf16.mxu0 0
      %1253 = vmatmul.mubr.bf16.gmra.mrb[0].mxu0 %v610
      %v1254 = vpop.f32.mrb[0].mxu0
      %v1255 = vadd.f32 0.0, %v1254
      %v1256 = vpop.f32.mrb[0].mxu0
      %v1257 = vpop.f32.mrb[0].mxu0
      %v1258 = vadd.f32 0.0, %v1257
      %v1259 = vpop.f32.mrb[0].mxu0
      %1260 = vmatprep.mubr.bf16.mxu0 0
      %1261 = vmatmul.mubr.bf16.gmra.mrb[0].mxu0 %v611
      %v1262 = vpop.f32.mrb[0].mxu0
      %v1263 = vadd.f32 0.0, %v1262
      %v1264 = vpop.f32.mrb[0].mxu0
      %v1265 = vpop.f32.mrb[0].mxu0
      %v1266 = vadd.f32 0.0, %v1265
      %v1267 = vpop.f32.mrb[0].mxu0
      %1268 = vdwg.mxu0
      %vm1269 = vcmp.ge.f32.partialorder %v759, 0.0
      %vm1270 = vcmp.ge.f32.partialorder %v762, 0.0
      %vm1271 = vcmp.ge.f32.partialorder %v767, 0.0
      %vm1272 = vcmp.ge.f32.partialorder %v770, 0.0
      %vm1273 = vcmp.ge.f32.partialorder %v775, 0.0
      %vm1274 = vcmp.ge.f32.partialorder %v778, 0.0
      %vm1275 = vcmp.ge.f32.partialorder %v783, 0.0
      %vm1276 = vcmp.ge.f32.partialorder %v786, 0.0
      %vm1277 = vcmp.ge.f32.partialorder %v791, 0.0
      %vm1278 = vcmp.ge.f32.partialorder %v794, 0.0
      %vm1279 = vcmp.ge.f32.partialorder %v799, 0.0
      %vm1280 = vcmp.ge.f32.partialorder %v802, 0.0
      %vm1281 = vcmp.ge.f32.partialorder %v807, 0.0
      %vm1282 = vcmp.ge.f32.partialorder %v810, 0.0
      %vm1283 = vcmp.ge.f32.partialorder %v815, 0.0
      %vm1284 = vcmp.ge.f32.partialorder %v818, 0.0
      %vm1285 = vcmp.ge.f32.partialorder %v823, 0.0
      %vm1286 = vcmp.ge.f32.partialorder %v826, 0.0
      %vm1287 = vcmp.ge.f32.partialorder %v831, 0.0
      %vm1288 = vcmp.ge.f32.partialorder %v834, 0.0
      %vm1289 = vcmp.ge.f32.partialorder %v839, 0.0
      %vm1290 = vcmp.ge.f32.partialorder %v842, 0.0
      %vm1291 = vcmp.ge.f32.partialorder %v847, 0.0
      %vm1292 = vcmp.ge.f32.partialorder %v850, 0.0
      %vm1293 = vcmp.ge.f32.partialorder %v855, 0.0
      %vm1294 = vcmp.ge.f32.partialorder %v858, 0.0
      %vm1295 = vcmp.ge.f32.partialorder %v863, 0.0
      %vm1296 = vcmp.ge.f32.partialorder %v866, 0.0
      %vm1297 = vcmp.ge.f32.partialorder %v871, 0.0
      %vm1298 = vcmp.ge.f32.partialorder %v874, 0.0
      %vm1299 = vcmp.ge.f32.partialorder %v879, 0.0
      %vm1300 = vcmp.ge.f32.partialorder %v882, 0.0
      %vm1301 = vcmp.ge.f32.partialorder %v887, 0.0
      %vm1302 = vcmp.ge.f32.partialorder %v890, 0.0
      %vm1303 = vcmp.ge.f32.partialorder %v895, 0.0
      %vm1304 = vcmp.ge.f32.partialorder %v898, 0.0
      %vm1305 = vcmp.ge.f32.partialorder %v903, 0.0
      %vm1306 = vcmp.ge.f32.partialorder %v906, 0.0
      %vm1307 = vcmp.ge.f32.partialorder %v911, 0.0
      %vm1308 = vcmp.ge.f32.partialorder %v914, 0.0
      %vm1309 = vcmp.ge.f32.partialorder %v919, 0.0
      %vm1310 = vcmp.ge.f32.partialorder %v922, 0.0
      %vm1311 = vcmp.ge.f32.partialorder %v927, 0.0
      %vm1312 = vcmp.ge.f32.partialorder %v930, 0.0
      %vm1313 = vcmp.ge.f32.partialorder %v935, 0.0
      %vm1314 = vcmp.ge.f32.partialorder %v938, 0.0
      %vm1315 = vcmp.ge.f32.partialorder %v943, 0.0
      %vm1316 = vcmp.ge.f32.partialorder %v946, 0.0
      %vm1317 = vcmp.ge.f32.partialorder %v951, 0.0
      %vm1318 = vcmp.ge.f32.partialorder %v954, 0.0
      %vm1319 = vcmp.ge.f32.partialorder %v959, 0.0
      %vm1320 = vcmp.ge.f32.partialorder %v962, 0.0
      %vm1321 = vcmp.ge.f32.partialorder %v967, 0.0
      %vm1322 = vcmp.ge.f32.partialorder %v970, 0.0
      %vm1323 = vcmp.ge.f32.partialorder %v975, 0.0
      %vm1324 = vcmp.ge.f32.partialorder %v978, 0.0
      %vm1325 = vcmp.ge.f32.partialorder %v983, 0.0
      %vm1326 = vcmp.ge.f32.partialorder %v986, 0.0
      %vm1327 = vcmp.ge.f32.partialorder %v991, 0.0
      %vm1328 = vcmp.ge.f32.partialorder %v994, 0.0
      %vm1329 = vcmp.ge.f32.partialorder %v999, 0.0
      %vm1330 = vcmp.ge.f32.partialorder %v1002, 0.0
      %vm1331 = vcmp.ge.f32.partialorder %v1007, 0.0
      %vm1332 = vcmp.ge.f32.partialorder %v1010, 0.0
      %vm1333 = vcmp.ge.f32.partialorder %v1015, 0.0
      %vm1334 = vcmp.ge.f32.partialorder %v1018, 0.0
      %vm1335 = vcmp.ge.f32.partialorder %v1023, 0.0
      %vm1336 = vcmp.ge.f32.partialorder %v1026, 0.0
      %vm1337 = vcmp.ge.f32.partialorder %v1031, 0.0
      %vm1338 = vcmp.ge.f32.partialorder %v1034, 0.0
      %vm1339 = vcmp.ge.f32.partialorder %v1039, 0.0
      %vm1340 = vcmp.ge.f32.partialorder %v1042, 0.0
      %vm1341 = vcmp.ge.f32.partialorder %v1047, 0.0
      %vm1342 = vcmp.ge.f32.partialorder %v1050, 0.0
      %vm1343 = vcmp.ge.f32.partialorder %v1055, 0.0
      %vm1344 = vcmp.ge.f32.partialorder %v1058, 0.0
      %vm1345 = vcmp.ge.f32.partialorder %v1063, 0.0
      %vm1346 = vcmp.ge.f32.partialorder %v1066, 0.0
      %vm1347 = vcmp.ge.f32.partialorder %v1071, 0.0
      %vm1348 = vcmp.ge.f32.partialorder %v1074, 0.0
      %vm1349 = vcmp.ge.f32.partialorder %v1079, 0.0
      %vm1350 = vcmp.ge.f32.partialorder %v1082, 0.0
      %vm1351 = vcmp.ge.f32.partialorder %v1087, 0.0
      %vm1352 = vcmp.ge.f32.partialorder %v1090, 0.0
      %vm1353 = vcmp.ge.f32.partialorder %v1095, 0.0
      %vm1354 = vcmp.ge.f32.partialorder %v1098, 0.0
      %vm1355 = vcmp.ge.f32.partialorder %v1103, 0.0
      %vm1356 = vcmp.ge.f32.partialorder %v1106, 0.0
      %vm1357 = vcmp.ge.f32.partialorder %v1111, 0.0
      %vm1358 = vcmp.ge.f32.partialorder %v1114, 0.0
      %vm1359 = vcmp.ge.f32.partialorder %v1119, 0.0
      %vm1360 = vcmp.ge.f32.partialorder %v1122, 0.0
      %vm1361 = vcmp.ge.f32.partialorder %v1127, 0.0
      %vm1362 = vcmp.ge.f32.partialorder %v1130, 0.0
      %vm1363 = vcmp.ge.f32.partialorder %v1135, 0.0
      %vm1364 = vcmp.ge.f32.partialorder %v1138, 0.0
      %vm1365 = vcmp.ge.f32.partialorder %v1143, 0.0
      %vm1366 = vcmp.ge.f32.partialorder %v1146, 0.0
      %vm1367 = vcmp.ge.f32.partialorder %v1151, 0.0
      %vm1368 = vcmp.ge.f32.partialorder %v1154, 0.0
      %vm1369 = vcmp.ge.f32.partialorder %v1159, 0.0
      %vm1370 = vcmp.ge.f32.partialorder %v1162, 0.0
      %vm1371 = vcmp.ge.f32.partialorder %v1167, 0.0
      %vm1372 = vcmp.ge.f32.partialorder %v1170, 0.0
      %vm1373 = vcmp.ge.f32.partialorder %v1175, 0.0
      %vm1374 = vcmp.ge.f32.partialorder %v1178, 0.0
      %vm1375 = vcmp.ge.f32.partialorder %v1183, 0.0
      %vm1376 = vcmp.ge.f32.partialorder %v1186, 0.0
      %vm1377 = vcmp.ge.f32.partialorder %v1191, 0.0
      %vm1378 = vcmp.ge.f32.partialorder %v1194, 0.0
      %vm1379 = vcmp.ge.f32.partialorder %v1199, 0.0
      %vm1380 = vcmp.ge.f32.partialorder %v1202, 0.0
      %vm1381 = vcmp.ge.f32.partialorder %v1207, 0.0
      %vm1382 = vcmp.ge.f32.partialorder %v1210, 0.0
      %vm1383 = vcmp.ge.f32.partialorder %v1215, 0.0
      %vm1384 = vcmp.ge.f32.partialorder %v1218, 0.0
      %vm1385 = vcmp.ge.f32.partialorder %v1223, 0.0
      %vm1386 = vcmp.ge.f32.partialorder %v1226, 0.0
      %vm1387 = vcmp.ge.f32.partialorder %v1231, 0.0
      %vm1388 = vcmp.ge.f32.partialorder %v1234, 0.0
      %vm1389 = vcmp.ge.f32.partialorder %v1239, 0.0
      %vm1390 = vcmp.ge.f32.partialorder %v1242, 0.0
      %vm1391 = vcmp.ge.f32.partialorder %v1247, 0.0
      %vm1392 = vcmp.ge.f32.partialorder %v1250, 0.0
      %vm1393 = vcmp.ge.f32.partialorder %v1255, 0.0
      %vm1394 = vcmp.ge.f32.partialorder %v1258, 0.0
      %vm1395 = vcmp.ge.f32.partialorder %v1263, 0.0
      %vm1396 = vcmp.ge.f32.partialorder %v1266, 0.0
      %v1397 = vmul.f32 %v759, 0.2
      %v1398 = vmul.f32 %v762, 0.2
      %v1399 = vmul.f32 %v767, 0.2
      %v1400 = vmul.f32 %v770, 0.2
      %v1401 = vmul.f32 %v775, 0.2
      %v1402 = vmul.f32 %v778, 0.2
      %v1403 = vmul.f32 %v783, 0.2
      %v1404 = vmul.f32 %v786, 0.2
      %v1405 = vmul.f32 %v791, 0.2
      %v1406 = vmul.f32 %v794, 0.2
      %v1407 = vmul.f32 %v799, 0.2
      %v1408 = vmul.f32 %v802, 0.2
      %v1409 = vmul.f32 %v807, 0.2
      %v1410 = vmul.f32 %v810, 0.2
      %v1411 = vmul.f32 %v815, 0.2
      %v1412 = vmul.f32 %v818, 0.2
      %v1413 = vmul.f32 %v823, 0.2
      %v1414 = vmul.f32 %v826, 0.2
      %v1415 = vmul.f32 %v831, 0.2
      %v1416 = vmul.f32 %v834, 0.2
      %v1417 = vmul.f32 %v839, 0.2
      %v1418 = vmul.f32 %v842, 0.2
      %v1419 = vmul.f32 %v847, 0.2
      %v1420 = vmul.f32 %v850, 0.2
      %v1421 = vmul.f32 %v855, 0.2
      %v1422 = vmul.f32 %v858, 0.2
      %v1423 = vmul.f32 %v863, 0.2
      %v1424 = vmul.f32 %v866, 0.2
      %v1425 = vmul.f32 %v871, 0.2
      %v1426 = vmul.f32 %v874, 0.2
      %v1427 = vmul.f32 %v879, 0.2
      %v1428 = vmul.f32 %v882, 0.2
      %v1429 = vmul.f32 %v887, 0.2
      %v1430 = vmul.f32 %v890, 0.2
      %v1431 = vmul.f32 %v895, 0.2
      %v1432 = vmul.f32 %v898, 0.2
      %v1433 = vmul.f32 %v903, 0.2
      %v1434 = vmul.f32 %v906, 0.2
      %v1435 = vmul.f32 %v911, 0.2
      %v1436 = vmul.f32 %v914, 0.2
      %v1437 = vmul.f32 %v919, 0.2
      %v1438 = vmul.f32 %v922, 0.2
      %v1439 = vmul.f32 %v927, 0.2
      %v1440 = vmul.f32 %v930, 0.2
      %v1441 = vmul.f32 %v935, 0.2
      %v1442 = vmul.f32 %v938, 0.2
      %v1443 = vmul.f32 %v943, 0.2
      %v1444 = vmul.f32 %v946, 0.2
      %v1445 = vmul.f32 %v951, 0.2
      %v1446 = vmul.f32 %v954, 0.2
      %v1447 = vmul.f32 %v959, 0.2
      %v1448 = vmul.f32 %v962, 0.2
      %v1449 = vmul.f32 %v967, 0.2
      %v1450 = vmul.f32 %v970, 0.2
      %v1451 = vmul.f32 %v975, 0.2
      %v1452 = vmul.f32 %v978, 0.2
      %v1453 = vmul.f32 %v983, 0.2
      %v1454 = vmul.f32 %v986, 0.2
      %v1455 = vmul.f32 %v991, 0.2
      %v1456 = vmul.f32 %v994, 0.2
      %v1457 = vmul.f32 %v999, 0.2
      %v1458 = vmul.f32 %v1002, 0.2
      %v1459 = vmul.f32 %v1007, 0.2
      %v1460 = vmul.f32 %v1010, 0.2
      %v1461 = vmul.f32 %v1015, 0.2
      %v1462 = vmul.f32 %v1018, 0.2
      %v1463 = vmul.f32 %v1023, 0.2
      %v1464 = vmul.f32 %v1026, 0.2
      %v1465 = vmul.f32 %v1031, 0.2
      %v1466 = vmul.f32 %v1034, 0.2
      %v1467 = vmul.f32 %v1039, 0.2
      %v1468 = vmul.f32 %v1042, 0.2
      %v1469 = vmul.f32 %v1047, 0.2
      %v1470 = vmul.f32 %v1050, 0.2
      %v1471 = vmul.f32 %v1055, 0.2
      %v1472 = vmul.f32 %v1058, 0.2
      %v1473 = vmul.f32 %v1063, 0.2
      %v1474 = vmul.f32 %v1066, 0.2
      %v1475 = vmul.f32 %v1071, 0.2
      %v1476 = vmul.f32 %v1074, 0.2
      %v1477 = vmul.f32 %v1079, 0.2
      %v1478 = vmul.f32 %v1082, 0.2
      %v1479 = vmul.f32 %v1087, 0.2
      %v1480 = vmul.f32 %v1090, 0.2
      %v1481 = vmul.f32 %v1095, 0.2
      %v1482 = vmul.f32 %v1098, 0.2
      %v1483 = vmul.f32 %v1103, 0.2
      %v1484 = vmul.f32 %v1106, 0.2
      %v1485 = vmul.f32 %v1111, 0.2
      %v1486 = vmul.f32 %v1114, 0.2
      %v1487 = vmul.f32 %v1119, 0.2
      %v1488 = vmul.f32 %v1122, 0.2
      %v1489 = vmul.f32 %v1127, 0.2
      %v1490 = vmul.f32 %v1130, 0.2
      %v1491 = vmul.f32 %v1135, 0.2
      %v1492 = vmul.f32 %v1138, 0.2
      %v1493 = vmul.f32 %v1143, 0.2
      %v1494 = vmul.f32 %v1146, 0.2
      %v1495 = vmul.f32 %v1151, 0.2
      %v1496 = vmul.f32 %v1154, 0.2
      %v1497 = vmul.f32 %v1159, 0.2
      %v1498 = vmul.f32 %v1162, 0.2
      %v1499 = vmul.f32 %v1167, 0.2
      %v1500 = vmul.f32 %v1170, 0.2
      %v1501 = vmul.f32 %v1175, 0.2
      %v1502 = vmul.f32 %v1178, 0.2
      %v1503 = vmul.f32 %v1183, 0.2
      %v1504 = vmul.f32 %v1186, 0.2
      %v1505 = vmul.f32 %v1191, 0.2
      %v1506 = vmul.f32 %v1194, 0.2
      %v1507 = vmul.f32 %v1199, 0.2
      %v1508 = vmul.f32 %v1202, 0.2
      %v1509 = vmul.f32 %v1207, 0.2
      %v1510 = vmul.f32 %v1210, 0.2
      %v1511 = vmul.f32 %v1215, 0.2
      %v1512 = vmul.f32 %v1218, 0.2
      %v1513 = vmul.f32 %v1223, 0.2
      %v1514 = vmul.f32 %v1226, 0.2
      %v1515 = vmul.f32 %v1231, 0.2
      %v1516 = vmul.f32 %v1234, 0.2
      %v1517 = vmul.f32 %v1239, 0.2
      %v1518 = vmul.f32 %v1242, 0.2
      %v1519 = vmul.f32 %v1247, 0.2
      %v1520 = vmul.f32 %v1250, 0.2
      %v1521 = vmul.f32 %v1255, 0.2
      %v1522 = vmul.f32 %v1258, 0.2
      %v1523 = vmul.f32 %v1263, 0.2
      %v1524 = vmul.f32 %v1266, 0.2
      %v1525 = vsel %vm1269, %v759, %v1397
      %v1526 = vsel %vm1270, %v762, %v1398
      %v1527 = vsel %vm1271, %v767, %v1399
      %v1528 = vsel %vm1272, %v770, %v1400
      %v1529 = vsel %vm1273, %v775, %v1401
      %v1530 = vsel %vm1274, %v778, %v1402
      %v1531 = vsel %vm1275, %v783, %v1403
      %v1532 = vsel %vm1276, %v786, %v1404
      %v1533 = vsel %vm1277, %v791, %v1405
      %v1534 = vsel %vm1278, %v794, %v1406
      %v1535 = vsel %vm1279, %v799, %v1407
      %v1536 = vsel %vm1280, %v802, %v1408
      %v1537 = vsel %vm1281, %v807, %v1409
      %v1538 = vsel %vm1282, %v810, %v1410
      %v1539 = vsel %vm1283, %v815, %v1411
      %v1540 = vsel %vm1284, %v818, %v1412
      %v1541 = vsel %vm1285, %v823, %v1413
      %v1542 = vsel %vm1286, %v826, %v1414
      %v1543 = vsel %vm1287, %v831, %v1415
      %v1544 = vsel %vm1288, %v834, %v1416
      %v1545 = vsel %vm1289, %v839, %v1417
      %v1546 = vsel %vm1290, %v842, %v1418
      %v1547 = vsel %vm1291, %v847, %v1419
      %v1548 = vsel %vm1292, %v850, %v1420
      %v1549 = vsel %vm1293, %v855, %v1421
      %v1550 = vsel %vm1294, %v858, %v1422
      %v1551 = vsel %vm1295, %v863, %v1423
      %v1552 = vsel %vm1296, %v866, %v1424
      %v1553 = vsel %vm1297, %v871, %v1425
      %v1554 = vsel %vm1298, %v874, %v1426
      %v1555 = vsel %vm1299, %v879, %v1427
      %v1556 = vsel %vm1300, %v882, %v1428
      %v1557 = vsel %vm1301, %v887, %v1429
      %v1558 = vsel %vm1302, %v890, %v1430
      %v1559 = vsel %vm1303, %v895, %v1431
      %v1560 = vsel %vm1304, %v898, %v1432
      %v1561 = vsel %vm1305, %v903, %v1433
      %v1562 = vsel %vm1306, %v906, %v1434
      %v1563 = vsel %vm1307, %v911, %v1435
      %v1564 = vsel %vm1308, %v914, %v1436
      %v1565 = vsel %vm1309, %v919, %v1437
      %v1566 = vsel %vm1310, %v922, %v1438
      %v1567 = vsel %vm1311, %v927, %v1439
      %v1568 = vsel %vm1312, %v930, %v1440
      %v1569 = vsel %vm1313, %v935, %v1441
      %v1570 = vsel %vm1314, %v938, %v1442
      %v1571 = vsel %vm1315, %v943, %v1443
      %v1572 = vsel %vm1316, %v946, %v1444
      %v1573 = vsel %vm1317, %v951, %v1445
      %v1574 = vsel %vm1318, %v954, %v1446
      %v1575 = vsel %vm1319, %v959, %v1447
      %v1576 = vsel %vm1320, %v962, %v1448
      %v1577 = vsel %vm1321, %v967, %v1449
      %v1578 = vsel %vm1322, %v970, %v1450
      %v1579 = vsel %vm1323, %v975, %v1451
      %v1580 = vsel %vm1324, %v978, %v1452
      %v1581 = vsel %vm1325, %v983, %v1453
      %v1582 = vsel %vm1326, %v986, %v1454
      %v1583 = vsel %vm1327, %v991, %v1455
      %v1584 = vsel %vm1328, %v994, %v1456
      %v1585 = vsel %vm1329, %v999, %v1457
      %v1586 = vsel %vm1330, %v1002, %v1458
      %v1587 = vsel %vm1331, %v1007, %v1459
      %v1588 = vsel %vm1332, %v1010, %v1460
      %v1589 = vsel %vm1333, %v1015, %v1461
      %v1590 = vsel %vm1334, %v1018, %v1462
      %v1591 = vsel %vm1335, %v1023, %v1463
      %v1592 = vsel %vm1336, %v1026, %v1464
      %v1593 = vsel %vm1337, %v1031, %v1465
      %v1594 = vsel %vm1338, %v1034, %v1466
      %v1595 = vsel %vm1339, %v1039, %v1467
      %v1596 = vsel %vm1340, %v1042, %v1468
      %v1597 = vsel %vm1341, %v1047, %v1469
      %v1598 = vsel %vm1342, %v1050, %v1470
      %v1599 = vsel %vm1343, %v1055, %v1471
      %v1600 = vsel %vm1344, %v1058, %v1472
      %v1601 = vsel %vm1345, %v1063, %v1473
      %v1602 = vsel %vm1346, %v1066, %v1474
      %v1603 = vsel %vm1347, %v1071, %v1475
      %v1604 = vsel %vm1348, %v1074, %v1476
      %v1605 = vsel %vm1349, %v1079, %v1477
      %v1606 = vsel %vm1350, %v1082, %v1478
      %v1607 = vsel %vm1351, %v1087, %v1479
      %v1608 = vsel %vm1352, %v1090, %v1480
      %v1609 = vsel %vm1353, %v1095, %v1481
      %v1610 = vsel %vm1354, %v1098, %v1482
      %v1611 = vsel %vm1355, %v1103, %v1483
      %v1612 = vsel %vm1356, %v1106, %v1484
      %v1613 = vsel %vm1357, %v1111, %v1485
      %v1614 = vsel %vm1358, %v1114, %v1486
      %v1615 = vsel %vm1359, %v1119, %v1487
      %v1616 = vsel %vm1360, %v1122, %v1488
      %v1617 = vsel %vm1361, %v1127, %v1489
      %v1618 = vsel %vm1362, %v1130, %v1490
      %v1619 = vsel %vm1363, %v1135, %v1491
      %v1620 = vsel %vm1364, %v1138, %v1492
      %v1621 = vsel %vm1365, %v1143, %v1493
      %v1622 = vsel %vm1366, %v1146, %v1494
      %v1623 = vsel %vm1367, %v1151, %v1495
      %v1624 = vsel %vm1368, %v1154, %v1496
      %v1625 = vsel %vm1369, %v1159, %v1497
      %v1626 = vsel %vm1370, %v1162, %v1498
      %v1627 = vsel %vm1371, %v1167, %v1499
      %v1628 = vsel %vm1372, %v1170, %v1500
      %v1629 = vsel %vm1373, %v1175, %v1501
      %v1630 = vsel %vm1374, %v1178, %v1502
      %v1631 = vsel %vm1375, %v1183, %v1503
      %v1632 = vsel %vm1376, %v1186, %v1504
      %v1633 = vsel %vm1377, %v1191, %v1505
      %v1634 = vsel %vm1378, %v1194, %v1506
      %v1635 = vsel %vm1379, %v1199, %v1507
      %v1636 = vsel %vm1380, %v1202, %v1508
      %v1637 = vsel %vm1381, %v1207, %v1509
      %v1638 = vsel %vm1382, %v1210, %v1510
      %v1639 = vsel %vm1383, %v1215, %v1511
      %v1640 = vsel %vm1384, %v1218, %v1512
      %v1641 = vsel %vm1385, %v1223, %v1513
      %v1642 = vsel %vm1386, %v1226, %v1514
      %v1643 = vsel %vm1387, %v1231, %v1515
      %v1644 = vsel %vm1388, %v1234, %v1516
      %v1645 = vsel %vm1389, %v1239, %v1517
      %v1646 = vsel %vm1390, %v1242, %v1518
      %v1647 = vsel %vm1391, %v1247, %v1519
      %v1648 = vsel %vm1392, %v1250, %v1520
      %v1649 = vsel %vm1393, %v1255, %v1521
      %v1650 = vsel %vm1394, %v1258, %v1522
      %v1651 = vsel %vm1395, %v1263, %v1523
      %v1652 = vsel %vm1396, %v1266, %v1524
      %v1653 = vpack.c.bf16 %v1526, %v1525
      %v1654 = vpack.c.bf16 %v1528, %v1527
      %v1655 = vpack.c.bf16 %v1530, %v1529
      %v1656 = vpack.c.bf16 %v1532, %v1531
      %v1657 = vpack.c.bf16 %v1534, %v1533
      %v1658 = vpack.c.bf16 %v1536, %v1535
      %v1659 = vpack.c.bf16 %v1538, %v1537
      %v1660 = vpack.c.bf16 %v1540, %v1539
      %v1661 = vpack.c.bf16 %v1542, %v1541
      %v1662 = vpack.c.bf16 %v1544, %v1543
      %v1663 = vpack.c.bf16 %v1546, %v1545
      %v1664 = vpack.c.bf16 %v1548, %v1547
      %v1665 = vpack.c.bf16 %v1550, %v1549
      %v1666 = vpack.c.bf16 %v1552, %v1551
      %v1667 = vpack.c.bf16 %v1554, %v1553
      %v1668 = vpack.c.bf16 %v1556, %v1555
      %v1669 = vpack.c.bf16 %v1558, %v1557
      %v1670 = vpack.c.bf16 %v1560, %v1559
      %v1671 = vpack.c.bf16 %v1562, %v1561
      %v1672 = vpack.c.bf16 %v1564, %v1563
      %v1673 = vpack.c.bf16 %v1566, %v1565
      %v1674 = vpack.c.bf16 %v1568, %v1567
      %v1675 = vpack.c.bf16 %v1570, %v1569
      %v1676 = vpack.c.bf16 %v1572, %v1571
      %v1677 = vpack.c.bf16 %v1574, %v1573
      %v1678 = vpack.c.bf16 %v1576, %v1575
      %v1679 = vpack.c.bf16 %v1578, %v1577
      %v1680 = vpack.c.bf16 %v1580, %v1579
      %v1681 = vpack.c.bf16 %v1582, %v1581
      %v1682 = vpack.c.bf16 %v1584, %v1583
      %v1683 = vpack.c.bf16 %v1586, %v1585
      %v1684 = vpack.c.bf16 %v1588, %v1587
      %v1685 = vpack.c.bf16 %v1590, %v1589
      %v1686 = vpack.c.bf16 %v1592, %v1591
      %v1687 = vpack.c.bf16 %v1594, %v1593
      %v1688 = vpack.c.bf16 %v1596, %v1595
      %v1689 = vpack.c.bf16 %v1598, %v1597
      %v1690 = vpack.c.bf16 %v1600, %v1599
      %v1691 = vpack.c.bf16 %v1602, %v1601
      %v1692 = vpack.c.bf16 %v1604, %v1603
      %v1693 = vpack.c.bf16 %v1606, %v1605
      %v1694 = vpack.c.bf16 %v1608, %v1607
      %v1695 = vpack.c.bf16 %v1610, %v1609
      %v1696 = vpack.c.bf16 %v1612, %v1611
      %v1697 = vpack.c.bf16 %v1614, %v1613
      %v1698 = vpack.c.bf16 %v1616, %v1615
      %v1699 = vpack.c.bf16 %v1618, %v1617
      %v1700 = vpack.c.bf16 %v1620, %v1619
      %v1701 = vpack.c.bf16 %v1622, %v1621
      %v1702 = vpack.c.bf16 %v1624, %v1623
      %v1703 = vpack.c.bf16 %v1626, %v1625
      %v1704 = vpack.c.bf16 %v1628, %v1627
      %v1705 = vpack.c.bf16 %v1630, %v1629
      %v1706 = vpack.c.bf16 %v1632, %v1631
      %v1707 = vpack.c.bf16 %v1634, %v1633
      %v1708 = vpack.c.bf16 %v1636, %v1635
      %v1709 = vpack.c.bf16 %v1638, %v1637
      %v1710 = vpack.c.bf16 %v1640, %v1639
      %v1711 = vpack.c.bf16 %v1642, %v1641
      %v1712 = vpack.c.bf16 %v1644, %v1643
      %v1713 = vpack.c.bf16 %v1646, %v1645
      %v1714 = vpack.c.bf16 %v1648, %v1647
      %v1715 = vpack.c.bf16 %v1650, %v1649
      %v1716 = vpack.c.bf16 %v1652, %v1651
      %v1781 = vunpack.c.l.b16 %v1653
      %v1782 = vunpack.c.h.b16 %v1653
      %v1783 = vunpack.c.l.b16 %v1654
      %v1784 = vunpack.c.h.b16 %v1654
      %v1785 = vunpack.c.l.b16 %v1655
      %v1786 = vunpack.c.h.b16 %v1655
      %v1787 = vunpack.c.l.b16 %v1656
      %v1788 = vunpack.c.h.b16 %v1656
      %v1789 = vunpack.c.l.b16 %v1657
      %v1790 = vunpack.c.h.b16 %v1657
      %v1791 = vunpack.c.l.b16 %v1658
      %v1792 = vunpack.c.h.b16 %v1658
      %v1793 = vunpack.c.l.b16 %v1659
      %v1794 = vunpack.c.h.b16 %v1659
      %v1795 = vunpack.c.l.b16 %v1660
      %v1796 = vunpack.c.h.b16 %v1660
      %v1797 = vunpack.c.l.b16 %v1661
      %v1798 = vunpack.c.h.b16 %v1661
      %v1799 = vunpack.c.l.b16 %v1662
      %v1800 = vunpack.c.h.b16 %v1662
      %v1801 = vunpack.c.l.b16 %v1663
      %v1802 = vunpack.c.h.b16 %v1663
      %v1803 = vunpack.c.l.b16 %v1664
      %v1804 = vunpack.c.h.b16 %v1664
      %v1805 = vunpack.c.l.b16 %v1665
      %v1806 = vunpack.c.h.b16 %v1665
      %v1807 = vunpack.c.l.b16 %v1666
      %v1808 = vunpack.c.h.b16 %v1666
      %v1809 = vunpack.c.l.b16 %v1667
      %v1810 = vunpack.c.h.b16 %v1667
      %v1811 = vunpack.c.l.b16 %v1668
      %v1812 = vunpack.c.h.b16 %v1668
      %v1813 = vunpack.c.l.b16 %v1669
      %v1814 = vunpack.c.h.b16 %v1669
      %v1815 = vunpack.c.l.b16 %v1670
      %v1816 = vunpack.c.h.b16 %v1670
      %v1817 = vunpack.c.l.b16 %v1671
      %v1818 = vunpack.c.h.b16 %v1671
      %v1819 = vunpack.c.l.b16 %v1672
      %v1820 = vunpack.c.h.b16 %v1672
      %v1821 = vunpack.c.l.b16 %v1673
      %v1822 = vunpack.c.h.b16 %v1673
      %v1823 = vunpack.c.l.b16 %v1674
      %v1824 = vunpack.c.h.b16 %v1674
      %v1825 = vunpack.c.l.b16 %v1675
      %v1826 = vunpack.c.h.b16 %v1675
      %v1827 = vunpack.c.l.b16 %v1676
      %v1828 = vunpack.c.h.b16 %v1676
      %v1829 = vunpack.c.l.b16 %v1677
      %v1830 = vunpack.c.h.b16 %v1677
      %v1831 = vunpack.c.l.b16 %v1678
      %v1832 = vunpack.c.h.b16 %v1678
      %v1833 = vunpack.c.l.b16 %v1679
      %v1834 = vunpack.c.h.b16 %v1679
      %v1835 = vunpack.c.l.b16 %v1680
      %v1836 = vunpack.c.h.b16 %v1680
      %v1837 = vunpack.c.l.b16 %v1681
      %v1838 = vunpack.c.h.b16 %v1681
      %v1839 = vunpack.c.l.b16 %v1682
      %v1840 = vunpack.c.h.b16 %v1682
      %v1841 = vunpack.c.l.b16 %v1683
      %v1842 = vunpack.c.h.b16 %v1683
      %v1843 = vunpack.c.l.b16 %v1684
      %v1844 = vunpack.c.h.b16 %v1684
      %v1845 = vunpack.c.l.b16 %v1685
      %v1846 = vunpack.c.h.b16 %v1685
      %v1847 = vunpack.c.l.b16 %v1686
      %v1848 = vunpack.c.h.b16 %v1686
      %v1849 = vunpack.c.l.b16 %v1687
      %v1850 = vunpack.c.h.b16 %v1687
      %v1851 = vunpack.c.l.b16 %v1688
      %v1852 = vunpack.c.h.b16 %v1688
      %v1853 = vunpack.c.l.b16 %v1689
      %v1854 = vunpack.c.h.b16 %v1689
      %v1855 = vunpack.c.l.b16 %v1690
      %v1856 = vunpack.c.h.b16 %v1690
      %v1857 = vunpack.c.l.b16 %v1691
      %v1858 = vunpack.c.h.b16 %v1691
      %v1859 = vunpack.c.l.b16 %v1692
      %v1860 = vunpack.c.h.b16 %v1692
      %v1861 = vunpack.c.l.b16 %v1693
      %v1862 = vunpack.c.h.b16 %v1693
      %v1863 = vunpack.c.l.b16 %v1694
      %v1864 = vunpack.c.h.b16 %v1694
      %v1865 = vunpack.c.l.b16 %v1695
      %v1866 = vunpack.c.h.b16 %v1695
      %v1867 = vunpack.c.l.b16 %v1696
      %v1868 = vunpack.c.h.b16 %v1696
      %v1869 = vunpack.c.l.b16 %v1697
      %v1870 = vunpack.c.h.b16 %v1697
      %v1871 = vunpack.c.l.b16 %v1698
      %v1872 = vunpack.c.h.b16 %v1698
      %v1873 = vunpack.c.l.b16 %v1699
      %v1874 = vunpack.c.h.b16 %v1699
      %v1875 = vunpack.c.l.b16 %v1700
      %v1876 = vunpack.c.h.b16 %v1700
      %v1877 = vunpack.c.l.b16 %v1701
      %v1878 = vunpack.c.h.b16 %v1701
      %v1879 = vunpack.c.l.b16 %v1702
      %v1880 = vunpack.c.h.b16 %v1702
      %v1881 = vunpack.c.l.b16 %v1703
      %v1882 = vunpack.c.h.b16 %v1703
      %v1883 = vunpack.c.l.b16 %v1704
      %v1884 = vunpack.c.h.b16 %v1704
      %v1885 = vunpack.c.l.b16 %v1705
      %v1886 = vunpack.c.h.b16 %v1705
      %v1887 = vunpack.c.l.b16 %v1706
      %v1888 = vunpack.c.h.b16 %v1706
      %v1889 = vunpack.c.l.b16 %v1707
      %v1890 = vunpack.c.h.b16 %v1707
      %v1891 = vunpack.c.l.b16 %v1708
      %v1892 = vunpack.c.h.b16 %v1708
      %v1893 = vunpack.c.l.b16 %v1709
      %v1894 = vunpack.c.h.b16 %v1709
      %v1895 = vunpack.c.l.b16 %v1710
      %v1896 = vunpack.c.h.b16 %v1710
      %v1897 = vunpack.c.l.b16 %v1711
      %v1898 = vunpack.c.h.b16 %v1711
      %v1899 = vunpack.c.l.b16 %v1712
      %v1900 = vunpack.c.h.b16 %v1712
      %v1901 = vunpack.c.l.b16 %v1713
      %v1902 = vunpack.c.h.b16 %v1713
      %v1903 = vunpack.c.l.b16 %v1714
      %v1904 = vunpack.c.h.b16 %v1714
      %v1905 = vunpack.c.l.b16 %v1715
      %v1906 = vunpack.c.h.b16 %v1715
      %v1907 = vunpack.c.l.b16 %v1716
      %v1908 = vunpack.c.h.b16 %v1716
      %v1909 = vpack.c.b16 %v1781, %v1781
      %v1910 = vpack.c.b16 %v1782, %v1782
      %v1911 = vpack.c.b16 %v1783, %v1783
      %v1912 = vpack.c.b16 %v1784, %v1784
      %v1913 = vpack.c.b16 %v1785, %v1785
      %v1914 = vpack.c.b16 %v1786, %v1786
      %v1915 = vpack.c.b16 %v1787, %v1787
      %v1916 = vpack.c.b16 %v1788, %v1788
      %v1917 = vpack.c.b16 %v1789, %v1789
      %v1918 = vpack.c.b16 %v1790, %v1790
      %v1919 = vpack.c.b16 %v1791, %v1791
      %v1920 = vpack.c.b16 %v1792, %v1792
      %v1921 = vpack.c.b16 %v1793, %v1793
      %v1922 = vpack.c.b16 %v1794, %v1794
      %v1923 = vpack.c.b16 %v1795, %v1795
      %v1924 = vpack.c.b16 %v1796, %v1796
      %v1925 = vpack.c.b16 %v1797, %v1797
      %v1926 = vpack.c.b16 %v1798, %v1798
      %v1927 = vpack.c.b16 %v1799, %v1799
      %v1928 = vpack.c.b16 %v1800, %v1800
      %v1929 = vpack.c.b16 %v1801, %v1801
      %v1930 = vpack.c.b16 %v1802, %v1802
      %v1931 = vpack.c.b16 %v1803, %v1803
      %v1932 = vpack.c.b16 %v1804, %v1804
      %v1933 = vpack.c.b16 %v1805, %v1805
      %v1934 = vpack.c.b16 %v1806, %v1806
      %v1935 = vpack.c.b16 %v1807, %v1807
      %v1936 = vpack.c.b16 %v1808, %v1808
      %v1937 = vpack.c.b16 %v1809, %v1809
      %v1938 = vpack.c.b16 %v1810, %v1810
      %v1939 = vpack.c.b16 %v1811, %v1811
      %v1940 = vpack.c.b16 %v1812, %v1812
      %v1941 = vpack.c.b16 %v1813, %v1813
      %v1942 = vpack.c.b16 %v1814, %v1814
      %v1943 = vpack.c.b16 %v1815, %v1815
      %v1944 = vpack.c.b16 %v1816, %v1816
      %v1945 = vpack.c.b16 %v1817, %v1817
      %v1946 = vpack.c.b16 %v1818, %v1818
      %v1947 = vpack.c.b16 %v1819, %v1819
      %v1948 = vpack.c.b16 %v1820, %v1820
      %v1949 = vpack.c.b16 %v1821, %v1821
      %v1950 = vpack.c.b16 %v1822, %v1822
      %v1951 = vpack.c.b16 %v1823, %v1823
      %v1952 = vpack.c.b16 %v1824, %v1824
      %v1953 = vpack.c.b16 %v1825, %v1825
      %v1954 = vpack.c.b16 %v1826, %v1826
      %v1955 = vpack.c.b16 %v1827, %v1827
      %v1956 = vpack.c.b16 %v1828, %v1828
      %v1957 = vpack.c.b16 %v1829, %v1829
      %v1958 = vpack.c.b16 %v1830, %v1830
      %v1959 = vpack.c.b16 %v1831, %v1831
      %v1960 = vpack.c.b16 %v1832, %v1832
      %v1961 = vpack.c.b16 %v1833, %v1833
      %v1962 = vpack.c.b16 %v1834, %v1834
      %v1963 = vpack.c.b16 %v1835, %v1835
      %v1964 = vpack.c.b16 %v1836, %v1836
      %v1965 = vpack.c.b16 %v1837, %v1837
      %v1966 = vpack.c.b16 %v1838, %v1838
      %v1967 = vpack.c.b16 %v1839, %v1839
      %v1968 = vpack.c.b16 %v1840, %v1840
      %v1969 = vpack.c.b16 %v1841, %v1841
      %v1970 = vpack.c.b16 %v1842, %v1842
      %v1971 = vpack.c.b16 %v1843, %v1843
      %v1972 = vpack.c.b16 %v1844, %v1844
      %v1973 = vpack.c.b16 %v1845, %v1845
      %v1974 = vpack.c.b16 %v1846, %v1846
      %v1975 = vpack.c.b16 %v1847, %v1847
      %v1976 = vpack.c.b16 %v1848, %v1848
      %v1977 = vpack.c.b16 %v1849, %v1849
      %v1978 = vpack.c.b16 %v1850, %v1850
      %v1979 = vpack.c.b16 %v1851, %v1851
      %v1980 = vpack.c.b16 %v1852, %v1852
      %v1981 = vpack.c.b16 %v1853, %v1853
      %v1982 = vpack.c.b16 %v1854, %v1854
      %v1983 = vpack.c.b16 %v1855, %v1855
      %v1984 = vpack.c.b16 %v1856, %v1856
      %v1985 = vpack.c.b16 %v1857, %v1857
      %v1986 = vpack.c.b16 %v1858, %v1858
      %v1987 = vpack.c.b16 %v1859, %v1859
      %v1988 = vpack.c.b16 %v1860, %v1860
      %v1989 = vpack.c.b16 %v1861, %v1861
      %v1990 = vpack.c.b16 %v1862, %v1862
      %v1991 = vpack.c.b16 %v1863, %v1863
      %v1992 = vpack.c.b16 %v1864, %v1864
      %v1993 = vpack.c.b16 %v1865, %v1865
      %v1994 = vpack.c.b16 %v1866, %v1866
      %v1995 = vpack.c.b16 %v1867, %v1867
      %v1996 = vpack.c.b16 %v1868, %v1868
      %v1997 = vpack.c.b16 %v1869, %v1869
      %v1998 = vpack.c.b16 %v1870, %v1870
      %v1999 = vpack.c.b16 %v1871, %v1871
      %v2000 = vpack.c.b16 %v1872, %v1872
      %v2001 = vpack.c.b16 %v1873, %v1873
      %v2002 = vpack.c.b16 %v1874, %v1874
      %v2003 = vpack.c.b16 %v1875, %v1875
      %v2004 = vpack.c.b16 %v1876, %v1876
      %v2005 = vpack.c.b16 %v1877, %v1877
      %v2006 = vpack.c.b16 %v1878, %v1878
      %v2007 = vpack.c.b16 %v1879, %v1879
      %v2008 = vpack.c.b16 %v1880, %v1880
      %v2009 = vpack.c.b16 %v1881, %v1881
      %v2010 = vpack.c.b16 %v1882, %v1882
      %v2011 = vpack.c.b16 %v1883, %v1883
      %v2012 = vpack.c.b16 %v1884, %v1884
      %v2013 = vpack.c.b16 %v1885, %v1885
      %v2014 = vpack.c.b16 %v1886, %v1886
      %v2015 = vpack.c.b16 %v1887, %v1887
      %v2016 = vpack.c.b16 %v1888, %v1888
      %v2017 = vpack.c.b16 %v1889, %v1889
      %v2018 = vpack.c.b16 %v1890, %v1890
      %v2019 = vpack.c.b16 %v1891, %v1891
      %v2020 = vpack.c.b16 %v1892, %v1892
      %v2021 = vpack.c.b16 %v1893, %v1893
      %v2022 = vpack.c.b16 %v1894, %v1894
      %v2023 = vpack.c.b16 %v1895, %v1895
      %v2024 = vpack.c.b16 %v1896, %v1896
      %v2025 = vpack.c.b16 %v1897, %v1897
      %v2026 = vpack.c.b16 %v1898, %v1898
      %v2027 = vpack.c.b16 %v1899, %v1899
      %v2028 = vpack.c.b16 %v1900, %v1900
      %v2029 = vpack.c.b16 %v1901, %v1901
      %v2030 = vpack.c.b16 %v1902, %v1902
      %v2031 = vpack.c.b16 %v1903, %v1903
      %v2032 = vpack.c.b16 %v1904, %v1904
      %v2033 = vpack.c.b16 %v1905, %v1905
      %v2034 = vpack.c.b16 %v1906, %v1906
      %v2035 = vpack.c.b16 %v1907, %v1907
      %v2036 = vpack.c.b16 %v1908, %v1908
      %2165 = vst [vmem:[%s145] sm:$0xf] %v1909
      %2166 = vst [vmem:[%s145 + $0x4] sm:$0xf] %v1910
      %2167 = vst [vmem:[%s145 + $0x8] sm:$0xf] %v1911
      %2168 = vst [vmem:[%s145 + $0xc] sm:$0xf] %v1912
      %2169 = vst [vmem:[%s145 + $0x10] sm:$0xf] %v1913
      %2170 = vst [vmem:[%s145 + $0x14] sm:$0xf] %v1914
      %2171 = vst [vmem:[%s145 + $0x18] sm:$0xf] %v1915
      %2172 = vst [vmem:[%s145 + $0x1c] sm:$0xf] %v1916
      %2173 = vst [vmem:[%s145 + $0x20] sm:$0xf] %v1917
      %2174 = vst [vmem:[%s145 + $0x24] sm:$0xf] %v1918
      %2175 = vst [vmem:[%s145 + $0x28] sm:$0xf] %v1919
      %2176 = vst [vmem:[%s145 + $0x2c] sm:$0xf] %v1920
      %2177 = vst [vmem:[%s145 + $0x30] sm:$0xf] %v1921
      %2178 = vst [vmem:[%s145 + $0x34] sm:$0xf] %v1922
      %2179 = vst [vmem:[%s145 + $0x38] sm:$0xf] %v1923
      %2180 = vst [vmem:[%s145 + $0x3c] sm:$0xf] %v1924
      %2181 = vst [vmem:[%s145 + $0x40] sm:$0xf] %v1925
      %2182 = vst [vmem:[%s145 + $0x44] sm:$0xf] %v1926
      %2183 = vst [vmem:[%s145 + $0x48] sm:$0xf] %v1927
      %2184 = vst [vmem:[%s145 + $0x4c] sm:$0xf] %v1928
      %2185 = vst [vmem:[%s145 + $0x50] sm:$0xf] %v1929
      %2186 = vst [vmem:[%s145 + $0x54] sm:$0xf] %v1930
      %2187 = vst [vmem:[%s145 + $0x58] sm:$0xf] %v1931
      %2188 = vst [vmem:[%s145 + $0x5c] sm:$0xf] %v1932
      %2189 = vst [vmem:[%s145 + $0x60] sm:$0xf] %v1933
      %2190 = vst [vmem:[%s145 + $0x64] sm:$0xf] %v1934
      %2191 = vst [vmem:[%s145 + $0x68] sm:$0xf] %v1935
      %2192 = vst [vmem:[%s145 + $0x6c] sm:$0xf] %v1936
      %2193 = vst [vmem:[%s145 + $0x70] sm:$0xf] %v1937
      %2194 = vst [vmem:[%s145 + $0x74] sm:$0xf] %v1938
      %2195 = vst [vmem:[%s145 + $0x78] sm:$0xf] %v1939
      %2196 = vst [vmem:[%s145 + $0x7c] sm:$0xf] %v1940
      %2197 = vst [vmem:[%s145 + $0x80] sm:$0xf] %v1941
      %2198 = vst [vmem:[%s145 + $0x84] sm:$0xf] %v1942
      %2199 = vst [vmem:[%s145 + $0x88] sm:$0xf] %v1943
      %2200 = vst [vmem:[%s145 + $0x8c] sm:$0xf] %v1944
      %2201 = vst [vmem:[%s145 + $0x90] sm:$0xf] %v1945
      %2202 = vst [vmem:[%s145 + $0x94] sm:$0xf] %v1946
      %2203 = vst [vmem:[%s145 + $0x98] sm:$0xf] %v1947
      %2204 = vst [vmem:[%s145 + $0x9c] sm:$0xf] %v1948
      %2205 = vst [vmem:[%s145 + $0xa0] sm:$0xf] %v1949
      %2206 = vst [vmem:[%s145 + $0xa4] sm:$0xf] %v1950
      %2207 = vst [vmem:[%s145 + $0xa8] sm:$0xf] %v1951
      %2208 = vst [vmem:[%s145 + $0xac] sm:$0xf] %v1952
      %2209 = vst [vmem:[%s145 + $0xb0] sm:$0xf] %v1953
      %2210 = vst [vmem:[%s145 + $0xb4] sm:$0xf] %v1954
      %2211 = vst [vmem:[%s145 + $0xb8] sm:$0xf] %v1955
      %2212 = vst [vmem:[%s145 + $0xbc] sm:$0xf] %v1956
      %2213 = vst [vmem:[%s145 + $0xc0] sm:$0xf] %v1957
      %2214 = vst [vmem:[%s145 + $0xc4] sm:$0xf] %v1958
      %2215 = vst [vmem:[%s145 + $0xc8] sm:$0xf] %v1959
      %2216 = vst [vmem:[%s145 + $0xcc] sm:$0xf] %v1960
      %2217 = vst [vmem:[%s145 + $0xd0] sm:$0xf] %v1961
      %2218 = vst [vmem:[%s145 + $0xd4] sm:$0xf] %v1962
      %2219 = vst [vmem:[%s145 + $0xd8] sm:$0xf] %v1963
      %2220 = vst [vmem:[%s145 + $0xdc] sm:$0xf] %v1964
      %2221 = vst [vmem:[%s145 + $0xe0] sm:$0xf] %v1965
      %2222 = vst [vmem:[%s145 + $0xe4] sm:$0xf] %v1966
      %2223 = vst [vmem:[%s145 + $0xe8] sm:$0xf] %v1967
      %2224 = vst [vmem:[%s145 + $0xec] sm:$0xf] %v1968
      %2225 = vst [vmem:[%s145 + $0xf0] sm:$0xf] %v1969
      %2226 = vst [vmem:[%s145 + $0xf4] sm:$0xf] %v1970
      %2227 = vst [vmem:[%s145 + $0xf8] sm:$0xf] %v1971
      %2228 = vst [vmem:[%s145 + $0xfc] sm:$0xf] %v1972
      %2229 = vst [vmem:[%s145 + $0x100] sm:$0xf] %v1973
      %2230 = vst [vmem:[%s145 + $0x104] sm:$0xf] %v1974
      %2231 = vst [vmem:[%s145 + $0x108] sm:$0xf] %v1975
      %2232 = vst [vmem:[%s145 + $0x10c] sm:$0xf] %v1976
      %2233 = vst [vmem:[%s145 + $0x110] sm:$0xf] %v1977
      %2234 = vst [vmem:[%s145 + $0x114] sm:$0xf] %v1978
      %2235 = vst [vmem:[%s145 + $0x118] sm:$0xf] %v1979
      %2236 = vst [vmem:[%s145 + $0x11c] sm:$0xf] %v1980
      %2237 = vst [vmem:[%s145 + $0x120] sm:$0xf] %v1981
      %2238 = vst [vmem:[%s145 + $0x124] sm:$0xf] %v1982
      %2239 = vst [vmem:[%s145 + $0x128] sm:$0xf] %v1983
      %2240 = vst [vmem:[%s145 + $0x12c] sm:$0xf] %v1984
      %2241 = vst [vmem:[%s145 + $0x130] sm:$0xf] %v1985
      %2242 = vst [vmem:[%s145 + $0x134] sm:$0xf] %v1986
      %2243 = vst [vmem:[%s145 + $0x138] sm:$0xf] %v1987
      %2244 = vst [vmem:[%s145 + $0x13c] sm:$0xf] %v1988
      %2245 = vst [vmem:[%s145 + $0x140] sm:$0xf] %v1989
      %2246 = vst [vmem:[%s145 + $0x144] sm:$0xf] %v1990
      %2247 = vst [vmem:[%s145 + $0x148] sm:$0xf] %v1991
      %2248 = vst [vmem:[%s145 + $0x14c] sm:$0xf] %v1992
      %2249 = vst [vmem:[%s145 + $0x150] sm:$0xf] %v1993
      %2250 = vst [vmem:[%s145 + $0x154] sm:$0xf] %v1994
      %2251 = vst [vmem:[%s145 + $0x158] sm:$0xf] %v1995
      %2252 = vst [vmem:[%s145 + $0x15c] sm:$0xf] %v1996
      %2253 = vst [vmem:[%s145 + $0x160] sm:$0xf] %v1997
      %2254 = vst [vmem:[%s145 + $0x164] sm:$0xf] %v1998
      %2255 = vst [vmem:[%s145 + $0x168] sm:$0xf] %v1999
      %2256 = vst [vmem:[%s145 + $0x16c] sm:$0xf] %v2000
      %2257 = vst [vmem:[%s145 + $0x170] sm:$0xf] %v2001
      %2258 = vst [vmem:[%s145 + $0x174] sm:$0xf] %v2002
      %2259 = vst [vmem:[%s145 + $0x178] sm:$0xf] %v2003
      %2260 = vst [vmem:[%s145 + $0x17c] sm:$0xf] %v2004
      %2261 = vst [vmem:[%s145 + $0x180] sm:$0xf] %v2005
      %2262 = vst [vmem:[%s145 + $0x184] sm:$0xf] %v2006
      %2263 = vst [vmem:[%s145 + $0x188] sm:$0xf] %v2007
      %2264 = vst [vmem:[%s145 + $0x18c] sm:$0xf] %v2008
      %2265 = vst [vmem:[%s145 + $0x190] sm:$0xf] %v2009
      %2266 = vst [vmem:[%s145 + $0x194] sm:$0xf] %v2010
      %2267 = vst [vmem:[%s145 + $0x198] sm:$0xf] %v2011
      %2268 = vst [vmem:[%s145 + $0x19c] sm:$0xf] %v2012
      %2269 = vst [vmem:[%s145 + $0x1a0] sm:$0xf] %v2013
      %2270 = vst [vmem:[%s145 + $0x1a4] sm:$0xf] %v2014
      %2271 = vst [vmem:[%s145 + $0x1a8] sm:$0xf] %v2015
      %2272 = vst [vmem:[%s145 + $0x1ac] sm:$0xf] %v2016
      %2273 = vst [vmem:[%s145 + $0x1b0] sm:$0xf] %v2017
      %2274 = vst [vmem:[%s145 + $0x1b4] sm:$0xf] %v2018
      %2275 = vst [vmem:[%s145 + $0x1b8] sm:$0xf] %v2019
      %2276 = vst [vmem:[%s145 + $0x1bc] sm:$0xf] %v2020
      %2277 = vst [vmem:[%s145 + $0x1c0] sm:$0xf] %v2021
      %2278 = vst [vmem:[%s145 + $0x1c4] sm:$0xf] %v2022
      %2279 = vst [vmem:[%s145 + $0x1c8] sm:$0xf] %v2023
      %2280 = vst [vmem:[%s145 + $0x1cc] sm:$0xf] %v2024
      %2281 = vst [vmem:[%s145 + $0x1d0] sm:$0xf] %v2025
      %2282 = vst [vmem:[%s145 + $0x1d4] sm:$0xf] %v2026
      %2283 = vst [vmem:[%s145 + $0x1d8] sm:$0xf] %v2027
      %2284 = vst [vmem:[%s145 + $0x1dc] sm:$0xf] %v2028
      %2285 = vst [vmem:[%s145 + $0x1e0] sm:$0xf] %v2029
      %2286 = vst [vmem:[%s145 + $0x1e4] sm:$0xf] %v2030
      %2287 = vst [vmem:[%s145 + $0x1e8] sm:$0xf] %v2031
      %2288 = vst [vmem:[%s145 + $0x1ec] sm:$0xf] %v2032
      %2289 = vst [vmem:[%s145 + $0x1f0] sm:$0xf] %v2033
      %2290 = vst [vmem:[%s145 + $0x1f4] sm:$0xf] %v2034
      %2291 = vst [vmem:[%s145 + $0x1f8] sm:$0xf] %v2035
      %2292 = vst [vmem:[%s145 + $0x1fc] sm:$0xf] %v2036
      %s2293 = smul.u32 128, %s13
      %p2294 = scmp.lt.s32.totalorder %s2293, 255
      %s2295 = scalar_select %p2294, %s2293, 255
      %s2296 = smul.addr %s2295, 4
      %s2297 = scalar_lea.vmem %s2, %s2296
      // Predicated region
      $region29: #{_lambda_.7} parent=27 // pred_check
        %p2298 = pneg %p78
      $region30: #{_lambda_.7} parent=27 // pred_check_branch
        %2300 = sbr.rel (%p2298) target = $region32
      $region31: #{_lambda_.7} parent=27 // pred_region
        %s2301 = smul.u32 128, %s13
      $region32: #{_lambda_.7} parent=27 // pred_fallthru
        _
    $region28: #{_lambda_.7} parent=5 // pred_fallthru
      _
    %p2302 = scmp.le.s32.totalorder 2, %s8
    // Predicated region
    $region33: #{_lambda_.7} parent=5 // pred_check
      %p2303 = pneg %p2302
    $region34: #{_lambda_.7} parent=5 // pred_check_branch
      %2305 = sbr.rel (%p2303) target = $region36
    $region35: #{_lambda_.7} parent=5 // pred_region
      %s2306 = ssub.s32 %s8, 2
      // Predicated region
      $region37: #{_lambda_.7} parent=35 // pred_check
        %p2307 = pneg %p84
      $region38: #{_lambda_.7} parent=35 // pred_check_branch
        %2309 = sbr.rel (%p2307) target = $region40
      $region39: #{_lambda_.7} parent=35 // pred_region
        %s2310 = smul.u32 128, %s14
        %p2311 = scmp.lt.s32.totalorder %s2310, 255
        %s2312 = scalar_select %p2311, %s2310, 255
        %s2313 = smul.addr %s2312, 4
        %s2314 = scalar_lea.vmem %s2, %s2313
      $region40: #{_lambda_.7} parent=35 // pred_fallthru
        _
    $region36: #{_lambda_.7} parent=5 // pred_fallthru
      _
  $region6: #{_lambda_.7} parent=0 // loop_footer
    %s12 = sadd.s32 1, %s8
  $region7: #{_lambda_.7} parent=0 // loop_footer_branch
    %7 = sbr.rel target = $region3
  $region8: #{_lambda_.7} parent=0 // loop_exit
    _

// kernel: _lambda_.8
$region0: #{_lambda_.8}
  #allocation0 [shape = 'u32[]', space=smem, size = 0x4, offset = 0x4, fixed_abs, tag = 'smem constant byte address 0x4 - core index']
  #allocation1 [shape = 'u32[144,128]{1,0:T(1,128)}', space=vmem, size = 0x12000, scoped, tag = 'internal scratch']
  %s0 = inlined_call_operand.vmem [shape: bf16[512,128], index: 0, kind: input, shape index: {}]
  %s1 = inlined_call_operand.vmem [shape: bf16[128,128], index: 1, kind: input, shape index: {}]
  %s2 = inlined_call_operand.vmem [shape: bf16[512,128], index: 2, kind: output, shape index: {}]
  %s3 = sld [smem:[#allocation0]]
  $region41: #{_lambda_.8} parent=0
    _
  %s5 = ssub.s32 1, %s3
  %s6 = scalar_select 0, %s5, %s3
  loop: start=0, step=1, limit=4
  $region2: #{_lambda_.8} parent=0 // loop_pre_header
    _
  $region3: #{_lambda_.8} parent=0 // loop_header
    %s8 = sphi 0, %s12
    %p9 = scmp.ge.s32.totalorder %s8, 4
    %s18 = sphi 0, %s20
    %s21 = sphi 0, %s18
    %s22 = sphi 0, %s21
    %s38 = sphi 0, %s22
    %s42 = sphi 0, %s42
    %s44 = sphi 0, %s42
    %s45 = sphi 0, %s44
    %s59 = sphi 0, %s45
    %s65 = sphi 0, %s67
    %s68 = sphi 0, %s65
    %s69 = sphi 0, %s68
    %s85 = sphi 0, %s69
  $region4: #{_lambda_.8} parent=0 // loop_header_branch
    %11 = sbr.rel (%p9) target = $region8
  $region5: #{_lambda_.8} parent=0 // loop_body
    %s13 = ssub.s32 %s8, 1
    %s14 = ssub.s32 %s8, 2
    %s15 = sadd.s32 %s8, 1
    %s16 = ssub.s32 %s8, %s15
    %p17 = scmp.eq.s32.totalorder %s16, 0
    %s19 = sadd.s32 %s18, 1
    %s20 = scalar_select %p17, %s18, %s19
    %p23 = pneg %p17
    %p24 = scmp.eq.s32.totalorder %s8, 1
    %p25 = por %p23, %p24
    %p26 = scmp.ne.s32.totalorder %s18, %s21
    %p27 = scmp.eq.s32.totalorder %s8, 0
    %p28 = por %p26, %p27
    %p29 = scmp.ne.s32.totalorder %s18, %s21
    %p30 = scmp.eq.s32.totalorder %s13, 1
    %p31 = por %p29, %p30
    %p32 = scmp.ne.s32.totalorder %s21, %s22
    %p33 = scmp.eq.s32.totalorder %s13, 0
    %p34 = por %p32, %p33
    %p35 = scmp.ne.s32.totalorder %s21, %s22
    %p36 = scmp.eq.s32.totalorder %s14, 1
    %p37 = por %p35, %p36
    %p39 = scmp.ne.s32.totalorder %s22, %s38
    %p40 = scmp.eq.s32.totalorder %s14, 0
    %p41 = por %p39, %p40
    %s43 = sadd.s32 %s42, 1
    %p46 = scmp.eq.s32.totalorder %s8, 1
    %p47 = scmp.ne.s32.totalorder %s42, %s44
    %p48 = scmp.eq.s32.totalorder %s8, 0
    %p49 = por %p47, %p48
    %p50 = scmp.ne.s32.totalorder %s42, %s44
    %p51 = scmp.eq.s32.totalorder %s13, 1
    %p52 = por %p50, %p51
    %p53 = scmp.ne.s32.totalorder %s44, %s45
    %p54 = scmp.eq.s32.totalorder %s13, 0
    %p55 = por %p53, %p54
    %p56 = scmp.ne.s32.totalorder %s44, %s45
    %p57 = scmp.eq.s32.totalorder %s14, 1
    %p58 = por %p56, %p57
    %p60 = scmp.ne.s32.totalorder %s45, %s59
    %p61 = scmp.eq.s32.totalorder %s14, 0
    %p62 = por %p60, %p61
    %s63 = ssub.s32 %s8, %s15
    %p64 = scmp.eq.s32.totalorder %s63, 0
    %s66 = sadd.s32 %s65, 1
    %s67 = scalar_select %p64, %s65, %s66
    %p70 = pneg %p64
    %p71 = scmp.eq.s32.totalorder %s8, 1
    %p72 = por %p70, %p71
    %p73 = scmp.ne.s32.totalorder %s65, %s68
    %p74 = scmp.eq.s32.totalorder %s8, 0
    %p75 = por %p73, %p74
    %p76 = scmp.ne.s32.totalorder %s65, %s68
    %p77 = scmp.eq.s32.totalorder %s13, 1
    %p78 = por %p76, %p77
    %p79 = scmp.ne.s32.totalorder %s68, %s69
    %p80 = scmp.eq.s32.totalorder %s13, 0
    %p81 = por %p79, %p80
    %p82 = scmp.ne.s32.totalorder %s68, %s69
    %p83 = scmp.eq.s32.totalorder %s14, 1
    %p84 = por %p82, %p83
    %p86 = scmp.ne.s32.totalorder %s69, %s85
    %p87 = scmp.eq.s32.totalorder %s14, 0
    %p88 = por %p86, %p87
    %p89 = scmp.le.s32.totalorder 1, %s8
    %p90 = scmp.lt.s32.totalorder %s8, 3
    %p91 = pnand %p89, %p90
    %p92 = pneg %p91
    // Predicated region
    $region9: #{_lambda_.8} parent=5 // pred_check
      _
    $region10: #{_lambda_.8} parent=5 // pred_check_branch
      %94 = sbr.rel (%p91) target = $region12
    $region11: #{_lambda_.8} parent=5 // pred_region
      %s95 = ssub.s32 %s8, 1
      // Predicated region
      $region13: #{_lambda_.8} parent=11 // pred_check
        %p96 = pneg %p55
      $region14: #{_lambda_.8} parent=11 // pred_check_branch
        %98 = sbr.rel (%p96) target = $region16
      $region15: #{_lambda_.8} parent=11 // pred_region
        _
      $region16: #{_lambda_.8} parent=11 // pred_fallthru
        _
    $region12: #{_lambda_.8} parent=5 // pred_fallthru
      _
    %p99 = scmp.lt.s32.totalorder %s8, 2
    // Predicated region
    $region17: #{_lambda_.8} parent=5 // pred_check
      %p100 = pneg %p99
    $region18: #{_lambda_.8} parent=5 // pred_check_branch
      %102 = sbr.rel (%p100) target = $region20
    $region19: #{_lambda_.8} parent=5 // pred_region
      // Predicated region
      $region21: #{_lambda_.8} parent=19 // pred_check
        %p103 = pneg %p28
      $region22: #{_lambda_.8} parent=19 // pred_check_branch
        %105 = sbr.rel (%p103) target = $region24
      $region23: #{_lambda_.8} parent=19 // pred_region
        %s106 = smul.u32 32, %s8
        %p107 = scmp.lt.s32.totalorder %s106, 63
        %s108 = scalar_select %p107, %s106, 63
        %s109 = smul.addr %s108, 4
        %s110 = scalar_lea.vmem %s0, %s109
        %s111 = smul.u32 32, %s8
      $region24: #{_lambda_.8} parent=19 // pred_fallthru
        _
    $region20: #{_lambda_.8} parent=5 // pred_fallthru
      _
    %p112 = scmp.le.s32.totalorder 1, %s8
    %p113 = scmp.lt.s32.totalorder %s8, 3
    %p114 = pnand %p112, %p113
    %p115 = pneg %p114
    // Predicated region
    $region25: #{_lambda_.8} parent=5 // pred_check
      _
    $region26: #{_lambda_.8} parent=5 // pred_check_branch
      %117 = sbr.rel (%p114) target = $region28
    $region27: #{_lambda_.8} parent=5 // pred_region
      %s118 = ssub.s32 %s8, 1
      %s119 = smul.u32 32, %s13
      %p120 = scmp.lt.s32.totalorder %s119, 63
      %s121 = scalar_select %p120, %s119, 63
      %s122 = smul.addr %s121, 4
      %s123 = scalar_lea.vmem %s0, %s122
      %p124 = pneg %p34
      %p125 = pneg %p31
      %p126 = pneg %p55
      %p127 = pneg %p52
      %p128 = pneg %p81
      %p129 = pneg %p78
      %s130 = smul.u32 32, %s13
      %p131 = scmp.lt.s32.totalorder %s130, 63
      %s132 = scalar_select %p131, %s130, 63
      %s133 = smul.addr %s132, 4
      %s134 = scalar_lea.vmem %s2, %s133
      %s135 = smul.u32 32, %s13
      %p136 = scmp.lt.s32.totalorder %s135, 63
      %s137 = scalar_select %p136, %s135, 63
      %s138 = smul.addr %s137, 4
      %s139 = scalar_lea.vmem %s0, %s138
      %s140 = smul.u32 32, %s13
      %s141 = smul.u32 32, %s13
      %p142 = scmp.lt.s32.totalorder %s141, 63
      %s143 = scalar_select %p142, %s141, 63
      %s144 = smul.addr %s143, 4
      %s145 = scalar_lea.vmem %s2, %s144
      %s146 = smul.u32 32, %s13
      %v148 = vld [vmem:[%s139] sm:$0xf]
      %v149 = vld [vmem:[%s139 + $0x4] sm:$0xf]
      %v150 = vld [vmem:[%s139 + $0x8] sm:$0xf]
      %v151 = vld [vmem:[%s139 + $0xc] sm:$0xf]
      %v152 = vld [vmem:[%s139 + $0x10] sm:$0xf]
      %v153 = vld [vmem:[%s139 + $0x14] sm:$0xf]
      %v154 = vld [vmem:[%s139 + $0x18] sm:$0xf]
      %v155 = vld [vmem:[%s139 + $0x1c] sm:$0xf]
      %v156 = vld [vmem:[%s139 + $0x20] sm:$0xf]
      %v157 = vld [vmem:[%s139 + $0x24] sm:$0xf]
      %v158 = vld [vmem:[%s139 + $0x28] sm:$0xf]
      %v159 = vld [vmem:[%s139 + $0x2c] sm:$0xf]
      %v160 = vld [vmem:[%s139 + $0x30] sm:$0xf]
      %v161 = vld [vmem:[%s139 + $0x34] sm:$0xf]
      %v162 = vld [vmem:[%s139 + $0x38] sm:$0xf]
      %v163 = vld [vmem:[%s139 + $0x3c] sm:$0xf]
      %v164 = vld [vmem:[%s139 + $0x40] sm:$0xf]
      %v165 = vld [vmem:[%s139 + $0x44] sm:$0xf]
      %v166 = vld [vmem:[%s139 + $0x48] sm:$0xf]
      %v167 = vld [vmem:[%s139 + $0x4c] sm:$0xf]
      %v168 = vld [vmem:[%s139 + $0x50] sm:$0xf]
      %v169 = vld [vmem:[%s139 + $0x54] sm:$0xf]
      %v170 = vld [vmem:[%s139 + $0x58] sm:$0xf]
      %v171 = vld [vmem:[%s139 + $0x5c] sm:$0xf]
      %v172 = vld [vmem:[%s139 + $0x60] sm:$0xf]
      %v173 = vld [vmem:[%s139 + $0x64] sm:$0xf]
      %v174 = vld [vmem:[%s139 + $0x68] sm:$0xf]
      %v175 = vld [vmem:[%s139 + $0x6c] sm:$0xf]
      %v176 = vld [vmem:[%s139 + $0x70] sm:$0xf]
      %v177 = vld [vmem:[%s139 + $0x74] sm:$0xf]
      %v178 = vld [vmem:[%s139 + $0x78] sm:$0xf]
      %v179 = vld [vmem:[%s139 + $0x7c] sm:$0xf]
      %v180 = vld [vmem:[%s1] sm:$0xf]
      %v181 = vld [vmem:[%s1 + $0x4] sm:$0xf]
      %v182 = vld [vmem:[%s1 + $0x8] sm:$0xf]
      %v183 = vld [vmem:[%s1 + $0xc] sm:$0xf]
      %v184 = vld [vmem:[%s1 + $0x10] sm:$0xf]
      %v185 = vld [vmem:[%s1 + $0x14] sm:$0xf]
      %v186 = vld [vmem:[%s1 + $0x18] sm:$0xf]
      %v187 = vld [vmem:[%s1 + $0x1c] sm:$0xf]
      %v188 = vld [vmem:[%s1 + $0x20] sm:$0xf]
      %v189 = vld [vmem:[%s1 + $0x24] sm:$0xf]
      %v190 = vld [vmem:[%s1 + $0x28] sm:$0xf]
      %v191 = vld [vmem:[%s1 + $0x2c] sm:$0xf]
      %v192 = vld [vmem:[%s1 + $0x30] sm:$0xf]
      %v193 = vld [vmem:[%s1 + $0x34] sm:$0xf]
      %v194 = vld [vmem:[%s1 + $0x38] sm:$0xf]
      %v195 = vld [vmem:[%s1 + $0x3c] sm:$0xf]
      %v228 = vunpack.c.l.b16 %v148
      %v229 = vunpack.c.l.b16 %v149
      %v230 = vunpack.c.l.b16 %v150
      %v231 = vunpack.c.l.b16 %v151
      %v232 = vunpack.c.l.b16 %v152
      %v233 = vunpack.c.l.b16 %v153
      %v234 = vunpack.c.l.b16 %v154
      %v235 = vunpack.c.l.b16 %v155
      %v236 = vunpack.c.l.b16 %v156
      %v237 = vunpack.c.l.b16 %v157
      %v238 = vunpack.c.l.b16 %v158
      %v239 = vunpack.c.l.b16 %v159
      %v240 = vunpack.c.l.b16 %v160
      %v241 = vunpack.c.l.b16 %v161
      %v242 = vunpack.c.l.b16 %v162
      %v243 = vunpack.c.l.b16 %v163
      %v244 = vunpack.c.l.b16 %v164
      %v245 = vunpack.c.l.b16 %v165
      %v246 = vunpack.c.l.b16 %v166
      %v247 = vunpack.c.l.b16 %v167
      %v248 = vunpack.c.l.b16 %v168
      %v249 = vunpack.c.l.b16 %v169
      %v250 = vunpack.c.l.b16 %v170
      %v251 = vunpack.c.l.b16 %v171
      %v252 = vunpack.c.l.b16 %v172
      %v253 = vunpack.c.l.b16 %v173
      %v254 = vunpack.c.l.b16 %v174
      %v255 = vunpack.c.l.b16 %v175
      %v256 = vunpack.c.l.b16 %v176
      %v257 = vunpack.c.l.b16 %v177
      %v258 = vunpack.c.l.b16 %v178
      %v259 = vunpack.c.l.b16 %v179
      %v260 = vpack.c.b16 %v229, %v228
      %v261 = vpack.c.b16 %v231, %v230
      %v262 = vpack.c.b16 %v233, %v232
      %v263 = vpack.c.b16 %v235, %v234
      %v264 = vpack.c.b16 %v237, %v236
      %v265 = vpack.c.b16 %v239, %v238
      %v266 = vpack.c.b16 %v241, %v240
      %v267 = vpack.c.b16 %v243, %v242
      %v268 = vpack.c.b16 %v245, %v244
      %v269 = vpack.c.b16 %v247, %v246
      %v270 = vpack.c.b16 %v249, %v248
      %v271 = vpack.c.b16 %v251, %v250
      %v272 = vpack.c.b16 %v253, %v252
      %v273 = vpack.c.b16 %v255, %v254
      %v274 = vpack.c.b16 %v257, %v256
      %v275 = vpack.c.b16 %v259, %v258
      %v308 = vunpack.c.l.b16 %v180
      %v309 = vunpack.c.l.b16 %v181
      %v310 = vunpack.c.l.b16 %v182
      %v311 = vunpack.c.l.b16 %v183
      %v312 = vunpack.c.l.b16 %v184
      %v313 = vunpack.c.l.b16 %v185
      %v314 = vunpack.c.l.b16 %v186
      %v315 = vunpack.c.l.b16 %v187
      %v316 = vunpack.c.l.b16 %v188
      %v317 = vunpack.c.l.b16 %v189
      %v318 = vunpack.c.l.b16 %v190
      %v319 = vunpack.c.l.b16 %v191
      %v320 = vunpack.c.l.b16 %v192
      %v321 = vunpack.c.l.b16 %v193
      %v322 = vunpack.c.l.b16 %v194
      %v323 = vunpack.c.l.b16 %v195
      %v324 = vpack.c.b16 %v309, %v308
      %v325 = vpack.c.b16 %v311, %v310
      %v326 = vpack.c.b16 %v313, %v312
      %v327 = vpack.c.b16 %v315, %v314
      %v328 = vpack.c.b16 %v317, %v316
      %v329 = vpack.c.b16 %v319, %v318
      %v330 = vpack.c.b16 %v321, %v320
      %v331 = vpack.c.b16 %v323, %v322
      %340 = vmatprep.subr.bf16.mxu0 0
      %341 = vmatpush1.bf16.msra.mxu0 %v324
      %342 = vmatprep.subr.bf16.mxu0 0
      %343 = vmatpush1.bf16.msra.mxu0 %v325
      %344 = vmatprep.subr.bf16.mxu0 0
      %345 = vmatpush1.bf16.msra.mxu0 %v326
      %346 = vmatprep.subr.bf16.mxu0 0
      %347 = vmatpush1.bf16.msra.mxu0 %v327
      %348 = vmatprep.subr.bf16.mxu0 0
      %349 = vmatpush1.bf16.msra.mxu0 %v328
      %350 = vmatprep.subr.bf16.mxu0 0
      %351 = vmatpush1.bf16.msra.mxu0 %v329
      %352 = vmatprep.subr.bf16.mxu0 0
      %353 = vmatpush1.bf16.msra.mxu0 %v330
      %354 = vmatprep.subr.bf16.mxu0 0
      %355 = vmatpush1.bf16.msra.mxu0 %v331
      %356 = vmatprep.subr.bf16.mxu0 0
      %357 = vmatpush1.bf16.msra.mxu0 0
      %358 = vmatprep.subr.bf16.mxu0 0
      %359 = vmatpush1.bf16.msra.mxu0 0
      %360 = vmatprep.subr.bf16.mxu0 0
      %361 = vmatpush1.bf16.msra.mxu0 0
      %362 = vmatprep.subr.bf16.mxu0 0
      %363 = vmatpush1.bf16.msra.mxu0 0
      %364 = vmatprep.subr.bf16.mxu0 0
      %365 = vmatpush1.bf16.msra.mxu0 0
      %366 = vmatprep.subr.bf16.mxu0 0
      %367 = vmatpush1.bf16.msra.mxu0 0
      %368 = vmatprep.subr.bf16.mxu0 0
      %369 = vmatpush1.bf16.msra.mxu0 0
      %370 = vmatprep.subr.bf16.mxu0 0
      %371 = vmatpush1.bf16.msra.mxu0 0
      %372 = vmatprep.mubr.bf16.mxu0 0
      %373 = vmatmul.mubr.bf16.gmra.mrb[0].mxu0 %v260
      %v374 = vpop.f32.mrb[0].mxu0
      %v375 = vadd.f32 0.0, %v374
      %v376 = vpop.f32.mrb[0].mxu0
      %v377 = vpop.f32.mrb[0].mxu0
      %v378 = vadd.f32 0.0, %v377
      %v379 = vpop.f32.mrb[0].mxu0
      %380 = vmatprep.mubr.bf16.mxu0 0
      %381 = vmatmul.mubr.bf16.gmra.mrb[0].mxu0 %v261
      %v382 = vpop.f32.mrb[0].mxu0
      %v383 = vadd.f32 0.0, %v382
      %v384 = vpop.f32.mrb[0].mxu0
      %v385 = vpop.f32.mrb[0].mxu0
      %v386 = vadd.f32 0.0, %v385
      %v387 = vpop.f32.mrb[0].mxu0
      %388 = vmatprep.mubr.bf16.mxu0 0
      %389 = vmatmul.mubr.bf16.gmra.mrb[0].mxu0 %v262
      %v390 = vpop.f32.mrb[0].mxu0
      %v391 = vadd.f32 0.0, %v390
      %v392 = vpop.f32.mrb[0].mxu0
      %v393 = vpop.f32.mrb[0].mxu0
      %v394 = vadd.f32 0.0, %v393
      %v395 = vpop.f32.mrb[0].mxu0
      %396 = vmatprep.mubr.bf16.mxu0 0
      %397 = vmatmul.mubr.bf16.gmra.mrb[0].mxu0 %v263
      %v398 = vpop.f32.mrb[0].mxu0
      %v399 = vadd.f32 0.0, %v398
      %v400 = vpop.f32.mrb[0].mxu0
      %v401 = vpop.f32.mrb[0].mxu0
      %v402 = vadd.f32 0.0, %v401
      %v403 = vpop.f32.mrb[0].mxu0
      %404 = vmatprep.mubr.bf16.mxu0 0
      %405 = vmatmul.mubr.bf16.gmra.mrb[0].mxu0 %v264
      %v406 = vpop.f32.mrb[0].mxu0
      %v407 = vadd.f32 0.0, %v406
      %v408 = vpop.f32.mrb[0].mxu0
      %v409 = vpop.f32.mrb[0].mxu0
      %v410 = vadd.f32 0.0, %v409
      %v411 = vpop.f32.mrb[0].mxu0
      %412 = vmatprep.mubr.bf16.mxu0 0
      %413 = vmatmul.mubr.bf16.gmra.mrb[0].mxu0 %v265
      %v414 = vpop.f32.mrb[0].mxu0
      %v415 = vadd.f32 0.0, %v414
      %v416 = vpop.f32.mrb[0].mxu0
      %v417 = vpop.f32.mrb[0].mxu0
      %v418 = vadd.f32 0.0, %v417
      %v419 = vpop.f32.mrb[0].mxu0
      %420 = vmatprep.mubr.bf16.mxu0 0
      %421 = vmatmul.mubr.bf16.gmra.mrb[0].mxu0 %v266
      %v422 = vpop.f32.mrb[0].mxu0
      %v423 = vadd.f32 0.0, %v422
      %v424 = vpop.f32.mrb[0].mxu0
      %v425 = vpop.f32.mrb[0].mxu0
      %v426 = vadd.f32 0.0, %v425
      %v427 = vpop.f32.mrb[0].mxu0
      %428 = vmatprep.mubr.bf16.mxu0 0
      %429 = vmatmul.mubr.bf16.gmra.mrb[0].mxu0 %v267
      %v430 = vpop.f32.mrb[0].mxu0
      %v431 = vadd.f32 0.0, %v430
      %v432 = vpop.f32.mrb[0].mxu0
      %v433 = vpop.f32.mrb[0].mxu0
      %v434 = vadd.f32 0.0, %v433
      %v435 = vpop.f32.mrb[0].mxu0
      %436 = vmatprep.mubr.bf16.mxu0 0
      %437 = vmatmul.mubr.bf16.gmra.mrb[0].mxu0 %v268
      %v438 = vpop.f32.mrb[0].mxu0
      %v439 = vadd.f32 0.0, %v438
      %v440 = vpop.f32.mrb[0].mxu0
      %v441 = vpop.f32.mrb[0].mxu0
      %v442 = vadd.f32 0.0, %v441
      %v443 = vpop.f32.mrb[0].mxu0
      %444 = vmatprep.mubr.bf16.mxu0 0
      %445 = vmatmul.mubr.bf16.gmra.mrb[0].mxu0 %v269
      %v446 = vpop.f32.mrb[0].mxu0
      %v447 = vadd.f32 0.0, %v446
      %v448 = vpop.f32.mrb[0].mxu0
      %v449 = vpop.f32.mrb[0].mxu0
      %v450 = vadd.f32 0.0, %v449
      %v451 = vpop.f32.mrb[0].mxu0
      %452 = vmatprep.mubr.bf16.mxu0 0
      %453 = vmatmul.mubr.bf16.gmra.mrb[0].mxu0 %v270
      %v454 = vpop.f32.mrb[0].mxu0
      %v455 = vadd.f32 0.0, %v454
      %v456 = vpop.f32.mrb[0].mxu0
      %v457 = vpop.f32.mrb[0].mxu0
      %v458 = vadd.f32 0.0, %v457
      %v459 = vpop.f32.mrb[0].mxu0
      %460 = vmatprep.mubr.bf16.mxu0 0
      %461 = vmatmul.mubr.bf16.gmra.mrb[0].mxu0 %v271
      %v462 = vpop.f32.mrb[0].mxu0
      %v463 = vadd.f32 0.0, %v462
      %v464 = vpop.f32.mrb[0].mxu0
      %v465 = vpop.f32.mrb[0].mxu0
      %v466 = vadd.f32 0.0, %v465
      %v467 = vpop.f32.mrb[0].mxu0
      %468 = vmatprep.mubr.bf16.mxu0 0
      %469 = vmatmul.mubr.bf16.gmra.mrb[0].mxu0 %v272
      %v470 = vpop.f32.mrb[0].mxu0
      %v471 = vadd.f32 0.0, %v470
      %v472 = vpop.f32.mrb[0].mxu0
      %v473 = vpop.f32.mrb[0].mxu0
      %v474 = vadd.f32 0.0, %v473
      %v475 = vpop.f32.mrb[0].mxu0
      %476 = vmatprep.mubr.bf16.mxu0 0
      %477 = vmatmul.mubr.bf16.gmra.mrb[0].mxu0 %v273
      %v478 = vpop.f32.mrb[0].mxu0
      %v479 = vadd.f32 0.0, %v478
      %v480 = vpop.f32.mrb[0].mxu0
      %v481 = vpop.f32.mrb[0].mxu0
      %v482 = vadd.f32 0.0, %v481
      %v483 = vpop.f32.mrb[0].mxu0
      %484 = vmatprep.mubr.bf16.mxu0 0
      %485 = vmatmul.mubr.bf16.gmra.mrb[0].mxu0 %v274
      %v486 = vpop.f32.mrb[0].mxu0
      %v487 = vadd.f32 0.0, %v486
      %v488 = vpop.f32.mrb[0].mxu0
      %v489 = vpop.f32.mrb[0].mxu0
      %v490 = vadd.f32 0.0, %v489
      %v491 = vpop.f32.mrb[0].mxu0
      %492 = vmatprep.mubr.bf16.mxu0 0
      %493 = vmatmul.mubr.bf16.gmra.mrb[0].mxu0 %v275
      %v494 = vpop.f32.mrb[0].mxu0
      %v495 = vadd.f32 0.0, %v494
      %v496 = vpop.f32.mrb[0].mxu0
      %v497 = vpop.f32.mrb[0].mxu0
      %v498 = vadd.f32 0.0, %v497
      %v499 = vpop.f32.mrb[0].mxu0
      %500 = vdwg.mxu0
      %vm501 = vcmp.ge.f32.partialorder %v375, 0.0
      %vm502 = vcmp.ge.f32.partialorder %v378, 0.0
      %vm503 = vcmp.ge.f32.partialorder %v383, 0.0
      %vm504 = vcmp.ge.f32.partialorder %v386, 0.0
      %vm505 = vcmp.ge.f32.partialorder %v391, 0.0
      %vm506 = vcmp.ge.f32.partialorder %v394, 0.0
      %vm507 = vcmp.ge.f32.partialorder %v399, 0.0
      %vm508 = vcmp.ge.f32.partialorder %v402, 0.0
      %vm509 = vcmp.ge.f32.partialorder %v407, 0.0
      %vm510 = vcmp.ge.f32.partialorder %v410, 0.0
      %vm511 = vcmp.ge.f32.partialorder %v415, 0.0
      %vm512 = vcmp.ge.f32.partialorder %v418, 0.0
      %vm513 = vcmp.ge.f32.partialorder %v423, 0.0
      %vm514 = vcmp.ge.f32.partialorder %v426, 0.0
      %vm515 = vcmp.ge.f32.partialorder %v431, 0.0
      %vm516 = vcmp.ge.f32.partialorder %v434, 0.0
      %vm517 = vcmp.ge.f32.partialorder %v439, 0.0
      %vm518 = vcmp.ge.f32.partialorder %v442, 0.0
      %vm519 = vcmp.ge.f32.partialorder %v447, 0.0
      %vm520 = vcmp.ge.f32.partialorder %v450, 0.0
      %vm521 = vcmp.ge.f32.partialorder %v455, 0.0
      %vm522 = vcmp.ge.f32.partialorder %v458, 0.0
      %vm523 = vcmp.ge.f32.partialorder %v463, 0.0
      %vm524 = vcmp.ge.f32.partialorder %v466, 0.0
      %vm525 = vcmp.ge.f32.partialorder %v471, 0.0
      %vm526 = vcmp.ge.f32.partialorder %v474, 0.0
      %vm527 = vcmp.ge.f32.partialorder %v479, 0.0
      %vm528 = vcmp.ge.f32.partialorder %v482, 0.0
      %vm529 = vcmp.ge.f32.partialorder %v487, 0.0
      %vm530 = vcmp.ge.f32.partialorder %v490, 0.0
      %vm531 = vcmp.ge.f32.partialorder %v495, 0.0
      %vm532 = vcmp.ge.f32.partialorder %v498, 0.0
      %v533 = vmul.f32 %v375, 0.2
      %v534 = vmul.f32 %v378, 0.2
      %v535 = vmul.f32 %v383, 0.2
      %v536 = vmul.f32 %v386, 0.2
      %v537 = vmul.f32 %v391, 0.2
      %v538 = vmul.f32 %v394, 0.2
      %v539 = vmul.f32 %v399, 0.2
      %v540 = vmul.f32 %v402, 0.2
      %v541 = vmul.f32 %v407, 0.2
      %v542 = vmul.f32 %v410, 0.2
      %v543 = vmul.f32 %v415, 0.2
      %v544 = vmul.f32 %v418, 0.2
      %v545 = vmul.f32 %v423, 0.2
      %v546 = vmul.f32 %v426, 0.2
      %v547 = vmul.f32 %v431, 0.2
      %v548 = vmul.f32 %v434, 0.2
      %v549 = vmul.f32 %v439, 0.2
      %v550 = vmul.f32 %v442, 0.2
      %v551 = vmul.f32 %v447, 0.2
      %v552 = vmul.f32 %v450, 0.2
      %v553 = vmul.f32 %v455, 0.2
      %v554 = vmul.f32 %v458, 0.2
      %v555 = vmul.f32 %v463, 0.2
      %v556 = vmul.f32 %v466, 0.2
      %v557 = vmul.f32 %v471, 0.2
      %v558 = vmul.f32 %v474, 0.2
      %v559 = vmul.f32 %v479, 0.2
      %v560 = vmul.f32 %v482, 0.2
      %v561 = vmul.f32 %v487, 0.2
      %v562 = vmul.f32 %v490, 0.2
      %v563 = vmul.f32 %v495, 0.2
      %v564 = vmul.f32 %v498, 0.2
      %v565 = vsel %vm501, %v375, %v533
      %v566 = vsel %vm502, %v378, %v534
      %v567 = vsel %vm503, %v383, %v535
      %v568 = vsel %vm504, %v386, %v536
      %v569 = vsel %vm505, %v391, %v537
      %v570 = vsel %vm506, %v394, %v538
      %v571 = vsel %vm507, %v399, %v539
      %v572 = vsel %vm508, %v402, %v540
      %v573 = vsel %vm509, %v407, %v541
      %v574 = vsel %vm510, %v410, %v542
      %v575 = vsel %vm511, %v415, %v543
      %v576 = vsel %vm512, %v418, %v544
      %v577 = vsel %vm513, %v423, %v545
      %v578 = vsel %vm514, %v426, %v546
      %v579 = vsel %vm515, %v431, %v547
      %v580 = vsel %vm516, %v434, %v548
      %v581 = vsel %vm517, %v439, %v549
      %v582 = vsel %vm518, %v442, %v550
      %v583 = vsel %vm519, %v447, %v551
      %v584 = vsel %vm520, %v450, %v552
      %v585 = vsel %vm521, %v455, %v553
      %v586 = vsel %vm522, %v458, %v554
      %v587 = vsel %vm523, %v463, %v555
      %v588 = vsel %vm524, %v466, %v556
      %v589 = vsel %vm525, %v471, %v557
      %v590 = vsel %vm526, %v474, %v558
      %v591 = vsel %vm527, %v479, %v559
      %v592 = vsel %vm528, %v482, %v560
      %v593 = vsel %vm529, %v487, %v561
      %v594 = vsel %vm530, %v490, %v562
      %v595 = vsel %vm531, %v495, %v563
      %v596 = vsel %vm532, %v498, %v564
      %v597 = vpack.c.bf16 %v566, %v565
      %v598 = vpack.c.bf16 %v568, %v567
      %v599 = vpack.c.bf16 %v570, %v569
      %v600 = vpack.c.bf16 %v572, %v571
      %v601 = vpack.c.bf16 %v574, %v573
      %v602 = vpack.c.bf16 %v576, %v575
      %v603 = vpack.c.bf16 %v578, %v577
      %v604 = vpack.c.bf16 %v580, %v579
      %v605 = vpack.c.bf16 %v582, %v581
      %v606 = vpack.c.bf16 %v584, %v583
      %v607 = vpack.c.bf16 %v586, %v585
      %v608 = vpack.c.bf16 %v588, %v587
      %v609 = vpack.c.bf16 %v590, %v589
      %v610 = vpack.c.bf16 %v592, %v591
      %v611 = vpack.c.bf16 %v594, %v593
      %v612 = vpack.c.bf16 %v596, %v595
      %v629 = vunpack.c.l.b16 %v597
      %v630 = vunpack.c.h.b16 %v597
      %v631 = vunpack.c.l.b16 %v598
      %v632 = vunpack.c.h.b16 %v598
      %v633 = vunpack.c.l.b16 %v599
      %v634 = vunpack.c.h.b16 %v599
      %v635 = vunpack.c.l.b16 %v600
      %v636 = vunpack.c.h.b16 %v600
      %v637 = vunpack.c.l.b16 %v601
      %v638 = vunpack.c.h.b16 %v601
      %v639 = vunpack.c.l.b16 %v602
      %v640 = vunpack.c.h.b16 %v602
      %v641 = vunpack.c.l.b16 %v603
      %v642 = vunpack.c.h.b16 %v603
      %v643 = vunpack.c.l.b16 %v604
      %v644 = vunpack.c.h.b16 %v604
      %v645 = vunpack.c.l.b16 %v605
      %v646 = vunpack.c.h.b16 %v605
      %v647 = vunpack.c.l.b16 %v606
      %v648 = vunpack.c.h.b16 %v606
      %v649 = vunpack.c.l.b16 %v607
      %v650 = vunpack.c.h.b16 %v607
      %v651 = vunpack.c.l.b16 %v608
      %v652 = vunpack.c.h.b16 %v608
      %v653 = vunpack.c.l.b16 %v609
      %v654 = vunpack.c.h.b16 %v609
      %v655 = vunpack.c.l.b16 %v610
      %v656 = vunpack.c.h.b16 %v610
      %v657 = vunpack.c.l.b16 %v611
      %v658 = vunpack.c.h.b16 %v611
      %v659 = vunpack.c.l.b16 %v612
      %v660 = vunpack.c.h.b16 %v612
      %v661 = vpack.c.b16 %v629, %v629
      %v662 = vpack.c.b16 %v630, %v630
      %v663 = vpack.c.b16 %v631, %v631
      %v664 = vpack.c.b16 %v632, %v632
      %v665 = vpack.c.b16 %v633, %v633
      %v666 = vpack.c.b16 %v634, %v634
      %v667 = vpack.c.b16 %v635, %v635
      %v668 = vpack.c.b16 %v636, %v636
      %v669 = vpack.c.b16 %v637, %v637
      %v670 = vpack.c.b16 %v638, %v638
      %v671 = vpack.c.b16 %v639, %v639
      %v672 = vpack.c.b16 %v640, %v640
      %v673 = vpack.c.b16 %v641, %v641
      %v674 = vpack.c.b16 %v642, %v642
      %v675 = vpack.c.b16 %v643, %v643
      %v676 = vpack.c.b16 %v644, %v644
      %v677 = vpack.c.b16 %v645, %v645
      %v678 = vpack.c.b16 %v646, %v646
      %v679 = vpack.c.b16 %v647, %v647
      %v680 = vpack.c.b16 %v648, %v648
      %v681 = vpack.c.b16 %v649, %v649
      %v682 = vpack.c.b16 %v650, %v650
      %v683 = vpack.c.b16 %v651, %v651
      %v684 = vpack.c.b16 %v652, %v652
      %v685 = vpack.c.b16 %v653, %v653
      %v686 = vpack.c.b16 %v654, %v654
      %v687 = vpack.c.b16 %v655, %v655
      %v688 = vpack.c.b16 %v656, %v656
      %v689 = vpack.c.b16 %v657, %v657
      %v690 = vpack.c.b16 %v658, %v658
      %v691 = vpack.c.b16 %v659, %v659
      %v692 = vpack.c.b16 %v660, %v660
      %725 = vst [vmem:[%s145] sm:$0xf] %v661
      %726 = vst [vmem:[%s145 + $0x4] sm:$0xf] %v662
      %727 = vst [vmem:[%s145 + $0x8] sm:$0xf] %v663
      %728 = vst [vmem:[%s145 + $0xc] sm:$0xf] %v664
      %729 = vst [vmem:[%s145 + $0x10] sm:$0xf] %v665
      %730 = vst [vmem:[%s145 + $0x14] sm:$0xf] %v666
      %731 = vst [vmem:[%s145 + $0x18] sm:$0xf] %v667
      %732 = vst [vmem:[%s145 + $0x1c] sm:$0xf] %v668
      %733 = vst [vmem:[%s145 + $0x20] sm:$0xf] %v669
      %734 = vst [vmem:[%s145 + $0x24] sm:$0xf] %v670
      %735 = vst [vmem:[%s145 + $0x28] sm:$0xf] %v671
      %736 = vst [vmem:[%s145 + $0x2c] sm:$0xf] %v672
      %737 = vst [vmem:[%s145 + $0x30] sm:$0xf] %v673
      %738 = vst [vmem:[%s145 + $0x34] sm:$0xf] %v674
      %739 = vst [vmem:[%s145 + $0x38] sm:$0xf] %v675
      %740 = vst [vmem:[%s145 + $0x3c] sm:$0xf] %v676
      %741 = vst [vmem:[%s145 + $0x40] sm:$0xf] %v677
      %742 = vst [vmem:[%s145 + $0x44] sm:$0xf] %v678
      %743 = vst [vmem:[%s145 + $0x48] sm:$0xf] %v679
      %744 = vst [vmem:[%s145 + $0x4c] sm:$0xf] %v680
      %745 = vst [vmem:[%s145 + $0x50] sm:$0xf] %v681
      %746 = vst [vmem:[%s145 + $0x54] sm:$0xf] %v682
      %747 = vst [vmem:[%s145 + $0x58] sm:$0xf] %v683
      %748 = vst [vmem:[%s145 + $0x5c] sm:$0xf] %v684
      %749 = vst [vmem:[%s145 + $0x60] sm:$0xf] %v685
      %750 = vst [vmem:[%s145 + $0x64] sm:$0xf] %v686
      %751 = vst [vmem:[%s145 + $0x68] sm:$0xf] %v687
      %752 = vst [vmem:[%s145 + $0x6c] sm:$0xf] %v688
      %753 = vst [vmem:[%s145 + $0x70] sm:$0xf] %v689
      %754 = vst [vmem:[%s145 + $0x74] sm:$0xf] %v690
      %755 = vst [vmem:[%s145 + $0x78] sm:$0xf] %v691
      %756 = vst [vmem:[%s145 + $0x7c] sm:$0xf] %v692
      %s757 = smul.u32 32, %s13
      %p758 = scmp.lt.s32.totalorder %s757, 63
      %s759 = scalar_select %p758, %s757, 63
      %s760 = smul.addr %s759, 4
      %s761 = scalar_lea.vmem %s2, %s760
      // Predicated region
      $region29: #{_lambda_.8} parent=27 // pred_check
        %p762 = pneg %p78
      $region30: #{_lambda_.8} parent=27 // pred_check_branch
        %764 = sbr.rel (%p762) target = $region32
      $region31: #{_lambda_.8} parent=27 // pred_region
        %s765 = smul.u32 32, %s13
      $region32: #{_lambda_.8} parent=27 // pred_fallthru
        _
    $region28: #{_lambda_.8} parent=5 // pred_fallthru
      _
    %p766 = scmp.le.s32.totalorder 2, %s8
    // Predicated region
    $region33: #{_lambda_.8} parent=5 // pred_check
      %p767 = pneg %p766
    $region34: #{_lambda_.8} parent=5 // pred_check_branch
      %769 = sbr.rel (%p767) target = $region36
    $region35: #{_lambda_.8} parent=5 // pred_region
      %s770 = ssub.s32 %s8, 2
      // Predicated region
      $region37: #{_lambda_.8} parent=35 // pred_check
        %p771 = pneg %p84
      $region38: #{_lambda_.8} parent=35 // pred_check_branch
        %773 = sbr.rel (%p771) target = $region40
      $region39: #{_lambda_.8} parent=35 // pred_region
        %s774 = smul.u32 32, %s14
        %p775 = scmp.lt.s32.totalorder %s774, 63
        %s776 = scalar_select %p775, %s774, 63
        %s777 = smul.addr %s776, 4
        %s778 = scalar_lea.vmem %s2, %s777
      $region40: #{_lambda_.8} parent=35 // pred_fallthru
        _
    $region36: #{_lambda_.8} parent=5 // pred_fallthru
      _
  $region6: #{_lambda_.8} parent=0 // loop_footer
    %s12 = sadd.s32 1, %s8
  $region7: #{_lambda_.8} parent=0 // loop_footer_branch
    %7 = sbr.rel target = $region3
  $region8: #{_lambda_.8} parent=0 // loop_exit
    _

// kernel: _lambda_.9
$region0: #{_lambda_.9}
  #allocation0 [shape = 'u32[]', space=smem, size = 0x4, offset = 0x4, fixed_abs, tag = 'smem constant byte address 0x4 - core index']
  #allocation1 [shape = 'u32[144,128]{1,0:T(1,128)}', space=vmem, size = 0x12000, scoped, tag = 'internal scratch']
  %s0 = inlined_call_operand.vmem [shape: bf16[128,256], index: 0, kind: input, shape index: {}]
  %s1 = inlined_call_operand.vmem [shape: bf16[256,128], index: 1, kind: input, shape index: {}]
  %s2 = inlined_call_operand.vmem [shape: bf16[128,128], index: 2, kind: output, shape index: {}]
  %s3 = sld [smem:[#allocation0]]
  $region41: #{_lambda_.9} parent=0
    _
  %s5 = ssub.s32 1, %s3
  %s6 = scalar_select 0, %s5, %s3
  loop: start=0, step=1, limit=4
  $region2: #{_lambda_.9} parent=0 // loop_pre_header
    _
  $region3: #{_lambda_.9} parent=0 // loop_header
    %s8 = sphi 0, %s12
    %p9 = scmp.ge.s32.totalorder %s8, 4
    %s18 = sphi 0, %s20
    %s21 = sphi 0, %s18
    %s22 = sphi 0, %s21
    %s38 = sphi 0, %s22
    %s42 = sphi 0, %s42
    %s44 = sphi 0, %s42
    %s45 = sphi 0, %s44
    %s59 = sphi 0, %s45
    %s65 = sphi 0, %s67
    %s68 = sphi 0, %s65
    %s69 = sphi 0, %s68
    %s85 = sphi 0, %s69
  $region4: #{_lambda_.9} parent=0 // loop_header_branch
    %11 = sbr.rel (%p9) target = $region8
  $region5: #{_lambda_.9} parent=0 // loop_body
    %s13 = ssub.s32 %s8, 1
    %s14 = ssub.s32 %s8, 2
    %s15 = sadd.s32 %s8, 1
    %s16 = ssub.s32 %s8, %s15
    %p17 = scmp.eq.s32.totalorder %s16, 0
    %s19 = sadd.s32 %s18, 1
    %s20 = scalar_select %p17, %s18, %s19
    %p23 = pneg %p17
    %p24 = scmp.eq.s32.totalorder %s8, 1
    %p25 = por %p23, %p24
    %p26 = scmp.ne.s32.totalorder %s18, %s21
    %p27 = scmp.eq.s32.totalorder %s8, 0
    %p28 = por %p26, %p27
    %p29 = scmp.ne.s32.totalorder %s18, %s21
    %p30 = scmp.eq.s32.totalorder %s13, 1
    %p31 = por %p29, %p30
    %p32 = scmp.ne.s32.totalorder %s21, %s22
    %p33 = scmp.eq.s32.totalorder %s13, 0
    %p34 = por %p32, %p33
    %p35 = scmp.ne.s32.totalorder %s21, %s22
    %p36 = scmp.eq.s32.totalorder %s14, 1
    %p37 = por %p35, %p36
    %p39 = scmp.ne.s32.totalorder %s22, %s38
    %p40 = scmp.eq.s32.totalorder %s14, 0
    %p41 = por %p39, %p40
    %s43 = sadd.s32 %s42, 1
    %p46 = scmp.eq.s32.totalorder %s8, 1
    %p47 = scmp.ne.s32.totalorder %s42, %s44
    %p48 = scmp.eq.s32.totalorder %s8, 0
    %p49 = por %p47, %p48
    %p50 = scmp.ne.s32.totalorder %s42, %s44
    %p51 = scmp.eq.s32.totalorder %s13, 1
    %p52 = por %p50, %p51
    %p53 = scmp.ne.s32.totalorder %s44, %s45
    %p54 = scmp.eq.s32.totalorder %s13, 0
    %p55 = por %p53, %p54
    %p56 = scmp.ne.s32.totalorder %s44, %s45
    %p57 = scmp.eq.s32.totalorder %s14, 1
    %p58 = por %p56, %p57
    %p60 = scmp.ne.s32.totalorder %s45, %s59
    %p61 = scmp.eq.s32.totalorder %s14, 0
    %p62 = por %p60, %p61
    %s63 = ssub.s32 %s8, %s15
    %p64 = scmp.eq.s32.totalorder %s63, 0
    %s66 = sadd.s32 %s65, 1
    %s67 = scalar_select %p64, %s65, %s66
    %p70 = pneg %p64
    %p71 = scmp.eq.s32.totalorder %s8, 1
    %p72 = por %p70, %p71
    %p73 = scmp.ne.s32.totalorder %s65, %s68
    %p74 = scmp.eq.s32.totalorder %s8, 0
    %p75 = por %p73, %p74
    %p76 = scmp.ne.s32.totalorder %s65, %s68
    %p77 = scmp.eq.s32.totalorder %s13, 1
    %p78 = por %p76, %p77
    %p79 = scmp.ne.s32.totalorder %s68, %s69
    %p80 = scmp.eq.s32.totalorder %s13, 0
    %p81 = por %p79, %p80
    %p82 = scmp.ne.s32.totalorder %s68, %s69
    %p83 = scmp.eq.s32.totalorder %s14, 1
    %p84 = por %p82, %p83
    %p86 = scmp.ne.s32.totalorder %s69, %s85
    %p87 = scmp.eq.s32.totalorder %s14, 0
    %p88 = por %p86, %p87
    %p89 = scmp.le.s32.totalorder 1, %s8
    %p90 = scmp.lt.s32.totalorder %s8, 3
    %p91 = pnand %p89, %p90
    %p92 = pneg %p91
    // Predicated region
    $region9: #{_lambda_.9} parent=5 // pred_check
      _
    $region10: #{_lambda_.9} parent=5 // pred_check_branch
      %94 = sbr.rel (%p91) target = $region12
    $region11: #{_lambda_.9} parent=5 // pred_region
      %s95 = ssub.s32 %s8, 1
      // Predicated region
      $region13: #{_lambda_.9} parent=11 // pred_check
        %p96 = pneg %p55
      $region14: #{_lambda_.9} parent=11 // pred_check_branch
        %98 = sbr.rel (%p96) target = $region16
      $region15: #{_lambda_.9} parent=11 // pred_region
        _
      $region16: #{_lambda_.9} parent=11 // pred_fallthru
        _
    $region12: #{_lambda_.9} parent=5 // pred_fallthru
      _
    %p99 = scmp.lt.s32.totalorder %s8, 2
    // Predicated region
    $region17: #{_lambda_.9} parent=5 // pred_check
      %p100 = pneg %p99
    $region18: #{_lambda_.9} parent=5 // pred_check_branch
      %102 = sbr.rel (%p100) target = $region20
    $region19: #{_lambda_.9} parent=5 // pred_region
      // Predicated region
      $region21: #{_lambda_.9} parent=19 // pred_check
        %p103 = pneg %p28
      $region22: #{_lambda_.9} parent=19 // pred_check_branch
        %105 = sbr.rel (%p103) target = $region24
      $region23: #{_lambda_.9} parent=19 // pred_region
        %s106 = smul.u32 8, %s8
        %p107 = scmp.lt.s32.totalorder %s106, 15
        %s108 = scalar_select %p107, %s106, 15
        %s109 = smul.addr %s108, 2
        %s110 = smul.addr %s109, 4
        %s111 = scalar_lea.vmem %s0, %s110
        %s112 = smul.u32 8, %s8
      $region24: #{_lambda_.9} parent=19 // pred_fallthru
        _
    $region20: #{_lambda_.9} parent=5 // pred_fallthru
      _
    %p113 = scmp.le.s32.totalorder 1, %s8
    %p114 = scmp.lt.s32.totalorder %s8, 3
    %p115 = pnand %p113, %p114
    %p116 = pneg %p115
    // Predicated region
    $region25: #{_lambda_.9} parent=5 // pred_check
      _
    $region26: #{_lambda_.9} parent=5 // pred_check_branch
      %118 = sbr.rel (%p115) target = $region28
    $region27: #{_lambda_.9} parent=5 // pred_region
      %s119 = ssub.s32 %s8, 1
      %s120 = smul.u32 8, %s13
      %p121 = scmp.lt.s32.totalorder %s120, 15
      %s122 = scalar_select %p121, %s120, 15
      %s123 = smul.addr %s122, 2
      %s124 = smul.addr %s123, 4
      %s125 = scalar_lea.vmem %s0, %s124
      %p126 = pneg %p34
      %p127 = pneg %p31
      %p128 = pneg %p55
      %p129 = pneg %p52
      %p130 = pneg %p81
      %p131 = pneg %p78
      %s132 = smul.u32 8, %s13
      %p133 = scmp.lt.s32.totalorder %s132, 15
      %s134 = scalar_select %p133, %s132, 15
      %s135 = smul.addr %s134, 4
      %s136 = scalar_lea.vmem %s2, %s135
      %s137 = smul.u32 8, %s13
      %p138 = scmp.lt.s32.totalorder %s137, 15
      %s139 = scalar_select %p138, %s137, 15
      %s140 = smul.addr %s139, 2
      %s141 = smul.addr %s140, 4
      %s142 = scalar_lea.vmem %s0, %s141
      %s143 = smul.u32 8, %s13
      %s144 = smul.u32 8, %s13
      %p145 = scmp.lt.s32.totalorder %s144, 15
      %s146 = scalar_select %p145, %s144, 15
      %s147 = smul.addr %s146, 4
      %s148 = scalar_lea.vmem %s2, %s147
      %s149 = smul.u32 8, %s13
      %v151 = vld [vmem:[%s142] sm:$0xff]
      %v152 = vld [vmem:[%s142 + $0x8] sm:$0xff]
      %v153 = vld [vmem:[%s142 + $0x10] sm:$0xff]
      %v154 = vld [vmem:[%s142 + $0x18] sm:$0xff]
      %v155 = vld [vmem:[%s142 + $0x20] sm:$0xff]
      %v156 = vld [vmem:[%s142 + $0x28] sm:$0xff]
      %v157 = vld [vmem:[%s142 + $0x30] sm:$0xff]
      %v158 = vld [vmem:[%s142 + $0x38] sm:$0xff]
      %v159 = vld [vmem:[%s1] sm:$0xf]
      %v160 = vld [vmem:[%s1 + $0x4] sm:$0xf]
      %v161 = vld [vmem:[%s1 + $0x8] sm:$0xf]
      %v162 = vld [vmem:[%s1 + $0xc] sm:$0xf]
      %v163 = vld [vmem:[%s1 + $0x10] sm:$0xf]
      %v164 = vld [vmem:[%s1 + $0x14] sm:$0xf]
      %v165 = vld [vmem:[%s1 + $0x18] sm:$0xf]
      %v166 = vld [vmem:[%s1 + $0x1c] sm:$0xf]
      %v167 = vld [vmem:[%s1 + $0x20] sm:$0xf]
      %v168 = vld [vmem:[%s1 + $0x24] sm:$0xf]
      %v169 = vld [vmem:[%s1 + $0x28] sm:$0xf]
      %v170 = vld [vmem:[%s1 + $0x2c] sm:$0xf]
      %v171 = vld [vmem:[%s1 + $0x30] sm:$0xf]
      %v172 = vld [vmem:[%s1 + $0x34] sm:$0xf]
      %v173 = vld [vmem:[%s1 + $0x38] sm:$0xf]
      %v174 = vld [vmem:[%s1 + $0x3c] sm:$0xf]
      %v175 = vld [vmem:[%s1 + $0x40] sm:$0xf]
      %v176 = vld [vmem:[%s1 + $0x44] sm:$0xf]
      %v177 = vld [vmem:[%s1 + $0x48] sm:$0xf]
      %v178 = vld [vmem:[%s1 + $0x4c] sm:$0xf]
      %v179 = vld [vmem:[%s1 + $0x50] sm:$0xf]
      %v180 = vld [vmem:[%s1 + $0x54] sm:$0xf]
      %v181 = vld [vmem:[%s1 + $0x58] sm:$0xf]
      %v182 = vld [vmem:[%s1 + $0x5c] sm:$0xf]
      %v183 = vld [vmem:[%s1 + $0x60] sm:$0xf]
      %v184 = vld [vmem:[%s1 + $0x64] sm:$0xf]
      %v185 = vld [vmem:[%s1 + $0x68] sm:$0xf]
      %v186 = vld [vmem:[%s1 + $0x6c] sm:$0xf]
      %v187 = vld [vmem:[%s1 + $0x70] sm:$0xf]
      %v188 = vld [vmem:[%s1 + $0x74] sm:$0xf]
      %v189 = vld [vmem:[%s1 + $0x78] sm:$0xf]
      %v190 = vld [vmem:[%s1 + $0x7c] sm:$0xf]
      %v199 = vunpack.c.l.b16 %v151
      %v200 = vunpack.c.h.b16 %v151
      %v201 = vunpack.c.l.b16 %v152
      %v202 = vunpack.c.h.b16 %v152
      %v203 = vunpack.c.l.b16 %v153
      %v204 = vunpack.c.h.b16 %v153
      %v205 = vunpack.c.l.b16 %v154
      %v206 = vunpack.c.h.b16 %v154
      %v207 = vunpack.c.l.b16 %v155
      %v208 = vunpack.c.h.b16 %v155
      %v209 = vunpack.c.l.b16 %v156
      %v210 = vunpack.c.h.b16 %v156
      %v211 = vunpack.c.l.b16 %v157
      %v212 = vunpack.c.h.b16 %v157
      %v213 = vunpack.c.l.b16 %v158
      %v214 = vunpack.c.h.b16 %v158
      %v215 = vpack.c.b16 %v201, %v199
      %v216 = vpack.c.b16 %v202, %v200
      %v217 = vpack.c.b16 %v205, %v203
      %v218 = vpack.c.b16 %v206, %v204
      %v219 = vpack.c.b16 %v209, %v207
      %v220 = vpack.c.b16 %v210, %v208
      %v221 = vpack.c.b16 %v213, %v211
      %v222 = vpack.c.b16 %v214, %v212
      %v263 = vunpack.c.l.b16 %v159
      %v264 = vunpack.c.l.b16 %v160
      %v265 = vunpack.c.l.b16 %v161
      %v266 = vunpack.c.l.b16 %v162
      %v267 = vunpack.c.l.b16 %v163
      %v268 = vunpack.c.l.b16 %v164
      %v269 = vunpack.c.l.b16 %v165
      %v270 = vunpack.c.l.b16 %v166
      %v271 = vunpack.c.l.b16 %v167
      %v272 = vunpack.c.l.b16 %v168
      %v273 = vunpack.c.l.b16 %v169
      %v274 = vunpack.c.l.b16 %v170
      %v275 = vunpack.c.l.b16 %v171
      %v276 = vunpack.c.l.b16 %v172
      %v277 = vunpack.c.l.b16 %v173
      %v278 = vunpack.c.l.b16 %v174
      %v279 = vunpack.c.l.b16 %v175
      %v280 = vunpack.c.l.b16 %v176
      %v281 = vunpack.c.l.b16 %v177
      %v282 = vunpack.c.l.b16 %v178
      %v283 = vunpack.c.l.b16 %v179
      %v284 = vunpack.c.l.b16 %v180
      %v285 = vunpack.c.l.b16 %v181
      %v286 = vunpack.c.l.b16 %v182
      %v287 = vunpack.c.l.b16 %v183
      %v288 = vunpack.c.l.b16 %v184
      %v289 = vunpack.c.l.b16 %v185
      %v290 = vunpack.c.l.b16 %v186
      %v291 = vunpack.c.l.b16 %v187
      %v292 = vunpack.c.l.b16 %v188
      %v293 = vunpack.c.l.b16 %v189
      %v294 = vunpack.c.l.b16 %v190
      %v295 = vpack.c.b16 %v264, %v263
      %v296 = vpack.c.b16 %v266, %v265
      %v297 = vpack.c.b16 %v268, %v267
      %v298 = vpack.c.b16 %v270, %v269
      %v299 = vpack.c.b16 %v272, %v271
      %v300 = vpack.c.b16 %v274, %v273
      %v301 = vpack.c.b16 %v276, %v275
      %v302 = vpack.c.b16 %v278, %v277
      %v303 = vpack.c.b16 %v280, %v279
      %v304 = vpack.c.b16 %v282, %v281
      %v305 = vpack.c.b16 %v284, %v283
      %v306 = vpack.c.b16 %v286, %v285
      %v307 = vpack.c.b16 %v288, %v287
      %v308 = vpack.c.b16 %v290, %v289
      %v309 = vpack.c.b16 %v292, %v291
      %v310 = vpack.c.b16 %v294, %v293
      %327 = vmatprep.subr.bf16.mxu0 0
      %328 = vmatpush1.bf16.msra.mxu0 %v295
      %329 = vmatprep.subr.bf16.mxu0 0
      %330 = vmatpush1.bf16.msra.mxu0 %v296
      %331 = vmatprep.subr.bf16.mxu0 0
      %332 = vmatpush1.bf16.msra.mxu0 %v297
      %333 = vmatprep.subr.bf16.mxu0 0
      %334 = vmatpush1.bf16.msra.mxu0 %v298
      %335 = vmatprep.subr.bf16.mxu0 0
      %336 = vmatpush1.bf16.msra.mxu0 %v299
      %337 = vmatprep.subr.bf16.mxu0 0
      %338 = vmatpush1.bf16.msra.mxu0 %v300
      %339 = vmatprep.subr.bf16.mxu0 0
      %340 = vmatpush1.bf16.msra.mxu0 %v301
      %341 = vmatprep.subr.bf16.mxu0 0
      %342 = vmatpush1.bf16.msra.mxu0 %v302
      %343 = vmatprep.subr.bf16.mxu0 0
      %344 = vmatpush1.bf16.msra.mxu0 %v303
      %345 = vmatprep.subr.bf16.mxu0 0
      %346 = vmatpush1.bf16.msra.mxu0 %v304
      %347 = vmatprep.subr.bf16.mxu0 0
      %348 = vmatpush1.bf16.msra.mxu0 %v305
      %349 = vmatprep.subr.bf16.mxu0 0
      %350 = vmatpush1.bf16.msra.mxu0 %v306
      %351 = vmatprep.subr.bf16.mxu0 0
      %352 = vmatpush1.bf16.msra.mxu0 %v307
      %353 = vmatprep.subr.bf16.mxu0 0
      %354 = vmatpush1.bf16.msra.mxu0 %v308
      %355 = vmatprep.subr.bf16.mxu0 0
      %356 = vmatpush1.bf16.msra.mxu0 %v309
      %357 = vmatprep.subr.bf16.mxu0 0
      %358 = vmatpush1.bf16.msra.mxu0 %v310
      %359 = vmatprep.mubr.bf16.mxu0 %v216
      %360 = vmatmul.mubr.bf16.gmra.mrb[0].mxu0 %v215
      %v361 = vpop.f32.mrb[0].mxu0
      %v362 = vadd.f32 0.0, %v361
      %v363 = vpop.f32.mrb[0].mxu0
      %v364 = vpop.f32.mrb[0].mxu0
      %v365 = vadd.f32 0.0, %v364
      %v366 = vpop.f32.mrb[0].mxu0
      %367 = vmatprep.mubr.bf16.mxu0 %v218
      %368 = vmatmul.mubr.bf16.gmra.mrb[0].mxu0 %v217
      %v369 = vpop.f32.mrb[0].mxu0
      %v370 = vadd.f32 0.0, %v369
      %v371 = vpop.f32.mrb[0].mxu0
      %v372 = vpop.f32.mrb[0].mxu0
      %v373 = vadd.f32 0.0, %v372
      %v374 = vpop.f32.mrb[0].mxu0
      %375 = vmatprep.mubr.bf16.mxu0 %v220
      %376 = vmatmul.mubr.bf16.gmra.mrb[0].mxu0 %v219
      %v377 = vpop.f32.mrb[0].mxu0
      %v378 = vadd.f32 0.0, %v377
      %v379 = vpop.f32.mrb[0].mxu0
      %v380 = vpop.f32.mrb[0].mxu0
      %v381 = vadd.f32 0.0, %v380
      %v382 = vpop.f32.mrb[0].mxu0
      %383 = vmatprep.mubr.bf16.mxu0 %v222
      %384 = vmatmul.mubr.bf16.gmra.mrb[0].mxu0 %v221
      %v385 = vpop.f32.mrb[0].mxu0
      %v386 = vadd.f32 0.0, %v385
      %v387 = vpop.f32.mrb[0].mxu0
      %v388 = vpop.f32.mrb[0].mxu0
      %v389 = vadd.f32 0.0, %v388
      %v390 = vpop.f32.mrb[0].mxu0
      %391 = vdwg.mxu0
      %vm392 = vcmp.ge.f32.partialorder %v362, 0.0
      %vm393 = vcmp.ge.f32.partialorder %v365, 0.0
      %vm394 = vcmp.ge.f32.partialorder %v370, 0.0
      %vm395 = vcmp.ge.f32.partialorder %v373, 0.0
      %vm396 = vcmp.ge.f32.partialorder %v378, 0.0
      %vm397 = vcmp.ge.f32.partialorder %v381, 0.0
      %vm398 = vcmp.ge.f32.partialorder %v386, 0.0
      %vm399 = vcmp.ge.f32.partialorder %v389, 0.0
      %v400 = vmul.f32 %v362, 0.2
      %v401 = vmul.f32 %v365, 0.2
      %v402 = vmul.f32 %v370, 0.2
      %v403 = vmul.f32 %v373, 0.2
      %v404 = vmul.f32 %v378, 0.2
      %v405 = vmul.f32 %v381, 0.2
      %v406 = vmul.f32 %v386, 0.2
      %v407 = vmul.f32 %v389, 0.2
      %v408 = vsel %vm392, %v362, %v400
      %v409 = vsel %vm393, %v365, %v401
      %v410 = vsel %vm394, %v370, %v402
      %v411 = vsel %vm395, %v373, %v403
      %v412 = vsel %vm396, %v378, %v404
      %v413 = vsel %vm397, %v381, %v405
      %v414 = vsel %vm398, %v386, %v406
      %v415 = vsel %vm399, %v389, %v407
      %v416 = vpack.c.bf16 %v409, %v408
      %v417 = vpack.c.bf16 %v411, %v410
      %v418 = vpack.c.bf16 %v413, %v412
      %v419 = vpack.c.bf16 %v415, %v414
      %v424 = vunpack.c.l.b16 %v416
      %v425 = vunpack.c.h.b16 %v416
      %v426 = vunpack.c.l.b16 %v417
      %v427 = vunpack.c.h.b16 %v417
      %v428 = vunpack.c.l.b16 %v418
      %v429 = vunpack.c.h.b16 %v418
      %v430 = vunpack.c.l.b16 %v419
      %v431 = vunpack.c.h.b16 %v419
      %v432 = vpack.c.b16 %v424, %v424
      %v433 = vpack.c.b16 %v425, %v425
      %v434 = vpack.c.b16 %v426, %v426
      %v435 = vpack.c.b16 %v427, %v427
      %v436 = vpack.c.b16 %v428, %v428
      %v437 = vpack.c.b16 %v429, %v429
      %v438 = vpack.c.b16 %v430, %v430
      %v439 = vpack.c.b16 %v431, %v431
      %448 = vst [vmem:[%s148] sm:$0xf] %v432
      %449 = vst [vmem:[%s148 + $0x4] sm:$0xf] %v433
      %450 = vst [vmem:[%s148 + $0x8] sm:$0xf] %v434
      %451 = vst [vmem:[%s148 + $0xc] sm:$0xf] %v435
      %452 = vst [vmem:[%s148 + $0x10] sm:$0xf] %v436
      %453 = vst [vmem:[%s148 + $0x14] sm:$0xf] %v437
      %454 = vst [vmem:[%s148 + $0x18] sm:$0xf] %v438
      %455 = vst [vmem:[%s148 + $0x1c] sm:$0xf] %v439
      %s456 = smul.u32 8, %s13
      %p457 = scmp.lt.s32.totalorder %s456, 15
      %s458 = scalar_select %p457, %s456, 15
      %s459 = smul.addr %s458, 4
      %s460 = scalar_lea.vmem %s2, %s459
      // Predicated region
      $region29: #{_lambda_.9} parent=27 // pred_check
        %p461 = pneg %p78
      $region30: #{_lambda_.9} parent=27 // pred_check_branch
        %463 = sbr.rel (%p461) target = $region32
      $region31: #{_lambda_.9} parent=27 // pred_region
        %s464 = smul.u32 8, %s13
      $region32: #{_lambda_.9} parent=27 // pred_fallthru
        _
    $region28: #{_lambda_.9} parent=5 // pred_fallthru
      _
    %p465 = scmp.le.s32.totalorder 2, %s8
    // Predicated region
    $region33: #{_lambda_.9} parent=5 // pred_check
      %p466 = pneg %p465
    $region34: #{_lambda_.9} parent=5 // pred_check_branch
      %468 = sbr.rel (%p466) target = $region36
    $region35: #{_lambda_.9} parent=5 // pred_region
      %s469 = ssub.s32 %s8, 2
      // Predicated region
      $region37: #{_lambda_.9} parent=35 // pred_check
        %p470 = pneg %p84
      $region38: #{_lambda_.9} parent=35 // pred_check_branch
        %472 = sbr.rel (%p470) target = $region40
      $region39: #{_lambda_.9} parent=35 // pred_region
        %s473 = smul.u32 8, %s14
        %p474 = scmp.lt.s32.totalorder %s473, 15
        %s475 = scalar_select %p474, %s473, 15
        %s476 = smul.addr %s475, 4
        %s477 = scalar_lea.vmem %s2, %s476
      $region40: #{_lambda_.9} parent=35 // pred_fallthru
        _
    $region36: #{_lambda_.9} parent=5 // pred_fallthru
      _
  $region6: #{_lambda_.9} parent=0 // loop_footer
    %s12 = sadd.s32 1, %s8
  $region7: #{_lambda_.9} parent=0 // loop_footer_branch
    %7 = sbr.rel target = $region3
  $region8: #{_lambda_.9} parent=0 // loop_exit
    _

// kernel: _lambda_.10
$region0: #{_lambda_.10}
  #allocation0 [shape = 'u32[]', space=smem, size = 0x4, offset = 0x4, fixed_abs, tag = 'smem constant byte address 0x4 - core index']
  #allocation1 [shape = 'u32[144,128]{1,0:T(1,128)}', space=vmem, size = 0x12000, scoped, tag = 'internal scratch']
  %s0 = inlined_call_operand.vmem [shape: bf16[32,512], index: 0, kind: input, shape index: {}]
  %s1 = inlined_call_operand.vmem [shape: bf16[512,128], index: 1, kind: input, shape index: {}]
  %s2 = inlined_call_operand.vmem [shape: bf16[32,128], index: 2, kind: output, shape index: {}]
  %s3 = sld [smem:[#allocation0]]
  $region41: #{_lambda_.10} parent=0
    _
  %s5 = ssub.s32 1, %s3
  %s6 = scalar_select 0, %s5, %s3
  loop: start=0, step=1, limit=4
  $region2: #{_lambda_.10} parent=0 // loop_pre_header
    _
  $region3: #{_lambda_.10} parent=0 // loop_header
    %s8 = sphi 0, %s12
    %p9 = scmp.ge.s32.totalorder %s8, 4
    %s18 = sphi 0, %s20
    %s21 = sphi 0, %s18
    %s22 = sphi 0, %s21
    %s38 = sphi 0, %s22
    %s42 = sphi 0, %s42
    %s44 = sphi 0, %s42
    %s45 = sphi 0, %s44
    %s59 = sphi 0, %s45
    %s65 = sphi 0, %s67
    %s68 = sphi 0, %s65
    %s69 = sphi 0, %s68
    %s85 = sphi 0, %s69
  $region4: #{_lambda_.10} parent=0 // loop_header_branch
    %11 = sbr.rel (%p9) target = $region8
  $region5: #{_lambda_.10} parent=0 // loop_body
    %s13 = ssub.s32 %s8, 1
    %s14 = ssub.s32 %s8, 2
    %s15 = sadd.s32 %s8, 1
    %s16 = ssub.s32 %s8, %s15
    %p17 = scmp.eq.s32.totalorder %s16, 0
    %s19 = sadd.s32 %s18, 1
    %s20 = scalar_select %p17, %s18, %s19
    %p23 = pneg %p17
    %p24 = scmp.eq.s32.totalorder %s8, 1
    %p25 = por %p23, %p24
    %p26 = scmp.ne.s32.totalorder %s18, %s21
    %p27 = scmp.eq.s32.totalorder %s8, 0
    %p28 = por %p26, %p27
    %p29 = scmp.ne.s32.totalorder %s18, %s21
    %p30 = scmp.eq.s32.totalorder %s13, 1
    %p31 = por %p29, %p30
    %p32 = scmp.ne.s32.totalorder %s21, %s22
    %p33 = scmp.eq.s32.totalorder %s13, 0
    %p34 = por %p32, %p33
    %p35 = scmp.ne.s32.totalorder %s21, %s22
    %p36 = scmp.eq.s32.totalorder %s14, 1
    %p37 = por %p35, %p36
    %p39 = scmp.ne.s32.totalorder %s22, %s38
    %p40 = scmp.eq.s32.totalorder %s14, 0
    %p41 = por %p39, %p40
    %s43 = sadd.s32 %s42, 1
    %p46 = scmp.eq.s32.totalorder %s8, 1
    %p47 = scmp.ne.s32.totalorder %s42, %s44
    %p48 = scmp.eq.s32.totalorder %s8, 0
    %p49 = por %p47, %p48
    %p50 = scmp.ne.s32.totalorder %s42, %s44
    %p51 = scmp.eq.s32.totalorder %s13, 1
    %p52 = por %p50, %p51
    %p53 = scmp.ne.s32.totalorder %s44, %s45
    %p54 = scmp.eq.s32.totalorder %s13, 0
    %p55 = por %p53, %p54
    %p56 = scmp.ne.s32.totalorder %s44, %s45
    %p57 = scmp.eq.s32.totalorder %s14, 1
    %p58 = por %p56, %p57
    %p60 = scmp.ne.s32.totalorder %s45, %s59
    %p61 = scmp.eq.s32.totalorder %s14, 0
    %p62 = por %p60, %p61
    %s63 = ssub.s32 %s8, %s15
    %p64 = scmp.eq.s32.totalorder %s63, 0
    %s66 = sadd.s32 %s65, 1
    %s67 = scalar_select %p64, %s65, %s66
    %p70 = pneg %p64
    %p71 = scmp.eq.s32.totalorder %s8, 1
    %p72 = por %p70, %p71
    %p73 = scmp.ne.s32.totalorder %s65, %s68
    %p74 = scmp.eq.s32.totalorder %s8, 0
    %p75 = por %p73, %p74
    %p76 = scmp.ne.s32.totalorder %s65, %s68
    %p77 = scmp.eq.s32.totalorder %s13, 1
    %p78 = por %p76, %p77
    %p79 = scmp.ne.s32.totalorder %s68, %s69
    %p80 = scmp.eq.s32.totalorder %s13, 0
    %p81 = por %p79, %p80
    %p82 = scmp.ne.s32.totalorder %s68, %s69
    %p83 = scmp.eq.s32.totalorder %s14, 1
    %p84 = por %p82, %p83
    %p86 = scmp.ne.s32.totalorder %s69, %s85
    %p87 = scmp.eq.s32.totalorder %s14, 0
    %p88 = por %p86, %p87
    %p89 = scmp.le.s32.totalorder 1, %s8
    %p90 = scmp.lt.s32.totalorder %s8, 3
    %p91 = pnand %p89, %p90
    %p92 = pneg %p91
    // Predicated region
    $region9: #{_lambda_.10} parent=5 // pred_check
      _
    $region10: #{_lambda_.10} parent=5 // pred_check_branch
      %94 = sbr.rel (%p91) target = $region12
    $region11: #{_lambda_.10} parent=5 // pred_region
      %s95 = ssub.s32 %s8, 1
      // Predicated region
      $region13: #{_lambda_.10} parent=11 // pred_check
        %p96 = pneg %p55
      $region14: #{_lambda_.10} parent=11 // pred_check_branch
        %98 = sbr.rel (%p96) target = $region16
      $region15: #{_lambda_.10} parent=11 // pred_region
        _
      $region16: #{_lambda_.10} parent=11 // pred_fallthru
        _
    $region12: #{_lambda_.10} parent=5 // pred_fallthru
      _
    %p99 = scmp.lt.s32.totalorder %s8, 2
    // Predicated region
    $region17: #{_lambda_.10} parent=5 // pred_check
      %p100 = pneg %p99
    $region18: #{_lambda_.10} parent=5 // pred_check_branch
      %102 = sbr.rel (%p100) target = $region20
    $region19: #{_lambda_.10} parent=5 // pred_region
      // Predicated region
      $region21: #{_lambda_.10} parent=19 // pred_check
        %p103 = pneg %p28
      $region22: #{_lambda_.10} parent=19 // pred_check_branch
        %105 = sbr.rel (%p103) target = $region24
      $region23: #{_lambda_.10} parent=19 // pred_region
        %s106 = smul.u32 2, %s8
        %p107 = scmp.lt.s32.totalorder %s106, 3
        %s108 = scalar_select %p107, %s106, 3
        %s109 = smul.addr %s108, 4
        %s110 = smul.addr %s109, 4
        %s111 = scalar_lea.vmem %s0, %s110
        %s112 = smul.u32 2, %s8
      $region24: #{_lambda_.10} parent=19 // pred_fallthru
        _
    $region20: #{_lambda_.10} parent=5 // pred_fallthru
      _
    %p113 = scmp.le.s32.totalorder 1, %s8
    %p114 = scmp.lt.s32.totalorder %s8, 3
    %p115 = pnand %p113, %p114
    %p116 = pneg %p115
    // Predicated region
    $region25: #{_lambda_.10} parent=5 // pred_check
      _
    $region26: #{_lambda_.10} parent=5 // pred_check_branch
      %118 = sbr.rel (%p115) target = $region28
    $region27: #{_lambda_.10} parent=5 // pred_region
      %s119 = ssub.s32 %s8, 1
      %s120 = smul.u32 2, %s13
      %p121 = scmp.lt.s32.totalorder %s120, 3
      %s122 = scalar_select %p121, %s120, 3
      %s123 = smul.addr %s122, 4
      %s124 = smul.addr %s123, 4
      %s125 = scalar_lea.vmem %s0, %s124
      %p126 = pneg %p34
      %p127 = pneg %p31
      %p128 = pneg %p55
      %p129 = pneg %p52
      %p130 = pneg %p81
      %p131 = pneg %p78
      %s132 = smul.u32 2, %s13
      %p133 = scmp.lt.s32.totalorder %s132, 3
      %s134 = scalar_select %p133, %s132, 3
      %s135 = smul.addr %s134, 4
      %s136 = scalar_lea.vmem %s2, %s135
      %s137 = smul.u32 2, %s13
      %p138 = scmp.lt.s32.totalorder %s137, 3
      %s139 = scalar_select %p138, %s137, 3
      %s140 = smul.addr %s139, 4
      %s141 = smul.addr %s140, 4
      %s142 = scalar_lea.vmem %s0, %s141
      %s143 = smul.u32 2, %s13
      %s144 = smul.u32 2, %s13
      %p145 = scmp.lt.s32.totalorder %s144, 3
      %s146 = scalar_select %p145, %s144, 3
      %s147 = smul.addr %s146, 4
      %s148 = scalar_lea.vmem %s2, %s147
      %s149 = smul.u32 2, %s13
      %v151 = vld [vmem:[%s142] sm:$0xff]
      %v152 = vld [vmem:[%s142 + $0x8] sm:$0xff]
      %v153 = vld [vmem:[%s142 + $0x10] sm:$0xff]
      %v154 = vld [vmem:[%s142 + $0x18] sm:$0xff]
      %v155 = vld [vmem:[%s1] sm:$0xf]
      %v156 = vld [vmem:[%s1 + $0x4] sm:$0xf]
      %v157 = vld [vmem:[%s1 + $0x8] sm:$0xf]
      %v158 = vld [vmem:[%s1 + $0xc] sm:$0xf]
      %v159 = vld [vmem:[%s1 + $0x10] sm:$0xf]
      %v160 = vld [vmem:[%s1 + $0x14] sm:$0xf]
      %v161 = vld [vmem:[%s1 + $0x18] sm:$0xf]
      %v162 = vld [vmem:[%s1 + $0x1c] sm:$0xf]
      %v163 = vld [vmem:[%s1 + $0x20] sm:$0xf]
      %v164 = vld [vmem:[%s1 + $0x24] sm:$0xf]
      %v165 = vld [vmem:[%s1 + $0x28] sm:$0xf]
      %v166 = vld [vmem:[%s1 + $0x2c] sm:$0xf]
      %v167 = vld [vmem:[%s1 + $0x30] sm:$0xf]
      %v168 = vld [vmem:[%s1 + $0x34] sm:$0xf]
      %v169 = vld [vmem:[%s1 + $0x38] sm:$0xf]
      %v170 = vld [vmem:[%s1 + $0x3c] sm:$0xf]
      %v171 = vld [vmem:[%s1 + $0x40] sm:$0xf]
      %v172 = vld [vmem:[%s1 + $0x44] sm:$0xf]
      %v173 = vld [vmem:[%s1 + $0x48] sm:$0xf]
      %v174 = vld [vmem:[%s1 + $0x4c] sm:$0xf]
      %v175 = vld [vmem:[%s1 + $0x50] sm:$0xf]
      %v176 = vld [vmem:[%s1 + $0x54] sm:$0xf]
      %v177 = vld [vmem:[%s1 + $0x58] sm:$0xf]
      %v178 = vld [vmem:[%s1 + $0x5c] sm:$0xf]
      %v179 = vld [vmem:[%s1 + $0x60] sm:$0xf]
      %v180 = vld [vmem:[%s1 + $0x64] sm:$0xf]
      %v181 = vld [vmem:[%s1 + $0x68] sm:$0xf]
      %v182 = vld [vmem:[%s1 + $0x6c] sm:$0xf]
      %v183 = vld [vmem:[%s1 + $0x70] sm:$0xf]
      %v184 = vld [vmem:[%s1 + $0x74] sm:$0xf]
      %v185 = vld [vmem:[%s1 + $0x78] sm:$0xf]
      %v186 = vld [vmem:[%s1 + $0x7c] sm:$0xf]
      %v187 = vld [vmem:[%s1 + $0x80] sm:$0xf]
      %v188 = vld [vmem:[%s1 + $0x84] sm:$0xf]
      %v189 = vld [vmem:[%s1 + $0x88] sm:$0xf]
      %v190 = vld [vmem:[%s1 + $0x8c] sm:$0xf]
      %v191 = vld [vmem:[%s1 + $0x90] sm:$0xf]
      %v192 = vld [vmem:[%s1 + $0x94] sm:$0xf]
      %v193 = vld [vmem:[%s1 + $0x98] sm:$0xf]
      %v194 = vld [vmem:[%s1 + $0x9c] sm:$0xf]
      %v195 = vld [vmem:[%s1 + $0xa0] sm:$0xf]
      %v196 = vld [vmem:[%s1 + $0xa4] sm:$0xf]
      %v197 = vld [vmem:[%s1 + $0xa8] sm:$0xf]
      %v198 = vld [vmem:[%s1 + $0xac] sm:$0xf]
      %v199 = vld [vmem:[%s1 + $0xb0] sm:$0xf]
      %v200 = vld [vmem:[%s1 + $0xb4] sm:$0xf]
      %v201 = vld [vmem:[%s1 + $0xb8] sm:$0xf]
      %v202 = vld [vmem:[%s1 + $0xbc] sm:$0xf]
      %v203 = vld [vmem:[%s1 + $0xc0] sm:$0xf]
      %v204 = vld [vmem:[%s1 + $0xc4] sm:$0xf]
      %v205 = vld [vmem:[%s1 + $0xc8] sm:$0xf]
      %v206 = vld [vmem:[%s1 + $0xcc] sm:$0xf]
      %v207 = vld [vmem:[%s1 + $0xd0] sm:$0xf]
      %v208 = vld [vmem:[%s1 + $0xd4] sm:$0xf]
      %v209 = vld [vmem:[%s1 + $0xd8] sm:$0xf]
      %v210 = vld [vmem:[%s1 + $0xdc] sm:$0xf]
      %v211 = vld [vmem:[%s1 + $0xe0] sm:$0xf]
      %v212 = vld [vmem:[%s1 + $0xe4] sm:$0xf]
      %v213 = vld [vmem:[%s1 + $0xe8] sm:$0xf]
      %v214 = vld [vmem:[%s1 + $0xec] sm:$0xf]
      %v215 = vld [vmem:[%s1 + $0xf0] sm:$0xf]
      %v216 = vld [vmem:[%s1 + $0xf4] sm:$0xf]
      %v217 = vld [vmem:[%s1 + $0xf8] sm:$0xf]
      %v218 = vld [vmem:[%s1 + $0xfc] sm:$0xf]
      %v223 = vunpack.c.l.b16 %v151
      %v224 = vunpack.c.h.b16 %v151
      %v225 = vunpack.c.l.b16 %v152
      %v226 = vunpack.c.h.b16 %v152
      %v227 = vunpack.c.l.b16 %v153
      %v228 = vunpack.c.h.b16 %v153
      %v229 = vunpack.c.l.b16 %v154
      %v230 = vunpack.c.h.b16 %v154
      %v231 = vpack.c.b16 %v227, %v223
      %v232 = vpack.c.b16 %v228, %v224
      %v233 = vpack.c.b16 %v229, %v225
      %v234 = vpack.c.b16 %v230, %v226
      %v303 = vunpack.c.l.b16 %v155
      %v304 = vunpack.c.l.b16 %v156
      %v305 = vunpack.c.l.b16 %v157
      %v306 = vunpack.c.l.b16 %v158
      %v307 = vunpack.c.l.b16 %v159
      %v308 = vunpack.c.l.b16 %v160
      %v309 = vunpack.c.l.b16 %v161
      %v310 = vunpack.c.l.b16 %v162
      %v311 = vunpack.c.l.b16 %v163
      %v312 = vunpack.c.l.b16 %v164
      %v313 = vunpack.c.l.b16 %v165
      %v314 = vunpack.c.l.b16 %v166
      %v315 = vunpack.c.l.b16 %v167
      %v316 = vunpack.c.l.b16 %v168
      %v317 = vunpack.c.l.b16 %v169
      %v318 = vunpack.c.l.b16 %v170
      %v319 = vunpack.c.l.b16 %v171
      %v320 = vunpack.c.l.b16 %v172
      %v321 = vunpack.c.l.b16 %v173
      %v322 = vunpack.c.l.b16 %v174
      %v323 = vunpack.c.l.b16 %v175
      %v324 = vunpack.c.l.b16 %v176
      %v325 = vunpack.c.l.b16 %v177
      %v326 = vunpack.c.l.b16 %v178
      %v327 = vunpack.c.l.b16 %v179
      %v328 = vunpack.c.l.b16 %v180
      %v329 = vunpack.c.l.b16 %v181
      %v330 = vunpack.c.l.b16 %v182
      %v331 = vunpack.c.l.b16 %v183
      %v332 = vunpack.c.l.b16 %v184
      %v333 = vunpack.c.l.b16 %v185
      %v334 = vunpack.c.l.b16 %v186
      %v335 = vunpack.c.l.b16 %v187
      %v336 = vunpack.c.l.b16 %v188
      %v337 = vunpack.c.l.b16 %v189
      %v338 = vunpack.c.l.b16 %v190
      %v339 = vunpack.c.l.b16 %v191
      %v340 = vunpack.c.l.b16 %v192
      %v341 = vunpack.c.l.b16 %v193
      %v342 = vunpack.c.l.b16 %v194
      %v343 = vunpack.c.l.b16 %v195
      %v344 = vunpack.c.l.b16 %v196
      %v345 = vunpack.c.l.b16 %v197
      %v346 = vunpack.c.l.b16 %v198
      %v347 = vunpack.c.l.b16 %v199
      %v348 = vunpack.c.l.b16 %v200
      %v349 = vunpack.c.l.b16 %v201
      %v350 = vunpack.c.l.b16 %v202
      %v351 = vunpack.c.l.b16 %v203
      %v352 = vunpack.c.l.b16 %v204
      %v353 = vunpack.c.l.b16 %v205
      %v354 = vunpack.c.l.b16 %v206
      %v355 = vunpack.c.l.b16 %v207
      %v356 = vunpack.c.l.b16 %v208
      %v357 = vunpack.c.l.b16 %v209
      %v358 = vunpack.c.l.b16 %v210
      %v359 = vunpack.c.l.b16 %v211
      %v360 = vunpack.c.l.b16 %v212
      %v361 = vunpack.c.l.b16 %v213
      %v362 = vunpack.c.l.b16 %v214
      %v363 = vunpack.c.l.b16 %v215
      %v364 = vunpack.c.l.b16 %v216
      %v365 = vunpack.c.l.b16 %v217
      %v366 = vunpack.c.l.b16 %v218
      %v367 = vpack.c.b16 %v304, %v303
      %v368 = vpack.c.b16 %v306, %v305
      %v369 = vpack.c.b16 %v308, %v307
      %v370 = vpack.c.b16 %v310, %v309
      %v371 = vpack.c.b16 %v312, %v311
      %v372 = vpack.c.b16 %v314, %v313
      %v373 = vpack.c.b16 %v316, %v315
      %v374 = vpack.c.b16 %v318, %v317
      %v375 = vpack.c.b16 %v320, %v319
      %v376 = vpack.c.b16 %v322, %v321
      %v377 = vpack.c.b16 %v324, %v323
      %v378 = vpack.c.b16 %v326, %v325
      %v379 = vpack.c.b16 %v328, %v327
      %v380 = vpack.c.b16 %v330, %v329
      %v381 = vpack.c.b16 %v332, %v331
      %v382 = vpack.c.b16 %v334, %v333
      %v383 = vpack.c.b16 %v336, %v335
      %v384 = vpack.c.b16 %v338, %v337
      %v385 = vpack.c.b16 %v340, %v339
      %v386 = vpack.c.b16 %v342, %v341
      %v387 = vpack.c.b16 %v344, %v343
      %v388 = vpack.c.b16 %v346, %v345
      %v389 = vpack.c.b16 %v348, %v347
      %v390 = vpack.c.b16 %v350, %v349
      %v391 = vpack.c.b16 %v352, %v351
      %v392 = vpack.c.b16 %v354, %v353
      %v393 = vpack.c.b16 %v356, %v355
      %v394 = vpack.c.b16 %v358, %v357
      %v395 = vpack.c.b16 %v360, %v359
      %v396 = vpack.c.b16 %v362, %v361
      %v397 = vpack.c.b16 %v364, %v363
      %v398 = vpack.c.b16 %v366, %v365
      %431 = vmatprep.subr.bf16.mxu0 0
      %432 = vmatpush1.bf16.msra.mxu0 %v367
      %433 = vmatprep.subr.bf16.mxu0 0
      %434 = vmatpush1.bf16.msra.mxu0 %v368
      %435 = vmatprep.subr.bf16.mxu0 0
      %436 = vmatpush1.bf16.msra.mxu0 %v369
      %437 = vmatprep.subr.bf16.mxu0 0
      %438 = vmatpush1.bf16.msra.mxu0 %v370
      %439 = vmatprep.subr.bf16.mxu0 0
      %440 = vmatpush1.bf16.msra.mxu0 %v371
      %441 = vmatprep.subr.bf16.mxu0 0
      %442 = vmatpush1.bf16.msra.mxu0 %v372
      %443 = vmatprep.subr.bf16.mxu0 0
      %444 = vmatpush1.bf16.msra.mxu0 %v373
      %445 = vmatprep.subr.bf16.mxu0 0
      %446 = vmatpush1.bf16.msra.mxu0 %v374
      %447 = vmatprep.subr.bf16.mxu0 0
      %448 = vmatpush1.bf16.msra.mxu0 %v375
      %449 = vmatprep.subr.bf16.mxu0 0
      %450 = vmatpush1.bf16.msra.mxu0 %v376
      %451 = vmatprep.subr.bf16.mxu0 0
      %452 = vmatpush1.bf16.msra.mxu0 %v377
      %453 = vmatprep.subr.bf16.mxu0 0
      %454 = vmatpush1.bf16.msra.mxu0 %v378
      %455 = vmatprep.subr.bf16.mxu0 0
      %456 = vmatpush1.bf16.msra.mxu0 %v379
      %457 = vmatprep.subr.bf16.mxu0 0
      %458 = vmatpush1.bf16.msra.mxu0 %v380
      %459 = vmatprep.subr.bf16.mxu0 0
      %460 = vmatpush1.bf16.msra.mxu0 %v381
      %461 = vmatprep.subr.bf16.mxu0 0
      %462 = vmatpush1.bf16.msra.mxu0 %v382
      %463 = vmatprep.mubr.bf16.mxu0 %v232
      %464 = vmatmul.mubr.bf16.gmra.mrb[0].mxu0 %v231
      %v465 = vpop.f32.mrb[0].mxu0
      %v466 = vadd.f32 0.0, %v465
      %v467 = vpop.f32.mrb[0].mxu0
      %v468 = vpop.f32.mrb[0].mxu0
      %v469 = vadd.f32 0.0, %v468
      %v470 = vpop.f32.mrb[0].mxu0
      %471 = vdwg.mxu0
      %472 = vmatprep.subr.bf16.mxu0 0
      %473 = vmatpush1.bf16.msra.mxu0 %v383
      %474 = vmatprep.subr.bf16.mxu0 0
      %475 = vmatpush1.bf16.msra.mxu0 %v384
      %476 = vmatprep.subr.bf16.mxu0 0
      %477 = vmatpush1.bf16.msra.mxu0 %v385
      %478 = vmatprep.subr.bf16.mxu0 0
      %479 = vmatpush1.bf16.msra.mxu0 %v386
      %480 = vmatprep.subr.bf16.mxu0 0
      %481 = vmatpush1.bf16.msra.mxu0 %v387
      %482 = vmatprep.subr.bf16.mxu0 0
      %483 = vmatpush1.bf16.msra.mxu0 %v388
      %484 = vmatprep.subr.bf16.mxu0 0
      %485 = vmatpush1.bf16.msra.mxu0 %v389
      %486 = vmatprep.subr.bf16.mxu0 0
      %487 = vmatpush1.bf16.msra.mxu0 %v390
      %488 = vmatprep.subr.bf16.mxu0 0
      %489 = vmatpush1.bf16.msra.mxu0 %v391
      %490 = vmatprep.subr.bf16.mxu0 0
      %491 = vmatpush1.bf16.msra.mxu0 %v392
      %492 = vmatprep.subr.bf16.mxu0 0
      %493 = vmatpush1.bf16.msra.mxu0 %v393
      %494 = vmatprep.subr.bf16.mxu0 0
      %495 = vmatpush1.bf16.msra.mxu0 %v394
      %496 = vmatprep.subr.bf16.mxu0 0
      %497 = vmatpush1.bf16.msra.mxu0 %v395
      %498 = vmatprep.subr.bf16.mxu0 0
      %499 = vmatpush1.bf16.msra.mxu0 %v396
      %500 = vmatprep.subr.bf16.mxu0 0
      %501 = vmatpush1.bf16.msra.mxu0 %v397
      %502 = vmatprep.subr.bf16.mxu0 0
      %503 = vmatpush1.bf16.msra.mxu0 %v398
      %504 = vmatprep.mubr.bf16.mxu0 %v234
      %505 = vmatmul.mubr.bf16.gmra.mrb[0].mxu0 %v233
      %v506 = vpop.f32.mrb[0].mxu0
      %v507 = vadd.f32 %v466, %v506
      %v508 = vpop.f32.mrb[0].mxu0
      %v509 = vpop.f32.mrb[0].mxu0
      %v510 = vadd.f32 %v469, %v509
      %v511 = vpop.f32.mrb[0].mxu0
      %512 = vdwg.mxu0
      %vm513 = vcmp.ge.f32.partialorder %v507, 0.0
      %vm514 = vcmp.ge.f32.partialorder %v510, 0.0
      %v515 = vmul.f32 %v507, 0.2
      %v516 = vmul.f32 %v510, 0.2
      %v517 = vsel %vm513, %v507, %v515
      %v518 = vsel %vm514, %v510, %v516
      %v519 = vpack.c.bf16 %v518, %v517
      %v521 = vunpack.c.l.b16 %v519
      %v522 = vunpack.c.h.b16 %v519
      %v523 = vpack.c.b16 %v521, %v521
      %v524 = vpack.c.b16 %v522, %v522
      %527 = vst [vmem:[%s148] sm:$0xf] %v523
      %528 = vst [vmem:[%s148 + $0x4] sm:$0xf] %v524
      %s529 = smul.u32 2, %s13
      %p530 = scmp.lt.s32.totalorder %s529, 3
      %s531 = scalar_select %p530, %s529, 3
      %s532 = smul.addr %s531, 4
      %s533 = scalar_lea.vmem %s2, %s532
      // Predicated region
      $region29: #{_lambda_.10} parent=27 // pred_check
        %p534 = pneg %p78
      $region30: #{_lambda_.10} parent=27 // pred_check_branch
        %536 = sbr.rel (%p534) target = $region32
      $region31: #{_lambda_.10} parent=27 // pred_region
        %s537 = smul.u32 2, %s13
      $region32: #{_lambda_.10} parent=27 // pred_fallthru
        _
    $region28: #{_lambda_.10} parent=5 // pred_fallthru
      _
    %p538 = scmp.le.s32.totalorder 2, %s8
    // Predicated region
    $region33: #{_lambda_.10} parent=5 // pred_check
      %p539 = pneg %p538
    $region34: #{_lambda_.10} parent=5 // pred_check_branch
      %541 = sbr.rel (%p539) target = $region36
    $region35: #{_lambda_.10} parent=5 // pred_region
      %s542 = ssub.s32 %s8, 2
      // Predicated region
      $region37: #{_lambda_.10} parent=35 // pred_check
        %p543 = pneg %p84
      $region38: #{_lambda_.10} parent=35 // pred_check_branch
        %545 = sbr.rel (%p543) target = $region40
      $region39: #{_lambda_.10} parent=35 // pred_region
        %s546 = smul.u32 2, %s14
        %p547 = scmp.lt.s32.totalorder %s546, 3
        %s548 = scalar_select %p547, %s546, 3
        %s549 = smul.addr %s548, 4
        %s550 = scalar_lea.vmem %s2, %s549
      $region40: #{_lambda_.10} parent=35 // pred_fallthru
        _
    $region36: #{_lambda_.10} parent=5 // pred_fallthru
      _
  $region6: #{_lambda_.10} parent=0 // loop_footer
    %s12 = sadd.s32 1, %s8
  $region7: #{_lambda_.10} parent=0 // loop_footer_branch
    %7 = sbr.rel target = $region3
  $region8: #{_lambda_.10} parent=0 // loop_exit
    _

// kernel: _lambda_.11
$region0: #{_lambda_.11}
  #allocation0 [shape = 'u32[]', space=smem, size = 0x4, offset = 0x4, fixed_abs, tag = 'smem constant byte address 0x4 - core index']
  #allocation1 [shape = 'u32[144,128]{1,0:T(1,128)}', space=vmem, size = 0x12000, scoped, tag = 'internal scratch']
  %s0 = inlined_call_operand.vmem [shape: bf16[2,1024], index: 0, kind: input, shape index: {}]
  %s1 = inlined_call_operand.vmem [shape: bf16[1024,128], index: 1, kind: input, shape index: {}]
  %s2 = inlined_call_operand.vmem [shape: f32[2,128], index: 2, kind: output, shape index: {}]
  %s3 = sld [smem:[#allocation0]]
  $region18: #{_lambda_.11} parent=0
    _
  %s5 = ssub.s32 1, %s3
  %s6 = scalar_select 0, %s5, %s3
  // Predicated region
  $region2: #{_lambda_.11} parent=0 // pred_check
    _
  $region3: #{_lambda_.11} parent=0 // pred_check_branch
    %8 = sbr.rel (0) target = $region5
  $region4: #{_lambda_.11} parent=0 // pred_region
    _
  $region5: #{_lambda_.11} parent=0 // pred_fallthru
    _
  // Predicated region
  $region6: #{_lambda_.11} parent=0 // pred_check
    _
  $region7: #{_lambda_.11} parent=0 // pred_check_branch
    %10 = sbr.rel (0) target = $region9
  $region8: #{_lambda_.11} parent=0 // pred_region
    _
  $region9: #{_lambda_.11} parent=0 // pred_fallthru
    _
  %v12 = vld [vmem:[%s0] sm:$0xff]
  %v13 = vld [vmem:[%s1] sm:$0xf]
  %v14 = vld [vmem:[%s1 + $0x4] sm:$0xf]
  %v15 = vld [vmem:[%s1 + $0x8] sm:$0xf]
  %v16 = vld [vmem:[%s1 + $0xc] sm:$0xf]
  %v17 = vld [vmem:[%s1 + $0x10] sm:$0xf]
  %v18 = vld [vmem:[%s1 + $0x14] sm:$0xf]
  %v19 = vld [vmem:[%s1 + $0x18] sm:$0xf]
  %v20 = vld [vmem:[%s1 + $0x1c] sm:$0xf]
  %v21 = vld [vmem:[%s1 + $0x20] sm:$0xf]
  %v22 = vld [vmem:[%s1 + $0x24] sm:$0xf]
  %v23 = vld [vmem:[%s1 + $0x28] sm:$0xf]
  %v24 = vld [vmem:[%s1 + $0x2c] sm:$0xf]
  %v25 = vld [vmem:[%s1 + $0x30] sm:$0xf]
  %v26 = vld [vmem:[%s1 + $0x34] sm:$0xf]
  %v27 = vld [vmem:[%s1 + $0x38] sm:$0xf]
  %v28 = vld [vmem:[%s1 + $0x3c] sm:$0xf]
  %v29 = vld [vmem:[%s1 + $0x40] sm:$0xf]
  %v30 = vld [vmem:[%s1 + $0x44] sm:$0xf]
  %v31 = vld [vmem:[%s1 + $0x48] sm:$0xf]
  %v32 = vld [vmem:[%s1 + $0x4c] sm:$0xf]
  %v33 = vld [vmem:[%s1 + $0x50] sm:$0xf]
  %v34 = vld [vmem:[%s1 + $0x54] sm:$0xf]
  %v35 = vld [vmem:[%s1 + $0x58] sm:$0xf]
  %v36 = vld [vmem:[%s1 + $0x5c] sm:$0xf]
  %v37 = vld [vmem:[%s1 + $0x60] sm:$0xf]
  %v38 = vld [vmem:[%s1 + $0x64] sm:$0xf]
  %v39 = vld [vmem:[%s1 + $0x68] sm:$0xf]
  %v40 = vld [vmem:[%s1 + $0x6c] sm:$0xf]
  %v41 = vld [vmem:[%s1 + $0x70] sm:$0xf]
  %v42 = vld [vmem:[%s1 + $0x74] sm:$0xf]
  %v43 = vld [vmem:[%s1 + $0x78] sm:$0xf]
  %v44 = vld [vmem:[%s1 + $0x7c] sm:$0xf]
  %v45 = vld [vmem:[%s1 + $0x80] sm:$0xf]
  %v46 = vld [vmem:[%s1 + $0x84] sm:$0xf]
  %v47 = vld [vmem:[%s1 + $0x88] sm:$0xf]
  %v48 = vld [vmem:[%s1 + $0x8c] sm:$0xf]
  %v49 = vld [vmem:[%s1 + $0x90] sm:$0xf]
  %v50 = vld [vmem:[%s1 + $0x94] sm:$0xf]
  %v51 = vld [vmem:[%s1 + $0x98] sm:$0xf]
  %v52 = vld [vmem:[%s1 + $0x9c] sm:$0xf]
  %v53 = vld [vmem:[%s1 + $0xa0] sm:$0xf]
  %v54 = vld [vmem:[%s1 + $0xa4] sm:$0xf]
  %v55 = vld [vmem:[%s1 + $0xa8] sm:$0xf]
  %v56 = vld [vmem:[%s1 + $0xac] sm:$0xf]
  %v57 = vld [vmem:[%s1 + $0xb0] sm:$0xf]
  %v58 = vld [vmem:[%s1 + $0xb4] sm:$0xf]
  %v59 = vld [vmem:[%s1 + $0xb8] sm:$0xf]
  %v60 = vld [vmem:[%s1 + $0xbc] sm:$0xf]
  %v61 = vld [vmem:[%s1 + $0xc0] sm:$0xf]
  %v62 = vld [vmem:[%s1 + $0xc4] sm:$0xf]
  %v63 = vld [vmem:[%s1 + $0xc8] sm:$0xf]
  %v64 = vld [vmem:[%s1 + $0xcc] sm:$0xf]
  %v65 = vld [vmem:[%s1 + $0xd0] sm:$0xf]
  %v66 = vld [vmem:[%s1 + $0xd4] sm:$0xf]
  %v67 = vld [vmem:[%s1 + $0xd8] sm:$0xf]
  %v68 = vld [vmem:[%s1 + $0xdc] sm:$0xf]
  %v69 = vld [vmem:[%s1 + $0xe0] sm:$0xf]
  %v70 = vld [vmem:[%s1 + $0xe4] sm:$0xf]
  %v71 = vld [vmem:[%s1 + $0xe8] sm:$0xf]
  %v72 = vld [vmem:[%s1 + $0xec] sm:$0xf]
  %v73 = vld [vmem:[%s1 + $0xf0] sm:$0xf]
  %v74 = vld [vmem:[%s1 + $0xf4] sm:$0xf]
  %v75 = vld [vmem:[%s1 + $0xf8] sm:$0xf]
  %v76 = vld [vmem:[%s1 + $0xfc] sm:$0xf]
  %v77 = vld [vmem:[%s1 + $0x100] sm:$0xf]
  %v78 = vld [vmem:[%s1 + $0x104] sm:$0xf]
  %v79 = vld [vmem:[%s1 + $0x108] sm:$0xf]
  %v80 = vld [vmem:[%s1 + $0x10c] sm:$0xf]
  %v81 = vld [vmem:[%s1 + $0x110] sm:$0xf]
  %v82 = vld [vmem:[%s1 + $0x114] sm:$0xf]
  %v83 = vld [vmem:[%s1 + $0x118] sm:$0xf]
  %v84 = vld [vmem:[%s1 + $0x11c] sm:$0xf]
  %v85 = vld [vmem:[%s1 + $0x120] sm:$0xf]
  %v86 = vld [vmem:[%s1 + $0x124] sm:$0xf]
  %v87 = vld [vmem:[%s1 + $0x128] sm:$0xf]
  %v88 = vld [vmem:[%s1 + $0x12c] sm:$0xf]
  %v89 = vld [vmem:[%s1 + $0x130] sm:$0xf]
  %v90 = vld [vmem:[%s1 + $0x134] sm:$0xf]
  %v91 = vld [vmem:[%s1 + $0x138] sm:$0xf]
  %v92 = vld [vmem:[%s1 + $0x13c] sm:$0xf]
  %v93 = vld [vmem:[%s1 + $0x140] sm:$0xf]
  %v94 = vld [vmem:[%s1 + $0x144] sm:$0xf]
  %v95 = vld [vmem:[%s1 + $0x148] sm:$0xf]
  %v96 = vld [vmem:[%s1 + $0x14c] sm:$0xf]
  %v97 = vld [vmem:[%s1 + $0x150] sm:$0xf]
  %v98 = vld [vmem:[%s1 + $0x154] sm:$0xf]
  %v99 = vld [vmem:[%s1 + $0x158] sm:$0xf]
  %v100 = vld [vmem:[%s1 + $0x15c] sm:$0xf]
  %v101 = vld [vmem:[%s1 + $0x160] sm:$0xf]
  %v102 = vld [vmem:[%s1 + $0x164] sm:$0xf]
  %v103 = vld [vmem:[%s1 + $0x168] sm:$0xf]
  %v104 = vld [vmem:[%s1 + $0x16c] sm:$0xf]
  %v105 = vld [vmem:[%s1 + $0x170] sm:$0xf]
  %v106 = vld [vmem:[%s1 + $0x174] sm:$0xf]
  %v107 = vld [vmem:[%s1 + $0x178] sm:$0xf]
  %v108 = vld [vmem:[%s1 + $0x17c] sm:$0xf]
  %v109 = vld [vmem:[%s1 + $0x180] sm:$0xf]
  %v110 = vld [vmem:[%s1 + $0x184] sm:$0xf]
  %v111 = vld [vmem:[%s1 + $0x188] sm:$0xf]
  %v112 = vld [vmem:[%s1 + $0x18c] sm:$0xf]
  %v113 = vld [vmem:[%s1 + $0x190] sm:$0xf]
  %v114 = vld [vmem:[%s1 + $0x194] sm:$0xf]
  %v115 = vld [vmem:[%s1 + $0x198] sm:$0xf]
  %v116 = vld [vmem:[%s1 + $0x19c] sm:$0xf]
  %v117 = vld [vmem:[%s1 + $0x1a0] sm:$0xf]
  %v118 = vld [vmem:[%s1 + $0x1a4] sm:$0xf]
  %v119 = vld [vmem:[%s1 + $0x1a8] sm:$0xf]
  %v120 = vld [vmem:[%s1 + $0x1ac] sm:$0xf]
  %v121 = vld [vmem:[%s1 + $0x1b0] sm:$0xf]
  %v122 = vld [vmem:[%s1 + $0x1b4] sm:$0xf]
  %v123 = vld [vmem:[%s1 + $0x1b8] sm:$0xf]
  %v124 = vld [vmem:[%s1 + $0x1bc] sm:$0xf]
  %v125 = vld [vmem:[%s1 + $0x1c0] sm:$0xf]
  %v126 = vld [vmem:[%s1 + $0x1c4] sm:$0xf]
  %v127 = vld [vmem:[%s1 + $0x1c8] sm:$0xf]
  %v128 = vld [vmem:[%s1 + $0x1cc] sm:$0xf]
  %v129 = vld [vmem:[%s1 + $0x1d0] sm:$0xf]
  %v130 = vld [vmem:[%s1 + $0x1d4] sm:$0xf]
  %v131 = vld [vmem:[%s1 + $0x1d8] sm:$0xf]
  %v132 = vld [vmem:[%s1 + $0x1dc] sm:$0xf]
  %v133 = vld [vmem:[%s1 + $0x1e0] sm:$0xf]
  %v134 = vld [vmem:[%s1 + $0x1e4] sm:$0xf]
  %v135 = vld [vmem:[%s1 + $0x1e8] sm:$0xf]
  %v136 = vld [vmem:[%s1 + $0x1ec] sm:$0xf]
  %v137 = vld [vmem:[%s1 + $0x1f0] sm:$0xf]
  %v138 = vld [vmem:[%s1 + $0x1f4] sm:$0xf]
  %v139 = vld [vmem:[%s1 + $0x1f8] sm:$0xf]
  %v140 = vld [vmem:[%s1 + $0x1fc] sm:$0xf]
  %v142 = vcombine.high %v12, %v12
  %v144 = vunpack.c.l.s4 1966171168
  %v145 = vunpack.c.0.s8 %v144
  %v146 = vlaneseq
  %v147 = vshrl.u32 %v146, 7
  %v148 = vsub.s32 %v145, %v147
  %v149 = vrot.slane %v12, %v148
  %v151 = vunpack.c.l.s4 1966171168
  %v152 = vunpack.c.0.s8 %v151
  %v153 = vlaneseq
  %v154 = vshrl.u32 %v153, 7
  %v155 = vsub.s32 %v152, %v154
  %v156 = vrot.slane %v142, %v155
  %v157 = vcombine.high %v149, %v149
  %v158 = vcombine.high %v156, %v156
  %v160 = vunpack.c.l.s4 1966171168
  %v161 = vunpack.c.0.s8 %v160
  %v162 = vlaneseq
  %v163 = vshrl.u32 %v162, 7
  %v164 = vsub.s32 %v161, %v163
  %v165 = vrot.slane %v149, %v164
  %v167 = vunpack.c.l.s4 1966171168
  %v168 = vunpack.c.0.s8 %v167
  %v169 = vlaneseq
  %v170 = vshrl.u32 %v169, 7
  %v171 = vsub.s32 %v168, %v170
  %v172 = vrot.slane %v156, %v171
  %v174 = vunpack.c.l.s4 1966171168
  %v175 = vunpack.c.0.s8 %v174
  %v176 = vlaneseq
  %v177 = vshrl.u32 %v176, 7
  %v178 = vsub.s32 %v175, %v177
  %v179 = vrot.slane %v157, %v178
  %v181 = vunpack.c.l.s4 1966171168
  %v182 = vunpack.c.0.s8 %v181
  %v183 = vlaneseq
  %v184 = vshrl.u32 %v183, 7
  %v185 = vsub.s32 %v182, %v184
  %v186 = vrot.slane %v158, %v185
  %v187 = vcombine.high %v165, %v165
  %v188 = vcombine.high %v172, %v172
  %v189 = vcombine.high %v179, %v179
  %v190 = vcombine.high %v186, %v186
  %v327 = vunpack.c.l.b16 %v13
  %v328 = vunpack.c.l.b16 %v14
  %v329 = vunpack.c.l.b16 %v15
  %v330 = vunpack.c.l.b16 %v16
  %v331 = vunpack.c.l.b16 %v17
  %v332 = vunpack.c.l.b16 %v18
  %v333 = vunpack.c.l.b16 %v19
  %v334 = vunpack.c.l.b16 %v20
  %v335 = vunpack.c.l.b16 %v21
  %v336 = vunpack.c.l.b16 %v22
  %v337 = vunpack.c.l.b16 %v23
  %v338 = vunpack.c.l.b16 %v24
  %v339 = vunpack.c.l.b16 %v25
  %v340 = vunpack.c.l.b16 %v26
  %v341 = vunpack.c.l.b16 %v27
  %v342 = vunpack.c.l.b16 %v28
  %v343 = vunpack.c.l.b16 %v29
  %v344 = vunpack.c.l.b16 %v30
  %v345 = vunpack.c.l.b16 %v31
  %v346 = vunpack.c.l.b16 %v32
  %v347 = vunpack.c.l.b16 %v33
  %v348 = vunpack.c.l.b16 %v34
  %v349 = vunpack.c.l.b16 %v35
  %v350 = vunpack.c.l.b16 %v36
  %v351 = vunpack.c.l.b16 %v37
  %v352 = vunpack.c.l.b16 %v38
  %v353 = vunpack.c.l.b16 %v39
  %v354 = vunpack.c.l.b16 %v40
  %v355 = vunpack.c.l.b16 %v41
  %v356 = vunpack.c.l.b16 %v42
  %v357 = vunpack.c.l.b16 %v43
  %v358 = vunpack.c.l.b16 %v44
  %v359 = vunpack.c.l.b16 %v45
  %v360 = vunpack.c.l.b16 %v46
  %v361 = vunpack.c.l.b16 %v47
  %v362 = vunpack.c.l.b16 %v48
  %v363 = vunpack.c.l.b16 %v49
  %v364 = vunpack.c.l.b16 %v50
  %v365 = vunpack.c.l.b16 %v51
  %v366 = vunpack.c.l.b16 %v52
  %v367 = vunpack.c.l.b16 %v53
  %v368 = vunpack.c.l.b16 %v54
  %v369 = vunpack.c.l.b16 %v55
  %v370 = vunpack.c.l.b16 %v56
  %v371 = vunpack.c.l.b16 %v57
  %v372 = vunpack.c.l.b16 %v58
  %v373 = vunpack.c.l.b16 %v59
  %v374 = vunpack.c.l.b16 %v60
  %v375 = vunpack.c.l.b16 %v61
  %v376 = vunpack.c.l.b16 %v62
  %v377 = vunpack.c.l.b16 %v63
  %v378 = vunpack.c.l.b16 %v64
  %v379 = vunpack.c.l.b16 %v65
  %v380 = vunpack.c.l.b16 %v66
  %v381 = vunpack.c.l.b16 %v67
  %v382 = vunpack.c.l.b16 %v68
  %v383 = vunpack.c.l.b16 %v69
  %v384 = vunpack.c.l.b16 %v70
  %v385 = vunpack.c.l.b16 %v71
  %v386 = vunpack.c.l.b16 %v72
  %v387 = vunpack.c.l.b16 %v73
  %v388 = vunpack.c.l.b16 %v74
  %v389 = vunpack.c.l.b16 %v75
  %v390 = vunpack.c.l.b16 %v76
  %v391 = vunpack.c.l.b16 %v77
  %v392 = vunpack.c.l.b16 %v78
  %v393 = vunpack.c.l.b16 %v79
  %v394 = vunpack.c.l.b16 %v80
  %v395 = vunpack.c.l.b16 %v81
  %v396 = vunpack.c.l.b16 %v82
  %v397 = vunpack.c.l.b16 %v83
  %v398 = vunpack.c.l.b16 %v84
  %v399 = vunpack.c.l.b16 %v85
  %v400 = vunpack.c.l.b16 %v86
  %v401 = vunpack.c.l.b16 %v87
  %v402 = vunpack.c.l.b16 %v88
  %v403 = vunpack.c.l.b16 %v89
  %v404 = vunpack.c.l.b16 %v90
  %v405 = vunpack.c.l.b16 %v91
  %v406 = vunpack.c.l.b16 %v92
  %v407 = vunpack.c.l.b16 %v93
  %v408 = vunpack.c.l.b16 %v94
  %v409 = vunpack.c.l.b16 %v95
  %v410 = vunpack.c.l.b16 %v96
  %v411 = vunpack.c.l.b16 %v97
  %v412 = vunpack.c.l.b16 %v98
  %v413 = vunpack.c.l.b16 %v99
  %v414 = vunpack.c.l.b16 %v100
  %v415 = vunpack.c.l.b16 %v101
  %v416 = vunpack.c.l.b16 %v102
  %v417 = vunpack.c.l.b16 %v103
  %v418 = vunpack.c.l.b16 %v104
  %v419 = vunpack.c.l.b16 %v105
  %v420 = vunpack.c.l.b16 %v106
  %v421 = vunpack.c.l.b16 %v107
  %v422 = vunpack.c.l.b16 %v108
  %v423 = vunpack.c.l.b16 %v109
  %v424 = vunpack.c.l.b16 %v110
  %v425 = vunpack.c.l.b16 %v111
  %v426 = vunpack.c.l.b16 %v112
  %v427 = vunpack.c.l.b16 %v113
  %v428 = vunpack.c.l.b16 %v114
  %v429 = vunpack.c.l.b16 %v115
  %v430 = vunpack.c.l.b16 %v116
  %v431 = vunpack.c.l.b16 %v117
  %v432 = vunpack.c.l.b16 %v118
  %v433 = vunpack.c.l.b16 %v119
  %v434 = vunpack.c.l.b16 %v120
  %v435 = vunpack.c.l.b16 %v121
  %v436 = vunpack.c.l.b16 %v122
  %v437 = vunpack.c.l.b16 %v123
  %v438 = vunpack.c.l.b16 %v124
  %v439 = vunpack.c.l.b16 %v125
  %v440 = vunpack.c.l.b16 %v126
  %v441 = vunpack.c.l.b16 %v127
  %v442 = vunpack.c.l.b16 %v128
  %v443 = vunpack.c.l.b16 %v129
  %v444 = vunpack.c.l.b16 %v130
  %v445 = vunpack.c.l.b16 %v131
  %v446 = vunpack.c.l.b16 %v132
  %v447 = vunpack.c.l.b16 %v133
  %v448 = vunpack.c.l.b16 %v134
  %v449 = vunpack.c.l.b16 %v135
  %v450 = vunpack.c.l.b16 %v136
  %v451 = vunpack.c.l.b16 %v137
  %v452 = vunpack.c.l.b16 %v138
  %v453 = vunpack.c.l.b16 %v139
  %v454 = vunpack.c.l.b16 %v140
  %v455 = vpack.c.b16 %v328, %v327
  %v456 = vpack.c.b16 %v330, %v329
  %v457 = vpack.c.b16 %v332, %v331
  %v458 = vpack.c.b16 %v334, %v333
  %v459 = vpack.c.b16 %v336, %v335
  %v460 = vpack.c.b16 %v338, %v337
  %v461 = vpack.c.b16 %v340, %v339
  %v462 = vpack.c.b16 %v342, %v341
  %v463 = vpack.c.b16 %v344, %v343
  %v464 = vpack.c.b16 %v346, %v345
  %v465 = vpack.c.b16 %v348, %v347
  %v466 = vpack.c.b16 %v350, %v349
  %v467 = vpack.c.b16 %v352, %v351
  %v468 = vpack.c.b16 %v354, %v353
  %v469 = vpack.c.b16 %v356, %v355
  %v470 = vpack.c.b16 %v358, %v357
  %v471 = vpack.c.b16 %v360, %v359
  %v472 = vpack.c.b16 %v362, %v361
  %v473 = vpack.c.b16 %v364, %v363
  %v474 = vpack.c.b16 %v366, %v365
  %v475 = vpack.c.b16 %v368, %v367
  %v476 = vpack.c.b16 %v370, %v369
  %v477 = vpack.c.b16 %v372, %v371
  %v478 = vpack.c.b16 %v374, %v373
  %v479 = vpack.c.b16 %v376, %v375
  %v480 = vpack.c.b16 %v378, %v377
  %v481 = vpack.c.b16 %v380, %v379
  %v482 = vpack.c.b16 %v382, %v381
  %v483 = vpack.c.b16 %v384, %v383
  %v484 = vpack.c.b16 %v386, %v385
  %v485 = vpack.c.b16 %v388, %v387
  %v486 = vpack.c.b16 %v390, %v389
  %v487 = vpack.c.b16 %v392, %v391
  %v488 = vpack.c.b16 %v394, %v393
  %v489 = vpack.c.b16 %v396, %v395
  %v490 = vpack.c.b16 %v398, %v397
  %v491 = vpack.c.b16 %v400, %v399
  %v492 = vpack.c.b16 %v402, %v401
  %v493 = vpack.c.b16 %v404, %v403
  %v494 = vpack.c.b16 %v406, %v405
  %v495 = vpack.c.b16 %v408, %v407
  %v496 = vpack.c.b16 %v410, %v409
  %v497 = vpack.c.b16 %v412, %v411
  %v498 = vpack.c.b16 %v414, %v413
  %v499 = vpack.c.b16 %v416, %v415
  %v500 = vpack.c.b16 %v418, %v417
  %v501 = vpack.c.b16 %v420, %v419
  %v502 = vpack.c.b16 %v422, %v421
  %v503 = vpack.c.b16 %v424, %v423
  %v504 = vpack.c.b16 %v426, %v425
  %v505 = vpack.c.b16 %v428, %v427
  %v506 = vpack.c.b16 %v430, %v429
  %v507 = vpack.c.b16 %v432, %v431
  %v508 = vpack.c.b16 %v434, %v433
  %v509 = vpack.c.b16 %v436, %v435
  %v510 = vpack.c.b16 %v438, %v437
  %v511 = vpack.c.b16 %v440, %v439
  %v512 = vpack.c.b16 %v442, %v441
  %v513 = vpack.c.b16 %v444, %v443
  %v514 = vpack.c.b16 %v446, %v445
  %v515 = vpack.c.b16 %v448, %v447
  %v516 = vpack.c.b16 %v450, %v449
  %v517 = vpack.c.b16 %v452, %v451
  %v518 = vpack.c.b16 %v454, %v453
  %583 = vmatprep.subr.bf16.mxu0 0
  %584 = vmatpush1.bf16.msra.mxu0 %v455
  %585 = vmatprep.subr.bf16.mxu0 0
  %586 = vmatpush1.bf16.msra.mxu0 %v456
  %587 = vmatprep.subr.bf16.mxu0 0
  %588 = vmatpush1.bf16.msra.mxu0 %v457
  %589 = vmatprep.subr.bf16.mxu0 0
  %590 = vmatpush1.bf16.msra.mxu0 %v458
  %591 = vmatprep.subr.bf16.mxu0 0
  %592 = vmatpush1.bf16.msra.mxu0 %v459
  %593 = vmatprep.subr.bf16.mxu0 0
  %594 = vmatpush1.bf16.msra.mxu0 %v460
  %595 = vmatprep.subr.bf16.mxu0 0
  %596 = vmatpush1.bf16.msra.mxu0 %v461
  %597 = vmatprep.subr.bf16.mxu0 0
  %598 = vmatpush1.bf16.msra.mxu0 %v462
  %599 = vmatprep.subr.bf16.mxu0 0
  %600 = vmatpush1.bf16.msra.mxu0 %v463
  %601 = vmatprep.subr.bf16.mxu0 0
  %602 = vmatpush1.bf16.msra.mxu0 %v464
  %603 = vmatprep.subr.bf16.mxu0 0
  %604 = vmatpush1.bf16.msra.mxu0 %v465
  %605 = vmatprep.subr.bf16.mxu0 0
  %606 = vmatpush1.bf16.msra.mxu0 %v466
  %607 = vmatprep.subr.bf16.mxu0 0
  %608 = vmatpush1.bf16.msra.mxu0 %v467
  %609 = vmatprep.subr.bf16.mxu0 0
  %610 = vmatpush1.bf16.msra.mxu0 %v468
  %611 = vmatprep.subr.bf16.mxu0 0
  %612 = vmatpush1.bf16.msra.mxu0 %v469
  %613 = vmatprep.subr.bf16.mxu0 0
  %614 = vmatpush1.bf16.msra.mxu0 %v470
  %615 = vmatprep.mubr.bf16.mxu0 %v179
  %616 = vmatmul.mubr.bf16.gmra.mrb[0].mxu0 %v165
  %v617 = vpop.f32.mrb[0].mxu0
  %v618 = vadd.f32 0.0, %v617
  %v619 = vpop.f32.mrb[0].mxu0
  %v620 = vpop.f32.mrb[0].mxu0
  %v621 = vpop.f32.mrb[0].mxu0
  %622 = vdwg.mxu0
  %623 = vmatprep.subr.bf16.mxu0 0
  %624 = vmatpush1.bf16.msra.mxu0 %v471
  %625 = vmatprep.subr.bf16.mxu0 0
  %626 = vmatpush1.bf16.msra.mxu0 %v472
  %627 = vmatprep.subr.bf16.mxu0 0
  %628 = vmatpush1.bf16.msra.mxu0 %v473
  %629 = vmatprep.subr.bf16.mxu0 0
  %630 = vmatpush1.bf16.msra.mxu0 %v474
  %631 = vmatprep.subr.bf16.mxu0 0
  %632 = vmatpush1.bf16.msra.mxu0 %v475
  %633 = vmatprep.subr.bf16.mxu0 0
  %634 = vmatpush1.bf16.msra.mxu0 %v476
  %635 = vmatprep.subr.bf16.mxu0 0
  %636 = vmatpush1.bf16.msra.mxu0 %v477
  %637 = vmatprep.subr.bf16.mxu0 0
  %638 = vmatpush1.bf16.msra.mxu0 %v478
  %639 = vmatprep.subr.bf16.mxu0 0
  %640 = vmatpush1.bf16.msra.mxu0 %v479
  %641 = vmatprep.subr.bf16.mxu0 0
  %642 = vmatpush1.bf16.msra.mxu0 %v480
  %643 = vmatprep.subr.bf16.mxu0 0
  %644 = vmatpush1.bf16.msra.mxu0 %v481
  %645 = vmatprep.subr.bf16.mxu0 0
  %646 = vmatpush1.bf16.msra.mxu0 %v482
  %647 = vmatprep.subr.bf16.mxu0 0
  %648 = vmatpush1.bf16.msra.mxu0 %v483
  %649 = vmatprep.subr.bf16.mxu0 0
  %650 = vmatpush1.bf16.msra.mxu0 %v484
  %651 = vmatprep.subr.bf16.mxu0 0
  %652 = vmatpush1.bf16.msra.mxu0 %v485
  %653 = vmatprep.subr.bf16.mxu0 0
  %654 = vmatpush1.bf16.msra.mxu0 %v486
  %655 = vmatprep.mubr.bf16.mxu0 %v189
  %656 = vmatmul.mubr.bf16.gmra.mrb[0].mxu0 %v187
  %v657 = vpop.f32.mrb[0].mxu0
  %v658 = vadd.f32 %v618, %v657
  %v659 = vpop.f32.mrb[0].mxu0
  %v660 = vpop.f32.mrb[0].mxu0
  %v661 = vpop.f32.mrb[0].mxu0
  %662 = vdwg.mxu0
  %663 = vmatprep.subr.bf16.mxu0 0
  %664 = vmatpush1.bf16.msra.mxu0 %v487
  %665 = vmatprep.subr.bf16.mxu0 0
  %666 = vmatpush1.bf16.msra.mxu0 %v488
  %667 = vmatprep.subr.bf16.mxu0 0
  %668 = vmatpush1.bf16.msra.mxu0 %v489
  %669 = vmatprep.subr.bf16.mxu0 0
  %670 = vmatpush1.bf16.msra.mxu0 %v490
  %671 = vmatprep.subr.bf16.mxu0 0
  %672 = vmatpush1.bf16.msra.mxu0 %v491
  %673 = vmatprep.subr.bf16.mxu0 0
  %674 = vmatpush1.bf16.msra.mxu0 %v492
  %675 = vmatprep.subr.bf16.mxu0 0
  %676 = vmatpush1.bf16.msra.mxu0 %v493
  %677 = vmatprep.subr.bf16.mxu0 0
  %678 = vmatpush1.bf16.msra.mxu0 %v494
  %679 = vmatprep.subr.bf16.mxu0 0
  %680 = vmatpush1.bf16.msra.mxu0 %v495
  %681 = vmatprep.subr.bf16.mxu0 0
  %682 = vmatpush1.bf16.msra.mxu0 %v496
  %683 = vmatprep.subr.bf16.mxu0 0
  %684 = vmatpush1.bf16.msra.mxu0 %v497
  %685 = vmatprep.subr.bf16.mxu0 0
  %686 = vmatpush1.bf16.msra.mxu0 %v498
  %687 = vmatprep.subr.bf16.mxu0 0
  %688 = vmatpush1.bf16.msra.mxu0 %v499
  %689 = vmatprep.subr.bf16.mxu0 0
  %690 = vmatpush1.bf16.msra.mxu0 %v500
  %691 = vmatprep.subr.bf16.mxu0 0
  %692 = vmatpush1.bf16.msra.mxu0 %v501
  %693 = vmatprep.subr.bf16.mxu0 0
  %694 = vmatpush1.bf16.msra.mxu0 %v502
  %695 = vmatprep.mubr.bf16.mxu0 %v186
  %696 = vmatmul.mubr.bf16.gmra.mrb[0].mxu0 %v172
  %v697 = vpop.f32.mrb[0].mxu0
  %v698 = vadd.f32 %v658, %v697
  %v699 = vpop.f32.mrb[0].mxu0
  %v700 = vpop.f32.mrb[0].mxu0
  %v701 = vpop.f32.mrb[0].mxu0
  %702 = vdwg.mxu0
  %703 = vmatprep.subr.bf16.mxu0 0
  %704 = vmatpush1.bf16.msra.mxu0 %v503
  %705 = vmatprep.subr.bf16.mxu0 0
  %706 = vmatpush1.bf16.msra.mxu0 %v504
  %707 = vmatprep.subr.bf16.mxu0 0
  %708 = vmatpush1.bf16.msra.mxu0 %v505
  %709 = vmatprep.subr.bf16.mxu0 0
  %710 = vmatpush1.bf16.msra.mxu0 %v506
  %711 = vmatprep.subr.bf16.mxu0 0
  %712 = vmatpush1.bf16.msra.mxu0 %v507
  %713 = vmatprep.subr.bf16.mxu0 0
  %714 = vmatpush1.bf16.msra.mxu0 %v508
  %715 = vmatprep.subr.bf16.mxu0 0
  %716 = vmatpush1.bf16.msra.mxu0 %v509
  %717 = vmatprep.subr.bf16.mxu0 0
  %718 = vmatpush1.bf16.msra.mxu0 %v510
  %719 = vmatprep.subr.bf16.mxu0 0
  %720 = vmatpush1.bf16.msra.mxu0 %v511
  %721 = vmatprep.subr.bf16.mxu0 0
  %722 = vmatpush1.bf16.msra.mxu0 %v512
  %723 = vmatprep.subr.bf16.mxu0 0
  %724 = vmatpush1.bf16.msra.mxu0 %v513
  %725 = vmatprep.subr.bf16.mxu0 0
  %726 = vmatpush1.bf16.msra.mxu0 %v514
  %727 = vmatprep.subr.bf16.mxu0 0
  %728 = vmatpush1.bf16.msra.mxu0 %v515
  %729 = vmatprep.subr.bf16.mxu0 0
  %730 = vmatpush1.bf16.msra.mxu0 %v516
  %731 = vmatprep.subr.bf16.mxu0 0
  %732 = vmatpush1.bf16.msra.mxu0 %v517
  %733 = vmatprep.subr.bf16.mxu0 0
  %734 = vmatpush1.bf16.msra.mxu0 %v518
  %735 = vmatprep.mubr.bf16.mxu0 %v190
  %736 = vmatmul.mubr.bf16.gmra.mrb[0].mxu0 %v188
  %v737 = vpop.f32.mrb[0].mxu0
  %v738 = vadd.f32 %v698, %v737
  %v739 = vpop.f32.mrb[0].mxu0
  %v740 = vpop.f32.mrb[0].mxu0
  %v741 = vpop.f32.mrb[0].mxu0
  %742 = vdwg.mxu0
  %743 = vst [vmem:[%s2] sm:$0x3] %v738
  // Predicated region
  $region10: #{_lambda_.11} parent=0 // pred_check
    _
  $region11: #{_lambda_.11} parent=0 // pred_check_branch
    %745 = sbr.rel (0) target = $region13
  $region12: #{_lambda_.11} parent=0 // pred_region
    _
  $region13: #{_lambda_.11} parent=0 // pred_fallthru
    _
  // Predicated region
  $region14: #{_lambda_.11} parent=0 // pred_check
    _
  $region15: #{_lambda_.11} parent=0 // pred_check_branch
    %747 = sbr.rel (0) target = $region17
  $region16: #{_lambda_.11} parent=0 // pred_region
    _
  $region17: #{_lambda_.11} parent=0 // pred_fallthru
    _

</llo_original>
